<compile_context>
chip_gen: v7x
topology: tpu7x:2x2x1
jax: 0.10.0
libtpu: 0.0.40
codegen_flags: <defaults>
</compile_context>

<pallas_src>
import functools

import jax
import jax.numpy as jnp
from jax.experimental import pallas as pl
from jax.experimental.pallas import tpu as pltpu


# ----------------------------------------------------------------------------
# Pallas kernels
# ----------------------------------------------------------------------------
def _cnn_gates_kernel(p_ref, wc_ref, bc_ref, wt_ref, bt_ref, wf_ref, bf_ref,
                      wih_ref, o_ref, pooled_sc, *, hw, fpt):
    # One grid step = `fpt` frames worth of im2col rows.
    # p_ref:  (fpt*HW, Kpad)   im2col patches row tile
    # wc_ref: (Kpad, 128)      conv weights (output channels zero-padded to 128 lanes)
    # pooled_sc: (N, 128)      VMEM-resident per-frame pooled features (accumulated per tile)
    i = pl.program_id(0)

    h = jnp.dot(p_ref[...], wc_ref[...], preferred_element_type=jnp.float32) + bc_ref[...]
    h = jnp.maximum(h, 0.0)                                        # conv3x3 + ReLU
    # Global average pool as an in-kernel reduction over the HW axis (no dense pool matrix).
    csize = h.shape[-1]
    pooled = jnp.sum(h.reshape(fpt, hw, csize), axis=1) * (1.0 / hw)   # (fpt, 128)
    start = pl.multiple_of(i * fpt, fpt)
    pooled_sc[pl.ds(start, fpt), :] = pooled

    @pl.when(i == pl.num_programs(0) - 1)
    def _():                                                        # epilogue on last tile
        z = jnp.dot(pooled_sc[...], wt_ref[...], preferred_element_type=jnp.float32) + bt_ref[...]
        z = jnp.maximum(z, 0.0)                                     # trunk projection + ReLU
        z = jnp.dot(z, wf_ref[...], preferred_element_type=jnp.float32) + bf_ref[...]
        z = jnp.maximum(z, 0.0)                                     # replaced resnet.fc + ReLU
        o_ref[...] = jnp.dot(z, wih_ref[...],
                             preferred_element_type=jnp.float32).astype(o_ref.dtype)  # x@W_ih^(0)


def _rnn_head_kernel(gimg_ref, keys_ref, wihk_ref,
                     whh0_img_ref, wcat_img_ref, b_img_ref,
                     whh0_key_ref, wcat_key_ref, b_key_ref,
                     w1_ref, b1_ref, w2_ref, b2_ref, w3_ref, b3_ref,
                     h10_ref, c10_ref, h20_ref, c20_ref,
                     out_ref, h1_ref, c1_ref, h2_ref, c2_ref,
                     h1_sc, c1_sc, h2_sc, c2_sc,
                     *, num_layers, hidden, t_img, t_key):
    # One grid step == one timestep of BOTH recurrences; head runs at the last step.
    # Weights use constant block indices (DMA'd once); h/c persist in VMEM scratch.
    t = pl.program_id(0)

    @pl.when(t == 0)
    def _():
        h1_sc[...] = h10_ref[...]
        c1_sc[...] = c10_ref[...]
        h2_sc[...] = h20_ref[...]
        c2_sc[...] = c20_ref[...]

    def cell(gates, c_prev):
        # gate order permuted at pack time to (i, f, o, g): one sigmoid over 3H lanes, one tanh
        sig = jax.nn.sigmoid(gates[:, :3 * hidden])
        i_g = sig[:, :hidden]
        f_g = sig[:, hidden:2 * hidden]
        o_g = sig[:, 2 * hidden:3 * hidden]
        g_g = jnp.tanh(gates[:, 3 * hidden:])
        c_new = f_g * c_prev + i_g * g_g
        return o_g * jnp.tanh(c_new), c_new

    def run_stack(gx0, whh0_ref, wcat_ref, b_ref, h_sc, c_sc):
        gates = gx0 + jnp.dot(h_sc[0], whh0_ref[...],
                              preferred_element_type=jnp.float32) + b_ref[0]
        h_new, c_new = cell(gates, c_sc[0])
        h_sc[0] = h_new
        c_sc[0] = c_new
        for l in range(1, num_layers):          # eval mode: inter-layer dropout == identity
            # fused [x_l ; h_prev] @ [W_ih ; W_hh] -> single 2H-deep MXU contraction
            xin = jnp.concatenate([h_new, h_sc[l]], axis=-1)
            gates = jnp.dot(xin, wcat_ref[l - 1],
                            preferred_element_type=jnp.float32) + b_ref[l]
            h_new, c_new = cell(gates, c_sc[l])
            h_sc[l] = h_new
            c_sc[l] = c_new

    @pl.when(t < t_img)
    def _():
        run_stack(gimg_ref[0], whh0_img_ref, wcat_img_ref, b_img_ref, h1_sc, c1_sc)

    @pl.when(t < t_key)
    def _():
        gx0 = jnp.dot(keys_ref[0], wihk_ref[...], preferred_element_type=jnp.float32)
        run_stack(gx0, whh0_key_ref, wcat_key_ref, b_key_ref, h2_sc, c2_sc)

    @pl.when(t == pl.num_programs(0) - 1)
    def _():
        # MLP head on VMEM-resident final hidden states; bn1/bn2 folded into fc weights.
        cat = jnp.concatenate([h1_sc[num_layers - 1], h2_sc[num_layers - 1]], axis=-1)
        h = jnp.dot(cat, w1_ref[...], preferred_element_type=jnp.float32) + b1_ref[...]
        h = jnp.maximum(h, 0.0)
        h = jnp.dot(h, w2_ref[...], preferred_element_type=jnp.float32) + b2_ref[...]
        h = jnp.maximum(h, 0.0)
        out_ref[...] = (jnp.dot(h, w3_ref[...], preferred_element_type=jnp.float32)
                        + b3_ref[...]).astype(out_ref.dtype)
        h1_ref[...] = h1_sc[...]
        c1_ref[...] = c1_sc[...]
        h2_ref[...] = h2_sc[...]
        c2_ref[...] = c2_sc[...]


# ----------------------------------------------------------------------------
# BlockSpec helpers
# ----------------------------------------------------------------------------
def _const_spec(shape):
    n = len(shape)
    return pl.BlockSpec(shape, lambda t, _n=n: (0,) * _n)


def _step_spec(seq_len, block_shape, seq_total):
    if seq_len == seq_total:
        return pl.BlockSpec(block_shape, lambda t: (t, 0, 0))
    return pl.BlockSpec(block_shape, lambda t: (jnp.minimum(t, seq_len - 1), 0, 0))


# ----------------------------------------------------------------------------
# Model forward
# ----------------------------------------------------------------------------
def kart_model8_forward(params, x_3d, key_inputs, hidden1=None, hidden2=None):
    # x_3d: (B, T, C, H, W) NCHW frames (PyTorch convention); key_inputs: (B, Tk, 6)
    f32 = jnp.float32
    B, T = x_3d.shape[0], x_3d.shape[1]
    L = params["num_layers"]
    H = params["lstm_hidden"]
    num_class = params["num_class"]
    Bp = ((B + 7) // 8) * 8                                   # pad batch to 8 sublanes up front

    if hidden1 is None:
        hidden1 = (jnp.zeros((L, B, H), f32), jnp.zeros((L, B, H), f32))
    if hidden2 is None:
        hidden2 = (jnp.zeros((L, B, H), f32), jnp.zeros((L, B, H), f32))

    # ---- batched CNN features for all T*Bp frames (one row-tiled kernel launch) ----
    fr = jnp.transpose(x_3d, (1, 0, 3, 4, 2)).astype(f32)     # (T, B, Hi, Wi, C)
    fr = jnp.pad(fr, ((0, 0), (0, Bp - B), (0, 0), (0, 0), (0, 0)))
    N = T * Bp                                                # multiple of 8 by construction
    frames = fr.reshape((N,) + fr.shape[2:])                  # (N, Hi, Wi, C)
    _, Hi, Wi, C = frames.shape
    HW = Hi * Wi
    K = 9 * C
    Kpad = ((K + 31) // 32) * 32

    # TODO(synk): im2col materializes ~9x the frame bytes in HBM; for v5e-scale inputs build
    # the patches inside the kernel from raw frames via 9 static shifts instead.
    xp = jnp.pad(frames, ((0, 0), (1, 1), (1, 1), (0, 0)))    # conv pad=1, stride=1
    cols = [xp[:, dy:dy + Hi, dx:dx + Wi, :] for dy in range(3) for dx in range(3)]
    patches = jnp.concatenate(cols, axis=-1).reshape(N * HW, K)
    patches = jnp.pad(patches, ((0, 0), (0, Kpad - K)))

    Cpad = params["conv_w"].shape[1]                          # conv channels padded to 128

    # frames-per-tile: power of two <= 8 dividing N, target tile <= 2048 rows
    fpt = 1
    while fpt * 2 <= 8 and (fpt * 2) * HW <= 2048 and N % (fpt * 2) == 0:
        fpt *= 2

    cnn_kernel = functools.partial(_cnn_gates_kernel, hw=HW, fpt=fpt)
    gates_img = pl.pallas_call(
        cnn_kernel,
        grid=(N // fpt,),
        in_specs=[pl.BlockSpec((fpt * HW, Kpad), lambda i: (i, 0))]
                 + [_const_spec(a.shape) for a in (
                     params["conv_w"], params["conv_b"], params["trunk_w"], params["trunk_b"],
                     params["resfc_w"], params["resfc_b"], params["lstm_image"]["wih0"])],
        out_specs=pl.BlockSpec((N, 4 * H), lambda i: (0, 0)),
        out_shape=jax.ShapeDtypeStruct((N, 4 * H), f32),
        scratch_shapes=[pltpu.VMEM((N, Cpad), f32)],
        compiler_params=pltpu.CompilerParams(
            dimension_semantics=("arbitrary",),
            vmem_limit_bytes=48 * 1024 * 1024),
    )(patches, params["conv_w"], params["conv_b"], params["trunk_w"], params["trunk_b"],
      params["resfc_w"], params["resfc_b"], params["lstm_image"]["wih0"])
    gates_img = gates_img.reshape(T, Bp, 4 * H)               # free: N == T * Bp

    # ---- key inputs (raw, projection done per-step inside the fused kernel) ----
    keys = jnp.transpose(key_inputs, (1, 0, 2)).astype(f32)   # (Tk, B, 6)
    Tk, _, Dk = keys.shape
    Dkp = params["lstm_key"]["wih0"].shape[0]                 # input dim padded to 8
    keys = jnp.pad(keys, ((0, 0), (0, Bp - B), (0, Dkp - Dk)))

    def pad_b(s):
        return jnp.pad(s.astype(f32), ((0, 0), (0, Bp - B), (0, 0)))

    h10, c10 = pad_b(hidden1[0]), pad_b(hidden1[1])
    h20, c20 = pad_b(hidden2[0]), pad_b(hidden2[1])

    # ---- fused: both LSTM recurrences + MLP head in ONE pallas_call ----
    # TODO(synk): on v7x the two recurrences could run on separate TensorCores via a leading
    # "parallel" axis, but the fused head needs both states in one core's VMEM, so keep serial.
    Tmax = max(T, Tk)
    li, lk = params["lstm_image"], params["lstm_key"]
    ncls_pad = params["fc3_w"].shape[1]

    rnn_kernel = functools.partial(_rnn_head_kernel, num_layers=L, hidden=H,
                                   t_img=T, t_key=Tk)
    big_inputs = (gates_img, keys, lk["wih0"],
                  li["whh0"], li["wcat"], li["b"],
                  lk["whh0"], lk["wcat"], lk["b"],
                  params["fc1_w"], params["fc1_b"],
                  params["fc2_w"], params["fc2_b"],
                  params["fc3_w"], params["fc3_b"],
                  h10, c10, h20, c20)
    in_specs = ([_step_spec(T, (1, Bp, 4 * H), Tmax),
                 _step_spec(Tk, (1, Bp, Dkp), Tmax)]
                + [_const_spec(a.shape) for a in big_inputs[2:]])
    out_shapes = (jax.ShapeDtypeStruct((Bp, ncls_pad), f32),
                  jax.ShapeDtypeStruct((L, Bp, H), f32),
                  jax.ShapeDtypeStruct((L, Bp, H), f32),
                  jax.ShapeDtypeStruct((L, Bp, H), f32),
                  jax.ShapeDtypeStruct((L, Bp, H), f32))

    out, h1n, c1n, h2n, c2n = pl.pallas_call(
        rnn_kernel,
        grid=(Tmax,),
        in_specs=in_specs,
        out_specs=tuple(_const_spec(s.shape) for s in out_shapes),
        out_shape=out_shapes,
        scratch_shapes=[pltpu.VMEM((L, Bp, H), f32)] * 4,
        compiler_params=pltpu.CompilerParams(dimension_semantics=("arbitrary",)),
    )(*big_inputs)

    return (out[:B, :num_class],
            (h1n[:, :B, :], c1n[:, :B, :]),
            (h2n[:, :B, :], c2n[:, :B, :]))


# ----------------------------------------------------------------------------
# Parameter init (PyTorch-style layout) and packing into kernel layout
# ----------------------------------------------------------------------------
def init_params(key, *, num_class=64, cnn_to_lstm=256, lstm_hidden=128, num_layers=2,
                in_channels=3, conv_channels=32, backbone_feat=2048):
    keys = iter(jax.random.split(key, 128))

    def w(shape, scale=0.05):
        return scale * jax.random.normal(next(keys), shape, jnp.float32)

    def lstm(in_size, hidden, layers):
        p = {"w_ih": [], "w_hh": [], "b_ih": [], "b_hh": []}
        for l in range(layers):
            isz = in_size if l == 0 else hidden
            p["w_ih"].append(w((4 * hidden, isz)))
            p["w_hh"].append(w((4 * hidden, hidden)))
            p["b_ih"].append(w((4 * hidden,)))
            p["b_hh"].append(w((4 * hidden,)))
        return p

    def bn(features):
        return {"gamma": 1.0 + 0.1 * jax.random.normal(next(keys), (features,), jnp.float32),
                "beta": w((features,)),
                "mean": w((features,)),
                "var": 0.5 + jax.random.uniform(next(keys), (features,), jnp.float32)}

    H = lstm_hidden
    return {
        "num_class": num_class, "num_layers": num_layers, "lstm_hidden": H,
        # TODO(synk): torchvision resnet50 is not defined in the provided source; the deep
        # trunk is a stand-in conv3x3+ReLU+GAP+Linear to the 2048-d pooled feature.  The
        # replaced resnet.fc (Linear(2048, cnn_to_lstm) + ReLU) and everything after are exact.
        "conv_w": w((conv_channels, in_channels, 3, 3)),      # torch conv layout (O,I,kh,kw)
        "conv_b": w((conv_channels,)),
        "trunk_w": w((backbone_feat, conv_channels)),         # torch linear layout (out, in)
        "trunk_b": w((backbone_feat,)),
        "resfc_w": w((cnn_to_lstm, backbone_feat)),
        "resfc_b": w((cnn_to_lstm,)),
        "lstm_image": lstm(cnn_to_lstm, H, num_layers),
        "lstm_key": lstm(6, H, num_layers),
        "fc1_w": w((2 * H, 2 * H)), "fc1_b": w((2 * H,)), "bn1": bn(2 * H),
        "fc2_w": w((H, 2 * H)), "fc2_b": w((H,)), "bn2": bn(H),
        "fc3_w": w((num_class, H)), "fc3_b": w((num_class,)),
    }


def pack_params(p):
    f32 = jnp.float32
    H = p["lstm_hidden"]
    L = p["num_layers"]
    # permute PyTorch gate order (i, f, g, o) -> (i, f, o, g): one contiguous sigmoid slice
    perm = jnp.concatenate([jnp.arange(0, 2 * H), jnp.arange(3 * H, 4 * H),
                            jnp.arange(2 * H, 3 * H)])

    def pack_lstm(lp):
        in_size = lp["w_ih"][0].shape[1]
        in_pad = ((in_size + 7) // 8) * 8
        wih0 = lp["w_ih"][0][perm].T                           # (in, 4H), gate-permuted
        wih0 = jnp.pad(wih0, ((0, in_pad - in_size), (0, 0)))
        whh0 = lp["w_hh"][0][perm].T                           # (H, 4H)
        b = jnp.stack([(lp["b_ih"][l] + lp["b_hh"][l])[perm] for l in range(L)])[:, None, :]
        if L > 1:
            wcat = jnp.stack([jnp.concatenate([lp["w_ih"][l][perm].T,
                                               lp["w_hh"][l][perm].T], axis=0)
                              for l in range(1, L)])           # (L-1, 2H, 4H) fused [W_ih;W_hh]
        else:
            wcat = jnp.zeros((1, 2 * H, 4 * H), f32)
        return {"wih0": wih0, "whh0": whh0, "wcat": wcat, "b": b}

    def bn_fold(w_t, b_t, bnp, eps=1e-5):                      # fold eval-mode BN into Linear
        s = bnp["gamma"] / jnp.sqrt(bnp["var"] + eps)
        return w_t.T * s[None, :], (b_t * s + bnp["beta"] - bnp["mean"] * s)[None, :]

    # conv weights in im2col (ky, kx, cin) row order; pad K -> 32 and Cout -> 128 lanes
    Cc = p["conv_w"].shape[0]
    Cpad = ((Cc + 127) // 128) * 128
    convw = jnp.transpose(p["conv_w"], (2, 3, 1, 0)).reshape(-1, Cc)
    K = convw.shape[0]
    Kpad = ((K + 31) // 32) * 32
    convw = jnp.pad(convw, ((0, Kpad - K), (0, Cpad - Cc)))
    convb = jnp.pad(p["conv_b"], (0, Cpad - Cc))[None, :]
    trunkw = jnp.pad(p["trunk_w"].T, ((0, Cpad - Cc), (0, 0)))
    trunkb = p["trunk_b"][None, :]
    resfcw = p["resfc_w"].T
    resfcb = p["resfc_b"][None, :]

    fc1w, fc1b = bn_fold(p["fc1_w"], p["fc1_b"], p["bn1"])
    fc2w, fc2b = bn_fold(p["fc2_w"], p["fc2_b"], p["bn2"])
    ncls = p["num_class"]
    ncls_pad = ((ncls + 127) // 128) * 128                     # lane-dense head output
    fc3w = jnp.pad(p["fc3_w"].T, ((0, 0), (0, ncls_pad - ncls)))
    fc3b = jnp.pad(p["fc3_b"], (0, ncls_pad - ncls))[None, :]

    return {
        "num_class": ncls, "num_layers": L, "lstm_hidden": H,
        "conv_w": convw, "conv_b": convb,
        "trunk_w": trunkw, "trunk_b": trunkb,
        "resfc_w": resfcw, "resfc_b": resfcb,
        "lstm_image": pack_lstm(p["lstm_image"]),
        "lstm_key": pack_lstm(p["lstm_key"]),
        "fc1_w": fc1w, "fc1_b": fc1b,
        "fc2_w": fc2w, "fc2_b": fc2b,
        "fc3_w": fc3w, "fc3_b": fc3b,
    }


# ----------------------------------------------------------------------------
if __name__ == "__main__":
    root = jax.random.PRNGKey(0)
    kp, kx, kk = jax.random.split(root, 3)

    raw = init_params(kp, num_class=64, cnn_to_lstm=256, lstm_hidden=128, num_layers=2)
    params = pack_params(raw)

    B, T, C, Himg, Wimg = 2, 2, 3, 16, 16
    Tk = 4
    x_3d = jax.random.normal(kx, (B, T, C, Himg, Wimg), jnp.float32)   # NCHW frames
    key_inputs = jax.random.normal(kk, (B, Tk, 6), jnp.float32)

    fwd = jax.jit(functools.partial(kart_model8_forward, params))
    out, hidden1, hidden2 = fwd(x_3d, key_inputs)

    jax.block_until_ready((out, hidden1, hidden2))
    assert out.shape == (B, params["num_class"])
    assert hidden1[0].shape == (params["num_layers"], B, params["lstm_hidden"])
    assert hidden2[1].shape == (params["num_layers"], B, params["lstm_hidden"])
    print("KERNEL_OK")
</pallas_src>

<mosaic_0001>
module attributes {stable_mosaic.version = 11 : i64} {
  func.func @_cnn_gates_kernel(%arg0: i32, %arg1: memref<2048x32xf32, #tpu.memory_space<vmem>>, %arg2: memref<32x128xf32, #tpu.memory_space<vmem>>, %arg3: memref<1x128xf32, #tpu.memory_space<vmem>>, %arg4: memref<128x2048xf32, #tpu.memory_space<vmem>>, %arg5: memref<1x2048xf32, #tpu.memory_space<vmem>>, %arg6: memref<2048x256xf32, #tpu.memory_space<vmem>>, %arg7: memref<1x256xf32, #tpu.memory_space<vmem>>, %arg8: memref<256x512xf32, #tpu.memory_space<vmem>>, %arg9: memref<16x512xf32, #tpu.memory_space<vmem>>, %arg10: memref<16x128xf32, #tpu.memory_space<vmem>>) attributes {dimension_semantics = [#tpu.dimension_semantics<arbitrary>], iteration_bounds = array<i64: 2>, scalar_prefetch = 0 : i64, scratch_operands = 1 : i64, tpu.core_type = #tpu.core_type<tc>, window_params = [{transform_indices = @transform_0, window_bounds = array<i64: 2048, 32>}, {pipeline_mode = #tpu.pipeline_mode<synchronous>, transform_indices = @transform_1, window_bounds = array<i64: 32, 128>}, {pipeline_mode = #tpu.pipeline_mode<synchronous>, transform_indices = @transform_2, window_bounds = array<i64: 1, 128>}, {pipeline_mode = #tpu.pipeline_mode<synchronous>, transform_indices = @transform_3, window_bounds = array<i64: 128, 2048>}, {pipeline_mode = #tpu.pipeline_mode<synchronous>, transform_indices = @transform_4, window_bounds = array<i64: 1, 2048>}, {pipeline_mode = #tpu.pipeline_mode<synchronous>, transform_indices = @transform_5, window_bounds = array<i64: 2048, 256>}, {pipeline_mode = #tpu.pipeline_mode<synchronous>, transform_indices = @transform_6, window_bounds = array<i64: 1, 256>}, {pipeline_mode = #tpu.pipeline_mode<synchronous>, transform_indices = @transform_7, window_bounds = array<i64: 256, 512>}, {pipeline_mode = #tpu.pipeline_mode<synchronous>, transform_indices = @transform_8, window_bounds = array<i64: 16, 512>}]} {
    %c0 = arith.constant 0 : index
    %c0_0 = arith.constant 0 : index
    %0 = vector.load %arg1[%c0, %c0_0] : memref<2048x32xf32, #tpu.memory_space<vmem>>, vector<2048x32xf32>
    %c0_1 = arith.constant 0 : index
    %c0_2 = arith.constant 0 : index
    %1 = vector.load %arg2[%c0_1, %c0_2] : memref<32x128xf32, #tpu.memory_space<vmem>>, vector<32x128xf32>
    %cst = arith.constant dense<0.000000e+00> : vector<2048x128xf32>
    %2 = tpu.matmul %0, %1, %cst {dimension_numbers = #tpu.dot_dimension_numbers<[1], [0], [0], [1], [0, 0, 1, 1], [], []>} : vector<2048x32xf32>, vector<32x128xf32>, vector<2048x128xf32> -> vector<2048x128xf32>
    %c0_3 = arith.constant 0 : index
    %c0_4 = arith.constant 0 : index
    %3 = vector.load %arg3[%c0_3, %c0_4] : memref<1x128xf32, #tpu.memory_space<vmem>>, vector<1x128xf32>
    %4 = vector.broadcast %3 : vector<1x128xf32> to vector<2048x128xf32>
    %5 = arith.addf %2, %4 : vector<2048x128xf32>
    %cst_5 = arith.constant 0.000000e+00 : f32
    %6 = vector.broadcast %cst_5 : f32 to vector<2048x128xf32>
    %7 = arith.maximumf %5, %6 : vector<2048x128xf32>
    %8 = vector.shape_cast %7 : vector<2048x128xf32> to vector<8x256x128xf32>
    %cst_6 = arith.constant dense<0.000000e+00> : vector<8x128xf32>
    %9 = vector.multi_reduction <add>, %8, %cst_6 [1] : vector<8x256x128xf32> to vector<8x128xf32>
    %cst_7 = arith.constant 3.906250e-03 : f32
    %10 = vector.broadcast %cst_7 : f32 to vector<8x128xf32>
    %11 = arith.mulf %9, %10 : vector<8x128xf32>
    %c8_i32 = arith.constant 8 : i32
    %12 = arith.muli %arg0, %c8_i32 : i32
    %13 = tpu.assume_multiple %12, 8 : i32
    %14 = arith.index_cast %13 : i32 to index
    %c0_8 = arith.constant 0 : index
    %15 = vector.load %arg10[%14, %c0_8] : memref<16x128xf32, #tpu.memory_space<vmem>>, vector<8x128xf32>
    tpu.vector_store %arg10[%14, %c0_8], %11 {strides = array<i32>} : memref<16x128xf32, #tpu.memory_space<vmem>>, vector<8x128xf32>,
    %c1_i32 = arith.constant 1 : i32
    %16 = arith.cmpi eq, %arg0, %c1_i32 : i32
    %17 = arith.extui %16 : i1 to i32
    %c0_i32 = arith.constant 0 : i32
    %18 = arith.cmpi ne, %17, %c0_i32 : i32
    scf.if %18 {
      %c0_9 = arith.constant 0 : index
      %c0_10 = arith.constant 0 : index
      %19 = vector.load %arg10[%c0_9, %c0_10] : memref<16x128xf32, #tpu.memory_space<vmem>>, vector<16x128xf32>
      %c0_11 = arith.constant 0 : index
      %c0_12 = arith.constant 0 : index
      %20 = vector.load %arg4[%c0_11, %c0_12] : memref<128x2048xf32, #tpu.memory_space<vmem>>, vector<128x2048xf32>
      %cst_13 = arith.constant dense<0.000000e+00> : vector<16x2048xf32>
      %21 = tpu.matmul %19, %20, %cst_13 {dimension_numbers = #tpu.dot_dimension_numbers<[1], [0], [0], [1], [0, 0, 1, 1], [], []>} : vector<16x128xf32>, vector<128x2048xf32>, vector<16x2048xf32> -> vector<16x2048xf32>
      %c0_14 = arith.constant 0 : index
      %c0_15 = arith.constant 0 : index
      %22 = vector.load %arg5[%c0_14, %c0_15] : memref<1x2048xf32, #tpu.memory_space<vmem>>, vector<1x2048xf32>
      %23 = vector.broadcast %22 : vector<1x2048xf32> to vector<16x2048xf32>
      %24 = arith.addf %21, %23 : vector<16x2048xf32>
      %cst_16 = arith.constant 0.000000e+00 : f32
      %25 = vector.broadcast %cst_16 : f32 to vector<16x2048xf32>
      %26 = arith.maximumf %24, %25 : vector<16x2048xf32>
      %c0_17 = arith.constant 0 : index
      %c0_18 = arith.constant 0 : index
      %27 = vector.load %arg6[%c0_17, %c0_18] : memref<2048x256xf32, #tpu.memory_space<vmem>>, vector<2048x256xf32>
      %cst_19 = arith.constant dense<0.000000e+00> : vector<16x256xf32>
      %28 = tpu.matmul %26, %27, %cst_19 {dimension_numbers = #tpu.dot_dimension_numbers<[1], [0], [0], [1], [0, 0, 1, 1], [], []>} : vector<16x2048xf32>, vector<2048x256xf32>, vector<16x256xf32> -> vector<16x256xf32>
      %c0_20 = arith.constant 0 : index
      %c0_21 = arith.constant 0 : index
      %29 = vector.load %arg7[%c0_20, %c0_21] : memref<1x256xf32, #tpu.memory_space<vmem>>, vector<1x256xf32>
      %30 = vector.broadcast %29 : vector<1x256xf32> to vector<16x256xf32>
      %31 = arith.addf %28, %30 : vector<16x256xf32>
      %cst_22 = arith.constant 0.000000e+00 : f32
      %32 = vector.broadcast %cst_22 : f32 to vector<16x256xf32>
      %33 = arith.maximumf %31, %32 : vector<16x256xf32>
      %c0_23 = arith.constant 0 : index
      %c0_24 = arith.constant 0 : index
      %34 = vector.load %arg8[%c0_23, %c0_24] : memref<256x512xf32, #tpu.memory_space<vmem>>, vector<256x512xf32>
      %cst_25 = arith.constant dense<0.000000e+00> : vector<16x512xf32>
      %35 = tpu.matmul %33, %34, %cst_25 {dimension_numbers = #tpu.dot_dimension_numbers<[1], [0], [0], [1], [0, 0, 1, 1], [], []>} : vector<16x256xf32>, vector<256x512xf32>, vector<16x512xf32> -> vector<16x512xf32>
      %c0_26 = arith.constant 0 : index
      %c0_27 = arith.constant 0 : index
      %36 = vector.load %arg9[%c0_26, %c0_27] : memref<16x512xf32, #tpu.memory_space<vmem>>, vector<16x512xf32>
      tpu.vector_store %arg9[%c0_26, %c0_27], %35 {strides = array<i32>} : memref<16x512xf32, #tpu.memory_space<vmem>>, vector<16x512xf32>,
    } else {
    }
    return
  }
  func.func @transform_0(%arg0: i32) -> (i32, i32) {
    %c0_i32 = arith.constant 0 : i32
    %c0_i32_0 = arith.constant 0 : i32
    return %arg0, %c0_i32 : i32, i32
  }
  func.func @transform_1(%arg0: i32) -> (i32, i32) {
    %c0_i32 = arith.constant 0 : i32
    %c0_i32_0 = arith.constant 0 : i32
    %c0_i32_1 = arith.constant 0 : i32
    return %c0_i32, %c0_i32_0 : i32, i32
  }
  func.func @transform_2(%arg0: i32) -> (i32, i32) {
    %c0_i32 = arith.constant 0 : i32
    %c0_i32_0 = arith.constant 0 : i32
    %c0_i32_1 = arith.constant 0 : i32
    return %c0_i32, %c0_i32_0 : i32, i32
  }
  func.func @transform_3(%arg0: i32) -> (i32, i32) {
    %c0_i32 = arith.constant 0 : i32
    %c0_i32_0 = arith.constant 0 : i32
    %c0_i32_1 = arith.constant 0 : i32
    return %c0_i32, %c0_i32_0 : i32, i32
  }
  func.func @transform_4(%arg0: i32) -> (i32, i32) {
    %c0_i32 = arith.constant 0 : i32
    %c0_i32_0 = arith.constant 0 : i32
    %c0_i32_1 = arith.constant 0 : i32
    return %c0_i32, %c0_i32_0 : i32, i32
  }
  func.func @transform_5(%arg0: i32) -> (i32, i32) {
    %c0_i32 = arith.constant 0 : i32
    %c0_i32_0 = arith.constant 0 : i32
    %c0_i32_1 = arith.constant 0 : i32
    return %c0_i32, %c0_i32_0 : i32, i32
  }
  func.func @transform_6(%arg0: i32) -> (i32, i32) {
    %c0_i32 = arith.constant 0 : i32
    %c0_i32_0 = arith.constant 0 : i32
    %c0_i32_1 = arith.constant 0 : i32
    return %c0_i32, %c0_i32_0 : i32, i32
  }
  func.func @transform_7(%arg0: i32) -> (i32, i32) {
    %c0_i32 = arith.constant 0 : i32
    %c0_i32_0 = arith.constant 0 : i32
    %c0_i32_1 = arith.constant 0 : i32
    return %c0_i32, %c0_i32_0 : i32, i32
  }
  func.func @transform_8(%arg0: i32) -> (i32, i32) {
    %c0_i32 = arith.constant 0 : i32
    %c0_i32_0 = arith.constant 0 : i32
    %c0_i32_1 = arith.constant 0 : i32
    return %c0_i32, %c0_i32_0 : i32, i32
  }
}

module attributes {stable_mosaic.version = 11 : i64} {
  func.func @_rnn_head_kernel(%arg0: i32, %arg1: memref<1x8x512xf32, #tpu.memory_space<vmem>>, %arg2: memref<1x8x8xf32, #tpu.memory_space<vmem>>, %arg3: memref<8x512xf32, #tpu.memory_space<vmem>>, %arg4: memref<128x512xf32, #tpu.memory_space<vmem>>, %arg5: memref<1x256x512xf32, #tpu.memory_space<vmem>>, %arg6: memref<2x1x512xf32, #tpu.memory_space<vmem>>, %arg7: memref<128x512xf32, #tpu.memory_space<vmem>>, %arg8: memref<1x256x512xf32, #tpu.memory_space<vmem>>, %arg9: memref<2x1x512xf32, #tpu.memory_space<vmem>>, %arg10: memref<256x256xf32, #tpu.memory_space<vmem>>, %arg11: memref<1x256xf32, #tpu.memory_space<vmem>>, %arg12: memref<256x128xf32, #tpu.memory_space<vmem>>, %arg13: memref<1x128xf32, #tpu.memory_space<vmem>>, %arg14: memref<128x128xf32, #tpu.memory_space<vmem>>, %arg15: memref<1x128xf32, #tpu.memory_space<vmem>>, %arg16: memref<2x8x128xf32, #tpu.memory_space<vmem>>, %arg17: memref<2x8x128xf32, #tpu.memory_space<vmem>>, %arg18: memref<2x8x128xf32, #tpu.memory_space<vmem>>, %arg19: memref<2x8x128xf32, #tpu.memory_space<vmem>>, %arg20: memref<8x128xf32, #tpu.memory_space<vmem>>, %arg21: memref<2x8x128xf32, #tpu.memory_space<vmem>>, %arg22: memref<2x8x128xf32, #tpu.memory_space<vmem>>, %arg23: memref<2x8x128xf32, #tpu.memory_space<vmem>>, %arg24: memref<2x8x128xf32, #tpu.memory_space<vmem>>, %arg25: memref<2x8x128xf32, #tpu.memory_space<vmem>>, %arg26: memref<2x8x128xf32, #tpu.memory_space<vmem>>, %arg27: memref<2x8x128xf32, #tpu.memory_space<vmem>>, %arg28: memref<2x8x128xf32, #tpu.memory_space<vmem>>) attributes {dimension_semantics = [#tpu.dimension_semantics<arbitrary>], iteration_bounds = array<i64: 4>, scalar_prefetch = 0 : i64, scratch_operands = 4 : i64, tpu.core_type = #tpu.core_type<tc>, window_params = [{transform_indices = @transform_0, window_bounds = array<i64: 1, 8, 512>}, {transform_indices = @transform_1, window_bounds = array<i64: 1, 8, 8>}, {pipeline_mode = #tpu.pipeline_mode<synchronous>, transform_indices = @transform_2, window_bounds = array<i64: 8, 512>}, {pipeline_mode = #tpu.pipeline_mode<synchronous>, transform_indices = @transform_3, window_bounds = array<i64: 128, 512>}, {pipeline_mode = #tpu.pipeline_mode<synchronous>, transform_indices = @transform_4, window_bounds = array<i64: 1, 256, 512>}, {pipeline_mode = #tpu.pipeline_mode<synchronous>, transform_indices = @transform_5, window_bounds = array<i64: 2, 1, 512>}, {pipeline_mode = #tpu.pipeline_mode<synchronous>, transform_indices = @transform_6, window_bounds = array<i64: 128, 512>}, {pipeline_mode = #tpu.pipeline_mode<synchronous>, transform_indices = @transform_7, window_bounds = array<i64: 1, 256, 512>}, {pipeline_mode = #tpu.pipeline_mode<synchronous>, transform_indices = @transform_8, window_bounds = array<i64: 2, 1, 512>}, {pipeline_mode = #tpu.pipeline_mode<synchronous>, transform_indices = @transform_9, window_bounds = array<i64: 256, 256>}, {pipeline_mode = #tpu.pipeline_mode<synchronous>, transform_indices = @transform_10, window_bounds = array<i64: 1, 256>}, {pipeline_mode = #tpu.pipeline_mode<synchronous>, transform_indices = @transform_11, window_bounds = array<i64: 256, 128>}, {pipeline_mode = #tpu.pipeline_mode<synchronous>, transform_indices = @transform_12, window_bounds = array<i64: 1, 128>}, {pipeline_mode = #tpu.pipeline_mode<synchronous>, transform_indices = @transform_13, window_bounds = array<i64: 128, 128>}, {pipeline_mode = #tpu.pipeline_mode<synchronous>, transform_indices = @transform_14, window_bounds = array<i64: 1, 128>}, {pipeline_mode = #tpu.pipeline_mode<synchronous>, transform_indices = @transform_15, window_bounds = array<i64: 2, 8, 128>}, {pipeline_mode = #tpu.pipeline_mode<synchronous>, transform_indices = @transform_16, window_bounds = array<i64: 2, 8, 128>}, {pipeline_mode = #tpu.pipeline_mode<synchronous>, transform_indices = @transform_17, window_bounds = array<i64: 2, 8, 128>}, {pipeline_mode = #tpu.pipeline_mode<synchronous>, transform_indices = @transform_18, window_bounds = array<i64: 2, 8, 128>}, {pipeline_mode = #tpu.pipeline_mode<synchronous>, transform_indices = @transform_19, window_bounds = array<i64: 8, 128>}, {pipeline_mode = #tpu.pipeline_mode<synchronous>, transform_indices = @transform_20, window_bounds = array<i64: 2, 8, 128>}, {pipeline_mode = #tpu.pipeline_mode<synchronous>, transform_indices = @transform_21, window_bounds = array<i64: 2, 8, 128>}, {pipeline_mode = #tpu.pipeline_mode<synchronous>, transform_indices = @transform_22, window_bounds = array<i64: 2, 8, 128>}, {pipeline_mode = #tpu.pipeline_mode<synchronous>, transform_indices = @transform_23, window_bounds = array<i64: 2, 8, 128>}]} {
    %c0_i32 = arith.constant 0 : i32
    %0 = arith.cmpi eq, %arg0, %c0_i32 : i32
    %1 = arith.extui %0 : i1 to i32
    %c0_i32_0 = arith.constant 0 : i32
    %2 = arith.cmpi ne, %1, %c0_i32_0 : i32
    scf.if %2 {
      %c0 = arith.constant 0 : index
      %c0_4 = arith.constant 0 : index
      %c0_5 = arith.constant 0 : index
      %12 = vector.load %arg16[%c0, %c0_4, %c0_5] : memref<2x8x128xf32, #tpu.memory_space<vmem>>, vector<2x8x128xf32>
      %c0_6 = arith.constant 0 : index
      %c0_7 = arith.constant 0 : index
      %c0_8 = arith.constant 0 : index
      %13 = vector.load %arg25[%c0_6, %c0_7, %c0_8] : memref<2x8x128xf32, #tpu.memory_space<vmem>>, vector<2x8x128xf32>
      tpu.vector_store %arg25[%c0_6, %c0_7, %c0_8], %12 {strides = array<i32>} : memref<2x8x128xf32, #tpu.memory_space<vmem>>, vector<2x8x128xf32>,
      %c0_9 = arith.constant 0 : index
      %c0_10 = arith.constant 0 : index
      %c0_11 = arith.constant 0 : index
      %14 = vector.load %arg17[%c0_9, %c0_10, %c0_11] : memref<2x8x128xf32, #tpu.memory_space<vmem>>, vector<2x8x128xf32>
      %c0_12 = arith.constant 0 : index
      %c0_13 = arith.constant 0 : index
      %c0_14 = arith.constant 0 : index
      %15 = vector.load %arg26[%c0_12, %c0_13, %c0_14] : memref<2x8x128xf32, #tpu.memory_space<vmem>>, vector<2x8x128xf32>
      tpu.vector_store %arg26[%c0_12, %c0_13, %c0_14], %14 {strides = array<i32>} : memref<2x8x128xf32, #tpu.memory_space<vmem>>, vector<2x8x128xf32>,
      %c0_15 = arith.constant 0 : index
      %c0_16 = arith.constant 0 : index
      %c0_17 = arith.constant 0 : index
      %16 = vector.load %arg18[%c0_15, %c0_16, %c0_17] : memref<2x8x128xf32, #tpu.memory_space<vmem>>, vector<2x8x128xf32>
      %c0_18 = arith.constant 0 : index
      %c0_19 = arith.constant 0 : index
      %c0_20 = arith.constant 0 : index
      %17 = vector.load %arg27[%c0_18, %c0_19, %c0_20] : memref<2x8x128xf32, #tpu.memory_space<vmem>>, vector<2x8x128xf32>
      tpu.vector_store %arg27[%c0_18, %c0_19, %c0_20], %16 {strides = array<i32>} : memref<2x8x128xf32, #tpu.memory_space<vmem>>, vector<2x8x128xf32>,
      %c0_21 = arith.constant 0 : index
      %c0_22 = arith.constant 0 : index
      %c0_23 = arith.constant 0 : index
      %18 = vector.load %arg19[%c0_21, %c0_22, %c0_23] : memref<2x8x128xf32, #tpu.memory_space<vmem>>, vector<2x8x128xf32>
      %c0_24 = arith.constant 0 : index
      %c0_25 = arith.constant 0 : index
      %c0_26 = arith.constant 0 : index
      %19 = vector.load %arg28[%c0_24, %c0_25, %c0_26] : memref<2x8x128xf32, #tpu.memory_space<vmem>>, vector<2x8x128xf32>
      tpu.vector_store %arg28[%c0_24, %c0_25, %c0_26], %18 {strides = array<i32>} : memref<2x8x128xf32, #tpu.memory_space<vmem>>, vector<2x8x128xf32>,
    } else {
    }
    %c2_i32 = arith.constant 2 : i32
    %3 = arith.cmpi slt, %arg0, %c2_i32 : i32
    %4 = arith.extui %3 : i1 to i32
    %c0_i32_1 = arith.constant 0 : i32
    %5 = arith.cmpi ne, %4, %c0_i32_1 : i32
    scf.if %5 {
      %c0 = arith.constant 0 : index
      %c0_4 = arith.constant 0 : index
      %c0_5 = arith.constant 0 : index
      %12 = vector.load %arg1[%c0, %c0_4, %c0_5] : memref<1x8x512xf32, #tpu.memory_space<vmem>>, vector<1x8x512xf32>
      %13 = vector.shape_cast %12 : vector<1x8x512xf32> to vector<8x512xf32>
      %c0_6 = arith.constant 0 : index
      %c0_7 = arith.constant 0 : index
      %c0_8 = arith.constant 0 : index
      %14 = vector.load %arg25[%c0_6, %c0_7, %c0_8] : memref<2x8x128xf32, #tpu.memory_space<vmem>>, vector<1x8x128xf32>
      %15 = vector.shape_cast %14 : vector<1x8x128xf32> to vector<8x128xf32>
      %c0_9 = arith.constant 0 : index
      %c0_10 = arith.constant 0 : index
      %16 = vector.load %arg4[%c0_9, %c0_10] : memref<128x512xf32, #tpu.memory_space<vmem>>, vector<128x512xf32>
      %cst = arith.constant dense<0.000000e+00> : vector<8x512xf32>
      %17 = tpu.matmul %15, %16, %cst {dimension_numbers = #tpu.dot_dimension_numbers<[1], [0], [0], [1], [0, 0, 1, 1], [], []>} : vector<8x128xf32>, vector<128x512xf32>, vector<8x512xf32> -> vector<8x512xf32>
      %18 = arith.addf %13, %17 : vector<8x512xf32>
      %c0_11 = arith.constant 0 : index
      %c0_12 = arith.constant 0 : index
      %c0_13 = arith.constant 0 : index
      %19 = vector.load %arg6[%c0_11, %c0_12, %c0_13] : memref<2x1x512xf32, #tpu.memory_space<vmem>>, vector<1x1x512xf32>
      %20 = vector.shape_cast %19 : vector<1x1x512xf32> to vector<1x512xf32>
      %21 = vector.broadcast %20 : vector<1x512xf32> to vector<8x512xf32>
      %22 = arith.addf %18, %21 : vector<8x512xf32>
      %c0_14 = arith.constant 0 : index
      %c0_15 = arith.constant 0 : index
      %c0_16 = arith.constant 0 : index
      %23 = vector.load %arg26[%c0_14, %c0_15, %c0_16] : memref<2x8x128xf32, #tpu.memory_space<vmem>>, vector<1x8x128xf32>
      %24 = vector.shape_cast %23 : vector<1x8x128xf32> to vector<8x128xf32>
      %25 = vector.extract_strided_slice %22 {offsets = [0, 0], sizes = [8, 384], strides = [1, 1]} : vector<8x512xf32> to vector<8x384xf32>
      %26 = arith.negf %25 : vector<8x384xf32>
      %27 = math.exp %26 : vector<8x384xf32>
      %cst_17 = arith.constant 1.000000e+00 : f32
      %28 = vector.broadcast %cst_17 : f32 to vector<8x384xf32>
      %29 = arith.addf %28, %27 : vector<8x384xf32>
      %30 = arith.divf %28, %29 : vector<8x384xf32>
      %31 = vector.extract_strided_slice %30 {offsets = [0, 0], sizes = [8, 128], strides = [1, 1]} : vector<8x384xf32> to vector<8x128xf32>
      %32 = vector.extract_strided_slice %30 {offsets = [0, 128], sizes = [8, 128], strides = [1, 1]} : vector<8x384xf32> to vector<8x128xf32>
      %33 = vector.extract_strided_slice %30 {offsets = [0, 256], sizes = [8, 128], strides = [1, 1]} : vector<8x384xf32> to vector<8x128xf32>
      %34 = vector.extract_strided_slice %22 {offsets = [0, 384], sizes = [8, 128], strides = [1, 1]} : vector<8x512xf32> to vector<8x128xf32>
      %35 = math.tanh %34 : vector<8x128xf32>
      %36 = arith.mulf %32, %24 : vector<8x128xf32>
      %37 = arith.mulf %31, %35 : vector<8x128xf32>
      %38 = arith.addf %36, %37 : vector<8x128xf32>
      %39 = math.tanh %38 : vector<8x128xf32>
      %40 = arith.mulf %33, %39 : vector<8x128xf32>
      %c0_18 = arith.constant 0 : index
      %c0_19 = arith.constant 0 : index
      %c0_20 = arith.constant 0 : index
      %41 = vector.load %arg25[%c0_18, %c0_19, %c0_20] : memref<2x8x128xf32, #tpu.memory_space<vmem>>, vector<1x8x128xf32>
      %42 = vector.shape_cast %41 : vector<1x8x128xf32> to vector<8x128xf32>
      %43 = vector.shape_cast %40 : vector<8x128xf32> to vector<1x8x128xf32>
      tpu.vector_store %arg25[%c0_18, %c0_19, %c0_20], %43 {strides = array<i32>} : memref<2x8x128xf32, #tpu.memory_space<vmem>>, vector<1x8x128xf32>,
      %c0_21 = arith.constant 0 : index
      %c0_22 = arith.constant 0 : index
      %c0_23 = arith.constant 0 : index
      %44 = vector.load %arg26[%c0_21, %c0_22, %c0_23] : memref<2x8x128xf32, #tpu.memory_space<vmem>>, vector<1x8x128xf32>
      %45 = vector.shape_cast %44 : vector<1x8x128xf32> to vector<8x128xf32>
      %46 = vector.shape_cast %38 : vector<8x128xf32> to vector<1x8x128xf32>
      tpu.vector_store %arg26[%c0_21, %c0_22, %c0_23], %46 {strides = array<i32>} : memref<2x8x128xf32, #tpu.memory_space<vmem>>, vector<1x8x128xf32>,
      %c1 = arith.constant 1 : index
      %c0_24 = arith.constant 0 : index
      %c0_25 = arith.constant 0 : index
      %47 = vector.load %arg25[%c1, %c0_24, %c0_25] : memref<2x8x128xf32, #tpu.memory_space<vmem>>, vector<1x8x128xf32>
      %48 = vector.shape_cast %47 : vector<1x8x128xf32> to vector<8x128xf32>
      %49 = tpu.concatenate %40, %48 in 1 : vector<8x128xf32>, vector<8x128xf32> -> vector<8x256xf32>
      %c0_26 = arith.constant 0 : index
      %c0_27 = arith.constant 0 : index
      %c0_28 = arith.constant 0 : index
      %50 = vector.load %arg5[%c0_26, %c0_27, %c0_28] : memref<1x256x512xf32, #tpu.memory_space<vmem>>, vector<1x256x512xf32>
      %51 = vector.shape_cast %50 : vector<1x256x512xf32> to vector<256x512xf32>
      %cst_29 = arith.constant dense<0.000000e+00> : vector<8x512xf32>
      %52 = tpu.matmul %49, %51, %cst_29 {dimension_numbers = #tpu.dot_dimension_numbers<[1], [0], [0], [1], [0, 0, 1, 1], [], []>} : vector<8x256xf32>, vector<256x512xf32>, vector<8x512xf32> -> vector<8x512xf32>
      %c1_30 = arith.constant 1 : index
      %c0_31 = arith.constant 0 : index
      %c0_32 = arith.constant 0 : index
      %53 = vector.load %arg6[%c1_30, %c0_31, %c0_32] : memref<2x1x512xf32, #tpu.memory_space<vmem>>, vector<1x1x512xf32>
      %54 = vector.shape_cast %53 : vector<1x1x512xf32> to vector<1x512xf32>
      %55 = vector.broadcast %54 : vector<1x512xf32> to vector<8x512xf32>
      %56 = arith.addf %52, %55 : vector<8x512xf32>
      %c1_33 = arith.constant 1 : index
      %c0_34 = arith.constant 0 : index
      %c0_35 = arith.constant 0 : index
      %57 = vector.load %arg26[%c1_33, %c0_34, %c0_35] : memref<2x8x128xf32, #tpu.memory_space<vmem>>, vector<1x8x128xf32>
      %58 = vector.shape_cast %57 : vector<1x8x128xf32> to vector<8x128xf32>
      %59 = vector.extract_strided_slice %56 {offsets = [0, 0], sizes = [8, 384], strides = [1, 1]} : vector<8x512xf32> to vector<8x384xf32>
      %60 = arith.negf %59 : vector<8x384xf32>
      %61 = math.exp %60 : vector<8x384xf32>
      %cst_36 = arith.constant 1.000000e+00 : f32
      %62 = vector.broadcast %cst_36 : f32 to vector<8x384xf32>
      %63 = arith.addf %62, %61 : vector<8x384xf32>
      %64 = arith.divf %62, %63 : vector<8x384xf32>
      %65 = vector.extract_strided_slice %64 {offsets = [0, 0], sizes = [8, 128], strides = [1, 1]} : vector<8x384xf32> to vector<8x128xf32>
      %66 = vector.extract_strided_slice %64 {offsets = [0, 128], sizes = [8, 128], strides = [1, 1]} : vector<8x384xf32> to vector<8x128xf32>
      %67 = vector.extract_strided_slice %64 {offsets = [0, 256], sizes = [8, 128], strides = [1, 1]} : vector<8x384xf32> to vector<8x128xf32>
      %68 = vector.extract_strided_slice %56 {offsets = [0, 384], sizes = [8, 128], strides = [1, 1]} : vector<8x512xf32> to vector<8x128xf32>
      %69 = math.tanh %68 : vector<8x128xf32>
      %70 = arith.mulf %66, %58 : vector<8x128xf32>
      %71 = arith.mulf %65, %69 : vector<8x128xf32>
      %72 = arith.addf %70, %71 : vector<8x128xf32>
      %73 = math.tanh %72 : vector<8x128xf32>
      %74 = arith.mulf %67, %73 : vector<8x128xf32>
      %c1_37 = arith.constant 1 : index
      %c0_38 = arith.constant 0 : index
      %c0_39 = arith.constant 0 : index
      %75 = vector.load %arg25[%c1_37, %c0_38, %c0_39] : memref<2x8x128xf32, #tpu.memory_space<vmem>>, vector<1x8x128xf32>
      %76 = vector.shape_cast %75 : vector<1x8x128xf32> to vector<8x128xf32>
      %77 = vector.shape_cast %74 : vector<8x128xf32> to vector<1x8x128xf32>
      tpu.vector_store %arg25[%c1_37, %c0_38, %c0_39], %77 {strides = array<i32>} : memref<2x8x128xf32, #tpu.memory_space<vmem>>, vector<1x8x128xf32>,
      %c1_40 = arith.constant 1 : index
      %c0_41 = arith.constant 0 : index
      %c0_42 = arith.constant 0 : index
      %78 = vector.load %arg26[%c1_40, %c0_41, %c0_42] : memref<2x8x128xf32, #tpu.memory_space<vmem>>, vector<1x8x128xf32>
      %79 = vector.shape_cast %78 : vector<1x8x128xf32> to vector<8x128xf32>
      %80 = vector.shape_cast %72 : vector<8x128xf32> to vector<1x8x128xf32>
      tpu.vector_store %arg26[%c1_40, %c0_41, %c0_42], %80 {strides = array<i32>} : memref<2x8x128xf32, #tpu.memory_space<vmem>>, vector<1x8x128xf32>,
    } else {
    }
    %c4_i32 = arith.constant 4 : i32
    %6 = arith.cmpi slt, %arg0, %c4_i32 : i32
    %7 = arith.extui %6 : i1 to i32
    %c0_i32_2 = arith.constant 0 : i32
    %8 = arith.cmpi ne, %7, %c0_i32_2 : i32
    scf.if %8 {
      %c0 = arith.constant 0 : index
      %c0_4 = arith.constant 0 : index
      %c0_5 = arith.constant 0 : index
      %12 = vector.load %arg2[%c0, %c0_4, %c0_5] : memref<1x8x8xf32, #tpu.memory_space<vmem>>, vector<1x8x8xf32>
      %13 = vector.shape_cast %12 : vector<1x8x8xf32> to vector<8x8xf32>
      %c0_6 = arith.constant 0 : index
      %c0_7 = arith.constant 0 : index
      %14 = vector.load %arg3[%c0_6, %c0_7] : memref<8x512xf32, #tpu.memory_space<vmem>>, vector<8x512xf32>
      %cst = arith.constant dense<0.000000e+00> : vector<8x512xf32>
      %15 = tpu.matmul %13, %14, %cst {dimension_numbers = #tpu.dot_dimension_numbers<[1], [0], [0], [1], [0, 0, 1, 1], [], []>} : vector<8x8xf32>, vector<8x512xf32>, vector<8x512xf32> -> vector<8x512xf32>
      %c0_8 = arith.constant 0 : index
      %c0_9 = arith.constant 0 : index
      %c0_10 = arith.constant 0 : index
      %16 = vector.load %arg27[%c0_8, %c0_9, %c0_10] : memref<2x8x128xf32, #tpu.memory_space<vmem>>, vector<1x8x128xf32>
      %17 = vector.shape_cast %16 : vector<1x8x128xf32> to vector<8x128xf32>
      %c0_11 = arith.constant 0 : index
      %c0_12 = arith.constant 0 : index
      %18 = vector.load %arg7[%c0_11, %c0_12] : memref<128x512xf32, #tpu.memory_space<vmem>>, vector<128x512xf32>
      %cst_13 = arith.constant dense<0.000000e+00> : vector<8x512xf32>
      %19 = tpu.matmul %17, %18, %cst_13 {dimension_numbers = #tpu.dot_dimension_numbers<[1], [0], [0], [1], [0, 0, 1, 1], [], []>} : vector<8x128xf32>, vector<128x512xf32>, vector<8x512xf32> -> vector<8x512xf32>
      %20 = arith.addf %15, %19 : vector<8x512xf32>
      %c0_14 = arith.constant 0 : index
      %c0_15 = arith.constant 0 : index
      %c0_16 = arith.constant 0 : index
      %21 = vector.load %arg9[%c0_14, %c0_15, %c0_16] : memref<2x1x512xf32, #tpu.memory_space<vmem>>, vector<1x1x512xf32>
      %22 = vector.shape_cast %21 : vector<1x1x512xf32> to vector<1x512xf32>
      %23 = vector.broadcast %22 : vector<1x512xf32> to vector<8x512xf32>
      %24 = arith.addf %20, %23 : vector<8x512xf32>
      %c0_17 = arith.constant 0 : index
      %c0_18 = arith.constant 0 : index
      %c0_19 = arith.constant 0 : index
      %25 = vector.load %arg28[%c0_17, %c0_18, %c0_19] : memref<2x8x128xf32, #tpu.memory_space<vmem>>, vector<1x8x128xf32>
      %26 = vector.shape_cast %25 : vector<1x8x128xf32> to vector<8x128xf32>
      %27 = vector.extract_strided_slice %24 {offsets = [0, 0], sizes = [8, 384], strides = [1, 1]} : vector<8x512xf32> to vector<8x384xf32>
      %28 = arith.negf %27 : vector<8x384xf32>
      %29 = math.exp %28 : vector<8x384xf32>
      %cst_20 = arith.constant 1.000000e+00 : f32
      %30 = vector.broadcast %cst_20 : f32 to vector<8x384xf32>
      %31 = arith.addf %30, %29 : vector<8x384xf32>
      %32 = arith.divf %30, %31 : vector<8x384xf32>
      %33 = vector.extract_strided_slice %32 {offsets = [0, 0], sizes = [8, 128], strides = [1, 1]} : vector<8x384xf32> to vector<8x128xf32>
      %34 = vector.extract_strided_slice %32 {offsets = [0, 128], sizes = [8, 128], strides = [1, 1]} : vector<8x384xf32> to vector<8x128xf32>
      %35 = vector.extract_strided_slice %32 {offsets = [0, 256], sizes = [8, 128], strides = [1, 1]} : vector<8x384xf32> to vector<8x128xf32>
      %36 = vector.extract_strided_slice %24 {offsets = [0, 384], sizes = [8, 128], strides = [1, 1]} : vector<8x512xf32> to vector<8x128xf32>
      %37 = math.tanh %36 : vector<8x128xf32>
      %38 = arith.mulf %34, %26 : vector<8x128xf32>
      %39 = arith.mulf %33, %37 : vector<8x128xf32>
      %40 = arith.addf %38, %39 : vector<8x128xf32>
      %41 = math.tanh %40 : vector<8x128xf32>
      %42 = arith.mulf %35, %41 : vector<8x128xf32>
      %c0_21 = arith.constant 0 : index
      %c0_22 = arith.constant 0 : index
      %c0_23 = arith.constant 0 : index
      %43 = vector.load %arg27[%c0_21, %c0_22, %c0_23] : memref<2x8x128xf32, #tpu.memory_space<vmem>>, vector<1x8x128xf32>
      %44 = vector.shape_cast %43 : vector<1x8x128xf32> to vector<8x128xf32>
      %45 = vector.shape_cast %42 : vector<8x128xf32> to vector<1x8x128xf32>
      tpu.vector_store %arg27[%c0_21, %c0_22, %c0_23], %45 {strides = array<i32>} : memref<2x8x128xf32, #tpu.memory_space<vmem>>, vector<1x8x128xf32>,
      %c0_24 = arith.constant 0 : index
      %c0_25 = arith.constant 0 : index
      %c0_26 = arith.constant 0 : index
      %46 = vector.load %arg28[%c0_24, %c0_25, %c0_26] : memref<2x8x128xf32, #tpu.memory_space<vmem>>, vector<1x8x128xf32>
      %47 = vector.shape_cast %46 : vector<1x8x128xf32> to vector<8x128xf32>
      %48 = vector.shape_cast %40 : vector<8x128xf32> to vector<1x8x128xf32>
      tpu.vector_store %arg28[%c0_24, %c0_25, %c0_26], %48 {strides = array<i32>} : memref<2x8x128xf32, #tpu.memory_space<vmem>>, vector<1x8x128xf32>,
      %c1 = arith.constant 1 : index
      %c0_27 = arith.constant 0 : index
      %c0_28 = arith.constant 0 : index
      %49 = vector.load %arg27[%c1, %c0_27, %c0_28] : memref<2x8x128xf32, #tpu.memory_space<vmem>>, vector<1x8x128xf32>
      %50 = vector.shape_cast %49 : vector<1x8x128xf32> to vector<8x128xf32>
      %51 = tpu.concatenate %42, %50 in 1 : vector<8x128xf32>, vector<8x128xf32> -> vector<8x256xf32>
      %c0_29 = arith.constant 0 : index
      %c0_30 = arith.constant 0 : index
      %c0_31 = arith.constant 0 : index
      %52 = vector.load %arg8[%c0_29, %c0_30, %c0_31] : memref<1x256x512xf32, #tpu.memory_space<vmem>>, vector<1x256x512xf32>
      %53 = vector.shape_cast %52 : vector<1x256x512xf32> to vector<256x512xf32>
      %cst_32 = arith.constant dense<0.000000e+00> : vector<8x512xf32>
      %54 = tpu.matmul %51, %53, %cst_32 {dimension_numbers = #tpu.dot_dimension_numbers<[1], [0], [0], [1], [0, 0, 1, 1], [], []>} : vector<8x256xf32>, vector<256x512xf32>, vector<8x512xf32> -> vector<8x512xf32>
      %c1_33 = arith.constant 1 : index
      %c0_34 = arith.constant 0 : index
      %c0_35 = arith.constant 0 : index
      %55 = vector.load %arg9[%c1_33, %c0_34, %c0_35] : memref<2x1x512xf32, #tpu.memory_space<vmem>>, vector<1x1x512xf32>
      %56 = vector.shape_cast %55 : vector<1x1x512xf32> to vector<1x512xf32>
      %57 = vector.broadcast %56 : vector<1x512xf32> to vector<8x512xf32>
      %58 = arith.addf %54, %57 : vector<8x512xf32>
      %c1_36 = arith.constant 1 : index
      %c0_37 = arith.constant 0 : index
      %c0_38 = arith.constant 0 : index
      %59 = vector.load %arg28[%c1_36, %c0_37, %c0_38] : memref<2x8x128xf32, #tpu.memory_space<vmem>>, vector<1x8x128xf32>
      %60 = vector.shape_cast %59 : vector<1x8x128xf32> to vector<8x128xf32>
      %61 = vector.extract_strided_slice %58 {offsets = [0, 0], sizes = [8, 384], strides = [1, 1]} : vector<8x512xf32> to vector<8x384xf32>
      %62 = arith.negf %61 : vector<8x384xf32>
      %63 = math.exp %62 : vector<8x384xf32>
      %cst_39 = arith.constant 1.000000e+00 : f32
      %64 = vector.broadcast %cst_39 : f32 to vector<8x384xf32>
      %65 = arith.addf %64, %63 : vector<8x384xf32>
      %66 = arith.divf %64, %65 : vector<8x384xf32>
      %67 = vector.extract_strided_slice %66 {offsets = [0, 0], sizes = [8, 128], strides = [1, 1]} : vector<8x384xf32> to vector<8x128xf32>
      %68 = vector.extract_strided_slice %66 {offsets = [0, 128], sizes = [8, 128], strides = [1, 1]} : vector<8x384xf32> to vector<8x128xf32>
      %69 = vector.extract_strided_slice %66 {offsets = [0, 256], sizes = [8, 128], strides = [1, 1]} : vector<8x384xf32> to vector<8x128xf32>
      %70 = vector.extract_strided_slice %58 {offsets = [0, 384], sizes = [8, 128], strides = [1, 1]} : vector<8x512xf32> to vector<8x128xf32>
      %71 = math.tanh %70 : vector<8x128xf32>
      %72 = arith.mulf %68, %60 : vector<8x128xf32>
      %73 = arith.mulf %67, %71 : vector<8x128xf32>
      %74 = arith.addf %72, %73 : vector<8x128xf32>
      %75 = math.tanh %74 : vector<8x128xf32>
      %76 = arith.mulf %69, %75 : vector<8x128xf32>
      %c1_40 = arith.constant 1 : index
      %c0_41 = arith.constant 0 : index
      %c0_42 = arith.constant 0 : index
      %77 = vector.load %arg27[%c1_40, %c0_41, %c0_42] : memref<2x8x128xf32, #tpu.memory_space<vmem>>, vector<1x8x128xf32>
      %78 = vector.shape_cast %77 : vector<1x8x128xf32> to vector<8x128xf32>
      %79 = vector.shape_cast %76 : vector<8x128xf32> to vector<1x8x128xf32>
      tpu.vector_store %arg27[%c1_40, %c0_41, %c0_42], %79 {strides = array<i32>} : memref<2x8x128xf32, #tpu.memory_space<vmem>>, vector<1x8x128xf32>,
      %c1_43 = arith.constant 1 : index
      %c0_44 = arith.constant 0 : index
      %c0_45 = arith.constant 0 : index
      %80 = vector.load %arg28[%c1_43, %c0_44, %c0_45] : memref<2x8x128xf32, #tpu.memory_space<vmem>>, vector<1x8x128xf32>
      %81 = vector.shape_cast %80 : vector<1x8x128xf32> to vector<8x128xf32>
      %82 = vector.shape_cast %74 : vector<8x128xf32> to vector<1x8x128xf32>
      tpu.vector_store %arg28[%c1_43, %c0_44, %c0_45], %82 {strides = array<i32>} : memref<2x8x128xf32, #tpu.memory_space<vmem>>, vector<1x8x128xf32>,
    } else {
    }
    %c3_i32 = arith.constant 3 : i32
    %9 = arith.cmpi eq, %arg0, %c3_i32 : i32
    %10 = arith.extui %9 : i1 to i32
    %c0_i32_3 = arith.constant 0 : i32
    %11 = arith.cmpi ne, %10, %c0_i32_3 : i32
    scf.if %11 {
      %c1 = arith.constant 1 : index
      %c0 = arith.constant 0 : index
      %c0_4 = arith.constant 0 : index
      %12 = vector.load %arg25[%c1, %c0, %c0_4] : memref<2x8x128xf32, #tpu.memory_space<vmem>>, vector<1x8x128xf32>
      %13 = vector.shape_cast %12 : vector<1x8x128xf32> to vector<8x128xf32>
      %c1_5 = arith.constant 1 : index
      %c0_6 = arith.constant 0 : index
      %c0_7 = arith.constant 0 : index
      %14 = vector.load %arg27[%c1_5, %c0_6, %c0_7] : memref<2x8x128xf32, #tpu.memory_space<vmem>>, vector<1x8x128xf32>
      %15 = vector.shape_cast %14 : vector<1x8x128xf32> to vector<8x128xf32>
      %16 = tpu.concatenate %13, %15 in 1 : vector<8x128xf32>, vector<8x128xf32> -> vector<8x256xf32>
      %c0_8 = arith.constant 0 : index
      %c0_9 = arith.constant 0 : index
      %17 = vector.load %arg10[%c0_8, %c0_9] : memref<256x256xf32, #tpu.memory_space<vmem>>, vector<256x256xf32>
      %cst = arith.constant dense<0.000000e+00> : vector<8x256xf32>
      %18 = tpu.matmul %16, %17, %cst {dimension_numbers = #tpu.dot_dimension_numbers<[1], [0], [0], [1], [0, 0, 1, 1], [], []>} : vector<8x256xf32>, vector<256x256xf32>, vector<8x256xf32> -> vector<8x256xf32>
      %c0_10 = arith.constant 0 : index
      %c0_11 = arith.constant 0 : index
      %19 = vector.load %arg11[%c0_10, %c0_11] : memref<1x256xf32, #tpu.memory_space<vmem>>, vector<1x256xf32>
      %20 = vector.broadcast %19 : vector<1x256xf32> to vector<8x256xf32>
      %21 = arith.addf %18, %20 : vector<8x256xf32>
      %cst_12 = arith.constant 0.000000e+00 : f32
      %22 = vector.broadcast %cst_12 : f32 to vector<8x256xf32>
      %23 = arith.maximumf %21, %22 : vector<8x256xf32>
      %c0_13 = arith.constant 0 : index
      %c0_14 = arith.constant 0 : index
      %24 = vector.load %arg12[%c0_13, %c0_14] : memref<256x128xf32, #tpu.memory_space<vmem>>, vector<256x128xf32>
      %cst_15 = arith.constant dense<0.000000e+00> : vector<8x128xf32>
      %25 = tpu.matmul %23, %24, %cst_15 {dimension_numbers = #tpu.dot_dimension_numbers<[1], [0], [0], [1], [0, 0, 1, 1], [], []>} : vector<8x256xf32>, vector<256x128xf32>, vector<8x128xf32> -> vector<8x128xf32>
      %c0_16 = arith.constant 0 : index
      %c0_17 = arith.constant 0 : index
      %26 = vector.load %arg13[%c0_16, %c0_17] : memref<1x128xf32, #tpu.memory_space<vmem>>, vector<1x128xf32>
      %27 = vector.broadcast %26 : vector<1x128xf32> to vector<8x128xf32>
      %28 = arith.addf %25, %27 : vector<8x128xf32>
      %cst_18 = arith.constant 0.000000e+00 : f32
      %29 = vector.broadcast %cst_18 : f32 to vector<8x128xf32>
      %30 = arith.maximumf %28, %29 : vector<8x128xf32>
      %c0_19 = arith.constant 0 : index
      %c0_20 = arith.constant 0 : index
      %31 = vector.load %arg14[%c0_19, %c0_20] : memref<128x128xf32, #tpu.memory_space<vmem>>, vector<128x128xf32>
      %cst_21 = arith.constant dense<0.000000e+00> : vector<8x128xf32>
      %32 = tpu.matmul %30, %31, %cst_21 {dimension_numbers = #tpu.dot_dimension_numbers<[1], [0], [0], [1], [0, 0, 1, 1], [], []>} : vector<8x128xf32>, vector<128x128xf32>, vector<8x128xf32> -> vector<8x128xf32>
      %c0_22 = arith.constant 0 : index
      %c0_23 = arith.constant 0 : index
      %33 = vector.load %arg15[%c0_22, %c0_23] : memref<1x128xf32, #tpu.memory_space<vmem>>, vector<1x128xf32>
      %34 = vector.broadcast %33 : vector<1x128xf32> to vector<8x128xf32>
      %35 = arith.addf %32, %34 : vector<8x128xf32>
      %c0_24 = arith.constant 0 : index
      %c0_25 = arith.constant 0 : index
      %36 = vector.load %arg20[%c0_24, %c0_25] : memref<8x128xf32, #tpu.memory_space<vmem>>, vector<8x128xf32>
      tpu.vector_store %arg20[%c0_24, %c0_25], %35 {strides = array<i32>} : memref<8x128xf32, #tpu.memory_space<vmem>>, vector<8x128xf32>,
      %c0_26 = arith.constant 0 : index
      %c0_27 = arith.constant 0 : index
      %c0_28 = arith.constant 0 : index
      %37 = vector.load %arg25[%c0_26, %c0_27, %c0_28] : memref<2x8x128xf32, #tpu.memory_space<vmem>>, vector<2x8x128xf32>
      %c0_29 = arith.constant 0 : index
      %c0_30 = arith.constant 0 : index
      %c0_31 = arith.constant 0 : index
      %38 = vector.load %arg21[%c0_29, %c0_30, %c0_31] : memref<2x8x128xf32, #tpu.memory_space<vmem>>, vector<2x8x128xf32>
      tpu.vector_store %arg21[%c0_29, %c0_30, %c0_31], %37 {strides = array<i32>} : memref<2x8x128xf32, #tpu.memory_space<vmem>>, vector<2x8x128xf32>,
      %c0_32 = arith.constant 0 : index
      %c0_33 = arith.constant 0 : index
      %c0_34 = arith.constant 0 : index
      %39 = vector.load %arg26[%c0_32, %c0_33, %c0_34] : memref<2x8x128xf32, #tpu.memory_space<vmem>>, vector<2x8x128xf32>
      %c0_35 = arith.constant 0 : index
      %c0_36 = arith.constant 0 : index
      %c0_37 = arith.constant 0 : index
      %40 = vector.load %arg22[%c0_35, %c0_36, %c0_37] : memref<2x8x128xf32, #tpu.memory_space<vmem>>, vector<2x8x128xf32>
      tpu.vector_store %arg22[%c0_35, %c0_36, %c0_37], %39 {strides = array<i32>} : memref<2x8x128xf32, #tpu.memory_space<vmem>>, vector<2x8x128xf32>,
      %c0_38 = arith.constant 0 : index
      %c0_39 = arith.constant 0 : index
      %c0_40 = arith.constant 0 : index
      %41 = vector.load %arg27[%c0_38, %c0_39, %c0_40] : memref<2x8x128xf32, #tpu.memory_space<vmem>>, vector<2x8x128xf32>
      %c0_41 = arith.constant 0 : index
      %c0_42 = arith.constant 0 : index
      %c0_43 = arith.constant 0 : index
      %42 = vector.load %arg23[%c0_41, %c0_42, %c0_43] : memref<2x8x128xf32, #tpu.memory_space<vmem>>, vector<2x8x128xf32>
      tpu.vector_store %arg23[%c0_41, %c0_42, %c0_43], %41 {strides = array<i32>} : memref<2x8x128xf32, #tpu.memory_space<vmem>>, vector<2x8x128xf32>,
      %c0_44 = arith.constant 0 : index
      %c0_45 = arith.constant 0 : index
      %c0_46 = arith.constant 0 : index
      %43 = vector.load %arg28[%c0_44, %c0_45, %c0_46] : memref<2x8x128xf32, #tpu.memory_space<vmem>>, vector<2x8x128xf32>
      %c0_47 = arith.constant 0 : index
      %c0_48 = arith.constant 0 : index
      %c0_49 = arith.constant 0 : index
      %44 = vector.load %arg24[%c0_47, %c0_48, %c0_49] : memref<2x8x128xf32, #tpu.memory_space<vmem>>, vector<2x8x128xf32>
      tpu.vector_store %arg24[%c0_47, %c0_48, %c0_49], %43 {strides = array<i32>} : memref<2x8x128xf32, #tpu.memory_space<vmem>>, vector<2x8x128xf32>,
    } else {
    }
    return
  }
  func.func @transform_0(%arg0: i32) -> (i32, i32, i32) {
    %c1_i32 = arith.constant 1 : i32
    %0 = arith.minsi %arg0, %c1_i32 : i32
    %c0_i32 = arith.constant 0 : i32
    %c0_i32_0 = arith.constant 0 : i32
    %c0_i32_1 = arith.constant 0 : i32
    return %0, %c0_i32, %c0_i32_0 : i32, i32, i32
  }
  func.func @transform_1(%arg0: i32) -> (i32, i32, i32) {
    %c0_i32 = arith.constant 0 : i32
    %c0_i32_0 = arith.constant 0 : i32
    %c0_i32_1 = arith.constant 0 : i32
    return %arg0, %c0_i32, %c0_i32_0 : i32, i32, i32
  }
  func.func @transform_2(%arg0: i32) -> (i32, i32) {
    %c0_i32 = arith.constant 0 : i32
    %c0_i32_0 = arith.constant 0 : i32
    %c0_i32_1 = arith.constant 0 : i32
    return %c0_i32, %c0_i32_0 : i32, i32
  }
  func.func @transform_3(%arg0: i32) -> (i32, i32) {
    %c0_i32 = arith.constant 0 : i32
    %c0_i32_0 = arith.constant 0 : i32
    %c0_i32_1 = arith.constant 0 : i32
    return %c0_i32, %c0_i32_0 : i32, i32
  }
  func.func @transform_4(%arg0: i32) -> (i32, i32, i32) {
    %c0_i32 = arith.constant 0 : i32
    %c0_i32_0 = arith.constant 0 : i32
    %c0_i32_1 = arith.constant 0 : i32
    %c0_i32_2 = arith.constant 0 : i32
    return %c0_i32, %c0_i32_0, %c0_i32_1 : i32, i32, i32
  }
  func.func @transform_5(%arg0: i32) -> (i32, i32, i32) {
    %c0_i32 = arith.constant 0 : i32
    %c0_i32_0 = arith.constant 0 : i32
    %c0_i32_1 = arith.constant 0 : i32
    %c0_i32_2 = arith.constant 0 : i32
    return %c0_i32, %c0_i32_0, %c0_i32_1 : i32, i32, i32
  }
  func.func @transform_6(%arg0: i32) -> (i32, i32) {
    %c0_i32 = arith.constant 0 : i32
    %c0_i32_0 = arith.constant 0 : i32
    %c0_i32_1 = arith.constant 0 : i32
    return %c0_i32, %c0_i32_0 : i32, i32
  }
  func.func @transform_7(%arg0: i32) -> (i32, i32, i32) {
    %c0_i32 = arith.constant 0 : i32
    %c0_i32_0 = arith.constant 0 : i32
    %c0_i32_1 = arith.constant 0 : i32
    %c0_i32_2 = arith.constant 0 : i32
    return %c0_i32, %c0_i32_0, %c0_i32_1 : i32, i32, i32
  }
  func.func @transform_8(%arg0: i32) -> (i32, i32, i32) {
    %c0_i32 = arith.constant 0 : i32
    %c0_i32_0 = arith.constant 0 : i32
    %c0_i32_1 = arith.constant 0 : i32
    %c0_i32_2 = arith.constant 0 : i32
    return %c0_i32, %c0_i32_0, %c0_i32_1 : i32, i32, i32
  }
  func.func @transform_9(%arg0: i32) -> (i32, i32) {
    %c0_i32 = arith.constant 0 : i32
    %c0_i32_0 = arith.constant 0 : i32
    %c0_i32_1 = arith.constant 0 : i32
    return %c0_i32, %c0_i32_0 : i32, i32
  }
  func.func @transform_10(%arg0: i32) -> (i32, i32) {
    %c0_i32 = arith.constant 0 : i32
    %c0_i32_0 = arith.constant 0 : i32
    %c0_i32_1 = arith.constant 0 : i32
    return %c0_i32, %c0_i32_0 : i32, i32
  }
  func.func @transform_11(%arg0: i32) -> (i32, i32) {
    %c0_i32 = arith.constant 0 : i32
    %c0_i32_0 = arith.constant 0 : i32
    %c0_i32_1 = arith.constant 0 : i32
    return %c0_i32, %c0_i32_0 : i32, i32
  }
  func.func @transform_12(%arg0: i32) -> (i32, i32) {
    %c0_i32 = arith.constant 0 : i32
    %c0_i32_0 = arith.constant 0 : i32
    %c0_i32_1 = arith.constant 0 : i32
    return %c0_i32, %c0_i32_0 : i32, i32
  }
  func.func @transform_13(%arg0: i32) -> (i32, i32) {
    %c0_i32 = arith.constant 0 : i32
    %c0_i32_0 = arith.constant 0 : i32
    %c0_i32_1 = arith.constant 0 : i32
    return %c0_i32, %c0_i32_0 : i32, i32
  }
  func.func @transform_14(%arg0: i32) -> (i32, i32) {
    %c0_i32 = arith.constant 0 : i32
    %c0_i32_0 = arith.constant 0 : i32
    %c0_i32_1 = arith.constant 0 : i32
    return %c0_i32, %c0_i32_0 : i32, i32
  }
  func.func @transform_15(%arg0: i32) -> (i32, i32, i32) {
    %c0_i32 = arith.constant 0 : i32
    %c0_i32_0 = arith.constant 0 : i32
    %c0_i32_1 = arith.constant 0 : i32
    %c0_i32_2 = arith.constant 0 : i32
    return %c0_i32, %c0_i32_0, %c0_i32_1 : i32, i32, i32
  }
  func.func @transform_16(%arg0: i32) -> (i32, i32, i32) {
    %c0_i32 = arith.constant 0 : i32
    %c0_i32_0 = arith.constant 0 : i32
    %c0_i32_1 = arith.constant 0 : i32
    %c0_i32_2 = arith.constant 0 : i32
    return %c0_i32, %c0_i32_0, %c0_i32_1 : i32, i32, i32
  }
  func.func @transform_17(%arg0: i32) -> (i32, i32, i32) {
    %c0_i32 = arith.constant 0 : i32
    %c0_i32_0 = arith.constant 0 : i32
    %c0_i32_1 = arith.constant 0 : i32
    %c0_i32_2 = arith.constant 0 : i32
    return %c0_i32, %c0_i32_0, %c0_i32_1 : i32, i32, i32
  }
  func.func @transform_18(%arg0: i32) -> (i32, i32, i32) {
    %c0_i32 = arith.constant 0 : i32
    %c0_i32_0 = arith.constant 0 : i32
    %c0_i32_1 = arith.constant 0 : i32
    %c0_i32_2 = arith.constant 0 : i32
    return %c0_i32, %c0_i32_0, %c0_i32_1 : i32, i32, i32
  }
  func.func @transform_19(%arg0: i32) -> (i32, i32) {
    %c0_i32 = arith.constant 0 : i32
    %c0_i32_0 = arith.constant 0 : i32
    %c0_i32_1 = arith.constant 0 : i32
    return %c0_i32, %c0_i32_0 : i32, i32
  }
  func.func @transform_20(%arg0: i32) -> (i32, i32, i32) {
    %c0_i32 = arith.constant 0 : i32
    %c0_i32_0 = arith.constant 0 : i32
    %c0_i32_1 = arith.constant 0 : i32
    %c0_i32_2 = arith.constant 0 : i32
    return %c0_i32, %c0_i32_0, %c0_i32_1 : i32, i32, i32
  }
  func.func @transform_21(%arg0: i32) -> (i32, i32, i32) {
    %c0_i32 = arith.constant 0 : i32
    %c0_i32_0 = arith.constant 0 : i32
    %c0_i32_1 = arith.constant 0 : i32
    %c0_i32_2 = arith.constant 0 : i32
    return %c0_i32, %c0_i32_0, %c0_i32_1 : i32, i32, i32
  }
  func.func @transform_22(%arg0: i32) -> (i32, i32, i32) {
    %c0_i32 = arith.constant 0 : i32
    %c0_i32_0 = arith.constant 0 : i32
    %c0_i32_1 = arith.constant 0 : i32
    %c0_i32_2 = arith.constant 0 : i32
    return %c0_i32, %c0_i32_0, %c0_i32_1 : i32, i32, i32
  }
  func.func @transform_23(%arg0: i32) -> (i32, i32, i32) {
    %c0_i32 = arith.constant 0 : i32
    %c0_i32_0 = arith.constant 0 : i32
    %c0_i32_1 = arith.constant 0 : i32
    %c0_i32_2 = arith.constant 0 : i32
    return %c0_i32, %c0_i32_0, %c0_i32_1 : i32, i32, i32
  }
}

</mosaic_0001>

<llo_original>
// kernel: kart_model8_forward.3
$region0: #{kart_model8_forward.3}
  #allocation0 [shape = 'u32[]', space=smem, size = 0x4, offset = 0x4, fixed_abs, tag = 'smem constant byte address 0x4 - core index']
  #allocation1 [shape = 'u32[144,128]{1,0:T(1,128)}', space=vmem, size = 0x12000, scoped, tag = 'internal scratch']
  #allocation2 [shape = 'f32[2,8,128]{2,1,0:T(8,128)}', space=vmem, size = 0x2000, scoped, tag = 'scratch operand']
  #allocation3 [shape = 'f32[2,8,128]{2,1,0:T(8,128)}', space=vmem, size = 0x2000, scoped, tag = 'scratch operand']
  #allocation4 [shape = 'f32[2,8,128]{2,1,0:T(8,128)}', space=vmem, size = 0x2000, scoped, tag = 'scratch operand']
  #allocation5 [shape = 'f32[2,8,128]{2,1,0:T(8,128)}', space=vmem, size = 0x2000, scoped, tag = 'scratch operand']
  %s0 = inlined_call_operand.vmem [shape: f32[2,8,512], index: 0, kind: input, shape index: {}]
  %s1 = inlined_call_operand.vmem [shape: f32[4,8,8], index: 1, kind: input, shape index: {}]
  %s2 = inlined_call_operand.vmem [shape: f32[8,512], index: 2, kind: input, shape index: {}]
  %s3 = inlined_call_operand.vmem [shape: f32[128,512], index: 3, kind: input, shape index: {}]
  %s4 = inlined_call_operand.vmem [shape: f32[1,256,512], index: 4, kind: input, shape index: {}]
  %s5 = inlined_call_operand.vmem [shape: f32[2,1,512], index: 5, kind: input, shape index: {}]
  %s6 = inlined_call_operand.vmem [shape: f32[128,512], index: 6, kind: input, shape index: {}]
  %s7 = inlined_call_operand.vmem [shape: f32[1,256,512], index: 7, kind: input, shape index: {}]
  %s8 = inlined_call_operand.vmem [shape: f32[2,1,512], index: 8, kind: input, shape index: {}]
  %s9 = inlined_call_operand.vmem [shape: f32[256,256], index: 9, kind: input, shape index: {}]
  %s10 = inlined_call_operand.vmem [shape: f32[1,256], index: 10, kind: input, shape index: {}]
  %s11 = inlined_call_operand.vmem [shape: f32[256,128], index: 11, kind: input, shape index: {}]
  %s12 = inlined_call_operand.vmem [shape: f32[1,128], index: 12, kind: input, shape index: {}]
  %s13 = inlined_call_operand.vmem [shape: f32[128,128], index: 13, kind: input, shape index: {}]
  %s14 = inlined_call_operand.vmem [shape: f32[1,128], index: 14, kind: input, shape index: {}]
  %s15 = inlined_call_operand.vmem [shape: f32[2,8,128], index: 15, kind: input, shape index: {}, may-alias: {15,16,17,18}]
  %s16 = inlined_call_operand.vmem [shape: f32[2,8,128], index: 16, kind: input, shape index: {}, may-alias: {15,16,17,18}]
  %s17 = inlined_call_operand.vmem [shape: f32[2,8,128], index: 17, kind: input, shape index: {}, may-alias: {15,16,17,18}]
  %s18 = inlined_call_operand.vmem [shape: f32[2,8,128], index: 18, kind: input, shape index: {}, may-alias: {15,16,17,18}]
  %s19 = inlined_call_operand.vmem [shape: f32[8,128], index: 19, kind: output, shape index: {0}]
  %s20 = inlined_call_operand.vmem [shape: f32[2,8,128], index: 20, kind: output, shape index: {1}]
  %s21 = inlined_call_operand.vmem [shape: f32[2,8,128], index: 21, kind: output, shape index: {2}]
  %s22 = inlined_call_operand.vmem [shape: f32[2,8,128], index: 22, kind: output, shape index: {3}]
  %s23 = inlined_call_operand.vmem [shape: f32[2,8,128], index: 23, kind: output, shape index: {4}]
  %24 = xla_tuple %s19, %s20, %s21, %s22, %s23
  %s25 = sld [smem:[#allocation0]]
  $region157: #{kart_model8_forward.3} parent=0
    _
  %s27 = ssub.s32 1, %s25
  %s28 = scalar_select 0, %s27, %s25
  loop: start=0, step=1, limit=6
  $region2: #{kart_model8_forward.3} parent=0 // loop_pre_header
    _
  $region3: #{kart_model8_forward.3} parent=0 // loop_header
    %s30 = sphi 0, %s34
    %p31 = scmp.ge.s32.totalorder %s30, 6
    %s44 = sphi 0, %s46
    %s47 = sphi 0, %s44
    %s48 = sphi 0, %s47
    %s64 = sphi 0, %s48
    %s70 = sphi 0, %s72
    %s73 = sphi 0, %s70
    %s74 = sphi 0, %s73
    %s90 = sphi 0, %s74
    %s94 = sphi 0, %s94
    %s96 = sphi 0, %s94
    %s97 = sphi 0, %s96
    %s111 = sphi 0, %s97
    %s115 = sphi 0, %s115
    %s117 = sphi 0, %s115
    %s118 = sphi 0, %s117
    %s132 = sphi 0, %s118
    %s136 = sphi 0, %s136
    %s138 = sphi 0, %s136
    %s139 = sphi 0, %s138
    %s153 = sphi 0, %s139
    %s157 = sphi 0, %s157
    %s159 = sphi 0, %s157
    %s160 = sphi 0, %s159
    %s174 = sphi 0, %s160
    %s178 = sphi 0, %s178
    %s180 = sphi 0, %s178
    %s181 = sphi 0, %s180
    %s195 = sphi 0, %s181
    %s199 = sphi 0, %s199
    %s201 = sphi 0, %s199
    %s202 = sphi 0, %s201
    %s216 = sphi 0, %s202
    %s220 = sphi 0, %s220
    %s222 = sphi 0, %s220
    %s223 = sphi 0, %s222
    %s237 = sphi 0, %s223
    %s241 = sphi 0, %s241
    %s243 = sphi 0, %s241
    %s244 = sphi 0, %s243
    %s258 = sphi 0, %s244
    %s262 = sphi 0, %s262
    %s264 = sphi 0, %s262
    %s265 = sphi 0, %s264
    %s279 = sphi 0, %s265
    %s283 = sphi 0, %s283
    %s285 = sphi 0, %s283
    %s286 = sphi 0, %s285
    %s300 = sphi 0, %s286
    %s304 = sphi 0, %s304
    %s306 = sphi 0, %s304
    %s307 = sphi 0, %s306
    %s321 = sphi 0, %s307
    %s325 = sphi 0, %s325
    %s327 = sphi 0, %s325
    %s328 = sphi 0, %s327
    %s342 = sphi 0, %s328
    %s346 = sphi 0, %s346
    %s348 = sphi 0, %s346
    %s349 = sphi 0, %s348
    %s363 = sphi 0, %s349
    %s367 = sphi 0, %s367
    %s369 = sphi 0, %s367
    %s370 = sphi 0, %s369
    %s384 = sphi 0, %s370
    %s388 = sphi 0, %s388
    %s390 = sphi 0, %s388
    %s391 = sphi 0, %s390
    %s405 = sphi 0, %s391
    %s409 = sphi 0, %s409
    %s411 = sphi 0, %s409
    %s412 = sphi 0, %s411
    %s426 = sphi 0, %s412
    %s430 = sphi 0, %s430
    %s432 = sphi 0, %s430
    %s433 = sphi 0, %s432
    %s447 = sphi 0, %s433
    %s451 = sphi 0, %s451
    %s453 = sphi 0, %s451
    %s454 = sphi 0, %s453
    %s468 = sphi 0, %s454
    %s472 = sphi 0, %s472
    %s474 = sphi 0, %s472
    %s475 = sphi 0, %s474
    %s489 = sphi 0, %s475
    %s493 = sphi 0, %s493
    %s495 = sphi 0, %s493
    %s496 = sphi 0, %s495
    %s510 = sphi 0, %s496
    %s514 = sphi 0, %s514
    %s516 = sphi 0, %s514
    %s517 = sphi 0, %s516
    %s531 = sphi 0, %s517
    %s535 = sphi 0, %s535
    %s537 = sphi 0, %s535
    %s538 = sphi 0, %s537
    %s552 = sphi 0, %s538
  $region4: #{kart_model8_forward.3} parent=0 // loop_header_branch
    %33 = sbr.rel (%p31) target = $region8
  $region5: #{kart_model8_forward.3} parent=0 // loop_body
    %s35 = ssub.s32 %s30, 1
    %s36 = ssub.s32 %s30, 2
    %s37 = sadd.s32 %s30, 1
    %p38 = scmp.lt.s32.totalorder %s30, 1
    %s39 = scalar_select %p38, %s30, 1
    %p40 = scmp.lt.s32.totalorder %s37, 1
    %s41 = scalar_select %p40, %s37, 1
    %s42 = ssub.s32 %s39, %s41
    %p43 = scmp.eq.s32.totalorder %s42, 0
    %s45 = sadd.s32 %s44, 1
    %s46 = scalar_select %p43, %s44, %s45
    %p49 = pneg %p43
    %p50 = scmp.eq.s32.totalorder %s30, 3
    %p51 = por %p49, %p50
    %p52 = scmp.ne.s32.totalorder %s44, %s47
    %p53 = scmp.eq.s32.totalorder %s30, 0
    %p54 = por %p52, %p53
    %p55 = scmp.ne.s32.totalorder %s44, %s47
    %p56 = scmp.eq.s32.totalorder %s35, 3
    %p57 = por %p55, %p56
    %p58 = scmp.ne.s32.totalorder %s47, %s48
    %p59 = scmp.eq.s32.totalorder %s35, 0
    %p60 = por %p58, %p59
    %p61 = scmp.ne.s32.totalorder %s47, %s48
    %p62 = scmp.eq.s32.totalorder %s36, 3
    %p63 = por %p61, %p62
    %p65 = scmp.ne.s32.totalorder %s48, %s64
    %p66 = scmp.eq.s32.totalorder %s36, 0
    %p67 = por %p65, %p66
    %s68 = ssub.s32 %s30, %s37
    %p69 = scmp.eq.s32.totalorder %s68, 0
    %s71 = sadd.s32 %s70, 1
    %s72 = scalar_select %p69, %s70, %s71
    %p75 = pneg %p69
    %p76 = scmp.eq.s32.totalorder %s30, 3
    %p77 = por %p75, %p76
    %p78 = scmp.ne.s32.totalorder %s70, %s73
    %p79 = scmp.eq.s32.totalorder %s30, 0
    %p80 = por %p78, %p79
    %p81 = scmp.ne.s32.totalorder %s70, %s73
    %p82 = scmp.eq.s32.totalorder %s35, 3
    %p83 = por %p81, %p82
    %p84 = scmp.ne.s32.totalorder %s73, %s74
    %p85 = scmp.eq.s32.totalorder %s35, 0
    %p86 = por %p84, %p85
    %p87 = scmp.ne.s32.totalorder %s73, %s74
    %p88 = scmp.eq.s32.totalorder %s36, 3
    %p89 = por %p87, %p88
    %p91 = scmp.ne.s32.totalorder %s74, %s90
    %p92 = scmp.eq.s32.totalorder %s36, 0
    %p93 = por %p91, %p92
    %s95 = sadd.s32 %s94, 1
    %p98 = scmp.eq.s32.totalorder %s30, 3
    %p99 = scmp.ne.s32.totalorder %s94, %s96
    %p100 = scmp.eq.s32.totalorder %s30, 0
    %p101 = por %p99, %p100
    %p102 = scmp.ne.s32.totalorder %s94, %s96
    %p103 = scmp.eq.s32.totalorder %s35, 3
    %p104 = por %p102, %p103
    %p105 = scmp.ne.s32.totalorder %s96, %s97
    %p106 = scmp.eq.s32.totalorder %s35, 0
    %p107 = por %p105, %p106
    %p108 = scmp.ne.s32.totalorder %s96, %s97
    %p109 = scmp.eq.s32.totalorder %s36, 3
    %p110 = por %p108, %p109
    %p112 = scmp.ne.s32.totalorder %s97, %s111
    %p113 = scmp.eq.s32.totalorder %s36, 0
    %p114 = por %p112, %p113
    %s116 = sadd.s32 %s115, 1
    %p119 = scmp.eq.s32.totalorder %s30, 3
    %p120 = scmp.ne.s32.totalorder %s115, %s117
    %p121 = scmp.eq.s32.totalorder %s30, 0
    %p122 = por %p120, %p121
    %p123 = scmp.ne.s32.totalorder %s115, %s117
    %p124 = scmp.eq.s32.totalorder %s35, 3
    %p125 = por %p123, %p124
    %p126 = scmp.ne.s32.totalorder %s117, %s118
    %p127 = scmp.eq.s32.totalorder %s35, 0
    %p128 = por %p126, %p127
    %p129 = scmp.ne.s32.totalorder %s117, %s118
    %p130 = scmp.eq.s32.totalorder %s36, 3
    %p131 = por %p129, %p130
    %p133 = scmp.ne.s32.totalorder %s118, %s132
    %p134 = scmp.eq.s32.totalorder %s36, 0
    %p135 = por %p133, %p134
    %s137 = sadd.s32 %s136, 1
    %p140 = scmp.eq.s32.totalorder %s30, 3
    %p141 = scmp.ne.s32.totalorder %s136, %s138
    %p142 = scmp.eq.s32.totalorder %s30, 0
    %p143 = por %p141, %p142
    %p144 = scmp.ne.s32.totalorder %s136, %s138
    %p145 = scmp.eq.s32.totalorder %s35, 3
    %p146 = por %p144, %p145
    %p147 = scmp.ne.s32.totalorder %s138, %s139
    %p148 = scmp.eq.s32.totalorder %s35, 0
    %p149 = por %p147, %p148
    %p150 = scmp.ne.s32.totalorder %s138, %s139
    %p151 = scmp.eq.s32.totalorder %s36, 3
    %p152 = por %p150, %p151
    %p154 = scmp.ne.s32.totalorder %s139, %s153
    %p155 = scmp.eq.s32.totalorder %s36, 0
    %p156 = por %p154, %p155
    %s158 = sadd.s32 %s157, 1
    %p161 = scmp.eq.s32.totalorder %s30, 3
    %p162 = scmp.ne.s32.totalorder %s157, %s159
    %p163 = scmp.eq.s32.totalorder %s30, 0
    %p164 = por %p162, %p163
    %p165 = scmp.ne.s32.totalorder %s157, %s159
    %p166 = scmp.eq.s32.totalorder %s35, 3
    %p167 = por %p165, %p166
    %p168 = scmp.ne.s32.totalorder %s159, %s160
    %p169 = scmp.eq.s32.totalorder %s35, 0
    %p170 = por %p168, %p169
    %p171 = scmp.ne.s32.totalorder %s159, %s160
    %p172 = scmp.eq.s32.totalorder %s36, 3
    %p173 = por %p171, %p172
    %p175 = scmp.ne.s32.totalorder %s160, %s174
    %p176 = scmp.eq.s32.totalorder %s36, 0
    %p177 = por %p175, %p176
    %s179 = sadd.s32 %s178, 1
    %p182 = scmp.eq.s32.totalorder %s30, 3
    %p183 = scmp.ne.s32.totalorder %s178, %s180
    %p184 = scmp.eq.s32.totalorder %s30, 0
    %p185 = por %p183, %p184
    %p186 = scmp.ne.s32.totalorder %s178, %s180
    %p187 = scmp.eq.s32.totalorder %s35, 3
    %p188 = por %p186, %p187
    %p189 = scmp.ne.s32.totalorder %s180, %s181
    %p190 = scmp.eq.s32.totalorder %s35, 0
    %p191 = por %p189, %p190
    %p192 = scmp.ne.s32.totalorder %s180, %s181
    %p193 = scmp.eq.s32.totalorder %s36, 3
    %p194 = por %p192, %p193
    %p196 = scmp.ne.s32.totalorder %s181, %s195
    %p197 = scmp.eq.s32.totalorder %s36, 0
    %p198 = por %p196, %p197
    %s200 = sadd.s32 %s199, 1
    %p203 = scmp.eq.s32.totalorder %s30, 3
    %p204 = scmp.ne.s32.totalorder %s199, %s201
    %p205 = scmp.eq.s32.totalorder %s30, 0
    %p206 = por %p204, %p205
    %p207 = scmp.ne.s32.totalorder %s199, %s201
    %p208 = scmp.eq.s32.totalorder %s35, 3
    %p209 = por %p207, %p208
    %p210 = scmp.ne.s32.totalorder %s201, %s202
    %p211 = scmp.eq.s32.totalorder %s35, 0
    %p212 = por %p210, %p211
    %p213 = scmp.ne.s32.totalorder %s201, %s202
    %p214 = scmp.eq.s32.totalorder %s36, 3
    %p215 = por %p213, %p214
    %p217 = scmp.ne.s32.totalorder %s202, %s216
    %p218 = scmp.eq.s32.totalorder %s36, 0
    %p219 = por %p217, %p218
    %s221 = sadd.s32 %s220, 1
    %p224 = scmp.eq.s32.totalorder %s30, 3
    %p225 = scmp.ne.s32.totalorder %s220, %s222
    %p226 = scmp.eq.s32.totalorder %s30, 0
    %p227 = por %p225, %p226
    %p228 = scmp.ne.s32.totalorder %s220, %s222
    %p229 = scmp.eq.s32.totalorder %s35, 3
    %p230 = por %p228, %p229
    %p231 = scmp.ne.s32.totalorder %s222, %s223
    %p232 = scmp.eq.s32.totalorder %s35, 0
    %p233 = por %p231, %p232
    %p234 = scmp.ne.s32.totalorder %s222, %s223
    %p235 = scmp.eq.s32.totalorder %s36, 3
    %p236 = por %p234, %p235
    %p238 = scmp.ne.s32.totalorder %s223, %s237
    %p239 = scmp.eq.s32.totalorder %s36, 0
    %p240 = por %p238, %p239
    %s242 = sadd.s32 %s241, 1
    %p245 = scmp.eq.s32.totalorder %s30, 3
    %p246 = scmp.ne.s32.totalorder %s241, %s243
    %p247 = scmp.eq.s32.totalorder %s30, 0
    %p248 = por %p246, %p247
    %p249 = scmp.ne.s32.totalorder %s241, %s243
    %p250 = scmp.eq.s32.totalorder %s35, 3
    %p251 = por %p249, %p250
    %p252 = scmp.ne.s32.totalorder %s243, %s244
    %p253 = scmp.eq.s32.totalorder %s35, 0
    %p254 = por %p252, %p253
    %p255 = scmp.ne.s32.totalorder %s243, %s244
    %p256 = scmp.eq.s32.totalorder %s36, 3
    %p257 = por %p255, %p256
    %p259 = scmp.ne.s32.totalorder %s244, %s258
    %p260 = scmp.eq.s32.totalorder %s36, 0
    %p261 = por %p259, %p260
    %s263 = sadd.s32 %s262, 1
    %p266 = scmp.eq.s32.totalorder %s30, 3
    %p267 = scmp.ne.s32.totalorder %s262, %s264
    %p268 = scmp.eq.s32.totalorder %s30, 0
    %p269 = por %p267, %p268
    %p270 = scmp.ne.s32.totalorder %s262, %s264
    %p271 = scmp.eq.s32.totalorder %s35, 3
    %p272 = por %p270, %p271
    %p273 = scmp.ne.s32.totalorder %s264, %s265
    %p274 = scmp.eq.s32.totalorder %s35, 0
    %p275 = por %p273, %p274
    %p276 = scmp.ne.s32.totalorder %s264, %s265
    %p277 = scmp.eq.s32.totalorder %s36, 3
    %p278 = por %p276, %p277
    %p280 = scmp.ne.s32.totalorder %s265, %s279
    %p281 = scmp.eq.s32.totalorder %s36, 0
    %p282 = por %p280, %p281
    %s284 = sadd.s32 %s283, 1
    %p287 = scmp.eq.s32.totalorder %s30, 3
    %p288 = scmp.ne.s32.totalorder %s283, %s285
    %p289 = scmp.eq.s32.totalorder %s30, 0
    %p290 = por %p288, %p289
    %p291 = scmp.ne.s32.totalorder %s283, %s285
    %p292 = scmp.eq.s32.totalorder %s35, 3
    %p293 = por %p291, %p292
    %p294 = scmp.ne.s32.totalorder %s285, %s286
    %p295 = scmp.eq.s32.totalorder %s35, 0
    %p296 = por %p294, %p295
    %p297 = scmp.ne.s32.totalorder %s285, %s286
    %p298 = scmp.eq.s32.totalorder %s36, 3
    %p299 = por %p297, %p298
    %p301 = scmp.ne.s32.totalorder %s286, %s300
    %p302 = scmp.eq.s32.totalorder %s36, 0
    %p303 = por %p301, %p302
    %s305 = sadd.s32 %s304, 1
    %p308 = scmp.eq.s32.totalorder %s30, 3
    %p309 = scmp.ne.s32.totalorder %s304, %s306
    %p310 = scmp.eq.s32.totalorder %s30, 0
    %p311 = por %p309, %p310
    %p312 = scmp.ne.s32.totalorder %s304, %s306
    %p313 = scmp.eq.s32.totalorder %s35, 3
    %p314 = por %p312, %p313
    %p315 = scmp.ne.s32.totalorder %s306, %s307
    %p316 = scmp.eq.s32.totalorder %s35, 0
    %p317 = por %p315, %p316
    %p318 = scmp.ne.s32.totalorder %s306, %s307
    %p319 = scmp.eq.s32.totalorder %s36, 3
    %p320 = por %p318, %p319
    %p322 = scmp.ne.s32.totalorder %s307, %s321
    %p323 = scmp.eq.s32.totalorder %s36, 0
    %p324 = por %p322, %p323
    %s326 = sadd.s32 %s325, 1
    %p329 = scmp.eq.s32.totalorder %s30, 3
    %p330 = scmp.ne.s32.totalorder %s325, %s327
    %p331 = scmp.eq.s32.totalorder %s30, 0
    %p332 = por %p330, %p331
    %p333 = scmp.ne.s32.totalorder %s325, %s327
    %p334 = scmp.eq.s32.totalorder %s35, 3
    %p335 = por %p333, %p334
    %p336 = scmp.ne.s32.totalorder %s327, %s328
    %p337 = scmp.eq.s32.totalorder %s35, 0
    %p338 = por %p336, %p337
    %p339 = scmp.ne.s32.totalorder %s327, %s328
    %p340 = scmp.eq.s32.totalorder %s36, 3
    %p341 = por %p339, %p340
    %p343 = scmp.ne.s32.totalorder %s328, %s342
    %p344 = scmp.eq.s32.totalorder %s36, 0
    %p345 = por %p343, %p344
    %s347 = sadd.s32 %s346, 1
    %p350 = scmp.eq.s32.totalorder %s30, 3
    %p351 = scmp.ne.s32.totalorder %s346, %s348
    %p352 = scmp.eq.s32.totalorder %s30, 0
    %p353 = por %p351, %p352
    %p354 = scmp.ne.s32.totalorder %s346, %s348
    %p355 = scmp.eq.s32.totalorder %s35, 3
    %p356 = por %p354, %p355
    %p357 = scmp.ne.s32.totalorder %s348, %s349
    %p358 = scmp.eq.s32.totalorder %s35, 0
    %p359 = por %p357, %p358
    %p360 = scmp.ne.s32.totalorder %s348, %s349
    %p361 = scmp.eq.s32.totalorder %s36, 3
    %p362 = por %p360, %p361
    %p364 = scmp.ne.s32.totalorder %s349, %s363
    %p365 = scmp.eq.s32.totalorder %s36, 0
    %p366 = por %p364, %p365
    %s368 = sadd.s32 %s367, 1
    %p371 = scmp.eq.s32.totalorder %s30, 3
    %p372 = scmp.ne.s32.totalorder %s367, %s369
    %p373 = scmp.eq.s32.totalorder %s30, 0
    %p374 = por %p372, %p373
    %p375 = scmp.ne.s32.totalorder %s367, %s369
    %p376 = scmp.eq.s32.totalorder %s35, 3
    %p377 = por %p375, %p376
    %p378 = scmp.ne.s32.totalorder %s369, %s370
    %p379 = scmp.eq.s32.totalorder %s35, 0
    %p380 = por %p378, %p379
    %p381 = scmp.ne.s32.totalorder %s369, %s370
    %p382 = scmp.eq.s32.totalorder %s36, 3
    %p383 = por %p381, %p382
    %p385 = scmp.ne.s32.totalorder %s370, %s384
    %p386 = scmp.eq.s32.totalorder %s36, 0
    %p387 = por %p385, %p386
    %s389 = sadd.s32 %s388, 1
    %p392 = scmp.eq.s32.totalorder %s30, 3
    %p393 = scmp.ne.s32.totalorder %s388, %s390
    %p394 = scmp.eq.s32.totalorder %s30, 0
    %p395 = por %p393, %p394
    %p396 = scmp.ne.s32.totalorder %s388, %s390
    %p397 = scmp.eq.s32.totalorder %s35, 3
    %p398 = por %p396, %p397
    %p399 = scmp.ne.s32.totalorder %s390, %s391
    %p400 = scmp.eq.s32.totalorder %s35, 0
    %p401 = por %p399, %p400
    %p402 = scmp.ne.s32.totalorder %s390, %s391
    %p403 = scmp.eq.s32.totalorder %s36, 3
    %p404 = por %p402, %p403
    %p406 = scmp.ne.s32.totalorder %s391, %s405
    %p407 = scmp.eq.s32.totalorder %s36, 0
    %p408 = por %p406, %p407
    %s410 = sadd.s32 %s409, 1
    %p413 = scmp.eq.s32.totalorder %s30, 3
    %p414 = scmp.ne.s32.totalorder %s409, %s411
    %p415 = scmp.eq.s32.totalorder %s30, 0
    %p416 = por %p414, %p415
    %p417 = scmp.ne.s32.totalorder %s409, %s411
    %p418 = scmp.eq.s32.totalorder %s35, 3
    %p419 = por %p417, %p418
    %p420 = scmp.ne.s32.totalorder %s411, %s412
    %p421 = scmp.eq.s32.totalorder %s35, 0
    %p422 = por %p420, %p421
    %p423 = scmp.ne.s32.totalorder %s411, %s412
    %p424 = scmp.eq.s32.totalorder %s36, 3
    %p425 = por %p423, %p424
    %p427 = scmp.ne.s32.totalorder %s412, %s426
    %p428 = scmp.eq.s32.totalorder %s36, 0
    %p429 = por %p427, %p428
    %s431 = sadd.s32 %s430, 1
    %p434 = scmp.eq.s32.totalorder %s30, 3
    %p435 = scmp.ne.s32.totalorder %s430, %s432
    %p436 = scmp.eq.s32.totalorder %s30, 0
    %p437 = por %p435, %p436
    %p438 = scmp.ne.s32.totalorder %s430, %s432
    %p439 = scmp.eq.s32.totalorder %s35, 3
    %p440 = por %p438, %p439
    %p441 = scmp.ne.s32.totalorder %s432, %s433
    %p442 = scmp.eq.s32.totalorder %s35, 0
    %p443 = por %p441, %p442
    %p444 = scmp.ne.s32.totalorder %s432, %s433
    %p445 = scmp.eq.s32.totalorder %s36, 3
    %p446 = por %p444, %p445
    %p448 = scmp.ne.s32.totalorder %s433, %s447
    %p449 = scmp.eq.s32.totalorder %s36, 0
    %p450 = por %p448, %p449
    %s452 = sadd.s32 %s451, 1
    %p455 = scmp.eq.s32.totalorder %s30, 3
    %p456 = scmp.ne.s32.totalorder %s451, %s453
    %p457 = scmp.eq.s32.totalorder %s30, 0
    %p458 = por %p456, %p457
    %p459 = scmp.ne.s32.totalorder %s451, %s453
    %p460 = scmp.eq.s32.totalorder %s35, 3
    %p461 = por %p459, %p460
    %p462 = scmp.ne.s32.totalorder %s453, %s454
    %p463 = scmp.eq.s32.totalorder %s35, 0
    %p464 = por %p462, %p463
    %p465 = scmp.ne.s32.totalorder %s453, %s454
    %p466 = scmp.eq.s32.totalorder %s36, 3
    %p467 = por %p465, %p466
    %p469 = scmp.ne.s32.totalorder %s454, %s468
    %p470 = scmp.eq.s32.totalorder %s36, 0
    %p471 = por %p469, %p470
    %s473 = sadd.s32 %s472, 1
    %p476 = scmp.eq.s32.totalorder %s30, 3
    %p477 = scmp.ne.s32.totalorder %s472, %s474
    %p478 = scmp.eq.s32.totalorder %s30, 0
    %p479 = por %p477, %p478
    %p480 = scmp.ne.s32.totalorder %s472, %s474
    %p481 = scmp.eq.s32.totalorder %s35, 3
    %p482 = por %p480, %p481
    %p483 = scmp.ne.s32.totalorder %s474, %s475
    %p484 = scmp.eq.s32.totalorder %s35, 0
    %p485 = por %p483, %p484
    %p486 = scmp.ne.s32.totalorder %s474, %s475
    %p487 = scmp.eq.s32.totalorder %s36, 3
    %p488 = por %p486, %p487
    %p490 = scmp.ne.s32.totalorder %s475, %s489
    %p491 = scmp.eq.s32.totalorder %s36, 0
    %p492 = por %p490, %p491
    %s494 = sadd.s32 %s493, 1
    %p497 = scmp.eq.s32.totalorder %s30, 3
    %p498 = scmp.ne.s32.totalorder %s493, %s495
    %p499 = scmp.eq.s32.totalorder %s30, 0
    %p500 = por %p498, %p499
    %p501 = scmp.ne.s32.totalorder %s493, %s495
    %p502 = scmp.eq.s32.totalorder %s35, 3
    %p503 = por %p501, %p502
    %p504 = scmp.ne.s32.totalorder %s495, %s496
    %p505 = scmp.eq.s32.totalorder %s35, 0
    %p506 = por %p504, %p505
    %p507 = scmp.ne.s32.totalorder %s495, %s496
    %p508 = scmp.eq.s32.totalorder %s36, 3
    %p509 = por %p507, %p508
    %p511 = scmp.ne.s32.totalorder %s496, %s510
    %p512 = scmp.eq.s32.totalorder %s36, 0
    %p513 = por %p511, %p512
    %s515 = sadd.s32 %s514, 1
    %p518 = scmp.eq.s32.totalorder %s30, 3
    %p519 = scmp.ne.s32.totalorder %s514, %s516
    %p520 = scmp.eq.s32.totalorder %s30, 0
    %p521 = por %p519, %p520
    %p522 = scmp.ne.s32.totalorder %s514, %s516
    %p523 = scmp.eq.s32.totalorder %s35, 3
    %p524 = por %p522, %p523
    %p525 = scmp.ne.s32.totalorder %s516, %s517
    %p526 = scmp.eq.s32.totalorder %s35, 0
    %p527 = por %p525, %p526
    %p528 = scmp.ne.s32.totalorder %s516, %s517
    %p529 = scmp.eq.s32.totalorder %s36, 3
    %p530 = por %p528, %p529
    %p532 = scmp.ne.s32.totalorder %s517, %s531
    %p533 = scmp.eq.s32.totalorder %s36, 0
    %p534 = por %p532, %p533
    %s536 = sadd.s32 %s535, 1
    %p539 = scmp.eq.s32.totalorder %s30, 3
    %p540 = scmp.ne.s32.totalorder %s535, %s537
    %p541 = scmp.eq.s32.totalorder %s30, 0
    %p542 = por %p540, %p541
    %p543 = scmp.ne.s32.totalorder %s535, %s537
    %p544 = scmp.eq.s32.totalorder %s35, 3
    %p545 = por %p543, %p544
    %p546 = scmp.ne.s32.totalorder %s537, %s538
    %p547 = scmp.eq.s32.totalorder %s35, 0
    %p548 = por %p546, %p547
    %p549 = scmp.ne.s32.totalorder %s537, %s538
    %p550 = scmp.eq.s32.totalorder %s36, 3
    %p551 = por %p549, %p550
    %p553 = scmp.ne.s32.totalorder %s538, %s552
    %p554 = scmp.eq.s32.totalorder %s36, 0
    %p555 = por %p553, %p554
    %p556 = scmp.le.s32.totalorder 1, %s30
    %p557 = scmp.lt.s32.totalorder %s30, 5
    %p558 = pnand %p556, %p557
    %p559 = pneg %p558
    // Predicated region
    $region9: #{kart_model8_forward.3} parent=5 // pred_check
      _
    $region10: #{kart_model8_forward.3} parent=5 // pred_check_branch
      %561 = sbr.rel (%p558) target = $region12
    $region11: #{kart_model8_forward.3} parent=5 // pred_region
      %s562 = ssub.s32 %s30, 1
      // Predicated region
      $region13: #{kart_model8_forward.3} parent=11 // pred_check
        %p563 = pneg %p107
      $region14: #{kart_model8_forward.3} parent=11 // pred_check_branch
        %565 = sbr.rel (%p563) target = $region16
      $region15: #{kart_model8_forward.3} parent=11 // pred_region
        _
      $region16: #{kart_model8_forward.3} parent=11 // pred_fallthru
        _
      // Predicated region
      $region17: #{kart_model8_forward.3} parent=11 // pred_check
        %p566 = pneg %p128
      $region18: #{kart_model8_forward.3} parent=11 // pred_check_branch
        %568 = sbr.rel (%p566) target = $region20
      $region19: #{kart_model8_forward.3} parent=11 // pred_region
        _
      $region20: #{kart_model8_forward.3} parent=11 // pred_fallthru
        _
      // Predicated region
      $region21: #{kart_model8_forward.3} parent=11 // pred_check
        %p569 = pneg %p149
      $region22: #{kart_model8_forward.3} parent=11 // pred_check_branch
        %571 = sbr.rel (%p569) target = $region24
      $region23: #{kart_model8_forward.3} parent=11 // pred_region
        _
      $region24: #{kart_model8_forward.3} parent=11 // pred_fallthru
        _
      // Predicated region
      $region25: #{kart_model8_forward.3} parent=11 // pred_check
        %p572 = pneg %p170
      $region26: #{kart_model8_forward.3} parent=11 // pred_check_branch
        %574 = sbr.rel (%p572) target = $region28
      $region27: #{kart_model8_forward.3} parent=11 // pred_region
        _
      $region28: #{kart_model8_forward.3} parent=11 // pred_fallthru
        _
      // Predicated region
      $region29: #{kart_model8_forward.3} parent=11 // pred_check
        %p575 = pneg %p191
      $region30: #{kart_model8_forward.3} parent=11 // pred_check_branch
        %577 = sbr.rel (%p575) target = $region32
      $region31: #{kart_model8_forward.3} parent=11 // pred_region
        _
      $region32: #{kart_model8_forward.3} parent=11 // pred_fallthru
        _
      // Predicated region
      $region33: #{kart_model8_forward.3} parent=11 // pred_check
        %p578 = pneg %p212
      $region34: #{kart_model8_forward.3} parent=11 // pred_check_branch
        %580 = sbr.rel (%p578) target = $region36
      $region35: #{kart_model8_forward.3} parent=11 // pred_region
        _
      $region36: #{kart_model8_forward.3} parent=11 // pred_fallthru
        _
      // Predicated region
      $region37: #{kart_model8_forward.3} parent=11 // pred_check
        %p581 = pneg %p233
      $region38: #{kart_model8_forward.3} parent=11 // pred_check_branch
        %583 = sbr.rel (%p581) target = $region40
      $region39: #{kart_model8_forward.3} parent=11 // pred_region
        _
      $region40: #{kart_model8_forward.3} parent=11 // pred_fallthru
        _
      // Predicated region
      $region41: #{kart_model8_forward.3} parent=11 // pred_check
        %p584 = pneg %p254
      $region42: #{kart_model8_forward.3} parent=11 // pred_check_branch
        %586 = sbr.rel (%p584) target = $region44
      $region43: #{kart_model8_forward.3} parent=11 // pred_region
        _
      $region44: #{kart_model8_forward.3} parent=11 // pred_fallthru
        _
      // Predicated region
      $region45: #{kart_model8_forward.3} parent=11 // pred_check
        %p587 = pneg %p275
      $region46: #{kart_model8_forward.3} parent=11 // pred_check_branch
        %589 = sbr.rel (%p587) target = $region48
      $region47: #{kart_model8_forward.3} parent=11 // pred_region
        _
      $region48: #{kart_model8_forward.3} parent=11 // pred_fallthru
        _
      // Predicated region
      $region49: #{kart_model8_forward.3} parent=11 // pred_check
        %p590 = pneg %p296
      $region50: #{kart_model8_forward.3} parent=11 // pred_check_branch
        %592 = sbr.rel (%p590) target = $region52
      $region51: #{kart_model8_forward.3} parent=11 // pred_region
        _
      $region52: #{kart_model8_forward.3} parent=11 // pred_fallthru
        _
      // Predicated region
      $region53: #{kart_model8_forward.3} parent=11 // pred_check
        %p593 = pneg %p317
      $region54: #{kart_model8_forward.3} parent=11 // pred_check_branch
        %595 = sbr.rel (%p593) target = $region56
      $region55: #{kart_model8_forward.3} parent=11 // pred_region
        _
      $region56: #{kart_model8_forward.3} parent=11 // pred_fallthru
        _
      // Predicated region
      $region57: #{kart_model8_forward.3} parent=11 // pred_check
        %p596 = pneg %p338
      $region58: #{kart_model8_forward.3} parent=11 // pred_check_branch
        %598 = sbr.rel (%p596) target = $region60
      $region59: #{kart_model8_forward.3} parent=11 // pred_region
        _
      $region60: #{kart_model8_forward.3} parent=11 // pred_fallthru
        _
      // Predicated region
      $region61: #{kart_model8_forward.3} parent=11 // pred_check
        %p599 = pneg %p359
      $region62: #{kart_model8_forward.3} parent=11 // pred_check_branch
        %601 = sbr.rel (%p599) target = $region64
      $region63: #{kart_model8_forward.3} parent=11 // pred_region
        _
      $region64: #{kart_model8_forward.3} parent=11 // pred_fallthru
        _
      // Predicated region
      $region65: #{kart_model8_forward.3} parent=11 // pred_check
        %p602 = pneg %p380
      $region66: #{kart_model8_forward.3} parent=11 // pred_check_branch
        %604 = sbr.rel (%p602) target = $region68
      $region67: #{kart_model8_forward.3} parent=11 // pred_region
        _
      $region68: #{kart_model8_forward.3} parent=11 // pred_fallthru
        _
      // Predicated region
      $region69: #{kart_model8_forward.3} parent=11 // pred_check
        %p605 = pneg %p401
      $region70: #{kart_model8_forward.3} parent=11 // pred_check_branch
        %607 = sbr.rel (%p605) target = $region72
      $region71: #{kart_model8_forward.3} parent=11 // pred_region
        _
      $region72: #{kart_model8_forward.3} parent=11 // pred_fallthru
        _
      // Predicated region
      $region73: #{kart_model8_forward.3} parent=11 // pred_check
        %p608 = pneg %p422
      $region74: #{kart_model8_forward.3} parent=11 // pred_check_branch
        %610 = sbr.rel (%p608) target = $region76
      $region75: #{kart_model8_forward.3} parent=11 // pred_region
        _
      $region76: #{kart_model8_forward.3} parent=11 // pred_fallthru
        _
      // Predicated region
      $region77: #{kart_model8_forward.3} parent=11 // pred_check
        %p611 = pneg %p443
      $region78: #{kart_model8_forward.3} parent=11 // pred_check_branch
        %613 = sbr.rel (%p611) target = $region80
      $region79: #{kart_model8_forward.3} parent=11 // pred_region
        _
      $region80: #{kart_model8_forward.3} parent=11 // pred_fallthru
        _
    $region12: #{kart_model8_forward.3} parent=5 // pred_fallthru
      _
    %p614 = scmp.lt.s32.totalorder %s30, 4
    // Predicated region
    $region81: #{kart_model8_forward.3} parent=5 // pred_check
      %p615 = pneg %p614
    $region82: #{kart_model8_forward.3} parent=5 // pred_check_branch
      %617 = sbr.rel (%p615) target = $region84
    $region83: #{kart_model8_forward.3} parent=5 // pred_region
      // Predicated region
      $region85: #{kart_model8_forward.3} parent=83 // pred_check
        %p618 = pneg %p54
      $region86: #{kart_model8_forward.3} parent=83 // pred_check_branch
        %620 = sbr.rel (%p618) target = $region88
      $region87: #{kart_model8_forward.3} parent=83 // pred_region
        %p621 = scmp.lt.s32.totalorder %s30, 1
        %s622 = scalar_select %p621, %s30, 1
        %p623 = scmp.lt.s32.totalorder %s622, 1
        %s624 = scalar_select %p623, %s622, 1
        %s625 = smul.addr %s624, 4
        %s626 = smul.addr %s625, 8
        %s627 = scalar_lea.vmem %s0, %s626
        %p628 = scmp.lt.s32.totalorder %s30, 1
        %s629 = scalar_select %p628, %s30, 1
      $region88: #{kart_model8_forward.3} parent=83 // pred_fallthru
        _
      // Predicated region
      $region89: #{kart_model8_forward.3} parent=83 // pred_check
        %p630 = pneg %p80
      $region90: #{kart_model8_forward.3} parent=83 // pred_check_branch
        %632 = sbr.rel (%p630) target = $region92
      $region91: #{kart_model8_forward.3} parent=83 // pred_region
        %p633 = scmp.lt.s32.totalorder %s30, 3
        %s634 = scalar_select %p633, %s30, 3
        %s635 = smul.addr %s634, 8
        %s636 = scalar_lea.vmem %s1, %s635
      $region92: #{kart_model8_forward.3} parent=83 // pred_fallthru
        _
    $region84: #{kart_model8_forward.3} parent=5 // pred_fallthru
      _
    %p637 = scmp.le.s32.totalorder 1, %s30
    %p638 = scmp.lt.s32.totalorder %s30, 5
    %p639 = pnand %p637, %p638
    %p640 = pneg %p639
    // Predicated region
    $region93: #{kart_model8_forward.3} parent=5 // pred_check
      _
    $region94: #{kart_model8_forward.3} parent=5 // pred_check_branch
      %642 = sbr.rel (%p639) target = $region96
    $region95: #{kart_model8_forward.3} parent=5 // pred_region
      %s643 = ssub.s32 %s30, 1
      %p644 = scmp.lt.s32.totalorder %s35, 1
      %s645 = scalar_select %p644, %s35, 1
      %p646 = scmp.lt.s32.totalorder %s645, 1
      %s647 = scalar_select %p646, %s645, 1
      %s648 = smul.addr %s647, 4
      %s649 = smul.addr %s648, 8
      %s650 = scalar_lea.vmem %s0, %s649
      %p651 = pneg %p60
      %p652 = pneg %p57
      %p653 = scmp.lt.s32.totalorder %s35, 3
      %s654 = scalar_select %p653, %s35, 3
      %s655 = smul.addr %s654, 8
      %s656 = scalar_lea.vmem %s1, %s655
      %p657 = pneg %p86
      %p658 = pneg %p83
      %p659 = pneg %p107
      %p660 = pneg %p104
      %p661 = pneg %p128
      %p662 = pneg %p125
      %p663 = pneg %p149
      %p664 = pneg %p146
      %p665 = pneg %p170
      %p666 = pneg %p167
      %p667 = pneg %p191
      %p668 = pneg %p188
      %p669 = pneg %p212
      %p670 = pneg %p209
      %p671 = pneg %p233
      %p672 = pneg %p230
      %p673 = pneg %p254
      %p674 = pneg %p251
      %p675 = pneg %p275
      %p676 = pneg %p272
      %p677 = pneg %p296
      %p678 = pneg %p293
      %p679 = pneg %p317
      %p680 = pneg %p314
      %p681 = pneg %p338
      %p682 = pneg %p335
      %p683 = pneg %p359
      %p684 = pneg %p356
      %p685 = pneg %p380
      %p686 = pneg %p377
      %p687 = pneg %p401
      %p688 = pneg %p398
      %p689 = pneg %p422
      %p690 = pneg %p419
      %p691 = pneg %p443
      %p692 = pneg %p440
      %p693 = pneg %p464
      %p694 = pneg %p461
      %p695 = pneg %p485
      %p696 = pneg %p482
      %p697 = pneg %p506
      %p698 = pneg %p503
      %p699 = pneg %p527
      %p700 = pneg %p524
      %p701 = pneg %p548
      %p702 = pneg %p545
      %p703 = scmp.lt.s32.totalorder %s35, 1
      %s704 = scalar_select %p703, %s35, 1
      %p705 = scmp.lt.s32.totalorder %s704, 1
      %s706 = scalar_select %p705, %s704, 1
      %s707 = smul.addr %s706, 4
      %s708 = smul.addr %s707, 8
      %s709 = scalar_lea.vmem %s0, %s708
      %p710 = scmp.lt.s32.totalorder %s35, 1
      %s711 = scalar_select %p710, %s35, 1
      %p712 = scmp.lt.s32.totalorder %s35, 3
      %s713 = scalar_select %p712, %s35, 3
      %s714 = smul.addr %s713, 8
      %s715 = scalar_lea.vmem %s1, %s714
      %p716 = scmp.eq.s32.totalorder %s35, 0
      // Predicated region
      $region97: #{kart_model8_forward.3} parent=95 // pred_check
        %p717 = pneg %p716
      $region98: #{kart_model8_forward.3} parent=95 // pred_check_branch
        %719 = sbr.rel (%p717) target = $region100
      $region99: #{kart_model8_forward.3} parent=95 // pred_region
        %v720 = vld [vmem:[%s15] sm:$0xff]
        %v721 = vld [vmem:[%s15 + $0x8] sm:$0xff]
        %722 = vst [vmem:[#allocation2] sm:$0xff] %v720
        %723 = vst [vmem:[#allocation2 + $0x8] sm:$0xff] %v721
        %v724 = vld [vmem:[%s16] sm:$0xff]
        %v725 = vld [vmem:[%s16 + $0x8] sm:$0xff]
        %726 = vst [vmem:[#allocation3] sm:$0xff] %v724
        %727 = vst [vmem:[#allocation3 + $0x8] sm:$0xff] %v725
        %v728 = vld [vmem:[%s17] sm:$0xff]
        %v729 = vld [vmem:[%s17 + $0x8] sm:$0xff]
        %730 = vst [vmem:[#allocation4] sm:$0xff] %v728
        %731 = vst [vmem:[#allocation4 + $0x8] sm:$0xff] %v729
        %v732 = vld [vmem:[%s18] sm:$0xff]
        %v733 = vld [vmem:[%s18 + $0x8] sm:$0xff]
        %734 = vst [vmem:[#allocation5] sm:$0xff] %v732
        %735 = vst [vmem:[#allocation5 + $0x8] sm:$0xff] %v733
      $region100: #{kart_model8_forward.3} parent=95 // pred_fallthru
        _
      %p736 = scmp.lt.s32.totalorder %s35, 2
      // Predicated region
      $region101: #{kart_model8_forward.3} parent=95 // pred_check
        %p737 = pneg %p736
      $region102: #{kart_model8_forward.3} parent=95 // pred_check_branch
        %739 = sbr.rel (%p737) target = $region104
      $region103: #{kart_model8_forward.3} parent=95 // pred_region
        %v740 = vld [vmem:[%s709] sm:$0xff]
        %v741 = vld [vmem:[%s709 + $0x8] sm:$0xff]
        %v742 = vld [vmem:[%s709 + $0x10] sm:$0xff]
        %v743 = vld [vmem:[%s709 + $0x18] sm:$0xff]
        %v744 = vld [vmem:[#allocation2] sm:$0xff]
        %v745 = vld [vmem:[%s3] sm:$0xff]
        %v746 = vld [vmem:[%s3 + $0x8] sm:$0xff]
        %v747 = vld [vmem:[%s3 + $0x10] sm:$0xff]
        %v748 = vld [vmem:[%s3 + $0x18] sm:$0xff]
        %v749 = vld [vmem:[%s3 + $0x20] sm:$0xff]
        %v750 = vld [vmem:[%s3 + $0x28] sm:$0xff]
        %v751 = vld [vmem:[%s3 + $0x30] sm:$0xff]
        %v752 = vld [vmem:[%s3 + $0x38] sm:$0xff]
        %v753 = vld [vmem:[%s3 + $0x40] sm:$0xff]
        %v754 = vld [vmem:[%s3 + $0x48] sm:$0xff]
        %v755 = vld [vmem:[%s3 + $0x50] sm:$0xff]
        %v756 = vld [vmem:[%s3 + $0x58] sm:$0xff]
        %v757 = vld [vmem:[%s3 + $0x60] sm:$0xff]
        %v758 = vld [vmem:[%s3 + $0x68] sm:$0xff]
        %v759 = vld [vmem:[%s3 + $0x70] sm:$0xff]
        %v760 = vld [vmem:[%s3 + $0x78] sm:$0xff]
        %v761 = vld [vmem:[%s3 + $0x80] sm:$0xff]
        %v762 = vld [vmem:[%s3 + $0x88] sm:$0xff]
        %v763 = vld [vmem:[%s3 + $0x90] sm:$0xff]
        %v764 = vld [vmem:[%s3 + $0x98] sm:$0xff]
        %v765 = vld [vmem:[%s3 + $0xa0] sm:$0xff]
        %v766 = vld [vmem:[%s3 + $0xa8] sm:$0xff]
        %v767 = vld [vmem:[%s3 + $0xb0] sm:$0xff]
        %v768 = vld [vmem:[%s3 + $0xb8] sm:$0xff]
        %v769 = vld [vmem:[%s3 + $0xc0] sm:$0xff]
        %v770 = vld [vmem:[%s3 + $0xc8] sm:$0xff]
        %v771 = vld [vmem:[%s3 + $0xd0] sm:$0xff]
        %v772 = vld [vmem:[%s3 + $0xd8] sm:$0xff]
        %v773 = vld [vmem:[%s3 + $0xe0] sm:$0xff]
        %v774 = vld [vmem:[%s3 + $0xe8] sm:$0xff]
        %v775 = vld [vmem:[%s3 + $0xf0] sm:$0xff]
        %v776 = vld [vmem:[%s3 + $0xf8] sm:$0xff]
        %v777 = vld [vmem:[%s3 + $0x100] sm:$0xff]
        %v778 = vld [vmem:[%s3 + $0x108] sm:$0xff]
        %v779 = vld [vmem:[%s3 + $0x110] sm:$0xff]
        %v780 = vld [vmem:[%s3 + $0x118] sm:$0xff]
        %v781 = vld [vmem:[%s3 + $0x120] sm:$0xff]
        %v782 = vld [vmem:[%s3 + $0x128] sm:$0xff]
        %v783 = vld [vmem:[%s3 + $0x130] sm:$0xff]
        %v784 = vld [vmem:[%s3 + $0x138] sm:$0xff]
        %v785 = vld [vmem:[%s3 + $0x140] sm:$0xff]
        %v786 = vld [vmem:[%s3 + $0x148] sm:$0xff]
        %v787 = vld [vmem:[%s3 + $0x150] sm:$0xff]
        %v788 = vld [vmem:[%s3 + $0x158] sm:$0xff]
        %v789 = vld [vmem:[%s3 + $0x160] sm:$0xff]
        %v790 = vld [vmem:[%s3 + $0x168] sm:$0xff]
        %v791 = vld [vmem:[%s3 + $0x170] sm:$0xff]
        %v792 = vld [vmem:[%s3 + $0x178] sm:$0xff]
        %v793 = vld [vmem:[%s3 + $0x180] sm:$0xff]
        %v794 = vld [vmem:[%s3 + $0x188] sm:$0xff]
        %v795 = vld [vmem:[%s3 + $0x190] sm:$0xff]
        %v796 = vld [vmem:[%s3 + $0x198] sm:$0xff]
        %v797 = vld [vmem:[%s3 + $0x1a0] sm:$0xff]
        %v798 = vld [vmem:[%s3 + $0x1a8] sm:$0xff]
        %v799 = vld [vmem:[%s3 + $0x1b0] sm:$0xff]
        %v800 = vld [vmem:[%s3 + $0x1b8] sm:$0xff]
        %v801 = vld [vmem:[%s3 + $0x1c0] sm:$0xff]
        %v802 = vld [vmem:[%s3 + $0x1c8] sm:$0xff]
        %v803 = vld [vmem:[%s3 + $0x1d0] sm:$0xff]
        %v804 = vld [vmem:[%s3 + $0x1d8] sm:$0xff]
        %v805 = vld [vmem:[%s3 + $0x1e0] sm:$0xff]
        %v806 = vld [vmem:[%s3 + $0x1e8] sm:$0xff]
        %v807 = vld [vmem:[%s3 + $0x1f0] sm:$0xff]
        %v808 = vld [vmem:[%s3 + $0x1f8] sm:$0xff]
        %809 = vmatprep.subr.mxu0 %v746
        %810 = vmatpush1.msra.mxu0 %v745
        %811 = vmatprep.subr.mxu0 %v750
        %812 = vmatpush1.msra.mxu0 %v749
        %813 = vmatprep.subr.mxu0 %v754
        %814 = vmatpush1.msra.mxu0 %v753
        %815 = vmatprep.subr.mxu0 %v758
        %816 = vmatpush1.msra.mxu0 %v757
        %817 = vmatprep.subr.mxu0 %v762
        %818 = vmatpush1.msra.mxu0 %v761
        %819 = vmatprep.subr.mxu0 %v766
        %820 = vmatpush1.msra.mxu0 %v765
        %821 = vmatprep.subr.mxu0 %v770
        %822 = vmatpush1.msra.mxu0 %v769
        %823 = vmatprep.subr.mxu0 %v774
        %824 = vmatpush1.msra.mxu0 %v773
        %825 = vmatprep.subr.mxu0 %v778
        %826 = vmatpush1.msra.mxu0 %v777
        %827 = vmatprep.subr.mxu0 %v782
        %828 = vmatpush1.msra.mxu0 %v781
        %829 = vmatprep.subr.mxu0 %v786
        %830 = vmatpush1.msra.mxu0 %v785
        %831 = vmatprep.subr.mxu0 %v790
        %832 = vmatpush1.msra.mxu0 %v789
        %833 = vmatprep.subr.mxu0 %v794
        %834 = vmatpush1.msra.mxu0 %v793
        %835 = vmatprep.subr.mxu0 %v798
        %836 = vmatpush1.msra.mxu0 %v797
        %837 = vmatprep.subr.mxu0 %v802
        %838 = vmatpush1.msra.mxu0 %v801
        %839 = vmatprep.subr.mxu0 %v806
        %840 = vmatpush1.msra.mxu0 %v805
        %841 = vmatprep.subr.mxu0 0.0
        %842 = vmatpush1.msra.mxu0 0.0
        %843 = vmatprep.subr.mxu0 0.0
        %844 = vmatpush1.msra.mxu0 0.0
        %845 = vmatprep.subr.mxu0 0.0
        %846 = vmatpush1.msra.mxu0 0.0
        %847 = vmatprep.subr.mxu0 0.0
        %848 = vmatpush1.msra.mxu0 0.0
        %849 = vmatprep.subr.mxu0 0.0
        %850 = vmatpush1.msra.mxu0 0.0
        %851 = vmatprep.subr.mxu0 0.0
        %852 = vmatpush1.msra.mxu0 0.0
        %853 = vmatprep.subr.mxu0 0.0
        %854 = vmatpush1.msra.mxu0 0.0
        %855 = vmatprep.subr.mxu0 0.0
        %856 = vmatpush1.msra.mxu0 0.0
        %857 = vmatprep.subr.mxu0 0.0
        %858 = vmatpush1.msra.mxu0 0.0
        %859 = vmatprep.subr.mxu0 0.0
        %860 = vmatpush1.msra.mxu0 0.0
        %861 = vmatprep.subr.mxu0 0.0
        %862 = vmatpush1.msra.mxu0 0.0
        %863 = vmatprep.subr.mxu0 0.0
        %864 = vmatpush1.msra.mxu0 0.0
        %865 = vmatprep.subr.mxu0 0.0
        %866 = vmatpush1.msra.mxu0 0.0
        %867 = vmatprep.subr.mxu0 0.0
        %868 = vmatpush1.msra.mxu0 0.0
        %869 = vmatprep.subr.mxu0 0.0
        %870 = vmatpush1.msra.mxu0 0.0
        %871 = vmatprep.subr.mxu0 0.0
        %872 = vmatpush1.msra.mxu0 0.0
        %873 = vmatprep.mubr.f32.mxu0 0.0
        %874 = vmatmul.mubr.f32.gmra.mrb[0].mxu0 %v744
        %v875 = vpop.f32.mrb[0].mxu0
        %v876 = vadd.f32 0.0, %v875
        %v877 = vpop.f32.mrb[0].mxu0
        %v878 = vadd.f32 0.0, %v877
        %879 = vdwg.mxu0
        %880 = vmatprep.subr.mxu0 %v748
        %881 = vmatpush1.msra.mxu0 %v747
        %882 = vmatprep.subr.mxu0 %v752
        %883 = vmatpush1.msra.mxu0 %v751
        %884 = vmatprep.subr.mxu0 %v756
        %885 = vmatpush1.msra.mxu0 %v755
        %886 = vmatprep.subr.mxu0 %v760
        %887 = vmatpush1.msra.mxu0 %v759
        %888 = vmatprep.subr.mxu0 %v764
        %889 = vmatpush1.msra.mxu0 %v763
        %890 = vmatprep.subr.mxu0 %v768
        %891 = vmatpush1.msra.mxu0 %v767
        %892 = vmatprep.subr.mxu0 %v772
        %893 = vmatpush1.msra.mxu0 %v771
        %894 = vmatprep.subr.mxu0 %v776
        %895 = vmatpush1.msra.mxu0 %v775
        %896 = vmatprep.subr.mxu0 %v780
        %897 = vmatpush1.msra.mxu0 %v779
        %898 = vmatprep.subr.mxu0 %v784
        %899 = vmatpush1.msra.mxu0 %v783
        %900 = vmatprep.subr.mxu0 %v788
        %901 = vmatpush1.msra.mxu0 %v787
        %902 = vmatprep.subr.mxu0 %v792
        %903 = vmatpush1.msra.mxu0 %v791
        %904 = vmatprep.subr.mxu0 %v796
        %905 = vmatpush1.msra.mxu0 %v795
        %906 = vmatprep.subr.mxu0 %v800
        %907 = vmatpush1.msra.mxu0 %v799
        %908 = vmatprep.subr.mxu0 %v804
        %909 = vmatpush1.msra.mxu0 %v803
        %910 = vmatprep.subr.mxu0 %v808
        %911 = vmatpush1.msra.mxu0 %v807
        %912 = vmatprep.subr.mxu0 0.0
        %913 = vmatpush1.msra.mxu0 0.0
        %914 = vmatprep.subr.mxu0 0.0
        %915 = vmatpush1.msra.mxu0 0.0
        %916 = vmatprep.subr.mxu0 0.0
        %917 = vmatpush1.msra.mxu0 0.0
        %918 = vmatprep.subr.mxu0 0.0
        %919 = vmatpush1.msra.mxu0 0.0
        %920 = vmatprep.subr.mxu0 0.0
        %921 = vmatpush1.msra.mxu0 0.0
        %922 = vmatprep.subr.mxu0 0.0
        %923 = vmatpush1.msra.mxu0 0.0
        %924 = vmatprep.subr.mxu0 0.0
        %925 = vmatpush1.msra.mxu0 0.0
        %926 = vmatprep.subr.mxu0 0.0
        %927 = vmatpush1.msra.mxu0 0.0
        %928 = vmatprep.subr.mxu0 0.0
        %929 = vmatpush1.msra.mxu0 0.0
        %930 = vmatprep.subr.mxu0 0.0
        %931 = vmatpush1.msra.mxu0 0.0
        %932 = vmatprep.subr.mxu0 0.0
        %933 = vmatpush1.msra.mxu0 0.0
        %934 = vmatprep.subr.mxu0 0.0
        %935 = vmatpush1.msra.mxu0 0.0
        %936 = vmatprep.subr.mxu0 0.0
        %937 = vmatpush1.msra.mxu0 0.0
        %938 = vmatprep.subr.mxu0 0.0
        %939 = vmatpush1.msra.mxu0 0.0
        %940 = vmatprep.subr.mxu0 0.0
        %941 = vmatpush1.msra.mxu0 0.0
        %942 = vmatprep.subr.mxu0 0.0
        %943 = vmatpush1.msra.mxu0 0.0
        %944 = vmatprep.mubr.f32.mxu0 0.0
        %945 = vmatmul.mubr.f32.gmra.mrb[0].mxu0 %v744
        %v946 = vpop.f32.mrb[0].mxu0
        %v947 = vadd.f32 0.0, %v946
        %v948 = vpop.f32.mrb[0].mxu0
        %v949 = vadd.f32 0.0, %v948
        %950 = vdwg.mxu0
        %v951 = vadd.f32 %v740, %v876
        %v952 = vadd.f32 %v741, %v878
        %v953 = vadd.f32 %v742, %v947
        %v954 = vadd.f32 %v743, %v949
        %v955 = vld [vmem:[%s5] sm:$0xf]
        %v957 = vlaneseq
        %v958 = vshrl.u32 %v957, 7
        %v959 = vsub.s32 0, %v958
        %v960 = vrot.slane %v955, %v959
        %v961 = vlaneseq
        %v962 = vshrl.u32 %v961, 7
        %v963 = vsub.s32 1, %v962
        %v964 = vrot.slane %v955, %v963
        %v965 = vlaneseq
        %v966 = vshrl.u32 %v965, 7
        %v967 = vsub.s32 2, %v966
        %v968 = vrot.slane %v955, %v967
        %v969 = vlaneseq
        %v970 = vshrl.u32 %v969, 7
        %v971 = vsub.s32 3, %v970
        %v972 = vrot.slane %v955, %v971
        %v977 = vadd.f32 %v951, %v960
        %v978 = vadd.f32 %v952, %v964
        %v979 = vadd.f32 %v953, %v968
        %v980 = vadd.f32 %v954, %v972
        %v981 = vld [vmem:[#allocation3] sm:$0xff]
        %v982 = vxor.u32 %v977, 2147483648
        %v983 = vxor.u32 %v978, 2147483648
        %v984 = vxor.u32 %v979, 2147483648
        %v985 = vmul.f32 %v982, 1.442695
        %v986 = vpow.pop %v985
        %v987 = vmul.f32 %v983, 1.442695
        %v988 = vpow.pop %v987
        %v989 = vmul.f32 %v984, 1.442695
        %v990 = vpow.pop %v989
        %v991 = vadd.f32 %v986, 1.0
        %v992 = vadd.f32 %v988, 1.0
        %v993 = vadd.f32 %v990, 1.0
        %v994 = vrcp.pop %v991
        %v995 = vmul.f32 1.0, %v994
        %v996 = vrcp.pop %v992
        %v997 = vmul.f32 1.0, %v996
        %v998 = vrcp.pop %v993
        %v999 = vmul.f32 1.0, %v998
        %v1000 = vtanh.pop %v980
        %v1001 = vmul.f32 %v997, %v981
        %v1002 = vmul.f32 %v995, %v1000
        %v1003 = vadd.f32 %v1001, %v1002
        %v1004 = vtanh.pop %v1003
        %v1005 = vmul.f32 %v999, %v1004
        %1006 = vst [vmem:[#allocation2] sm:$0xff] %v1005
        %1007 = vst [vmem:[#allocation3] sm:$0xff] %v1003
        %s1008 = scalar_lea.vmem [#allocation2], 8
        %v1009 = vld [vmem:[%s1008] sm:$0xff]
        %v1010 = vld [vmem:[%s4] sm:$0xff]
        %v1011 = vld [vmem:[%s4 + $0x8] sm:$0xff]
        %v1012 = vld [vmem:[%s4 + $0x10] sm:$0xff]
        %v1013 = vld [vmem:[%s4 + $0x18] sm:$0xff]
        %v1014 = vld [vmem:[%s4 + $0x20] sm:$0xff]
        %v1015 = vld [vmem:[%s4 + $0x28] sm:$0xff]
        %v1016 = vld [vmem:[%s4 + $0x30] sm:$0xff]
        %v1017 = vld [vmem:[%s4 + $0x38] sm:$0xff]
        %v1018 = vld [vmem:[%s4 + $0x40] sm:$0xff]
        %v1019 = vld [vmem:[%s4 + $0x48] sm:$0xff]
        %v1020 = vld [vmem:[%s4 + $0x50] sm:$0xff]
        %v1021 = vld [vmem:[%s4 + $0x58] sm:$0xff]
        %v1022 = vld [vmem:[%s4 + $0x60] sm:$0xff]
        %v1023 = vld [vmem:[%s4 + $0x68] sm:$0xff]
        %v1024 = vld [vmem:[%s4 + $0x70] sm:$0xff]
        %v1025 = vld [vmem:[%s4 + $0x78] sm:$0xff]
        %v1026 = vld [vmem:[%s4 + $0x80] sm:$0xff]
        %v1027 = vld [vmem:[%s4 + $0x88] sm:$0xff]
        %v1028 = vld [vmem:[%s4 + $0x90] sm:$0xff]
        %v1029 = vld [vmem:[%s4 + $0x98] sm:$0xff]
        %v1030 = vld [vmem:[%s4 + $0xa0] sm:$0xff]
        %v1031 = vld [vmem:[%s4 + $0xa8] sm:$0xff]
        %v1032 = vld [vmem:[%s4 + $0xb0] sm:$0xff]
        %v1033 = vld [vmem:[%s4 + $0xb8] sm:$0xff]
        %v1034 = vld [vmem:[%s4 + $0xc0] sm:$0xff]
        %v1035 = vld [vmem:[%s4 + $0xc8] sm:$0xff]
        %v1036 = vld [vmem:[%s4 + $0xd0] sm:$0xff]
        %v1037 = vld [vmem:[%s4 + $0xd8] sm:$0xff]
        %v1038 = vld [vmem:[%s4 + $0xe0] sm:$0xff]
        %v1039 = vld [vmem:[%s4 + $0xe8] sm:$0xff]
        %v1040 = vld [vmem:[%s4 + $0xf0] sm:$0xff]
        %v1041 = vld [vmem:[%s4 + $0xf8] sm:$0xff]
        %v1042 = vld [vmem:[%s4 + $0x100] sm:$0xff]
        %v1043 = vld [vmem:[%s4 + $0x108] sm:$0xff]
        %v1044 = vld [vmem:[%s4 + $0x110] sm:$0xff]
        %v1045 = vld [vmem:[%s4 + $0x118] sm:$0xff]
        %v1046 = vld [vmem:[%s4 + $0x120] sm:$0xff]
        %v1047 = vld [vmem:[%s4 + $0x128] sm:$0xff]
        %v1048 = vld [vmem:[%s4 + $0x130] sm:$0xff]
        %v1049 = vld [vmem:[%s4 + $0x138] sm:$0xff]
        %v1050 = vld [vmem:[%s4 + $0x140] sm:$0xff]
        %v1051 = vld [vmem:[%s4 + $0x148] sm:$0xff]
        %v1052 = vld [vmem:[%s4 + $0x150] sm:$0xff]
        %v1053 = vld [vmem:[%s4 + $0x158] sm:$0xff]
        %v1054 = vld [vmem:[%s4 + $0x160] sm:$0xff]
        %v1055 = vld [vmem:[%s4 + $0x168] sm:$0xff]
        %v1056 = vld [vmem:[%s4 + $0x170] sm:$0xff]
        %v1057 = vld [vmem:[%s4 + $0x178] sm:$0xff]
        %v1058 = vld [vmem:[%s4 + $0x180] sm:$0xff]
        %v1059 = vld [vmem:[%s4 + $0x188] sm:$0xff]
        %v1060 = vld [vmem:[%s4 + $0x190] sm:$0xff]
        %v1061 = vld [vmem:[%s4 + $0x198] sm:$0xff]
        %v1062 = vld [vmem:[%s4 + $0x1a0] sm:$0xff]
        %v1063 = vld [vmem:[%s4 + $0x1a8] sm:$0xff]
        %v1064 = vld [vmem:[%s4 + $0x1b0] sm:$0xff]
        %v1065 = vld [vmem:[%s4 + $0x1b8] sm:$0xff]
        %v1066 = vld [vmem:[%s4 + $0x1c0] sm:$0xff]
        %v1067 = vld [vmem:[%s4 + $0x1c8] sm:$0xff]
        %v1068 = vld [vmem:[%s4 + $0x1d0] sm:$0xff]
        %v1069 = vld [vmem:[%s4 + $0x1d8] sm:$0xff]
        %v1070 = vld [vmem:[%s4 + $0x1e0] sm:$0xff]
        %v1071 = vld [vmem:[%s4 + $0x1e8] sm:$0xff]
        %v1072 = vld [vmem:[%s4 + $0x1f0] sm:$0xff]
        %v1073 = vld [vmem:[%s4 + $0x1f8] sm:$0xff]
        %v1074 = vld [vmem:[%s4 + $0x200] sm:$0xff]
        %v1075 = vld [vmem:[%s4 + $0x208] sm:$0xff]
        %v1076 = vld [vmem:[%s4 + $0x210] sm:$0xff]
        %v1077 = vld [vmem:[%s4 + $0x218] sm:$0xff]
        %v1078 = vld [vmem:[%s4 + $0x220] sm:$0xff]
        %v1079 = vld [vmem:[%s4 + $0x228] sm:$0xff]
        %v1080 = vld [vmem:[%s4 + $0x230] sm:$0xff]
        %v1081 = vld [vmem:[%s4 + $0x238] sm:$0xff]
        %v1082 = vld [vmem:[%s4 + $0x240] sm:$0xff]
        %v1083 = vld [vmem:[%s4 + $0x248] sm:$0xff]
        %v1084 = vld [vmem:[%s4 + $0x250] sm:$0xff]
        %v1085 = vld [vmem:[%s4 + $0x258] sm:$0xff]
        %v1086 = vld [vmem:[%s4 + $0x260] sm:$0xff]
        %v1087 = vld [vmem:[%s4 + $0x268] sm:$0xff]
        %v1088 = vld [vmem:[%s4 + $0x270] sm:$0xff]
        %v1089 = vld [vmem:[%s4 + $0x278] sm:$0xff]
        %v1090 = vld [vmem:[%s4 + $0x280] sm:$0xff]
        %v1091 = vld [vmem:[%s4 + $0x288] sm:$0xff]
        %v1092 = vld [vmem:[%s4 + $0x290] sm:$0xff]
        %v1093 = vld [vmem:[%s4 + $0x298] sm:$0xff]
        %v1094 = vld [vmem:[%s4 + $0x2a0] sm:$0xff]
        %v1095 = vld [vmem:[%s4 + $0x2a8] sm:$0xff]
        %v1096 = vld [vmem:[%s4 + $0x2b0] sm:$0xff]
        %v1097 = vld [vmem:[%s4 + $0x2b8] sm:$0xff]
        %v1098 = vld [vmem:[%s4 + $0x2c0] sm:$0xff]
        %v1099 = vld [vmem:[%s4 + $0x2c8] sm:$0xff]
        %v1100 = vld [vmem:[%s4 + $0x2d0] sm:$0xff]
        %v1101 = vld [vmem:[%s4 + $0x2d8] sm:$0xff]
        %v1102 = vld [vmem:[%s4 + $0x2e0] sm:$0xff]
        %v1103 = vld [vmem:[%s4 + $0x2e8] sm:$0xff]
        %v1104 = vld [vmem:[%s4 + $0x2f0] sm:$0xff]
        %v1105 = vld [vmem:[%s4 + $0x2f8] sm:$0xff]
        %v1106 = vld [vmem:[%s4 + $0x300] sm:$0xff]
        %v1107 = vld [vmem:[%s4 + $0x308] sm:$0xff]
        %v1108 = vld [vmem:[%s4 + $0x310] sm:$0xff]
        %v1109 = vld [vmem:[%s4 + $0x318] sm:$0xff]
        %v1110 = vld [vmem:[%s4 + $0x320] sm:$0xff]
        %v1111 = vld [vmem:[%s4 + $0x328] sm:$0xff]
        %v1112 = vld [vmem:[%s4 + $0x330] sm:$0xff]
        %v1113 = vld [vmem:[%s4 + $0x338] sm:$0xff]
        %v1114 = vld [vmem:[%s4 + $0x340] sm:$0xff]
        %v1115 = vld [vmem:[%s4 + $0x348] sm:$0xff]
        %v1116 = vld [vmem:[%s4 + $0x350] sm:$0xff]
        %v1117 = vld [vmem:[%s4 + $0x358] sm:$0xff]
        %v1118 = vld [vmem:[%s4 + $0x360] sm:$0xff]
        %v1119 = vld [vmem:[%s4 + $0x368] sm:$0xff]
        %v1120 = vld [vmem:[%s4 + $0x370] sm:$0xff]
        %v1121 = vld [vmem:[%s4 + $0x378] sm:$0xff]
        %v1122 = vld [vmem:[%s4 + $0x380] sm:$0xff]
        %v1123 = vld [vmem:[%s4 + $0x388] sm:$0xff]
        %v1124 = vld [vmem:[%s4 + $0x390] sm:$0xff]
        %v1125 = vld [vmem:[%s4 + $0x398] sm:$0xff]
        %v1126 = vld [vmem:[%s4 + $0x3a0] sm:$0xff]
        %v1127 = vld [vmem:[%s4 + $0x3a8] sm:$0xff]
        %v1128 = vld [vmem:[%s4 + $0x3b0] sm:$0xff]
        %v1129 = vld [vmem:[%s4 + $0x3b8] sm:$0xff]
        %v1130 = vld [vmem:[%s4 + $0x3c0] sm:$0xff]
        %v1131 = vld [vmem:[%s4 + $0x3c8] sm:$0xff]
        %v1132 = vld [vmem:[%s4 + $0x3d0] sm:$0xff]
        %v1133 = vld [vmem:[%s4 + $0x3d8] sm:$0xff]
        %v1134 = vld [vmem:[%s4 + $0x3e0] sm:$0xff]
        %v1135 = vld [vmem:[%s4 + $0x3e8] sm:$0xff]
        %v1136 = vld [vmem:[%s4 + $0x3f0] sm:$0xff]
        %v1137 = vld [vmem:[%s4 + $0x3f8] sm:$0xff]
        %s1138 = scalar_lea.vmem %s5, 4
        %v1139 = vld [vmem:[%s1138] sm:$0xf]
        %v1141 = vlaneseq
        %v1142 = vshrl.u32 %v1141, 7
        %v1143 = vsub.s32 0, %v1142
        %v1144 = vrot.slane %v1139, %v1143
        %v1145 = vlaneseq
        %v1146 = vshrl.u32 %v1145, 7
        %v1147 = vsub.s32 1, %v1146
        %v1148 = vrot.slane %v1139, %v1147
        %v1149 = vlaneseq
        %v1150 = vshrl.u32 %v1149, 7
        %v1151 = vsub.s32 2, %v1150
        %v1152 = vrot.slane %v1139, %v1151
        %v1153 = vlaneseq
        %v1154 = vshrl.u32 %v1153, 7
        %v1155 = vsub.s32 3, %v1154
        %v1156 = vrot.slane %v1139, %v1155
        %1161 = vmatprep.subr.mxu0 %v1011
        %1162 = vmatpush1.msra.mxu0 %v1010
        %1163 = vmatprep.subr.mxu0 %v1015
        %1164 = vmatpush1.msra.mxu0 %v1014
        %1165 = vmatprep.subr.mxu0 %v1019
        %1166 = vmatpush1.msra.mxu0 %v1018
        %1167 = vmatprep.subr.mxu0 %v1023
        %1168 = vmatpush1.msra.mxu0 %v1022
        %1169 = vmatprep.subr.mxu0 %v1027
        %1170 = vmatpush1.msra.mxu0 %v1026
        %1171 = vmatprep.subr.mxu0 %v1031
        %1172 = vmatpush1.msra.mxu0 %v1030
        %1173 = vmatprep.subr.mxu0 %v1035
        %1174 = vmatpush1.msra.mxu0 %v1034
        %1175 = vmatprep.subr.mxu0 %v1039
        %1176 = vmatpush1.msra.mxu0 %v1038
        %1177 = vmatprep.subr.mxu0 %v1043
        %1178 = vmatpush1.msra.mxu0 %v1042
        %1179 = vmatprep.subr.mxu0 %v1047
        %1180 = vmatpush1.msra.mxu0 %v1046
        %1181 = vmatprep.subr.mxu0 %v1051
        %1182 = vmatpush1.msra.mxu0 %v1050
        %1183 = vmatprep.subr.mxu0 %v1055
        %1184 = vmatpush1.msra.mxu0 %v1054
        %1185 = vmatprep.subr.mxu0 %v1059
        %1186 = vmatpush1.msra.mxu0 %v1058
        %1187 = vmatprep.subr.mxu0 %v1063
        %1188 = vmatpush1.msra.mxu0 %v1062
        %1189 = vmatprep.subr.mxu0 %v1067
        %1190 = vmatpush1.msra.mxu0 %v1066
        %1191 = vmatprep.subr.mxu0 %v1071
        %1192 = vmatpush1.msra.mxu0 %v1070
        %1193 = vmatprep.subr.mxu0 %v1075
        %1194 = vmatpush1.msra.mxu0 %v1074
        %1195 = vmatprep.subr.mxu0 %v1079
        %1196 = vmatpush1.msra.mxu0 %v1078
        %1197 = vmatprep.subr.mxu0 %v1083
        %1198 = vmatpush1.msra.mxu0 %v1082
        %1199 = vmatprep.subr.mxu0 %v1087
        %1200 = vmatpush1.msra.mxu0 %v1086
        %1201 = vmatprep.subr.mxu0 %v1091
        %1202 = vmatpush1.msra.mxu0 %v1090
        %1203 = vmatprep.subr.mxu0 %v1095
        %1204 = vmatpush1.msra.mxu0 %v1094
        %1205 = vmatprep.subr.mxu0 %v1099
        %1206 = vmatpush1.msra.mxu0 %v1098
        %1207 = vmatprep.subr.mxu0 %v1103
        %1208 = vmatpush1.msra.mxu0 %v1102
        %1209 = vmatprep.subr.mxu0 %v1107
        %1210 = vmatpush1.msra.mxu0 %v1106
        %1211 = vmatprep.subr.mxu0 %v1111
        %1212 = vmatpush1.msra.mxu0 %v1110
        %1213 = vmatprep.subr.mxu0 %v1115
        %1214 = vmatpush1.msra.mxu0 %v1114
        %1215 = vmatprep.subr.mxu0 %v1119
        %1216 = vmatpush1.msra.mxu0 %v1118
        %1217 = vmatprep.subr.mxu0 %v1123
        %1218 = vmatpush1.msra.mxu0 %v1122
        %1219 = vmatprep.subr.mxu0 %v1127
        %1220 = vmatpush1.msra.mxu0 %v1126
        %1221 = vmatprep.subr.mxu0 %v1131
        %1222 = vmatpush1.msra.mxu0 %v1130
        %1223 = vmatprep.subr.mxu0 %v1135
        %1224 = vmatpush1.msra.mxu0 %v1134
        %1225 = vmatprep.mubr.f32.mxu0 %v1009
        %1226 = vmatmul.mubr.f32.gmra.mrb[0].mxu0 %v1005
        %v1227 = vpop.f32.mrb[0].mxu0
        %v1228 = vadd.f32 %v1144, %v1227
        %v1229 = vpop.f32.mrb[0].mxu0
        %v1230 = vadd.f32 %v1148, %v1229
        %1231 = vdwg.mxu0
        %1232 = vmatprep.subr.mxu0 %v1013
        %1233 = vmatpush1.msra.mxu0 %v1012
        %1234 = vmatprep.subr.mxu0 %v1017
        %1235 = vmatpush1.msra.mxu0 %v1016
        %1236 = vmatprep.subr.mxu0 %v1021
        %1237 = vmatpush1.msra.mxu0 %v1020
        %1238 = vmatprep.subr.mxu0 %v1025
        %1239 = vmatpush1.msra.mxu0 %v1024
        %1240 = vmatprep.subr.mxu0 %v1029
        %1241 = vmatpush1.msra.mxu0 %v1028
        %1242 = vmatprep.subr.mxu0 %v1033
        %1243 = vmatpush1.msra.mxu0 %v1032
        %1244 = vmatprep.subr.mxu0 %v1037
        %1245 = vmatpush1.msra.mxu0 %v1036
        %1246 = vmatprep.subr.mxu0 %v1041
        %1247 = vmatpush1.msra.mxu0 %v1040
        %1248 = vmatprep.subr.mxu0 %v1045
        %1249 = vmatpush1.msra.mxu0 %v1044
        %1250 = vmatprep.subr.mxu0 %v1049
        %1251 = vmatpush1.msra.mxu0 %v1048
        %1252 = vmatprep.subr.mxu0 %v1053
        %1253 = vmatpush1.msra.mxu0 %v1052
        %1254 = vmatprep.subr.mxu0 %v1057
        %1255 = vmatpush1.msra.mxu0 %v1056
        %1256 = vmatprep.subr.mxu0 %v1061
        %1257 = vmatpush1.msra.mxu0 %v1060
        %1258 = vmatprep.subr.mxu0 %v1065
        %1259 = vmatpush1.msra.mxu0 %v1064
        %1260 = vmatprep.subr.mxu0 %v1069
        %1261 = vmatpush1.msra.mxu0 %v1068
        %1262 = vmatprep.subr.mxu0 %v1073
        %1263 = vmatpush1.msra.mxu0 %v1072
        %1264 = vmatprep.subr.mxu0 %v1077
        %1265 = vmatpush1.msra.mxu0 %v1076
        %1266 = vmatprep.subr.mxu0 %v1081
        %1267 = vmatpush1.msra.mxu0 %v1080
        %1268 = vmatprep.subr.mxu0 %v1085
        %1269 = vmatpush1.msra.mxu0 %v1084
        %1270 = vmatprep.subr.mxu0 %v1089
        %1271 = vmatpush1.msra.mxu0 %v1088
        %1272 = vmatprep.subr.mxu0 %v1093
        %1273 = vmatpush1.msra.mxu0 %v1092
        %1274 = vmatprep.subr.mxu0 %v1097
        %1275 = vmatpush1.msra.mxu0 %v1096
        %1276 = vmatprep.subr.mxu0 %v1101
        %1277 = vmatpush1.msra.mxu0 %v1100
        %1278 = vmatprep.subr.mxu0 %v1105
        %1279 = vmatpush1.msra.mxu0 %v1104
        %1280 = vmatprep.subr.mxu0 %v1109
        %1281 = vmatpush1.msra.mxu0 %v1108
        %1282 = vmatprep.subr.mxu0 %v1113
        %1283 = vmatpush1.msra.mxu0 %v1112
        %1284 = vmatprep.subr.mxu0 %v1117
        %1285 = vmatpush1.msra.mxu0 %v1116
        %1286 = vmatprep.subr.mxu0 %v1121
        %1287 = vmatpush1.msra.mxu0 %v1120
        %1288 = vmatprep.subr.mxu0 %v1125
        %1289 = vmatpush1.msra.mxu0 %v1124
        %1290 = vmatprep.subr.mxu0 %v1129
        %1291 = vmatpush1.msra.mxu0 %v1128
        %1292 = vmatprep.subr.mxu0 %v1133
        %1293 = vmatpush1.msra.mxu0 %v1132
        %1294 = vmatprep.subr.mxu0 %v1137
        %1295 = vmatpush1.msra.mxu0 %v1136
        %1296 = vmatprep.mubr.f32.mxu0 %v1009
        %1297 = vmatmul.mubr.f32.gmra.mrb[0].mxu0 %v1005
        %v1298 = vpop.f32.mrb[0].mxu0
        %v1299 = vadd.f32 %v1152, %v1298
        %v1300 = vpop.f32.mrb[0].mxu0
        %v1301 = vadd.f32 %v1156, %v1300
        %1302 = vdwg.mxu0
        %s1303 = scalar_lea.vmem [#allocation3], 8
        %v1304 = vld [vmem:[%s1303] sm:$0xff]
        %v1305 = vxor.u32 %v1228, 2147483648
        %v1306 = vxor.u32 %v1230, 2147483648
        %v1307 = vxor.u32 %v1299, 2147483648
        %v1308 = vmul.f32 %v1305, 1.442695
        %v1309 = vpow.pop %v1308
        %v1310 = vmul.f32 %v1306, 1.442695
        %v1311 = vpow.pop %v1310
        %v1312 = vmul.f32 %v1307, 1.442695
        %v1313 = vpow.pop %v1312
        %v1314 = vadd.f32 %v1309, 1.0
        %v1315 = vadd.f32 %v1311, 1.0
        %v1316 = vadd.f32 %v1313, 1.0
        %v1317 = vrcp.pop %v1314
        %v1318 = vmul.f32 1.0, %v1317
        %v1319 = vrcp.pop %v1315
        %v1320 = vmul.f32 1.0, %v1319
        %v1321 = vrcp.pop %v1316
        %v1322 = vmul.f32 1.0, %v1321
        %v1323 = vtanh.pop %v1301
        %v1324 = vmul.f32 %v1320, %v1304
        %v1325 = vmul.f32 %v1318, %v1323
        %v1326 = vadd.f32 %v1324, %v1325
        %v1327 = vtanh.pop %v1326
        %v1328 = vmul.f32 %v1322, %v1327
        %1329 = vst [vmem:[%s1008] sm:$0xff] %v1328
        %1330 = vst [vmem:[%s1303] sm:$0xff] %v1326
      $region104: #{kart_model8_forward.3} parent=95 // pred_fallthru
        _
      %p1331 = scmp.lt.s32.totalorder %s35, 4
      // Predicated region
      $region105: #{kart_model8_forward.3} parent=95 // pred_check
        %p1332 = pneg %p1331
      $region106: #{kart_model8_forward.3} parent=95 // pred_check_branch
        %1334 = sbr.rel (%p1332) target = $region108
      $region107: #{kart_model8_forward.3} parent=95 // pred_region
        %v1335 = vld [vmem:[%s715] sm:$0xff]
        %v1336 = vld [vmem:[%s2] sm:$0xff]
        %v1337 = vld [vmem:[%s2 + $0x8] sm:$0xff]
        %v1338 = vld [vmem:[%s2 + $0x10] sm:$0xff]
        %v1339 = vld [vmem:[%s2 + $0x18] sm:$0xff]
        %v1340 = vld [vmem:[#allocation4] sm:$0xff]
        %v1341 = vld [vmem:[%s6] sm:$0xff]
        %v1342 = vld [vmem:[%s6 + $0x8] sm:$0xff]
        %v1343 = vld [vmem:[%s6 + $0x10] sm:$0xff]
        %v1344 = vld [vmem:[%s6 + $0x18] sm:$0xff]
        %v1345 = vld [vmem:[%s6 + $0x20] sm:$0xff]
        %v1346 = vld [vmem:[%s6 + $0x28] sm:$0xff]
        %v1347 = vld [vmem:[%s6 + $0x30] sm:$0xff]
        %v1348 = vld [vmem:[%s6 + $0x38] sm:$0xff]
        %v1349 = vld [vmem:[%s6 + $0x40] sm:$0xff]
        %v1350 = vld [vmem:[%s6 + $0x48] sm:$0xff]
        %v1351 = vld [vmem:[%s6 + $0x50] sm:$0xff]
        %v1352 = vld [vmem:[%s6 + $0x58] sm:$0xff]
        %v1353 = vld [vmem:[%s6 + $0x60] sm:$0xff]
        %v1354 = vld [vmem:[%s6 + $0x68] sm:$0xff]
        %v1355 = vld [vmem:[%s6 + $0x70] sm:$0xff]
        %v1356 = vld [vmem:[%s6 + $0x78] sm:$0xff]
        %v1357 = vld [vmem:[%s6 + $0x80] sm:$0xff]
        %v1358 = vld [vmem:[%s6 + $0x88] sm:$0xff]
        %v1359 = vld [vmem:[%s6 + $0x90] sm:$0xff]
        %v1360 = vld [vmem:[%s6 + $0x98] sm:$0xff]
        %v1361 = vld [vmem:[%s6 + $0xa0] sm:$0xff]
        %v1362 = vld [vmem:[%s6 + $0xa8] sm:$0xff]
        %v1363 = vld [vmem:[%s6 + $0xb0] sm:$0xff]
        %v1364 = vld [vmem:[%s6 + $0xb8] sm:$0xff]
        %v1365 = vld [vmem:[%s6 + $0xc0] sm:$0xff]
        %v1366 = vld [vmem:[%s6 + $0xc8] sm:$0xff]
        %v1367 = vld [vmem:[%s6 + $0xd0] sm:$0xff]
        %v1368 = vld [vmem:[%s6 + $0xd8] sm:$0xff]
        %v1369 = vld [vmem:[%s6 + $0xe0] sm:$0xff]
        %v1370 = vld [vmem:[%s6 + $0xe8] sm:$0xff]
        %v1371 = vld [vmem:[%s6 + $0xf0] sm:$0xff]
        %v1372 = vld [vmem:[%s6 + $0xf8] sm:$0xff]
        %v1373 = vld [vmem:[%s6 + $0x100] sm:$0xff]
        %v1374 = vld [vmem:[%s6 + $0x108] sm:$0xff]
        %v1375 = vld [vmem:[%s6 + $0x110] sm:$0xff]
        %v1376 = vld [vmem:[%s6 + $0x118] sm:$0xff]
        %v1377 = vld [vmem:[%s6 + $0x120] sm:$0xff]
        %v1378 = vld [vmem:[%s6 + $0x128] sm:$0xff]
        %v1379 = vld [vmem:[%s6 + $0x130] sm:$0xff]
        %v1380 = vld [vmem:[%s6 + $0x138] sm:$0xff]
        %v1381 = vld [vmem:[%s6 + $0x140] sm:$0xff]
        %v1382 = vld [vmem:[%s6 + $0x148] sm:$0xff]
        %v1383 = vld [vmem:[%s6 + $0x150] sm:$0xff]
        %v1384 = vld [vmem:[%s6 + $0x158] sm:$0xff]
        %v1385 = vld [vmem:[%s6 + $0x160] sm:$0xff]
        %v1386 = vld [vmem:[%s6 + $0x168] sm:$0xff]
        %v1387 = vld [vmem:[%s6 + $0x170] sm:$0xff]
        %v1388 = vld [vmem:[%s6 + $0x178] sm:$0xff]
        %v1389 = vld [vmem:[%s6 + $0x180] sm:$0xff]
        %v1390 = vld [vmem:[%s6 + $0x188] sm:$0xff]
        %v1391 = vld [vmem:[%s6 + $0x190] sm:$0xff]
        %v1392 = vld [vmem:[%s6 + $0x198] sm:$0xff]
        %v1393 = vld [vmem:[%s6 + $0x1a0] sm:$0xff]
        %v1394 = vld [vmem:[%s6 + $0x1a8] sm:$0xff]
        %v1395 = vld [vmem:[%s6 + $0x1b0] sm:$0xff]
        %v1396 = vld [vmem:[%s6 + $0x1b8] sm:$0xff]
        %v1397 = vld [vmem:[%s6 + $0x1c0] sm:$0xff]
        %v1398 = vld [vmem:[%s6 + $0x1c8] sm:$0xff]
        %v1399 = vld [vmem:[%s6 + $0x1d0] sm:$0xff]
        %v1400 = vld [vmem:[%s6 + $0x1d8] sm:$0xff]
        %v1401 = vld [vmem:[%s6 + $0x1e0] sm:$0xff]
        %v1402 = vld [vmem:[%s6 + $0x1e8] sm:$0xff]
        %v1403 = vld [vmem:[%s6 + $0x1f0] sm:$0xff]
        %v1404 = vld [vmem:[%s6 + $0x1f8] sm:$0xff]
        %1405 = vmatprep.subr.mxu0 %v1342
        %1406 = vmatpush1.msra.mxu0 %v1341
        %1407 = vmatprep.subr.mxu0 %v1346
        %1408 = vmatpush1.msra.mxu0 %v1345
        %1409 = vmatprep.subr.mxu0 %v1350
        %1410 = vmatpush1.msra.mxu0 %v1349
        %1411 = vmatprep.subr.mxu0 %v1354
        %1412 = vmatpush1.msra.mxu0 %v1353
        %1413 = vmatprep.subr.mxu0 %v1358
        %1414 = vmatpush1.msra.mxu0 %v1357
        %1415 = vmatprep.subr.mxu0 %v1362
        %1416 = vmatpush1.msra.mxu0 %v1361
        %1417 = vmatprep.subr.mxu0 %v1366
        %1418 = vmatpush1.msra.mxu0 %v1365
        %1419 = vmatprep.subr.mxu0 %v1370
        %1420 = vmatpush1.msra.mxu0 %v1369
        %1421 = vmatprep.subr.mxu0 %v1374
        %1422 = vmatpush1.msra.mxu0 %v1373
        %1423 = vmatprep.subr.mxu0 %v1378
        %1424 = vmatpush1.msra.mxu0 %v1377
        %1425 = vmatprep.subr.mxu0 %v1382
        %1426 = vmatpush1.msra.mxu0 %v1381
        %1427 = vmatprep.subr.mxu0 %v1386
        %1428 = vmatpush1.msra.mxu0 %v1385
        %1429 = vmatprep.subr.mxu0 %v1390
        %1430 = vmatpush1.msra.mxu0 %v1389
        %1431 = vmatprep.subr.mxu0 %v1394
        %1432 = vmatpush1.msra.mxu0 %v1393
        %1433 = vmatprep.subr.mxu0 %v1398
        %1434 = vmatpush1.msra.mxu0 %v1397
        %1435 = vmatprep.subr.mxu0 %v1402
        %1436 = vmatpush1.msra.mxu0 %v1401
        %1437 = vmatprep.subr.mxu0 0.0
        %1438 = vmatpush1.msra.mxu0 0.0
        %1439 = vmatprep.subr.mxu0 0.0
        %1440 = vmatpush1.msra.mxu0 0.0
        %1441 = vmatprep.subr.mxu0 0.0
        %1442 = vmatpush1.msra.mxu0 0.0
        %1443 = vmatprep.subr.mxu0 0.0
        %1444 = vmatpush1.msra.mxu0 0.0
        %1445 = vmatprep.subr.mxu0 0.0
        %1446 = vmatpush1.msra.mxu0 0.0
        %1447 = vmatprep.subr.mxu0 0.0
        %1448 = vmatpush1.msra.mxu0 0.0
        %1449 = vmatprep.subr.mxu0 0.0
        %1450 = vmatpush1.msra.mxu0 0.0
        %1451 = vmatprep.subr.mxu0 0.0
        %1452 = vmatpush1.msra.mxu0 0.0
        %1453 = vmatprep.subr.mxu0 0.0
        %1454 = vmatpush1.msra.mxu0 0.0
        %1455 = vmatprep.subr.mxu0 0.0
        %1456 = vmatpush1.msra.mxu0 0.0
        %1457 = vmatprep.subr.mxu0 0.0
        %1458 = vmatpush1.msra.mxu0 0.0
        %1459 = vmatprep.subr.mxu0 0.0
        %1460 = vmatpush1.msra.mxu0 0.0
        %1461 = vmatprep.subr.mxu0 0.0
        %1462 = vmatpush1.msra.mxu0 0.0
        %1463 = vmatprep.subr.mxu0 0.0
        %1464 = vmatpush1.msra.mxu0 0.0
        %1465 = vmatprep.subr.mxu0 0.0
        %1466 = vmatpush1.msra.mxu0 0.0
        %1467 = vmatprep.subr.mxu0 0.0
        %1468 = vmatpush1.msra.mxu0 0.0
        %1469 = vmatprep.mubr.f32.mxu0 0.0
        %1470 = vmatmul.mubr.f32.gmra.mrb[0].mxu0 %v1340
        %v1471 = vpop.f32.mrb[0].mxu0
        %v1472 = vadd.f32 0.0, %v1471
        %v1473 = vpop.f32.mrb[0].mxu0
        %v1474 = vadd.f32 0.0, %v1473
        %1475 = vdwg.mxu0
        %1476 = vmatprep.subr.mxu0 %v1344
        %1477 = vmatpush1.msra.mxu0 %v1343
        %1478 = vmatprep.subr.mxu0 %v1348
        %1479 = vmatpush1.msra.mxu0 %v1347
        %1480 = vmatprep.subr.mxu0 %v1352
        %1481 = vmatpush1.msra.mxu0 %v1351
        %1482 = vmatprep.subr.mxu0 %v1356
        %1483 = vmatpush1.msra.mxu0 %v1355
        %1484 = vmatprep.subr.mxu0 %v1360
        %1485 = vmatpush1.msra.mxu0 %v1359
        %1486 = vmatprep.subr.mxu0 %v1364
        %1487 = vmatpush1.msra.mxu0 %v1363
        %1488 = vmatprep.subr.mxu0 %v1368
        %1489 = vmatpush1.msra.mxu0 %v1367
        %1490 = vmatprep.subr.mxu0 %v1372
        %1491 = vmatpush1.msra.mxu0 %v1371
        %1492 = vmatprep.subr.mxu0 %v1376
        %1493 = vmatpush1.msra.mxu0 %v1375
        %1494 = vmatprep.subr.mxu0 %v1380
        %1495 = vmatpush1.msra.mxu0 %v1379
        %1496 = vmatprep.subr.mxu0 %v1384
        %1497 = vmatpush1.msra.mxu0 %v1383
        %1498 = vmatprep.subr.mxu0 %v1388
        %1499 = vmatpush1.msra.mxu0 %v1387
        %1500 = vmatprep.subr.mxu0 %v1392
        %1501 = vmatpush1.msra.mxu0 %v1391
        %1502 = vmatprep.subr.mxu0 %v1396
        %1503 = vmatpush1.msra.mxu0 %v1395
        %1504 = vmatprep.subr.mxu0 %v1400
        %1505 = vmatpush1.msra.mxu0 %v1399
        %1506 = vmatprep.subr.mxu0 %v1404
        %1507 = vmatpush1.msra.mxu0 %v1403
        %1508 = vmatprep.subr.mxu0 0.0
        %1509 = vmatpush1.msra.mxu0 0.0
        %1510 = vmatprep.subr.mxu0 0.0
        %1511 = vmatpush1.msra.mxu0 0.0
        %1512 = vmatprep.subr.mxu0 0.0
        %1513 = vmatpush1.msra.mxu0 0.0
        %1514 = vmatprep.subr.mxu0 0.0
        %1515 = vmatpush1.msra.mxu0 0.0
        %1516 = vmatprep.subr.mxu0 0.0
        %1517 = vmatpush1.msra.mxu0 0.0
        %1518 = vmatprep.subr.mxu0 0.0
        %1519 = vmatpush1.msra.mxu0 0.0
        %1520 = vmatprep.subr.mxu0 0.0
        %1521 = vmatpush1.msra.mxu0 0.0
        %1522 = vmatprep.subr.mxu0 0.0
        %1523 = vmatpush1.msra.mxu0 0.0
        %1524 = vmatprep.subr.mxu0 0.0
        %1525 = vmatpush1.msra.mxu0 0.0
        %1526 = vmatprep.subr.mxu0 0.0
        %1527 = vmatpush1.msra.mxu0 0.0
        %1528 = vmatprep.subr.mxu0 0.0
        %1529 = vmatpush1.msra.mxu0 0.0
        %1530 = vmatprep.subr.mxu0 0.0
        %1531 = vmatpush1.msra.mxu0 0.0
        %1532 = vmatprep.subr.mxu0 0.0
        %1533 = vmatpush1.msra.mxu0 0.0
        %1534 = vmatprep.subr.mxu0 0.0
        %1535 = vmatpush1.msra.mxu0 0.0
        %1536 = vmatprep.subr.mxu0 0.0
        %1537 = vmatpush1.msra.mxu0 0.0
        %1538 = vmatprep.subr.mxu0 0.0
        %1539 = vmatpush1.msra.mxu0 0.0
        %1540 = vmatprep.mubr.f32.mxu0 0.0
        %1541 = vmatmul.mubr.f32.gmra.mrb[0].mxu0 %v1340
        %v1542 = vpop.f32.mrb[0].mxu0
        %v1543 = vadd.f32 0.0, %v1542
        %v1544 = vpop.f32.mrb[0].mxu0
        %v1545 = vadd.f32 0.0, %v1544
        %1546 = vdwg.mxu0
        %vm1547 = vcmask 64512
        %v1549 = vsel %vm1547, %v1335, 0
        %1551 = vmatprep.subr.mxu0 %v1337
        %1552 = vmatpush1.msra.mxu0 %v1336
        %1553 = vmatprep.subr.mxu0 0.0
        %1554 = vmatpush1.msra.mxu0 0.0
        %1555 = vmatprep.subr.mxu0 0.0
        %1556 = vmatpush1.msra.mxu0 0.0
        %1557 = vmatprep.subr.mxu0 0.0
        %1558 = vmatpush1.msra.mxu0 0.0
        %1559 = vmatprep.subr.mxu0 0.0
        %1560 = vmatpush1.msra.mxu0 0.0
        %1561 = vmatprep.subr.mxu0 0.0
        %1562 = vmatpush1.msra.mxu0 0.0
        %1563 = vmatprep.subr.mxu0 0.0
        %1564 = vmatpush1.msra.mxu0 0.0
        %1565 = vmatprep.subr.mxu0 0.0
        %1566 = vmatpush1.msra.mxu0 0.0
        %1567 = vmatprep.subr.mxu0 0.0
        %1568 = vmatpush1.msra.mxu0 0.0
        %1569 = vmatprep.subr.mxu0 0.0
        %1570 = vmatpush1.msra.mxu0 0.0
        %1571 = vmatprep.subr.mxu0 0.0
        %1572 = vmatpush1.msra.mxu0 0.0
        %1573 = vmatprep.subr.mxu0 0.0
        %1574 = vmatpush1.msra.mxu0 0.0
        %1575 = vmatprep.subr.mxu0 0.0
        %1576 = vmatpush1.msra.mxu0 0.0
        %1577 = vmatprep.subr.mxu0 0.0
        %1578 = vmatpush1.msra.mxu0 0.0
        %1579 = vmatprep.subr.mxu0 0.0
        %1580 = vmatpush1.msra.mxu0 0.0
        %1581 = vmatprep.subr.mxu0 0.0
        %1582 = vmatpush1.msra.mxu0 0.0
        %1583 = vmatprep.subr.mxu0 0.0
        %1584 = vmatpush1.msra.mxu0 0.0
        %1585 = vmatprep.subr.mxu0 0.0
        %1586 = vmatpush1.msra.mxu0 0.0
        %1587 = vmatprep.subr.mxu0 0.0
        %1588 = vmatpush1.msra.mxu0 0.0
        %1589 = vmatprep.subr.mxu0 0.0
        %1590 = vmatpush1.msra.mxu0 0.0
        %1591 = vmatprep.subr.mxu0 0.0
        %1592 = vmatpush1.msra.mxu0 0.0
        %1593 = vmatprep.subr.mxu0 0.0
        %1594 = vmatpush1.msra.mxu0 0.0
        %1595 = vmatprep.subr.mxu0 0.0
        %1596 = vmatpush1.msra.mxu0 0.0
        %1597 = vmatprep.subr.mxu0 0.0
        %1598 = vmatpush1.msra.mxu0 0.0
        %1599 = vmatprep.subr.mxu0 0.0
        %1600 = vmatpush1.msra.mxu0 0.0
        %1601 = vmatprep.subr.mxu0 0.0
        %1602 = vmatpush1.msra.mxu0 0.0
        %1603 = vmatprep.subr.mxu0 0.0
        %1604 = vmatpush1.msra.mxu0 0.0
        %1605 = vmatprep.subr.mxu0 0.0
        %1606 = vmatpush1.msra.mxu0 0.0
        %1607 = vmatprep.subr.mxu0 0.0
        %1608 = vmatpush1.msra.mxu0 0.0
        %1609 = vmatprep.subr.mxu0 0.0
        %1610 = vmatpush1.msra.mxu0 0.0
        %1611 = vmatprep.subr.mxu0 0.0
        %1612 = vmatpush1.msra.mxu0 0.0
        %1613 = vmatprep.subr.mxu0 0.0
        %1614 = vmatpush1.msra.mxu0 0.0
        %1615 = vmatprep.mubr.f32.mxu0 0.0
        %1616 = vmatmul.mubr.f32.gmra.mrb[0].mxu0 %v1549
        %v1617 = vpop.f32.mrb[0].mxu0
        %v1618 = vadd.f32 %v1472, %v1617
        %v1619 = vpop.f32.mrb[0].mxu0
        %v1620 = vadd.f32 %v1474, %v1619
        %1621 = vdwg.mxu0
        %1622 = vmatprep.subr.mxu0 %v1339
        %1623 = vmatpush1.msra.mxu0 %v1338
        %1624 = vmatprep.subr.mxu0 0.0
        %1625 = vmatpush1.msra.mxu0 0.0
        %1626 = vmatprep.subr.mxu0 0.0
        %1627 = vmatpush1.msra.mxu0 0.0
        %1628 = vmatprep.subr.mxu0 0.0
        %1629 = vmatpush1.msra.mxu0 0.0
        %1630 = vmatprep.subr.mxu0 0.0
        %1631 = vmatpush1.msra.mxu0 0.0
        %1632 = vmatprep.subr.mxu0 0.0
        %1633 = vmatpush1.msra.mxu0 0.0
        %1634 = vmatprep.subr.mxu0 0.0
        %1635 = vmatpush1.msra.mxu0 0.0
        %1636 = vmatprep.subr.mxu0 0.0
        %1637 = vmatpush1.msra.mxu0 0.0
        %1638 = vmatprep.subr.mxu0 0.0
        %1639 = vmatpush1.msra.mxu0 0.0
        %1640 = vmatprep.subr.mxu0 0.0
        %1641 = vmatpush1.msra.mxu0 0.0
        %1642 = vmatprep.subr.mxu0 0.0
        %1643 = vmatpush1.msra.mxu0 0.0
        %1644 = vmatprep.subr.mxu0 0.0
        %1645 = vmatpush1.msra.mxu0 0.0
        %1646 = vmatprep.subr.mxu0 0.0
        %1647 = vmatpush1.msra.mxu0 0.0
        %1648 = vmatprep.subr.mxu0 0.0
        %1649 = vmatpush1.msra.mxu0 0.0
        %1650 = vmatprep.subr.mxu0 0.0
        %1651 = vmatpush1.msra.mxu0 0.0
        %1652 = vmatprep.subr.mxu0 0.0
        %1653 = vmatpush1.msra.mxu0 0.0
        %1654 = vmatprep.subr.mxu0 0.0
        %1655 = vmatpush1.msra.mxu0 0.0
        %1656 = vmatprep.subr.mxu0 0.0
        %1657 = vmatpush1.msra.mxu0 0.0
        %1658 = vmatprep.subr.mxu0 0.0
        %1659 = vmatpush1.msra.mxu0 0.0
        %1660 = vmatprep.subr.mxu0 0.0
        %1661 = vmatpush1.msra.mxu0 0.0
        %1662 = vmatprep.subr.mxu0 0.0
        %1663 = vmatpush1.msra.mxu0 0.0
        %1664 = vmatprep.subr.mxu0 0.0
        %1665 = vmatpush1.msra.mxu0 0.0
        %1666 = vmatprep.subr.mxu0 0.0
        %1667 = vmatpush1.msra.mxu0 0.0
        %1668 = vmatprep.subr.mxu0 0.0
        %1669 = vmatpush1.msra.mxu0 0.0
        %1670 = vmatprep.subr.mxu0 0.0
        %1671 = vmatpush1.msra.mxu0 0.0
        %1672 = vmatprep.subr.mxu0 0.0
        %1673 = vmatpush1.msra.mxu0 0.0
        %1674 = vmatprep.subr.mxu0 0.0
        %1675 = vmatpush1.msra.mxu0 0.0
        %1676 = vmatprep.subr.mxu0 0.0
        %1677 = vmatpush1.msra.mxu0 0.0
        %1678 = vmatprep.subr.mxu0 0.0
        %1679 = vmatpush1.msra.mxu0 0.0
        %1680 = vmatprep.subr.mxu0 0.0
        %1681 = vmatpush1.msra.mxu0 0.0
        %1682 = vmatprep.subr.mxu0 0.0
        %1683 = vmatpush1.msra.mxu0 0.0
        %1684 = vmatprep.subr.mxu0 0.0
        %1685 = vmatpush1.msra.mxu0 0.0
        %1686 = vmatprep.mubr.f32.mxu0 0.0
        %1687 = vmatmul.mubr.f32.gmra.mrb[0].mxu0 %v1549
        %v1688 = vpop.f32.mrb[0].mxu0
        %v1689 = vadd.f32 %v1543, %v1688
        %v1690 = vpop.f32.mrb[0].mxu0
        %v1691 = vadd.f32 %v1545, %v1690
        %1692 = vdwg.mxu0
        %v1693 = vld [vmem:[%s8] sm:$0xf]
        %v1695 = vlaneseq
        %v1696 = vshrl.u32 %v1695, 7
        %v1697 = vsub.s32 0, %v1696
        %v1698 = vrot.slane %v1693, %v1697
        %v1699 = vlaneseq
        %v1700 = vshrl.u32 %v1699, 7
        %v1701 = vsub.s32 1, %v1700
        %v1702 = vrot.slane %v1693, %v1701
        %v1703 = vlaneseq
        %v1704 = vshrl.u32 %v1703, 7
        %v1705 = vsub.s32 2, %v1704
        %v1706 = vrot.slane %v1693, %v1705
        %v1707 = vlaneseq
        %v1708 = vshrl.u32 %v1707, 7
        %v1709 = vsub.s32 3, %v1708
        %v1710 = vrot.slane %v1693, %v1709
        %v1715 = vadd.f32 %v1618, %v1698
        %v1716 = vadd.f32 %v1620, %v1702
        %v1717 = vadd.f32 %v1689, %v1706
        %v1718 = vadd.f32 %v1691, %v1710
        %v1719 = vld [vmem:[#allocation5] sm:$0xff]
        %v1720 = vxor.u32 %v1715, 2147483648
        %v1721 = vxor.u32 %v1716, 2147483648
        %v1722 = vxor.u32 %v1717, 2147483648
        %v1723 = vmul.f32 %v1720, 1.442695
        %v1724 = vpow.pop %v1723
        %v1725 = vmul.f32 %v1721, 1.442695
        %v1726 = vpow.pop %v1725
        %v1727 = vmul.f32 %v1722, 1.442695
        %v1728 = vpow.pop %v1727
        %v1729 = vadd.f32 %v1724, 1.0
        %v1730 = vadd.f32 %v1726, 1.0
        %v1731 = vadd.f32 %v1728, 1.0
        %v1732 = vrcp.pop %v1729
        %v1733 = vmul.f32 1.0, %v1732
        %v1734 = vrcp.pop %v1730
        %v1735 = vmul.f32 1.0, %v1734
        %v1736 = vrcp.pop %v1731
        %v1737 = vmul.f32 1.0, %v1736
        %v1738 = vtanh.pop %v1718
        %v1739 = vmul.f32 %v1735, %v1719
        %v1740 = vmul.f32 %v1733, %v1738
        %v1741 = vadd.f32 %v1739, %v1740
        %v1742 = vtanh.pop %v1741
        %v1743 = vmul.f32 %v1737, %v1742
        %1744 = vst [vmem:[#allocation4] sm:$0xff] %v1743
        %1745 = vst [vmem:[#allocation5] sm:$0xff] %v1741
        %s1746 = scalar_lea.vmem [#allocation4], 8
        %v1747 = vld [vmem:[%s1746] sm:$0xff]
        %v1748 = vld [vmem:[%s7] sm:$0xff]
        %v1749 = vld [vmem:[%s7 + $0x8] sm:$0xff]
        %v1750 = vld [vmem:[%s7 + $0x10] sm:$0xff]
        %v1751 = vld [vmem:[%s7 + $0x18] sm:$0xff]
        %v1752 = vld [vmem:[%s7 + $0x20] sm:$0xff]
        %v1753 = vld [vmem:[%s7 + $0x28] sm:$0xff]
        %v1754 = vld [vmem:[%s7 + $0x30] sm:$0xff]
        %v1755 = vld [vmem:[%s7 + $0x38] sm:$0xff]
        %v1756 = vld [vmem:[%s7 + $0x40] sm:$0xff]
        %v1757 = vld [vmem:[%s7 + $0x48] sm:$0xff]
        %v1758 = vld [vmem:[%s7 + $0x50] sm:$0xff]
        %v1759 = vld [vmem:[%s7 + $0x58] sm:$0xff]
        %v1760 = vld [vmem:[%s7 + $0x60] sm:$0xff]
        %v1761 = vld [vmem:[%s7 + $0x68] sm:$0xff]
        %v1762 = vld [vmem:[%s7 + $0x70] sm:$0xff]
        %v1763 = vld [vmem:[%s7 + $0x78] sm:$0xff]
        %v1764 = vld [vmem:[%s7 + $0x80] sm:$0xff]
        %v1765 = vld [vmem:[%s7 + $0x88] sm:$0xff]
        %v1766 = vld [vmem:[%s7 + $0x90] sm:$0xff]
        %v1767 = vld [vmem:[%s7 + $0x98] sm:$0xff]
        %v1768 = vld [vmem:[%s7 + $0xa0] sm:$0xff]
        %v1769 = vld [vmem:[%s7 + $0xa8] sm:$0xff]
        %v1770 = vld [vmem:[%s7 + $0xb0] sm:$0xff]
        %v1771 = vld [vmem:[%s7 + $0xb8] sm:$0xff]
        %v1772 = vld [vmem:[%s7 + $0xc0] sm:$0xff]
        %v1773 = vld [vmem:[%s7 + $0xc8] sm:$0xff]
        %v1774 = vld [vmem:[%s7 + $0xd0] sm:$0xff]
        %v1775 = vld [vmem:[%s7 + $0xd8] sm:$0xff]
        %v1776 = vld [vmem:[%s7 + $0xe0] sm:$0xff]
        %v1777 = vld [vmem:[%s7 + $0xe8] sm:$0xff]
        %v1778 = vld [vmem:[%s7 + $0xf0] sm:$0xff]
        %v1779 = vld [vmem:[%s7 + $0xf8] sm:$0xff]
        %v1780 = vld [vmem:[%s7 + $0x100] sm:$0xff]
        %v1781 = vld [vmem:[%s7 + $0x108] sm:$0xff]
        %v1782 = vld [vmem:[%s7 + $0x110] sm:$0xff]
        %v1783 = vld [vmem:[%s7 + $0x118] sm:$0xff]
        %v1784 = vld [vmem:[%s7 + $0x120] sm:$0xff]
        %v1785 = vld [vmem:[%s7 + $0x128] sm:$0xff]
        %v1786 = vld [vmem:[%s7 + $0x130] sm:$0xff]
        %v1787 = vld [vmem:[%s7 + $0x138] sm:$0xff]
        %v1788 = vld [vmem:[%s7 + $0x140] sm:$0xff]
        %v1789 = vld [vmem:[%s7 + $0x148] sm:$0xff]
        %v1790 = vld [vmem:[%s7 + $0x150] sm:$0xff]
        %v1791 = vld [vmem:[%s7 + $0x158] sm:$0xff]
        %v1792 = vld [vmem:[%s7 + $0x160] sm:$0xff]
        %v1793 = vld [vmem:[%s7 + $0x168] sm:$0xff]
        %v1794 = vld [vmem:[%s7 + $0x170] sm:$0xff]
        %v1795 = vld [vmem:[%s7 + $0x178] sm:$0xff]
        %v1796 = vld [vmem:[%s7 + $0x180] sm:$0xff]
        %v1797 = vld [vmem:[%s7 + $0x188] sm:$0xff]
        %v1798 = vld [vmem:[%s7 + $0x190] sm:$0xff]
        %v1799 = vld [vmem:[%s7 + $0x198] sm:$0xff]
        %v1800 = vld [vmem:[%s7 + $0x1a0] sm:$0xff]
        %v1801 = vld [vmem:[%s7 + $0x1a8] sm:$0xff]
        %v1802 = vld [vmem:[%s7 + $0x1b0] sm:$0xff]
        %v1803 = vld [vmem:[%s7 + $0x1b8] sm:$0xff]
        %v1804 = vld [vmem:[%s7 + $0x1c0] sm:$0xff]
        %v1805 = vld [vmem:[%s7 + $0x1c8] sm:$0xff]
        %v1806 = vld [vmem:[%s7 + $0x1d0] sm:$0xff]
        %v1807 = vld [vmem:[%s7 + $0x1d8] sm:$0xff]
        %v1808 = vld [vmem:[%s7 + $0x1e0] sm:$0xff]
        %v1809 = vld [vmem:[%s7 + $0x1e8] sm:$0xff]
        %v1810 = vld [vmem:[%s7 + $0x1f0] sm:$0xff]
        %v1811 = vld [vmem:[%s7 + $0x1f8] sm:$0xff]
        %v1812 = vld [vmem:[%s7 + $0x200] sm:$0xff]
        %v1813 = vld [vmem:[%s7 + $0x208] sm:$0xff]
        %v1814 = vld [vmem:[%s7 + $0x210] sm:$0xff]
        %v1815 = vld [vmem:[%s7 + $0x218] sm:$0xff]
        %v1816 = vld [vmem:[%s7 + $0x220] sm:$0xff]
        %v1817 = vld [vmem:[%s7 + $0x228] sm:$0xff]
        %v1818 = vld [vmem:[%s7 + $0x230] sm:$0xff]
        %v1819 = vld [vmem:[%s7 + $0x238] sm:$0xff]
        %v1820 = vld [vmem:[%s7 + $0x240] sm:$0xff]
        %v1821 = vld [vmem:[%s7 + $0x248] sm:$0xff]
        %v1822 = vld [vmem:[%s7 + $0x250] sm:$0xff]
        %v1823 = vld [vmem:[%s7 + $0x258] sm:$0xff]
        %v1824 = vld [vmem:[%s7 + $0x260] sm:$0xff]
        %v1825 = vld [vmem:[%s7 + $0x268] sm:$0xff]
        %v1826 = vld [vmem:[%s7 + $0x270] sm:$0xff]
        %v1827 = vld [vmem:[%s7 + $0x278] sm:$0xff]
        %v1828 = vld [vmem:[%s7 + $0x280] sm:$0xff]
        %v1829 = vld [vmem:[%s7 + $0x288] sm:$0xff]
        %v1830 = vld [vmem:[%s7 + $0x290] sm:$0xff]
        %v1831 = vld [vmem:[%s7 + $0x298] sm:$0xff]
        %v1832 = vld [vmem:[%s7 + $0x2a0] sm:$0xff]
        %v1833 = vld [vmem:[%s7 + $0x2a8] sm:$0xff]
        %v1834 = vld [vmem:[%s7 + $0x2b0] sm:$0xff]
        %v1835 = vld [vmem:[%s7 + $0x2b8] sm:$0xff]
        %v1836 = vld [vmem:[%s7 + $0x2c0] sm:$0xff]
        %v1837 = vld [vmem:[%s7 + $0x2c8] sm:$0xff]
        %v1838 = vld [vmem:[%s7 + $0x2d0] sm:$0xff]
        %v1839 = vld [vmem:[%s7 + $0x2d8] sm:$0xff]
        %v1840 = vld [vmem:[%s7 + $0x2e0] sm:$0xff]
        %v1841 = vld [vmem:[%s7 + $0x2e8] sm:$0xff]
        %v1842 = vld [vmem:[%s7 + $0x2f0] sm:$0xff]
        %v1843 = vld [vmem:[%s7 + $0x2f8] sm:$0xff]
        %v1844 = vld [vmem:[%s7 + $0x300] sm:$0xff]
        %v1845 = vld [vmem:[%s7 + $0x308] sm:$0xff]
        %v1846 = vld [vmem:[%s7 + $0x310] sm:$0xff]
        %v1847 = vld [vmem:[%s7 + $0x318] sm:$0xff]
        %v1848 = vld [vmem:[%s7 + $0x320] sm:$0xff]
        %v1849 = vld [vmem:[%s7 + $0x328] sm:$0xff]
        %v1850 = vld [vmem:[%s7 + $0x330] sm:$0xff]
        %v1851 = vld [vmem:[%s7 + $0x338] sm:$0xff]
        %v1852 = vld [vmem:[%s7 + $0x340] sm:$0xff]
        %v1853 = vld [vmem:[%s7 + $0x348] sm:$0xff]
        %v1854 = vld [vmem:[%s7 + $0x350] sm:$0xff]
        %v1855 = vld [vmem:[%s7 + $0x358] sm:$0xff]
        %v1856 = vld [vmem:[%s7 + $0x360] sm:$0xff]
        %v1857 = vld [vmem:[%s7 + $0x368] sm:$0xff]
        %v1858 = vld [vmem:[%s7 + $0x370] sm:$0xff]
        %v1859 = vld [vmem:[%s7 + $0x378] sm:$0xff]
        %v1860 = vld [vmem:[%s7 + $0x380] sm:$0xff]
        %v1861 = vld [vmem:[%s7 + $0x388] sm:$0xff]
        %v1862 = vld [vmem:[%s7 + $0x390] sm:$0xff]
        %v1863 = vld [vmem:[%s7 + $0x398] sm:$0xff]
        %v1864 = vld [vmem:[%s7 + $0x3a0] sm:$0xff]
        %v1865 = vld [vmem:[%s7 + $0x3a8] sm:$0xff]
        %v1866 = vld [vmem:[%s7 + $0x3b0] sm:$0xff]
        %v1867 = vld [vmem:[%s7 + $0x3b8] sm:$0xff]
        %v1868 = vld [vmem:[%s7 + $0x3c0] sm:$0xff]
        %v1869 = vld [vmem:[%s7 + $0x3c8] sm:$0xff]
        %v1870 = vld [vmem:[%s7 + $0x3d0] sm:$0xff]
        %v1871 = vld [vmem:[%s7 + $0x3d8] sm:$0xff]
        %v1872 = vld [vmem:[%s7 + $0x3e0] sm:$0xff]
        %v1873 = vld [vmem:[%s7 + $0x3e8] sm:$0xff]
        %v1874 = vld [vmem:[%s7 + $0x3f0] sm:$0xff]
        %v1875 = vld [vmem:[%s7 + $0x3f8] sm:$0xff]
        %s1876 = scalar_lea.vmem %s8, 4
        %v1877 = vld [vmem:[%s1876] sm:$0xf]
        %v1879 = vlaneseq
        %v1880 = vshrl.u32 %v1879, 7
        %v1881 = vsub.s32 0, %v1880
        %v1882 = vrot.slane %v1877, %v1881
        %v1883 = vlaneseq
        %v1884 = vshrl.u32 %v1883, 7
        %v1885 = vsub.s32 1, %v1884
        %v1886 = vrot.slane %v1877, %v1885
        %v1887 = vlaneseq
        %v1888 = vshrl.u32 %v1887, 7
        %v1889 = vsub.s32 2, %v1888
        %v1890 = vrot.slane %v1877, %v1889
        %v1891 = vlaneseq
        %v1892 = vshrl.u32 %v1891, 7
        %v1893 = vsub.s32 3, %v1892
        %v1894 = vrot.slane %v1877, %v1893
        %1899 = vmatprep.subr.mxu0 %v1749
        %1900 = vmatpush1.msra.mxu0 %v1748
        %1901 = vmatprep.subr.mxu0 %v1753
        %1902 = vmatpush1.msra.mxu0 %v1752
        %1903 = vmatprep.subr.mxu0 %v1757
        %1904 = vmatpush1.msra.mxu0 %v1756
        %1905 = vmatprep.subr.mxu0 %v1761
        %1906 = vmatpush1.msra.mxu0 %v1760
        %1907 = vmatprep.subr.mxu0 %v1765
        %1908 = vmatpush1.msra.mxu0 %v1764
        %1909 = vmatprep.subr.mxu0 %v1769
        %1910 = vmatpush1.msra.mxu0 %v1768
        %1911 = vmatprep.subr.mxu0 %v1773
        %1912 = vmatpush1.msra.mxu0 %v1772
        %1913 = vmatprep.subr.mxu0 %v1777
        %1914 = vmatpush1.msra.mxu0 %v1776
        %1915 = vmatprep.subr.mxu0 %v1781
        %1916 = vmatpush1.msra.mxu0 %v1780
        %1917 = vmatprep.subr.mxu0 %v1785
        %1918 = vmatpush1.msra.mxu0 %v1784
        %1919 = vmatprep.subr.mxu0 %v1789
        %1920 = vmatpush1.msra.mxu0 %v1788
        %1921 = vmatprep.subr.mxu0 %v1793
        %1922 = vmatpush1.msra.mxu0 %v1792
        %1923 = vmatprep.subr.mxu0 %v1797
        %1924 = vmatpush1.msra.mxu0 %v1796
        %1925 = vmatprep.subr.mxu0 %v1801
        %1926 = vmatpush1.msra.mxu0 %v1800
        %1927 = vmatprep.subr.mxu0 %v1805
        %1928 = vmatpush1.msra.mxu0 %v1804
        %1929 = vmatprep.subr.mxu0 %v1809
        %1930 = vmatpush1.msra.mxu0 %v1808
        %1931 = vmatprep.subr.mxu0 %v1813
        %1932 = vmatpush1.msra.mxu0 %v1812
        %1933 = vmatprep.subr.mxu0 %v1817
        %1934 = vmatpush1.msra.mxu0 %v1816
        %1935 = vmatprep.subr.mxu0 %v1821
        %1936 = vmatpush1.msra.mxu0 %v1820
        %1937 = vmatprep.subr.mxu0 %v1825
        %1938 = vmatpush1.msra.mxu0 %v1824
        %1939 = vmatprep.subr.mxu0 %v1829
        %1940 = vmatpush1.msra.mxu0 %v1828
        %1941 = vmatprep.subr.mxu0 %v1833
        %1942 = vmatpush1.msra.mxu0 %v1832
        %1943 = vmatprep.subr.mxu0 %v1837
        %1944 = vmatpush1.msra.mxu0 %v1836
        %1945 = vmatprep.subr.mxu0 %v1841
        %1946 = vmatpush1.msra.mxu0 %v1840
        %1947 = vmatprep.subr.mxu0 %v1845
        %1948 = vmatpush1.msra.mxu0 %v1844
        %1949 = vmatprep.subr.mxu0 %v1849
        %1950 = vmatpush1.msra.mxu0 %v1848
        %1951 = vmatprep.subr.mxu0 %v1853
        %1952 = vmatpush1.msra.mxu0 %v1852
        %1953 = vmatprep.subr.mxu0 %v1857
        %1954 = vmatpush1.msra.mxu0 %v1856
        %1955 = vmatprep.subr.mxu0 %v1861
        %1956 = vmatpush1.msra.mxu0 %v1860
        %1957 = vmatprep.subr.mxu0 %v1865
        %1958 = vmatpush1.msra.mxu0 %v1864
        %1959 = vmatprep.subr.mxu0 %v1869
        %1960 = vmatpush1.msra.mxu0 %v1868
        %1961 = vmatprep.subr.mxu0 %v1873
        %1962 = vmatpush1.msra.mxu0 %v1872
        %1963 = vmatprep.mubr.f32.mxu0 %v1747
        %1964 = vmatmul.mubr.f32.gmra.mrb[0].mxu0 %v1743
        %v1965 = vpop.f32.mrb[0].mxu0
        %v1966 = vadd.f32 %v1882, %v1965
        %v1967 = vpop.f32.mrb[0].mxu0
        %v1968 = vadd.f32 %v1886, %v1967
        %1969 = vdwg.mxu0
        %1970 = vmatprep.subr.mxu0 %v1751
        %1971 = vmatpush1.msra.mxu0 %v1750
        %1972 = vmatprep.subr.mxu0 %v1755
        %1973 = vmatpush1.msra.mxu0 %v1754
        %1974 = vmatprep.subr.mxu0 %v1759
        %1975 = vmatpush1.msra.mxu0 %v1758
        %1976 = vmatprep.subr.mxu0 %v1763
        %1977 = vmatpush1.msra.mxu0 %v1762
        %1978 = vmatprep.subr.mxu0 %v1767
        %1979 = vmatpush1.msra.mxu0 %v1766
        %1980 = vmatprep.subr.mxu0 %v1771
        %1981 = vmatpush1.msra.mxu0 %v1770
        %1982 = vmatprep.subr.mxu0 %v1775
        %1983 = vmatpush1.msra.mxu0 %v1774
        %1984 = vmatprep.subr.mxu0 %v1779
        %1985 = vmatpush1.msra.mxu0 %v1778
        %1986 = vmatprep.subr.mxu0 %v1783
        %1987 = vmatpush1.msra.mxu0 %v1782
        %1988 = vmatprep.subr.mxu0 %v1787
        %1989 = vmatpush1.msra.mxu0 %v1786
        %1990 = vmatprep.subr.mxu0 %v1791
        %1991 = vmatpush1.msra.mxu0 %v1790
        %1992 = vmatprep.subr.mxu0 %v1795
        %1993 = vmatpush1.msra.mxu0 %v1794
        %1994 = vmatprep.subr.mxu0 %v1799
        %1995 = vmatpush1.msra.mxu0 %v1798
        %1996 = vmatprep.subr.mxu0 %v1803
        %1997 = vmatpush1.msra.mxu0 %v1802
        %1998 = vmatprep.subr.mxu0 %v1807
        %1999 = vmatpush1.msra.mxu0 %v1806
        %2000 = vmatprep.subr.mxu0 %v1811
        %2001 = vmatpush1.msra.mxu0 %v1810
        %2002 = vmatprep.subr.mxu0 %v1815
        %2003 = vmatpush1.msra.mxu0 %v1814
        %2004 = vmatprep.subr.mxu0 %v1819
        %2005 = vmatpush1.msra.mxu0 %v1818
        %2006 = vmatprep.subr.mxu0 %v1823
        %2007 = vmatpush1.msra.mxu0 %v1822
        %2008 = vmatprep.subr.mxu0 %v1827
        %2009 = vmatpush1.msra.mxu0 %v1826
        %2010 = vmatprep.subr.mxu0 %v1831
        %2011 = vmatpush1.msra.mxu0 %v1830
        %2012 = vmatprep.subr.mxu0 %v1835
        %2013 = vmatpush1.msra.mxu0 %v1834
        %2014 = vmatprep.subr.mxu0 %v1839
        %2015 = vmatpush1.msra.mxu0 %v1838
        %2016 = vmatprep.subr.mxu0 %v1843
        %2017 = vmatpush1.msra.mxu0 %v1842
        %2018 = vmatprep.subr.mxu0 %v1847
        %2019 = vmatpush1.msra.mxu0 %v1846
        %2020 = vmatprep.subr.mxu0 %v1851
        %2021 = vmatpush1.msra.mxu0 %v1850
        %2022 = vmatprep.subr.mxu0 %v1855
        %2023 = vmatpush1.msra.mxu0 %v1854
        %2024 = vmatprep.subr.mxu0 %v1859
        %2025 = vmatpush1.msra.mxu0 %v1858
        %2026 = vmatprep.subr.mxu0 %v1863
        %2027 = vmatpush1.msra.mxu0 %v1862
        %2028 = vmatprep.subr.mxu0 %v1867
        %2029 = vmatpush1.msra.mxu0 %v1866
        %2030 = vmatprep.subr.mxu0 %v1871
        %2031 = vmatpush1.msra.mxu0 %v1870
        %2032 = vmatprep.subr.mxu0 %v1875
        %2033 = vmatpush1.msra.mxu0 %v1874
        %2034 = vmatprep.mubr.f32.mxu0 %v1747
        %2035 = vmatmul.mubr.f32.gmra.mrb[0].mxu0 %v1743
        %v2036 = vpop.f32.mrb[0].mxu0
        %v2037 = vadd.f32 %v1890, %v2036
        %v2038 = vpop.f32.mrb[0].mxu0
        %v2039 = vadd.f32 %v1894, %v2038
        %2040 = vdwg.mxu0
        %s2041 = scalar_lea.vmem [#allocation5], 8
        %v2042 = vld [vmem:[%s2041] sm:$0xff]
        %v2043 = vxor.u32 %v1966, 2147483648
        %v2044 = vxor.u32 %v1968, 2147483648
        %v2045 = vxor.u32 %v2037, 2147483648
        %v2046 = vmul.f32 %v2043, 1.442695
        %v2047 = vpow.pop %v2046
        %v2048 = vmul.f32 %v2044, 1.442695
        %v2049 = vpow.pop %v2048
        %v2050 = vmul.f32 %v2045, 1.442695
        %v2051 = vpow.pop %v2050
        %v2052 = vadd.f32 %v2047, 1.0
        %v2053 = vadd.f32 %v2049, 1.0
        %v2054 = vadd.f32 %v2051, 1.0
        %v2055 = vrcp.pop %v2052
        %v2056 = vmul.f32 1.0, %v2055
        %v2057 = vrcp.pop %v2053
        %v2058 = vmul.f32 1.0, %v2057
        %v2059 = vrcp.pop %v2054
        %v2060 = vmul.f32 1.0, %v2059
        %v2061 = vtanh.pop %v2039
        %v2062 = vmul.f32 %v2058, %v2042
        %v2063 = vmul.f32 %v2056, %v2061
        %v2064 = vadd.f32 %v2062, %v2063
        %v2065 = vtanh.pop %v2064
        %v2066 = vmul.f32 %v2060, %v2065
        %2067 = vst [vmem:[%s1746] sm:$0xff] %v2066
        %2068 = vst [vmem:[%s2041] sm:$0xff] %v2064
      $region108: #{kart_model8_forward.3} parent=95 // pred_fallthru
        _
      %p2069 = scmp.eq.s32.totalorder %s35, 3
      // Predicated region
      $region109: #{kart_model8_forward.3} parent=95 // pred_check
        %p2070 = pneg %p2069
      $region110: #{kart_model8_forward.3} parent=95 // pred_check_branch
        %2072 = sbr.rel (%p2070) target = $region112
      $region111: #{kart_model8_forward.3} parent=95 // pred_region
        %s2073 = scalar_lea.vmem [#allocation2], 8
        %v2074 = vld [vmem:[%s2073] sm:$0xff]
        %s2075 = scalar_lea.vmem [#allocation4], 8
        %v2076 = vld [vmem:[%s2075] sm:$0xff]
        %v2077 = vld [vmem:[%s9] sm:$0xff]
        %v2078 = vld [vmem:[%s9 + $0x8] sm:$0xff]
        %v2079 = vld [vmem:[%s9 + $0x10] sm:$0xff]
        %v2080 = vld [vmem:[%s9 + $0x18] sm:$0xff]
        %v2081 = vld [vmem:[%s9 + $0x20] sm:$0xff]
        %v2082 = vld [vmem:[%s9 + $0x28] sm:$0xff]
        %v2083 = vld [vmem:[%s9 + $0x30] sm:$0xff]
        %v2084 = vld [vmem:[%s9 + $0x38] sm:$0xff]
        %v2085 = vld [vmem:[%s9 + $0x40] sm:$0xff]
        %v2086 = vld [vmem:[%s9 + $0x48] sm:$0xff]
        %v2087 = vld [vmem:[%s9 + $0x50] sm:$0xff]
        %v2088 = vld [vmem:[%s9 + $0x58] sm:$0xff]
        %v2089 = vld [vmem:[%s9 + $0x60] sm:$0xff]
        %v2090 = vld [vmem:[%s9 + $0x68] sm:$0xff]
        %v2091 = vld [vmem:[%s9 + $0x70] sm:$0xff]
        %v2092 = vld [vmem:[%s9 + $0x78] sm:$0xff]
        %v2093 = vld [vmem:[%s9 + $0x80] sm:$0xff]
        %v2094 = vld [vmem:[%s9 + $0x88] sm:$0xff]
        %v2095 = vld [vmem:[%s9 + $0x90] sm:$0xff]
        %v2096 = vld [vmem:[%s9 + $0x98] sm:$0xff]
        %v2097 = vld [vmem:[%s9 + $0xa0] sm:$0xff]
        %v2098 = vld [vmem:[%s9 + $0xa8] sm:$0xff]
        %v2099 = vld [vmem:[%s9 + $0xb0] sm:$0xff]
        %v2100 = vld [vmem:[%s9 + $0xb8] sm:$0xff]
        %v2101 = vld [vmem:[%s9 + $0xc0] sm:$0xff]
        %v2102 = vld [vmem:[%s9 + $0xc8] sm:$0xff]
        %v2103 = vld [vmem:[%s9 + $0xd0] sm:$0xff]
        %v2104 = vld [vmem:[%s9 + $0xd8] sm:$0xff]
        %v2105 = vld [vmem:[%s9 + $0xe0] sm:$0xff]
        %v2106 = vld [vmem:[%s9 + $0xe8] sm:$0xff]
        %v2107 = vld [vmem:[%s9 + $0xf0] sm:$0xff]
        %v2108 = vld [vmem:[%s9 + $0xf8] sm:$0xff]
        %v2109 = vld [vmem:[%s9 + $0x100] sm:$0xff]
        %v2110 = vld [vmem:[%s9 + $0x108] sm:$0xff]
        %v2111 = vld [vmem:[%s9 + $0x110] sm:$0xff]
        %v2112 = vld [vmem:[%s9 + $0x118] sm:$0xff]
        %v2113 = vld [vmem:[%s9 + $0x120] sm:$0xff]
        %v2114 = vld [vmem:[%s9 + $0x128] sm:$0xff]
        %v2115 = vld [vmem:[%s9 + $0x130] sm:$0xff]
        %v2116 = vld [vmem:[%s9 + $0x138] sm:$0xff]
        %v2117 = vld [vmem:[%s9 + $0x140] sm:$0xff]
        %v2118 = vld [vmem:[%s9 + $0x148] sm:$0xff]
        %v2119 = vld [vmem:[%s9 + $0x150] sm:$0xff]
        %v2120 = vld [vmem:[%s9 + $0x158] sm:$0xff]
        %v2121 = vld [vmem:[%s9 + $0x160] sm:$0xff]
        %v2122 = vld [vmem:[%s9 + $0x168] sm:$0xff]
        %v2123 = vld [vmem:[%s9 + $0x170] sm:$0xff]
        %v2124 = vld [vmem:[%s9 + $0x178] sm:$0xff]
        %v2125 = vld [vmem:[%s9 + $0x180] sm:$0xff]
        %v2126 = vld [vmem:[%s9 + $0x188] sm:$0xff]
        %v2127 = vld [vmem:[%s9 + $0x190] sm:$0xff]
        %v2128 = vld [vmem:[%s9 + $0x198] sm:$0xff]
        %v2129 = vld [vmem:[%s9 + $0x1a0] sm:$0xff]
        %v2130 = vld [vmem:[%s9 + $0x1a8] sm:$0xff]
        %v2131 = vld [vmem:[%s9 + $0x1b0] sm:$0xff]
        %v2132 = vld [vmem:[%s9 + $0x1b8] sm:$0xff]
        %v2133 = vld [vmem:[%s9 + $0x1c0] sm:$0xff]
        %v2134 = vld [vmem:[%s9 + $0x1c8] sm:$0xff]
        %v2135 = vld [vmem:[%s9 + $0x1d0] sm:$0xff]
        %v2136 = vld [vmem:[%s9 + $0x1d8] sm:$0xff]
        %v2137 = vld [vmem:[%s9 + $0x1e0] sm:$0xff]
        %v2138 = vld [vmem:[%s9 + $0x1e8] sm:$0xff]
        %v2139 = vld [vmem:[%s9 + $0x1f0] sm:$0xff]
        %v2140 = vld [vmem:[%s9 + $0x1f8] sm:$0xff]
        %v2141 = vld [vmem:[%s10] sm:$0x3]
        %v2143 = vlaneseq
        %v2144 = vshrl.u32 %v2143, 7
        %v2145 = vsub.s32 0, %v2144
        %v2146 = vrot.slane %v2141, %v2145
        %v2147 = vlaneseq
        %v2148 = vshrl.u32 %v2147, 7
        %v2149 = vsub.s32 1, %v2148
        %v2150 = vrot.slane %v2141, %v2149
        %2153 = vmatprep.subr.mxu0 %v2078
        %2154 = vmatpush1.msra.mxu0 %v2077
        %2155 = vmatprep.subr.mxu0 %v2080
        %2156 = vmatpush1.msra.mxu0 %v2079
        %2157 = vmatprep.subr.mxu0 %v2082
        %2158 = vmatpush1.msra.mxu0 %v2081
        %2159 = vmatprep.subr.mxu0 %v2084
        %2160 = vmatpush1.msra.mxu0 %v2083
        %2161 = vmatprep.subr.mxu0 %v2086
        %2162 = vmatpush1.msra.mxu0 %v2085
        %2163 = vmatprep.subr.mxu0 %v2088
        %2164 = vmatpush1.msra.mxu0 %v2087
        %2165 = vmatprep.subr.mxu0 %v2090
        %2166 = vmatpush1.msra.mxu0 %v2089
        %2167 = vmatprep.subr.mxu0 %v2092
        %2168 = vmatpush1.msra.mxu0 %v2091
        %2169 = vmatprep.subr.mxu0 %v2094
        %2170 = vmatpush1.msra.mxu0 %v2093
        %2171 = vmatprep.subr.mxu0 %v2096
        %2172 = vmatpush1.msra.mxu0 %v2095
        %2173 = vmatprep.subr.mxu0 %v2098
        %2174 = vmatpush1.msra.mxu0 %v2097
        %2175 = vmatprep.subr.mxu0 %v2100
        %2176 = vmatpush1.msra.mxu0 %v2099
        %2177 = vmatprep.subr.mxu0 %v2102
        %2178 = vmatpush1.msra.mxu0 %v2101
        %2179 = vmatprep.subr.mxu0 %v2104
        %2180 = vmatpush1.msra.mxu0 %v2103
        %2181 = vmatprep.subr.mxu0 %v2106
        %2182 = vmatpush1.msra.mxu0 %v2105
        %2183 = vmatprep.subr.mxu0 %v2108
        %2184 = vmatpush1.msra.mxu0 %v2107
        %2185 = vmatprep.subr.mxu0 %v2110
        %2186 = vmatpush1.msra.mxu0 %v2109
        %2187 = vmatprep.subr.mxu0 %v2112
        %2188 = vmatpush1.msra.mxu0 %v2111
        %2189 = vmatprep.subr.mxu0 %v2114
        %2190 = vmatpush1.msra.mxu0 %v2113
        %2191 = vmatprep.subr.mxu0 %v2116
        %2192 = vmatpush1.msra.mxu0 %v2115
        %2193 = vmatprep.subr.mxu0 %v2118
        %2194 = vmatpush1.msra.mxu0 %v2117
        %2195 = vmatprep.subr.mxu0 %v2120
        %2196 = vmatpush1.msra.mxu0 %v2119
        %2197 = vmatprep.subr.mxu0 %v2122
        %2198 = vmatpush1.msra.mxu0 %v2121
        %2199 = vmatprep.subr.mxu0 %v2124
        %2200 = vmatpush1.msra.mxu0 %v2123
        %2201 = vmatprep.subr.mxu0 %v2126
        %2202 = vmatpush1.msra.mxu0 %v2125
        %2203 = vmatprep.subr.mxu0 %v2128
        %2204 = vmatpush1.msra.mxu0 %v2127
        %2205 = vmatprep.subr.mxu0 %v2130
        %2206 = vmatpush1.msra.mxu0 %v2129
        %2207 = vmatprep.subr.mxu0 %v2132
        %2208 = vmatpush1.msra.mxu0 %v2131
        %2209 = vmatprep.subr.mxu0 %v2134
        %2210 = vmatpush1.msra.mxu0 %v2133
        %2211 = vmatprep.subr.mxu0 %v2136
        %2212 = vmatpush1.msra.mxu0 %v2135
        %2213 = vmatprep.subr.mxu0 %v2138
        %2214 = vmatpush1.msra.mxu0 %v2137
        %2215 = vmatprep.subr.mxu0 %v2140
        %2216 = vmatpush1.msra.mxu0 %v2139
        %2217 = vmatprep.mubr.f32.mxu0 %v2076
        %2218 = vmatmul.mubr.f32.gmra.mrb[0].mxu0 %v2074
        %v2219 = vpop.f32.mrb[0].mxu0
        %v2220 = vadd.f32 %v2146, %v2219
        %v2221 = vpop.f32.mrb[0].mxu0
        %v2222 = vadd.f32 %v2150, %v2221
        %2223 = vdwg.mxu0
        %v2224 = vmax.f32 %v2220, 0.0
        %v2225 = vmax.f32 %v2222, 0.0
        %v2226 = vld [vmem:[%s11] sm:$0xff]
        %v2227 = vld [vmem:[%s11 + $0x8] sm:$0xff]
        %v2228 = vld [vmem:[%s11 + $0x10] sm:$0xff]
        %v2229 = vld [vmem:[%s11 + $0x18] sm:$0xff]
        %v2230 = vld [vmem:[%s11 + $0x20] sm:$0xff]
        %v2231 = vld [vmem:[%s11 + $0x28] sm:$0xff]
        %v2232 = vld [vmem:[%s11 + $0x30] sm:$0xff]
        %v2233 = vld [vmem:[%s11 + $0x38] sm:$0xff]
        %v2234 = vld [vmem:[%s11 + $0x40] sm:$0xff]
        %v2235 = vld [vmem:[%s11 + $0x48] sm:$0xff]
        %v2236 = vld [vmem:[%s11 + $0x50] sm:$0xff]
        %v2237 = vld [vmem:[%s11 + $0x58] sm:$0xff]
        %v2238 = vld [vmem:[%s11 + $0x60] sm:$0xff]
        %v2239 = vld [vmem:[%s11 + $0x68] sm:$0xff]
        %v2240 = vld [vmem:[%s11 + $0x70] sm:$0xff]
        %v2241 = vld [vmem:[%s11 + $0x78] sm:$0xff]
        %v2242 = vld [vmem:[%s11 + $0x80] sm:$0xff]
        %v2243 = vld [vmem:[%s11 + $0x88] sm:$0xff]
        %v2244 = vld [vmem:[%s11 + $0x90] sm:$0xff]
        %v2245 = vld [vmem:[%s11 + $0x98] sm:$0xff]
        %v2246 = vld [vmem:[%s11 + $0xa0] sm:$0xff]
        %v2247 = vld [vmem:[%s11 + $0xa8] sm:$0xff]
        %v2248 = vld [vmem:[%s11 + $0xb0] sm:$0xff]
        %v2249 = vld [vmem:[%s11 + $0xb8] sm:$0xff]
        %v2250 = vld [vmem:[%s11 + $0xc0] sm:$0xff]
        %v2251 = vld [vmem:[%s11 + $0xc8] sm:$0xff]
        %v2252 = vld [vmem:[%s11 + $0xd0] sm:$0xff]
        %v2253 = vld [vmem:[%s11 + $0xd8] sm:$0xff]
        %v2254 = vld [vmem:[%s11 + $0xe0] sm:$0xff]
        %v2255 = vld [vmem:[%s11 + $0xe8] sm:$0xff]
        %v2256 = vld [vmem:[%s11 + $0xf0] sm:$0xff]
        %v2257 = vld [vmem:[%s11 + $0xf8] sm:$0xff]
        %v2258 = vld [vmem:[%s12] sm:$0x1]
        %v2260 = vlaneseq
        %v2261 = vshrl.u32 %v2260, 7
        %v2262 = vsub.s32 0, %v2261
        %v2263 = vrot.slane %v2258, %v2262
        %2265 = vmatprep.subr.mxu0 0.0
        %2266 = vmatpush1.msra.mxu0 %v2226
        %2267 = vmatprep.subr.mxu0 0.0
        %2268 = vmatpush1.msra.mxu0 %v2227
        %2269 = vmatprep.subr.mxu0 0.0
        %2270 = vmatpush1.msra.mxu0 %v2228
        %2271 = vmatprep.subr.mxu0 0.0
        %2272 = vmatpush1.msra.mxu0 %v2229
        %2273 = vmatprep.subr.mxu0 0.0
        %2274 = vmatpush1.msra.mxu0 %v2230
        %2275 = vmatprep.subr.mxu0 0.0
        %2276 = vmatpush1.msra.mxu0 %v2231
        %2277 = vmatprep.subr.mxu0 0.0
        %2278 = vmatpush1.msra.mxu0 %v2232
        %2279 = vmatprep.subr.mxu0 0.0
        %2280 = vmatpush1.msra.mxu0 %v2233
        %2281 = vmatprep.subr.mxu0 0.0
        %2282 = vmatpush1.msra.mxu0 %v2234
        %2283 = vmatprep.subr.mxu0 0.0
        %2284 = vmatpush1.msra.mxu0 %v2235
        %2285 = vmatprep.subr.mxu0 0.0
        %2286 = vmatpush1.msra.mxu0 %v2236
        %2287 = vmatprep.subr.mxu0 0.0
        %2288 = vmatpush1.msra.mxu0 %v2237
        %2289 = vmatprep.subr.mxu0 0.0
        %2290 = vmatpush1.msra.mxu0 %v2238
        %2291 = vmatprep.subr.mxu0 0.0
        %2292 = vmatpush1.msra.mxu0 %v2239
        %2293 = vmatprep.subr.mxu0 0.0
        %2294 = vmatpush1.msra.mxu0 %v2240
        %2295 = vmatprep.subr.mxu0 0.0
        %2296 = vmatpush1.msra.mxu0 %v2241
        %2297 = vmatprep.subr.mxu0 0.0
        %2298 = vmatpush1.msra.mxu0 %v2242
        %2299 = vmatprep.subr.mxu0 0.0
        %2300 = vmatpush1.msra.mxu0 %v2243
        %2301 = vmatprep.subr.mxu0 0.0
        %2302 = vmatpush1.msra.mxu0 %v2244
        %2303 = vmatprep.subr.mxu0 0.0
        %2304 = vmatpush1.msra.mxu0 %v2245
        %2305 = vmatprep.subr.mxu0 0.0
        %2306 = vmatpush1.msra.mxu0 %v2246
        %2307 = vmatprep.subr.mxu0 0.0
        %2308 = vmatpush1.msra.mxu0 %v2247
        %2309 = vmatprep.subr.mxu0 0.0
        %2310 = vmatpush1.msra.mxu0 %v2248
        %2311 = vmatprep.subr.mxu0 0.0
        %2312 = vmatpush1.msra.mxu0 %v2249
        %2313 = vmatprep.subr.mxu0 0.0
        %2314 = vmatpush1.msra.mxu0 %v2250
        %2315 = vmatprep.subr.mxu0 0.0
        %2316 = vmatpush1.msra.mxu0 %v2251
        %2317 = vmatprep.subr.mxu0 0.0
        %2318 = vmatpush1.msra.mxu0 %v2252
        %2319 = vmatprep.subr.mxu0 0.0
        %2320 = vmatpush1.msra.mxu0 %v2253
        %2321 = vmatprep.subr.mxu0 0.0
        %2322 = vmatpush1.msra.mxu0 %v2254
        %2323 = vmatprep.subr.mxu0 0.0
        %2324 = vmatpush1.msra.mxu0 %v2255
        %2325 = vmatprep.subr.mxu0 0.0
        %2326 = vmatpush1.msra.mxu0 %v2256
        %2327 = vmatprep.subr.mxu0 0.0
        %2328 = vmatpush1.msra.mxu0 %v2257
        %2329 = vmatprep.mubr.f32.mxu0 %v2225
        %2330 = vmatmul.mubr.f32.gmra.mrb[0].mxu0 %v2224
        %v2331 = vpop.f32.mrb[0].mxu0
        %v2332 = vadd.f32 %v2263, %v2331
        %v2333 = vpop.f32.mrb[0].mxu0
        %2334 = vdwg.mxu0
        %v2335 = vmax.f32 %v2332, 0.0
        %v2336 = vld [vmem:[%s13] sm:$0xff]
        %v2337 = vld [vmem:[%s13 + $0x8] sm:$0xff]
        %v2338 = vld [vmem:[%s13 + $0x10] sm:$0xff]
        %v2339 = vld [vmem:[%s13 + $0x18] sm:$0xff]
        %v2340 = vld [vmem:[%s13 + $0x20] sm:$0xff]
        %v2341 = vld [vmem:[%s13 + $0x28] sm:$0xff]
        %v2342 = vld [vmem:[%s13 + $0x30] sm:$0xff]
        %v2343 = vld [vmem:[%s13 + $0x38] sm:$0xff]
        %v2344 = vld [vmem:[%s13 + $0x40] sm:$0xff]
        %v2345 = vld [vmem:[%s13 + $0x48] sm:$0xff]
        %v2346 = vld [vmem:[%s13 + $0x50] sm:$0xff]
        %v2347 = vld [vmem:[%s13 + $0x58] sm:$0xff]
        %v2348 = vld [vmem:[%s13 + $0x60] sm:$0xff]
        %v2349 = vld [vmem:[%s13 + $0x68] sm:$0xff]
        %v2350 = vld [vmem:[%s13 + $0x70] sm:$0xff]
        %v2351 = vld [vmem:[%s13 + $0x78] sm:$0xff]
        %v2352 = vld [vmem:[%s14] sm:$0x1]
        %v2354 = vlaneseq
        %v2355 = vshrl.u32 %v2354, 7
        %v2356 = vsub.s32 0, %v2355
        %v2357 = vrot.slane %v2352, %v2356
        %2359 = vmatprep.subr.mxu0 0.0
        %2360 = vmatpush1.msra.mxu0 %v2336
        %2361 = vmatprep.subr.mxu0 0.0
        %2362 = vmatpush1.msra.mxu0 %v2337
        %2363 = vmatprep.subr.mxu0 0.0
        %2364 = vmatpush1.msra.mxu0 %v2338
        %2365 = vmatprep.subr.mxu0 0.0
        %2366 = vmatpush1.msra.mxu0 %v2339
        %2367 = vmatprep.subr.mxu0 0.0
        %2368 = vmatpush1.msra.mxu0 %v2340
        %2369 = vmatprep.subr.mxu0 0.0
        %2370 = vmatpush1.msra.mxu0 %v2341
        %2371 = vmatprep.subr.mxu0 0.0
        %2372 = vmatpush1.msra.mxu0 %v2342
        %2373 = vmatprep.subr.mxu0 0.0
        %2374 = vmatpush1.msra.mxu0 %v2343
        %2375 = vmatprep.subr.mxu0 0.0
        %2376 = vmatpush1.msra.mxu0 %v2344
        %2377 = vmatprep.subr.mxu0 0.0
        %2378 = vmatpush1.msra.mxu0 %v2345
        %2379 = vmatprep.subr.mxu0 0.0
        %2380 = vmatpush1.msra.mxu0 %v2346
        %2381 = vmatprep.subr.mxu0 0.0
        %2382 = vmatpush1.msra.mxu0 %v2347
        %2383 = vmatprep.subr.mxu0 0.0
        %2384 = vmatpush1.msra.mxu0 %v2348
        %2385 = vmatprep.subr.mxu0 0.0
        %2386 = vmatpush1.msra.mxu0 %v2349
        %2387 = vmatprep.subr.mxu0 0.0
        %2388 = vmatpush1.msra.mxu0 %v2350
        %2389 = vmatprep.subr.mxu0 0.0
        %2390 = vmatpush1.msra.mxu0 %v2351
        %2391 = vmatprep.subr.mxu0 0.0
        %2392 = vmatpush1.msra.mxu0 0.0
        %2393 = vmatprep.subr.mxu0 0.0
        %2394 = vmatpush1.msra.mxu0 0.0
        %2395 = vmatprep.subr.mxu0 0.0
        %2396 = vmatpush1.msra.mxu0 0.0
        %2397 = vmatprep.subr.mxu0 0.0
        %2398 = vmatpush1.msra.mxu0 0.0
        %2399 = vmatprep.subr.mxu0 0.0
        %2400 = vmatpush1.msra.mxu0 0.0
        %2401 = vmatprep.subr.mxu0 0.0
        %2402 = vmatpush1.msra.mxu0 0.0
        %2403 = vmatprep.subr.mxu0 0.0
        %2404 = vmatpush1.msra.mxu0 0.0
        %2405 = vmatprep.subr.mxu0 0.0
        %2406 = vmatpush1.msra.mxu0 0.0
        %2407 = vmatprep.subr.mxu0 0.0
        %2408 = vmatpush1.msra.mxu0 0.0
        %2409 = vmatprep.subr.mxu0 0.0
        %2410 = vmatpush1.msra.mxu0 0.0
        %2411 = vmatprep.subr.mxu0 0.0
        %2412 = vmatpush1.msra.mxu0 0.0
        %2413 = vmatprep.subr.mxu0 0.0
        %2414 = vmatpush1.msra.mxu0 0.0
        %2415 = vmatprep.subr.mxu0 0.0
        %2416 = vmatpush1.msra.mxu0 0.0
        %2417 = vmatprep.subr.mxu0 0.0
        %2418 = vmatpush1.msra.mxu0 0.0
        %2419 = vmatprep.subr.mxu0 0.0
        %2420 = vmatpush1.msra.mxu0 0.0
        %2421 = vmatprep.subr.mxu0 0.0
        %2422 = vmatpush1.msra.mxu0 0.0
        %2423 = vmatprep.mubr.f32.mxu0 0.0
        %2424 = vmatmul.mubr.f32.gmra.mrb[0].mxu0 %v2335
        %v2425 = vpop.f32.mrb[0].mxu0
        %v2426 = vadd.f32 %v2357, %v2425
        %v2427 = vpop.f32.mrb[0].mxu0
        %2428 = vdwg.mxu0
        %2429 = vst [vmem:[%s19] sm:$0xff] %v2426
        %v2430 = vld [vmem:[#allocation2] sm:$0xff]
        %v2431 = vld [vmem:[#allocation2 + $0x8] sm:$0xff]
        %2432 = vst [vmem:[%s20] sm:$0xff] %v2430
        %2433 = vst [vmem:[%s20 + $0x8] sm:$0xff] %v2431
        %v2434 = vld [vmem:[#allocation3] sm:$0xff]
        %v2435 = vld [vmem:[#allocation3 + $0x8] sm:$0xff]
        %2436 = vst [vmem:[%s21] sm:$0xff] %v2434
        %2437 = vst [vmem:[%s21 + $0x8] sm:$0xff] %v2435
        %v2438 = vld [vmem:[#allocation4] sm:$0xff]
        %v2439 = vld [vmem:[#allocation4 + $0x8] sm:$0xff]
        %2440 = vst [vmem:[%s22] sm:$0xff] %v2438
        %2441 = vst [vmem:[%s22 + $0x8] sm:$0xff] %v2439
        %v2442 = vld [vmem:[#allocation5] sm:$0xff]
        %v2443 = vld [vmem:[#allocation5 + $0x8] sm:$0xff]
        %2444 = vst [vmem:[%s23] sm:$0xff] %v2442
        %2445 = vst [vmem:[%s23 + $0x8] sm:$0xff] %v2443
      $region112: #{kart_model8_forward.3} parent=95 // pred_fallthru
        _
      // Predicated region
      $region113: #{kart_model8_forward.3} parent=95 // pred_check
        %p2446 = pneg %p461
      $region114: #{kart_model8_forward.3} parent=95 // pred_check_branch
        %2448 = sbr.rel (%p2446) target = $region116
      $region115: #{kart_model8_forward.3} parent=95 // pred_region
        _
      $region116: #{kart_model8_forward.3} parent=95 // pred_fallthru
        _
      // Predicated region
      $region117: #{kart_model8_forward.3} parent=95 // pred_check
        %p2449 = pneg %p482
      $region118: #{kart_model8_forward.3} parent=95 // pred_check_branch
        %2451 = sbr.rel (%p2449) target = $region120
      $region119: #{kart_model8_forward.3} parent=95 // pred_region
        _
      $region120: #{kart_model8_forward.3} parent=95 // pred_fallthru
        _
      // Predicated region
      $region121: #{kart_model8_forward.3} parent=95 // pred_check
        %p2452 = pneg %p503
      $region122: #{kart_model8_forward.3} parent=95 // pred_check_branch
        %2454 = sbr.rel (%p2452) target = $region124
      $region123: #{kart_model8_forward.3} parent=95 // pred_region
        _
      $region124: #{kart_model8_forward.3} parent=95 // pred_fallthru
        _
      // Predicated region
      $region125: #{kart_model8_forward.3} parent=95 // pred_check
        %p2455 = pneg %p524
      $region126: #{kart_model8_forward.3} parent=95 // pred_check_branch
        %2457 = sbr.rel (%p2455) target = $region128
      $region127: #{kart_model8_forward.3} parent=95 // pred_region
        _
      $region128: #{kart_model8_forward.3} parent=95 // pred_fallthru
        _
      // Predicated region
      $region129: #{kart_model8_forward.3} parent=95 // pred_check
        %p2458 = pneg %p545
      $region130: #{kart_model8_forward.3} parent=95 // pred_check_branch
        %2460 = sbr.rel (%p2458) target = $region132
      $region131: #{kart_model8_forward.3} parent=95 // pred_region
        _
      $region132: #{kart_model8_forward.3} parent=95 // pred_fallthru
        _
      // Predicated region
      $region133: #{kart_model8_forward.3} parent=95 // pred_check
        %p2461 = pneg %p461
      $region134: #{kart_model8_forward.3} parent=95 // pred_check_branch
        %2463 = sbr.rel (%p2461) target = $region136
      $region135: #{kart_model8_forward.3} parent=95 // pred_region
        _
      $region136: #{kart_model8_forward.3} parent=95 // pred_fallthru
        _
      // Predicated region
      $region137: #{kart_model8_forward.3} parent=95 // pred_check
        %p2464 = pneg %p482
      $region138: #{kart_model8_forward.3} parent=95 // pred_check_branch
        %2466 = sbr.rel (%p2464) target = $region140
      $region139: #{kart_model8_forward.3} parent=95 // pred_region
        _
      $region140: #{kart_model8_forward.3} parent=95 // pred_fallthru
        _
      // Predicated region
      $region141: #{kart_model8_forward.3} parent=95 // pred_check
        %p2467 = pneg %p503
      $region142: #{kart_model8_forward.3} parent=95 // pred_check_branch
        %2469 = sbr.rel (%p2467) target = $region144
      $region143: #{kart_model8_forward.3} parent=95 // pred_region
        _
      $region144: #{kart_model8_forward.3} parent=95 // pred_fallthru
        _
      // Predicated region
      $region145: #{kart_model8_forward.3} parent=95 // pred_check
        %p2470 = pneg %p524
      $region146: #{kart_model8_forward.3} parent=95 // pred_check_branch
        %2472 = sbr.rel (%p2470) target = $region148
      $region147: #{kart_model8_forward.3} parent=95 // pred_region
        _
      $region148: #{kart_model8_forward.3} parent=95 // pred_fallthru
        _
      // Predicated region
      $region149: #{kart_model8_forward.3} parent=95 // pred_check
        %p2473 = pneg %p545
      $region150: #{kart_model8_forward.3} parent=95 // pred_check_branch
        %2475 = sbr.rel (%p2473) target = $region152
      $region151: #{kart_model8_forward.3} parent=95 // pred_region
        _
      $region152: #{kart_model8_forward.3} parent=95 // pred_fallthru
        _
    $region96: #{kart_model8_forward.3} parent=5 // pred_fallthru
      _
    %p2476 = scmp.le.s32.totalorder 2, %s30
    // Predicated region
    $region153: #{kart_model8_forward.3} parent=5 // pred_check
      %p2477 = pneg %p2476
    $region154: #{kart_model8_forward.3} parent=5 // pred_check_branch
      %2479 = sbr.rel (%p2477) target = $region156
    $region155: #{kart_model8_forward.3} parent=5 // pred_region
      %s2480 = ssub.s32 %s30, 2
    $region156: #{kart_model8_forward.3} parent=5 // pred_fallthru
      _
  $region6: #{kart_model8_forward.3} parent=0 // loop_footer
    %s34 = sadd.s32 1, %s30
  $region7: #{kart_model8_forward.3} parent=0 // loop_footer_branch
    %29 = sbr.rel target = $region3
  $region8: #{kart_model8_forward.3} parent=0 // loop_exit
    _

// kernel: kart_model8_forward.2
$region0: #{kart_model8_forward.2}
  #allocation0 [shape = 'u32[]', space=smem, size = 0x4, offset = 0x4, fixed_abs, tag = 'smem constant byte address 0x4 - core index']
  #allocation1 [shape = 'u32[144,128]{1,0:T(1,128)}', space=vmem, size = 0x12000, scoped, tag = 'internal scratch']
  #allocation2 [shape = 'f32[16,128]{1,0:T(8,128)}', space=vmem, size = 0x2000, scoped, tag = 'scratch operand']
  %s0 = inlined_call_operand.vmem [shape: f32[4096,32], index: 0, kind: input, shape index: {}]
  %s1 = inlined_call_operand.vmem [shape: f32[32,128], index: 1, kind: input, shape index: {}]
  %s2 = inlined_call_operand.vmem [shape: f32[1,128], index: 2, kind: input, shape index: {}]
  %s3 = inlined_call_operand.vmem [shape: f32[128,2048], index: 3, kind: input, shape index: {}]
  %s4 = inlined_call_operand.vmem [shape: f32[1,2048], index: 4, kind: input, shape index: {}]
  %s5 = inlined_call_operand.vmem [shape: f32[2048,256], index: 5, kind: input, shape index: {}]
  %s6 = inlined_call_operand.vmem [shape: f32[1,256], index: 6, kind: input, shape index: {}]
  %s7 = inlined_call_operand.vmem [shape: f32[256,512], index: 7, kind: input, shape index: {}]
  %s8 = inlined_call_operand.vmem [shape: f32[16,512], index: 8, kind: output, shape index: {}]
  %s9 = sld [smem:[#allocation0]]
  $region69: #{kart_model8_forward.2} parent=0
    _
  %s11 = ssub.s32 1, %s9
  %s12 = scalar_select 0, %s11, %s9
  loop: start=0, step=1, limit=4
  $region2: #{kart_model8_forward.2} parent=0 // loop_pre_header
    _
  $region3: #{kart_model8_forward.2} parent=0 // loop_header
    %s14 = sphi 0, %s18
    %p15 = scmp.ge.s32.totalorder %s14, 4
    %s24 = sphi 0, %s26
    %s27 = sphi 0, %s24
    %s28 = sphi 0, %s27
    %s44 = sphi 0, %s28
    %s48 = sphi 0, %s48
    %s50 = sphi 0, %s48
    %s51 = sphi 0, %s50
    %s65 = sphi 0, %s51
    %s69 = sphi 0, %s69
    %s71 = sphi 0, %s69
    %s72 = sphi 0, %s71
    %s86 = sphi 0, %s72
    %s90 = sphi 0, %s90
    %s92 = sphi 0, %s90
    %s93 = sphi 0, %s92
    %s107 = sphi 0, %s93
    %s111 = sphi 0, %s111
    %s113 = sphi 0, %s111
    %s114 = sphi 0, %s113
    %s128 = sphi 0, %s114
    %s132 = sphi 0, %s132
    %s134 = sphi 0, %s132
    %s135 = sphi 0, %s134
    %s149 = sphi 0, %s135
    %s153 = sphi 0, %s153
    %s155 = sphi 0, %s153
    %s156 = sphi 0, %s155
    %s170 = sphi 0, %s156
    %s174 = sphi 0, %s174
    %s176 = sphi 0, %s174
    %s177 = sphi 0, %s176
    %s191 = sphi 0, %s177
    %s195 = sphi 0, %s195
    %s197 = sphi 0, %s195
    %s198 = sphi 0, %s197
    %s212 = sphi 0, %s198
  $region4: #{kart_model8_forward.2} parent=0 // loop_header_branch
    %17 = sbr.rel (%p15) target = $region8
  $region5: #{kart_model8_forward.2} parent=0 // loop_body
    %s19 = ssub.s32 %s14, 1
    %s20 = ssub.s32 %s14, 2
    %s21 = sadd.s32 %s14, 1
    %s22 = ssub.s32 %s14, %s21
    %p23 = scmp.eq.s32.totalorder %s22, 0
    %s25 = sadd.s32 %s24, 1
    %s26 = scalar_select %p23, %s24, %s25
    %p29 = pneg %p23
    %p30 = scmp.eq.s32.totalorder %s14, 1
    %p31 = por %p29, %p30
    %p32 = scmp.ne.s32.totalorder %s24, %s27
    %p33 = scmp.eq.s32.totalorder %s14, 0
    %p34 = por %p32, %p33
    %p35 = scmp.ne.s32.totalorder %s24, %s27
    %p36 = scmp.eq.s32.totalorder %s19, 1
    %p37 = por %p35, %p36
    %p38 = scmp.ne.s32.totalorder %s27, %s28
    %p39 = scmp.eq.s32.totalorder %s19, 0
    %p40 = por %p38, %p39
    %p41 = scmp.ne.s32.totalorder %s27, %s28
    %p42 = scmp.eq.s32.totalorder %s20, 1
    %p43 = por %p41, %p42
    %p45 = scmp.ne.s32.totalorder %s28, %s44
    %p46 = scmp.eq.s32.totalorder %s20, 0
    %p47 = por %p45, %p46
    %s49 = sadd.s32 %s48, 1
    %p52 = scmp.eq.s32.totalorder %s14, 1
    %p53 = scmp.ne.s32.totalorder %s48, %s50
    %p54 = scmp.eq.s32.totalorder %s14, 0
    %p55 = por %p53, %p54
    %p56 = scmp.ne.s32.totalorder %s48, %s50
    %p57 = scmp.eq.s32.totalorder %s19, 1
    %p58 = por %p56, %p57
    %p59 = scmp.ne.s32.totalorder %s50, %s51
    %p60 = scmp.eq.s32.totalorder %s19, 0
    %p61 = por %p59, %p60
    %p62 = scmp.ne.s32.totalorder %s50, %s51
    %p63 = scmp.eq.s32.totalorder %s20, 1
    %p64 = por %p62, %p63
    %p66 = scmp.ne.s32.totalorder %s51, %s65
    %p67 = scmp.eq.s32.totalorder %s20, 0
    %p68 = por %p66, %p67
    %s70 = sadd.s32 %s69, 1
    %p73 = scmp.eq.s32.totalorder %s14, 1
    %p74 = scmp.ne.s32.totalorder %s69, %s71
    %p75 = scmp.eq.s32.totalorder %s14, 0
    %p76 = por %p74, %p75
    %p77 = scmp.ne.s32.totalorder %s69, %s71
    %p78 = scmp.eq.s32.totalorder %s19, 1
    %p79 = por %p77, %p78
    %p80 = scmp.ne.s32.totalorder %s71, %s72
    %p81 = scmp.eq.s32.totalorder %s19, 0
    %p82 = por %p80, %p81
    %p83 = scmp.ne.s32.totalorder %s71, %s72
    %p84 = scmp.eq.s32.totalorder %s20, 1
    %p85 = por %p83, %p84
    %p87 = scmp.ne.s32.totalorder %s72, %s86
    %p88 = scmp.eq.s32.totalorder %s20, 0
    %p89 = por %p87, %p88
    %s91 = sadd.s32 %s90, 1
    %p94 = scmp.eq.s32.totalorder %s14, 1
    %p95 = scmp.ne.s32.totalorder %s90, %s92
    %p96 = scmp.eq.s32.totalorder %s14, 0
    %p97 = por %p95, %p96
    %p98 = scmp.ne.s32.totalorder %s90, %s92
    %p99 = scmp.eq.s32.totalorder %s19, 1
    %p100 = por %p98, %p99
    %p101 = scmp.ne.s32.totalorder %s92, %s93
    %p102 = scmp.eq.s32.totalorder %s19, 0
    %p103 = por %p101, %p102
    %p104 = scmp.ne.s32.totalorder %s92, %s93
    %p105 = scmp.eq.s32.totalorder %s20, 1
    %p106 = por %p104, %p105
    %p108 = scmp.ne.s32.totalorder %s93, %s107
    %p109 = scmp.eq.s32.totalorder %s20, 0
    %p110 = por %p108, %p109
    %s112 = sadd.s32 %s111, 1
    %p115 = scmp.eq.s32.totalorder %s14, 1
    %p116 = scmp.ne.s32.totalorder %s111, %s113
    %p117 = scmp.eq.s32.totalorder %s14, 0
    %p118 = por %p116, %p117
    %p119 = scmp.ne.s32.totalorder %s111, %s113
    %p120 = scmp.eq.s32.totalorder %s19, 1
    %p121 = por %p119, %p120
    %p122 = scmp.ne.s32.totalorder %s113, %s114
    %p123 = scmp.eq.s32.totalorder %s19, 0
    %p124 = por %p122, %p123
    %p125 = scmp.ne.s32.totalorder %s113, %s114
    %p126 = scmp.eq.s32.totalorder %s20, 1
    %p127 = por %p125, %p126
    %p129 = scmp.ne.s32.totalorder %s114, %s128
    %p130 = scmp.eq.s32.totalorder %s20, 0
    %p131 = por %p129, %p130
    %s133 = sadd.s32 %s132, 1
    %p136 = scmp.eq.s32.totalorder %s14, 1
    %p137 = scmp.ne.s32.totalorder %s132, %s134
    %p138 = scmp.eq.s32.totalorder %s14, 0
    %p139 = por %p137, %p138
    %p140 = scmp.ne.s32.totalorder %s132, %s134
    %p141 = scmp.eq.s32.totalorder %s19, 1
    %p142 = por %p140, %p141
    %p143 = scmp.ne.s32.totalorder %s134, %s135
    %p144 = scmp.eq.s32.totalorder %s19, 0
    %p145 = por %p143, %p144
    %p146 = scmp.ne.s32.totalorder %s134, %s135
    %p147 = scmp.eq.s32.totalorder %s20, 1
    %p148 = por %p146, %p147
    %p150 = scmp.ne.s32.totalorder %s135, %s149
    %p151 = scmp.eq.s32.totalorder %s20, 0
    %p152 = por %p150, %p151
    %s154 = sadd.s32 %s153, 1
    %p157 = scmp.eq.s32.totalorder %s14, 1
    %p158 = scmp.ne.s32.totalorder %s153, %s155
    %p159 = scmp.eq.s32.totalorder %s14, 0
    %p160 = por %p158, %p159
    %p161 = scmp.ne.s32.totalorder %s153, %s155
    %p162 = scmp.eq.s32.totalorder %s19, 1
    %p163 = por %p161, %p162
    %p164 = scmp.ne.s32.totalorder %s155, %s156
    %p165 = scmp.eq.s32.totalorder %s19, 0
    %p166 = por %p164, %p165
    %p167 = scmp.ne.s32.totalorder %s155, %s156
    %p168 = scmp.eq.s32.totalorder %s20, 1
    %p169 = por %p167, %p168
    %p171 = scmp.ne.s32.totalorder %s156, %s170
    %p172 = scmp.eq.s32.totalorder %s20, 0
    %p173 = por %p171, %p172
    %s175 = sadd.s32 %s174, 1
    %p178 = scmp.eq.s32.totalorder %s14, 1
    %p179 = scmp.ne.s32.totalorder %s174, %s176
    %p180 = scmp.eq.s32.totalorder %s14, 0
    %p181 = por %p179, %p180
    %p182 = scmp.ne.s32.totalorder %s174, %s176
    %p183 = scmp.eq.s32.totalorder %s19, 1
    %p184 = por %p182, %p183
    %p185 = scmp.ne.s32.totalorder %s176, %s177
    %p186 = scmp.eq.s32.totalorder %s19, 0
    %p187 = por %p185, %p186
    %p188 = scmp.ne.s32.totalorder %s176, %s177
    %p189 = scmp.eq.s32.totalorder %s20, 1
    %p190 = por %p188, %p189
    %p192 = scmp.ne.s32.totalorder %s177, %s191
    %p193 = scmp.eq.s32.totalorder %s20, 0
    %p194 = por %p192, %p193
    %s196 = sadd.s32 %s195, 1
    %p199 = scmp.eq.s32.totalorder %s14, 1
    %p200 = scmp.ne.s32.totalorder %s195, %s197
    %p201 = scmp.eq.s32.totalorder %s14, 0
    %p202 = por %p200, %p201
    %p203 = scmp.ne.s32.totalorder %s195, %s197
    %p204 = scmp.eq.s32.totalorder %s19, 1
    %p205 = por %p203, %p204
    %p206 = scmp.ne.s32.totalorder %s197, %s198
    %p207 = scmp.eq.s32.totalorder %s19, 0
    %p208 = por %p206, %p207
    %p209 = scmp.ne.s32.totalorder %s197, %s198
    %p210 = scmp.eq.s32.totalorder %s20, 1
    %p211 = por %p209, %p210
    %p213 = scmp.ne.s32.totalorder %s198, %s212
    %p214 = scmp.eq.s32.totalorder %s20, 0
    %p215 = por %p213, %p214
    %p216 = scmp.le.s32.totalorder 1, %s14
    %p217 = scmp.lt.s32.totalorder %s14, 3
    %p218 = pnand %p216, %p217
    %p219 = pneg %p218
    // Predicated region
    $region9: #{kart_model8_forward.2} parent=5 // pred_check
      _
    $region10: #{kart_model8_forward.2} parent=5 // pred_check_branch
      %221 = sbr.rel (%p218) target = $region12
    $region11: #{kart_model8_forward.2} parent=5 // pred_region
      %s222 = ssub.s32 %s14, 1
      // Predicated region
      $region13: #{kart_model8_forward.2} parent=11 // pred_check
        %p223 = pneg %p61
      $region14: #{kart_model8_forward.2} parent=11 // pred_check_branch
        %225 = sbr.rel (%p223) target = $region16
      $region15: #{kart_model8_forward.2} parent=11 // pred_region
        _
      $region16: #{kart_model8_forward.2} parent=11 // pred_fallthru
        _
      // Predicated region
      $region17: #{kart_model8_forward.2} parent=11 // pred_check
        %p226 = pneg %p82
      $region18: #{kart_model8_forward.2} parent=11 // pred_check_branch
        %228 = sbr.rel (%p226) target = $region20
      $region19: #{kart_model8_forward.2} parent=11 // pred_region
        _
      $region20: #{kart_model8_forward.2} parent=11 // pred_fallthru
        _
      // Predicated region
      $region21: #{kart_model8_forward.2} parent=11 // pred_check
        %p229 = pneg %p103
      $region22: #{kart_model8_forward.2} parent=11 // pred_check_branch
        %231 = sbr.rel (%p229) target = $region24
      $region23: #{kart_model8_forward.2} parent=11 // pred_region
        _
      $region24: #{kart_model8_forward.2} parent=11 // pred_fallthru
        _
      // Predicated region
      $region25: #{kart_model8_forward.2} parent=11 // pred_check
        %p232 = pneg %p124
      $region26: #{kart_model8_forward.2} parent=11 // pred_check_branch
        %234 = sbr.rel (%p232) target = $region28
      $region27: #{kart_model8_forward.2} parent=11 // pred_region
        _
      $region28: #{kart_model8_forward.2} parent=11 // pred_fallthru
        _
      // Predicated region
      $region29: #{kart_model8_forward.2} parent=11 // pred_check
        %p235 = pneg %p145
      $region30: #{kart_model8_forward.2} parent=11 // pred_check_branch
        %237 = sbr.rel (%p235) target = $region32
      $region31: #{kart_model8_forward.2} parent=11 // pred_region
        _
      $region32: #{kart_model8_forward.2} parent=11 // pred_fallthru
        _
      // Predicated region
      $region33: #{kart_model8_forward.2} parent=11 // pred_check
        %p238 = pneg %p166
      $region34: #{kart_model8_forward.2} parent=11 // pred_check_branch
        %240 = sbr.rel (%p238) target = $region36
      $region35: #{kart_model8_forward.2} parent=11 // pred_region
        _
      $region36: #{kart_model8_forward.2} parent=11 // pred_fallthru
        _
      // Predicated region
      $region37: #{kart_model8_forward.2} parent=11 // pred_check
        %p241 = pneg %p187
      $region38: #{kart_model8_forward.2} parent=11 // pred_check_branch
        %243 = sbr.rel (%p241) target = $region40
      $region39: #{kart_model8_forward.2} parent=11 // pred_region
        _
      $region40: #{kart_model8_forward.2} parent=11 // pred_fallthru
        _
    $region12: #{kart_model8_forward.2} parent=5 // pred_fallthru
      _
    %p244 = scmp.lt.s32.totalorder %s14, 2
    // Predicated region
    $region41: #{kart_model8_forward.2} parent=5 // pred_check
      %p245 = pneg %p244
    $region42: #{kart_model8_forward.2} parent=5 // pred_check_branch
      %247 = sbr.rel (%p245) target = $region44
    $region43: #{kart_model8_forward.2} parent=5 // pred_region
      // Predicated region
      $region45: #{kart_model8_forward.2} parent=43 // pred_check
        %p248 = pneg %p34
      $region46: #{kart_model8_forward.2} parent=43 // pred_check_branch
        %250 = sbr.rel (%p248) target = $region48
      $region47: #{kart_model8_forward.2} parent=43 // pred_region
        %s251 = smul.u32 256, %s14
        %p252 = scmp.lt.s32.totalorder %s251, 511
        %s253 = scalar_select %p252, %s251, 511
        %s254 = smul.addr %s253, 8
        %s255 = scalar_lea.vmem %s0, %s254
        %s256 = smul.u32 256, %s14
      $region48: #{kart_model8_forward.2} parent=43 // pred_fallthru
        _
    $region44: #{kart_model8_forward.2} parent=5 // pred_fallthru
      _
    %p257 = scmp.le.s32.totalorder 1, %s14
    %p258 = scmp.lt.s32.totalorder %s14, 3
    %p259 = pnand %p257, %p258
    %p260 = pneg %p259
    // Predicated region
    $region49: #{kart_model8_forward.2} parent=5 // pred_check
      _
    $region50: #{kart_model8_forward.2} parent=5 // pred_check_branch
      %262 = sbr.rel (%p259) target = $region52
    $region51: #{kart_model8_forward.2} parent=5 // pred_region
      %s263 = ssub.s32 %s14, 1
      %s264 = smul.u32 256, %s19
      %p265 = scmp.lt.s32.totalorder %s264, 511
      %s266 = scalar_select %p265, %s264, 511
      %s267 = smul.addr %s266, 8
      %s268 = scalar_lea.vmem %s0, %s267
      %p269 = pneg %p40
      %p270 = pneg %p37
      %p271 = pneg %p61
      %p272 = pneg %p58
      %p273 = pneg %p82
      %p274 = pneg %p79
      %p275 = pneg %p103
      %p276 = pneg %p100
      %p277 = pneg %p124
      %p278 = pneg %p121
      %p279 = pneg %p145
      %p280 = pneg %p142
      %p281 = pneg %p166
      %p282 = pneg %p163
      %p283 = pneg %p187
      %p284 = pneg %p184
      %p285 = pneg %p208
      %p286 = pneg %p205
      %s287 = smul.u32 256, %s19
      %p288 = scmp.lt.s32.totalorder %s287, 511
      %s289 = scalar_select %p288, %s287, 511
      %s290 = smul.addr %s289, 8
      %s291 = scalar_lea.vmem %s0, %s290
      %s292 = smul.u32 256, %s19
      %v293 = vld [vmem:[%s291] sm:$0xff]
      %v294 = vld [vmem:[%s291 + $0x8] sm:$0xff]
      %v295 = vld [vmem:[%s291 + $0x10] sm:$0xff]
      %v296 = vld [vmem:[%s291 + $0x18] sm:$0xff]
      %v297 = vld [vmem:[%s291 + $0x20] sm:$0xff]
      %v298 = vld [vmem:[%s291 + $0x28] sm:$0xff]
      %v299 = vld [vmem:[%s291 + $0x30] sm:$0xff]
      %v300 = vld [vmem:[%s291 + $0x38] sm:$0xff]
      %v301 = vld [vmem:[%s291 + $0x40] sm:$0xff]
      %v302 = vld [vmem:[%s291 + $0x48] sm:$0xff]
      %v303 = vld [vmem:[%s291 + $0x50] sm:$0xff]
      %v304 = vld [vmem:[%s291 + $0x58] sm:$0xff]
      %v305 = vld [vmem:[%s291 + $0x60] sm:$0xff]
      %v306 = vld [vmem:[%s291 + $0x68] sm:$0xff]
      %v307 = vld [vmem:[%s291 + $0x70] sm:$0xff]
      %v308 = vld [vmem:[%s291 + $0x78] sm:$0xff]
      %v309 = vld [vmem:[%s291 + $0x80] sm:$0xff]
      %v310 = vld [vmem:[%s291 + $0x88] sm:$0xff]
      %v311 = vld [vmem:[%s291 + $0x90] sm:$0xff]
      %v312 = vld [vmem:[%s291 + $0x98] sm:$0xff]
      %v313 = vld [vmem:[%s291 + $0xa0] sm:$0xff]
      %v314 = vld [vmem:[%s291 + $0xa8] sm:$0xff]
      %v315 = vld [vmem:[%s291 + $0xb0] sm:$0xff]
      %v316 = vld [vmem:[%s291 + $0xb8] sm:$0xff]
      %v317 = vld [vmem:[%s291 + $0xc0] sm:$0xff]
      %v318 = vld [vmem:[%s291 + $0xc8] sm:$0xff]
      %v319 = vld [vmem:[%s291 + $0xd0] sm:$0xff]
      %v320 = vld [vmem:[%s291 + $0xd8] sm:$0xff]
      %v321 = vld [vmem:[%s291 + $0xe0] sm:$0xff]
      %v322 = vld [vmem:[%s291 + $0xe8] sm:$0xff]
      %v323 = vld [vmem:[%s291 + $0xf0] sm:$0xff]
      %v324 = vld [vmem:[%s291 + $0xf8] sm:$0xff]
      %v325 = vld [vmem:[%s291 + $0x100] sm:$0xff]
      %v326 = vld [vmem:[%s291 + $0x108] sm:$0xff]
      %v327 = vld [vmem:[%s291 + $0x110] sm:$0xff]
      %v328 = vld [vmem:[%s291 + $0x118] sm:$0xff]
      %v329 = vld [vmem:[%s291 + $0x120] sm:$0xff]
      %v330 = vld [vmem:[%s291 + $0x128] sm:$0xff]
      %v331 = vld [vmem:[%s291 + $0x130] sm:$0xff]
      %v332 = vld [vmem:[%s291 + $0x138] sm:$0xff]
      %v333 = vld [vmem:[%s291 + $0x140] sm:$0xff]
      %v334 = vld [vmem:[%s291 + $0x148] sm:$0xff]
      %v335 = vld [vmem:[%s291 + $0x150] sm:$0xff]
      %v336 = vld [vmem:[%s291 + $0x158] sm:$0xff]
      %v337 = vld [vmem:[%s291 + $0x160] sm:$0xff]
      %v338 = vld [vmem:[%s291 + $0x168] sm:$0xff]
      %v339 = vld [vmem:[%s291 + $0x170] sm:$0xff]
      %v340 = vld [vmem:[%s291 + $0x178] sm:$0xff]
      %v341 = vld [vmem:[%s291 + $0x180] sm:$0xff]
      %v342 = vld [vmem:[%s291 + $0x188] sm:$0xff]
      %v343 = vld [vmem:[%s291 + $0x190] sm:$0xff]
      %v344 = vld [vmem:[%s291 + $0x198] sm:$0xff]
      %v345 = vld [vmem:[%s291 + $0x1a0] sm:$0xff]
      %v346 = vld [vmem:[%s291 + $0x1a8] sm:$0xff]
      %v347 = vld [vmem:[%s291 + $0x1b0] sm:$0xff]
      %v348 = vld [vmem:[%s291 + $0x1b8] sm:$0xff]
      %v349 = vld [vmem:[%s291 + $0x1c0] sm:$0xff]
      %v350 = vld [vmem:[%s291 + $0x1c8] sm:$0xff]
      %v351 = vld [vmem:[%s291 + $0x1d0] sm:$0xff]
      %v352 = vld [vmem:[%s291 + $0x1d8] sm:$0xff]
      %v353 = vld [vmem:[%s291 + $0x1e0] sm:$0xff]
      %v354 = vld [vmem:[%s291 + $0x1e8] sm:$0xff]
      %v355 = vld [vmem:[%s291 + $0x1f0] sm:$0xff]
      %v356 = vld [vmem:[%s291 + $0x1f8] sm:$0xff]
      %v357 = vld [vmem:[%s291 + $0x200] sm:$0xff]
      %v358 = vld [vmem:[%s291 + $0x208] sm:$0xff]
      %v359 = vld [vmem:[%s291 + $0x210] sm:$0xff]
      %v360 = vld [vmem:[%s291 + $0x218] sm:$0xff]
      %v361 = vld [vmem:[%s291 + $0x220] sm:$0xff]
      %v362 = vld [vmem:[%s291 + $0x228] sm:$0xff]
      %v363 = vld [vmem:[%s291 + $0x230] sm:$0xff]
      %v364 = vld [vmem:[%s291 + $0x238] sm:$0xff]
      %v365 = vld [vmem:[%s291 + $0x240] sm:$0xff]
      %v366 = vld [vmem:[%s291 + $0x248] sm:$0xff]
      %v367 = vld [vmem:[%s291 + $0x250] sm:$0xff]
      %v368 = vld [vmem:[%s291 + $0x258] sm:$0xff]
      %v369 = vld [vmem:[%s291 + $0x260] sm:$0xff]
      %v370 = vld [vmem:[%s291 + $0x268] sm:$0xff]
      %v371 = vld [vmem:[%s291 + $0x270] sm:$0xff]
      %v372 = vld [vmem:[%s291 + $0x278] sm:$0xff]
      %v373 = vld [vmem:[%s291 + $0x280] sm:$0xff]
      %v374 = vld [vmem:[%s291 + $0x288] sm:$0xff]
      %v375 = vld [vmem:[%s291 + $0x290] sm:$0xff]
      %v376 = vld [vmem:[%s291 + $0x298] sm:$0xff]
      %v377 = vld [vmem:[%s291 + $0x2a0] sm:$0xff]
      %v378 = vld [vmem:[%s291 + $0x2a8] sm:$0xff]
      %v379 = vld [vmem:[%s291 + $0x2b0] sm:$0xff]
      %v380 = vld [vmem:[%s291 + $0x2b8] sm:$0xff]
      %v381 = vld [vmem:[%s291 + $0x2c0] sm:$0xff]
      %v382 = vld [vmem:[%s291 + $0x2c8] sm:$0xff]
      %v383 = vld [vmem:[%s291 + $0x2d0] sm:$0xff]
      %v384 = vld [vmem:[%s291 + $0x2d8] sm:$0xff]
      %v385 = vld [vmem:[%s291 + $0x2e0] sm:$0xff]
      %v386 = vld [vmem:[%s291 + $0x2e8] sm:$0xff]
      %v387 = vld [vmem:[%s291 + $0x2f0] sm:$0xff]
      %v388 = vld [vmem:[%s291 + $0x2f8] sm:$0xff]
      %v389 = vld [vmem:[%s291 + $0x300] sm:$0xff]
      %v390 = vld [vmem:[%s291 + $0x308] sm:$0xff]
      %v391 = vld [vmem:[%s291 + $0x310] sm:$0xff]
      %v392 = vld [vmem:[%s291 + $0x318] sm:$0xff]
      %v393 = vld [vmem:[%s291 + $0x320] sm:$0xff]
      %v394 = vld [vmem:[%s291 + $0x328] sm:$0xff]
      %v395 = vld [vmem:[%s291 + $0x330] sm:$0xff]
      %v396 = vld [vmem:[%s291 + $0x338] sm:$0xff]
      %v397 = vld [vmem:[%s291 + $0x340] sm:$0xff]
      %v398 = vld [vmem:[%s291 + $0x348] sm:$0xff]
      %v399 = vld [vmem:[%s291 + $0x350] sm:$0xff]
      %v400 = vld [vmem:[%s291 + $0x358] sm:$0xff]
      %v401 = vld [vmem:[%s291 + $0x360] sm:$0xff]
      %v402 = vld [vmem:[%s291 + $0x368] sm:$0xff]
      %v403 = vld [vmem:[%s291 + $0x370] sm:$0xff]
      %v404 = vld [vmem:[%s291 + $0x378] sm:$0xff]
      %v405 = vld [vmem:[%s291 + $0x380] sm:$0xff]
      %v406 = vld [vmem:[%s291 + $0x388] sm:$0xff]
      %v407 = vld [vmem:[%s291 + $0x390] sm:$0xff]
      %v408 = vld [vmem:[%s291 + $0x398] sm:$0xff]
      %v409 = vld [vmem:[%s291 + $0x3a0] sm:$0xff]
      %v410 = vld [vmem:[%s291 + $0x3a8] sm:$0xff]
      %v411 = vld [vmem:[%s291 + $0x3b0] sm:$0xff]
      %v412 = vld [vmem:[%s291 + $0x3b8] sm:$0xff]
      %v413 = vld [vmem:[%s291 + $0x3c0] sm:$0xff]
      %v414 = vld [vmem:[%s291 + $0x3c8] sm:$0xff]
      %v415 = vld [vmem:[%s291 + $0x3d0] sm:$0xff]
      %v416 = vld [vmem:[%s291 + $0x3d8] sm:$0xff]
      %v417 = vld [vmem:[%s291 + $0x3e0] sm:$0xff]
      %v418 = vld [vmem:[%s291 + $0x3e8] sm:$0xff]
      %v419 = vld [vmem:[%s291 + $0x3f0] sm:$0xff]
      %v420 = vld [vmem:[%s291 + $0x3f8] sm:$0xff]
      %v421 = vld [vmem:[%s291 + $0x400] sm:$0xff]
      %v422 = vld [vmem:[%s291 + $0x408] sm:$0xff]
      %v423 = vld [vmem:[%s291 + $0x410] sm:$0xff]
      %v424 = vld [vmem:[%s291 + $0x418] sm:$0xff]
      %v425 = vld [vmem:[%s291 + $0x420] sm:$0xff]
      %v426 = vld [vmem:[%s291 + $0x428] sm:$0xff]
      %v427 = vld [vmem:[%s291 + $0x430] sm:$0xff]
      %v428 = vld [vmem:[%s291 + $0x438] sm:$0xff]
      %v429 = vld [vmem:[%s291 + $0x440] sm:$0xff]
      %v430 = vld [vmem:[%s291 + $0x448] sm:$0xff]
      %v431 = vld [vmem:[%s291 + $0x450] sm:$0xff]
      %v432 = vld [vmem:[%s291 + $0x458] sm:$0xff]
      %v433 = vld [vmem:[%s291 + $0x460] sm:$0xff]
      %v434 = vld [vmem:[%s291 + $0x468] sm:$0xff]
      %v435 = vld [vmem:[%s291 + $0x470] sm:$0xff]
      %v436 = vld [vmem:[%s291 + $0x478] sm:$0xff]
      %v437 = vld [vmem:[%s291 + $0x480] sm:$0xff]
      %v438 = vld [vmem:[%s291 + $0x488] sm:$0xff]
      %v439 = vld [vmem:[%s291 + $0x490] sm:$0xff]
      %v440 = vld [vmem:[%s291 + $0x498] sm:$0xff]
      %v441 = vld [vmem:[%s291 + $0x4a0] sm:$0xff]
      %v442 = vld [vmem:[%s291 + $0x4a8] sm:$0xff]
      %v443 = vld [vmem:[%s291 + $0x4b0] sm:$0xff]
      %v444 = vld [vmem:[%s291 + $0x4b8] sm:$0xff]
      %v445 = vld [vmem:[%s291 + $0x4c0] sm:$0xff]
      %v446 = vld [vmem:[%s291 + $0x4c8] sm:$0xff]
      %v447 = vld [vmem:[%s291 + $0x4d0] sm:$0xff]
      %v448 = vld [vmem:[%s291 + $0x4d8] sm:$0xff]
      %v449 = vld [vmem:[%s291 + $0x4e0] sm:$0xff]
      %v450 = vld [vmem:[%s291 + $0x4e8] sm:$0xff]
      %v451 = vld [vmem:[%s291 + $0x4f0] sm:$0xff]
      %v452 = vld [vmem:[%s291 + $0x4f8] sm:$0xff]
      %v453 = vld [vmem:[%s291 + $0x500] sm:$0xff]
      %v454 = vld [vmem:[%s291 + $0x508] sm:$0xff]
      %v455 = vld [vmem:[%s291 + $0x510] sm:$0xff]
      %v456 = vld [vmem:[%s291 + $0x518] sm:$0xff]
      %v457 = vld [vmem:[%s291 + $0x520] sm:$0xff]
      %v458 = vld [vmem:[%s291 + $0x528] sm:$0xff]
      %v459 = vld [vmem:[%s291 + $0x530] sm:$0xff]
      %v460 = vld [vmem:[%s291 + $0x538] sm:$0xff]
      %v461 = vld [vmem:[%s291 + $0x540] sm:$0xff]
      %v462 = vld [vmem:[%s291 + $0x548] sm:$0xff]
      %v463 = vld [vmem:[%s291 + $0x550] sm:$0xff]
      %v464 = vld [vmem:[%s291 + $0x558] sm:$0xff]
      %v465 = vld [vmem:[%s291 + $0x560] sm:$0xff]
      %v466 = vld [vmem:[%s291 + $0x568] sm:$0xff]
      %v467 = vld [vmem:[%s291 + $0x570] sm:$0xff]
      %v468 = vld [vmem:[%s291 + $0x578] sm:$0xff]
      %v469 = vld [vmem:[%s291 + $0x580] sm:$0xff]
      %v470 = vld [vmem:[%s291 + $0x588] sm:$0xff]
      %v471 = vld [vmem:[%s291 + $0x590] sm:$0xff]
      %v472 = vld [vmem:[%s291 + $0x598] sm:$0xff]
      %v473 = vld [vmem:[%s291 + $0x5a0] sm:$0xff]
      %v474 = vld [vmem:[%s291 + $0x5a8] sm:$0xff]
      %v475 = vld [vmem:[%s291 + $0x5b0] sm:$0xff]
      %v476 = vld [vmem:[%s291 + $0x5b8] sm:$0xff]
      %v477 = vld [vmem:[%s291 + $0x5c0] sm:$0xff]
      %v478 = vld [vmem:[%s291 + $0x5c8] sm:$0xff]
      %v479 = vld [vmem:[%s291 + $0x5d0] sm:$0xff]
      %v480 = vld [vmem:[%s291 + $0x5d8] sm:$0xff]
      %v481 = vld [vmem:[%s291 + $0x5e0] sm:$0xff]
      %v482 = vld [vmem:[%s291 + $0x5e8] sm:$0xff]
      %v483 = vld [vmem:[%s291 + $0x5f0] sm:$0xff]
      %v484 = vld [vmem:[%s291 + $0x5f8] sm:$0xff]
      %v485 = vld [vmem:[%s291 + $0x600] sm:$0xff]
      %v486 = vld [vmem:[%s291 + $0x608] sm:$0xff]
      %v487 = vld [vmem:[%s291 + $0x610] sm:$0xff]
      %v488 = vld [vmem:[%s291 + $0x618] sm:$0xff]
      %v489 = vld [vmem:[%s291 + $0x620] sm:$0xff]
      %v490 = vld [vmem:[%s291 + $0x628] sm:$0xff]
      %v491 = vld [vmem:[%s291 + $0x630] sm:$0xff]
      %v492 = vld [vmem:[%s291 + $0x638] sm:$0xff]
      %v493 = vld [vmem:[%s291 + $0x640] sm:$0xff]
      %v494 = vld [vmem:[%s291 + $0x648] sm:$0xff]
      %v495 = vld [vmem:[%s291 + $0x650] sm:$0xff]
      %v496 = vld [vmem:[%s291 + $0x658] sm:$0xff]
      %v497 = vld [vmem:[%s291 + $0x660] sm:$0xff]
      %v498 = vld [vmem:[%s291 + $0x668] sm:$0xff]
      %v499 = vld [vmem:[%s291 + $0x670] sm:$0xff]
      %v500 = vld [vmem:[%s291 + $0x678] sm:$0xff]
      %v501 = vld [vmem:[%s291 + $0x680] sm:$0xff]
      %v502 = vld [vmem:[%s291 + $0x688] sm:$0xff]
      %v503 = vld [vmem:[%s291 + $0x690] sm:$0xff]
      %v504 = vld [vmem:[%s291 + $0x698] sm:$0xff]
      %v505 = vld [vmem:[%s291 + $0x6a0] sm:$0xff]
      %v506 = vld [vmem:[%s291 + $0x6a8] sm:$0xff]
      %v507 = vld [vmem:[%s291 + $0x6b0] sm:$0xff]
      %v508 = vld [vmem:[%s291 + $0x6b8] sm:$0xff]
      %v509 = vld [vmem:[%s291 + $0x6c0] sm:$0xff]
      %v510 = vld [vmem:[%s291 + $0x6c8] sm:$0xff]
      %v511 = vld [vmem:[%s291 + $0x6d0] sm:$0xff]
      %v512 = vld [vmem:[%s291 + $0x6d8] sm:$0xff]
      %v513 = vld [vmem:[%s291 + $0x6e0] sm:$0xff]
      %v514 = vld [vmem:[%s291 + $0x6e8] sm:$0xff]
      %v515 = vld [vmem:[%s291 + $0x6f0] sm:$0xff]
      %v516 = vld [vmem:[%s291 + $0x6f8] sm:$0xff]
      %v517 = vld [vmem:[%s291 + $0x700] sm:$0xff]
      %v518 = vld [vmem:[%s291 + $0x708] sm:$0xff]
      %v519 = vld [vmem:[%s291 + $0x710] sm:$0xff]
      %v520 = vld [vmem:[%s291 + $0x718] sm:$0xff]
      %v521 = vld [vmem:[%s291 + $0x720] sm:$0xff]
      %v522 = vld [vmem:[%s291 + $0x728] sm:$0xff]
      %v523 = vld [vmem:[%s291 + $0x730] sm:$0xff]
      %v524 = vld [vmem:[%s291 + $0x738] sm:$0xff]
      %v525 = vld [vmem:[%s291 + $0x740] sm:$0xff]
      %v526 = vld [vmem:[%s291 + $0x748] sm:$0xff]
      %v527 = vld [vmem:[%s291 + $0x750] sm:$0xff]
      %v528 = vld [vmem:[%s291 + $0x758] sm:$0xff]
      %v529 = vld [vmem:[%s291 + $0x760] sm:$0xff]
      %v530 = vld [vmem:[%s291 + $0x768] sm:$0xff]
      %v531 = vld [vmem:[%s291 + $0x770] sm:$0xff]
      %v532 = vld [vmem:[%s291 + $0x778] sm:$0xff]
      %v533 = vld [vmem:[%s291 + $0x780] sm:$0xff]
      %v534 = vld [vmem:[%s291 + $0x788] sm:$0xff]
      %v535 = vld [vmem:[%s291 + $0x790] sm:$0xff]
      %v536 = vld [vmem:[%s291 + $0x798] sm:$0xff]
      %v537 = vld [vmem:[%s291 + $0x7a0] sm:$0xff]
      %v538 = vld [vmem:[%s291 + $0x7a8] sm:$0xff]
      %v539 = vld [vmem:[%s291 + $0x7b0] sm:$0xff]
      %v540 = vld [vmem:[%s291 + $0x7b8] sm:$0xff]
      %v541 = vld [vmem:[%s291 + $0x7c0] sm:$0xff]
      %v542 = vld [vmem:[%s291 + $0x7c8] sm:$0xff]
      %v543 = vld [vmem:[%s291 + $0x7d0] sm:$0xff]
      %v544 = vld [vmem:[%s291 + $0x7d8] sm:$0xff]
      %v545 = vld [vmem:[%s291 + $0x7e0] sm:$0xff]
      %v546 = vld [vmem:[%s291 + $0x7e8] sm:$0xff]
      %v547 = vld [vmem:[%s291 + $0x7f0] sm:$0xff]
      %v548 = vld [vmem:[%s291 + $0x7f8] sm:$0xff]
      %v549 = vld [vmem:[%s1] sm:$0xff]
      %v550 = vld [vmem:[%s1 + $0x8] sm:$0xff]
      %v551 = vld [vmem:[%s1 + $0x10] sm:$0xff]
      %v552 = vld [vmem:[%s1 + $0x18] sm:$0xff]
      %v553 = vld [vmem:[%s2] sm:$0x1]
      %v555 = vlaneseq
      %v556 = vshrl.u32 %v555, 7
      %v557 = vsub.s32 0, %v556
      %v558 = vrot.slane %v553, %v557
      %vm560 = vcmask 261120
      %v562 = vsel %vm560, %v293, 0
      %v565 = vsel %vm560, %v294, 0
      %v568 = vsel %vm560, %v295, 0
      %v571 = vsel %vm560, %v296, 0
      %v574 = vsel %vm560, %v297, 0
      %v577 = vsel %vm560, %v298, 0
      %v580 = vsel %vm560, %v299, 0
      %v583 = vsel %vm560, %v300, 0
      %v586 = vsel %vm560, %v301, 0
      %v589 = vsel %vm560, %v302, 0
      %v592 = vsel %vm560, %v303, 0
      %v595 = vsel %vm560, %v304, 0
      %v598 = vsel %vm560, %v305, 0
      %v601 = vsel %vm560, %v306, 0
      %v604 = vsel %vm560, %v307, 0
      %v607 = vsel %vm560, %v308, 0
      %v610 = vsel %vm560, %v309, 0
      %v613 = vsel %vm560, %v310, 0
      %v616 = vsel %vm560, %v311, 0
      %v619 = vsel %vm560, %v312, 0
      %v622 = vsel %vm560, %v313, 0
      %v625 = vsel %vm560, %v314, 0
      %v628 = vsel %vm560, %v315, 0
      %v631 = vsel %vm560, %v316, 0
      %v634 = vsel %vm560, %v317, 0
      %v637 = vsel %vm560, %v318, 0
      %v640 = vsel %vm560, %v319, 0
      %v643 = vsel %vm560, %v320, 0
      %v646 = vsel %vm560, %v321, 0
      %v649 = vsel %vm560, %v322, 0
      %v652 = vsel %vm560, %v323, 0
      %v655 = vsel %vm560, %v324, 0
      %v658 = vsel %vm560, %v325, 0
      %v661 = vsel %vm560, %v326, 0
      %v664 = vsel %vm560, %v327, 0
      %v667 = vsel %vm560, %v328, 0
      %v670 = vsel %vm560, %v329, 0
      %v673 = vsel %vm560, %v330, 0
      %v676 = vsel %vm560, %v331, 0
      %v679 = vsel %vm560, %v332, 0
      %v682 = vsel %vm560, %v333, 0
      %v685 = vsel %vm560, %v334, 0
      %v688 = vsel %vm560, %v335, 0
      %v691 = vsel %vm560, %v336, 0
      %v694 = vsel %vm560, %v337, 0
      %v697 = vsel %vm560, %v338, 0
      %v700 = vsel %vm560, %v339, 0
      %v703 = vsel %vm560, %v340, 0
      %v706 = vsel %vm560, %v341, 0
      %v709 = vsel %vm560, %v342, 0
      %v712 = vsel %vm560, %v343, 0
      %v715 = vsel %vm560, %v344, 0
      %v718 = vsel %vm560, %v345, 0
      %v721 = vsel %vm560, %v346, 0
      %v724 = vsel %vm560, %v347, 0
      %v727 = vsel %vm560, %v348, 0
      %v730 = vsel %vm560, %v349, 0
      %v733 = vsel %vm560, %v350, 0
      %v736 = vsel %vm560, %v351, 0
      %v739 = vsel %vm560, %v352, 0
      %v742 = vsel %vm560, %v353, 0
      %v745 = vsel %vm560, %v354, 0
      %v748 = vsel %vm560, %v355, 0
      %v751 = vsel %vm560, %v356, 0
      %v754 = vsel %vm560, %v357, 0
      %v757 = vsel %vm560, %v358, 0
      %v760 = vsel %vm560, %v359, 0
      %v763 = vsel %vm560, %v360, 0
      %v766 = vsel %vm560, %v361, 0
      %v769 = vsel %vm560, %v362, 0
      %v772 = vsel %vm560, %v363, 0
      %v775 = vsel %vm560, %v364, 0
      %v778 = vsel %vm560, %v365, 0
      %v781 = vsel %vm560, %v366, 0
      %v784 = vsel %vm560, %v367, 0
      %v787 = vsel %vm560, %v368, 0
      %v790 = vsel %vm560, %v369, 0
      %v793 = vsel %vm560, %v370, 0
      %v796 = vsel %vm560, %v371, 0
      %v799 = vsel %vm560, %v372, 0
      %v802 = vsel %vm560, %v373, 0
      %v805 = vsel %vm560, %v374, 0
      %v808 = vsel %vm560, %v375, 0
      %v811 = vsel %vm560, %v376, 0
      %v814 = vsel %vm560, %v377, 0
      %v817 = vsel %vm560, %v378, 0
      %v820 = vsel %vm560, %v379, 0
      %v823 = vsel %vm560, %v380, 0
      %v826 = vsel %vm560, %v381, 0
      %v829 = vsel %vm560, %v382, 0
      %v832 = vsel %vm560, %v383, 0
      %v835 = vsel %vm560, %v384, 0
      %v838 = vsel %vm560, %v385, 0
      %v841 = vsel %vm560, %v386, 0
      %v844 = vsel %vm560, %v387, 0
      %v847 = vsel %vm560, %v388, 0
      %v850 = vsel %vm560, %v389, 0
      %v853 = vsel %vm560, %v390, 0
      %v856 = vsel %vm560, %v391, 0
      %v859 = vsel %vm560, %v392, 0
      %v862 = vsel %vm560, %v393, 0
      %v865 = vsel %vm560, %v394, 0
      %v868 = vsel %vm560, %v395, 0
      %v871 = vsel %vm560, %v396, 0
      %v874 = vsel %vm560, %v397, 0
      %v877 = vsel %vm560, %v398, 0
      %v880 = vsel %vm560, %v399, 0
      %v883 = vsel %vm560, %v400, 0
      %v886 = vsel %vm560, %v401, 0
      %v889 = vsel %vm560, %v402, 0
      %v892 = vsel %vm560, %v403, 0
      %v895 = vsel %vm560, %v404, 0
      %v898 = vsel %vm560, %v405, 0
      %v901 = vsel %vm560, %v406, 0
      %v904 = vsel %vm560, %v407, 0
      %v907 = vsel %vm560, %v408, 0
      %v910 = vsel %vm560, %v409, 0
      %v913 = vsel %vm560, %v410, 0
      %v916 = vsel %vm560, %v411, 0
      %v919 = vsel %vm560, %v412, 0
      %v922 = vsel %vm560, %v413, 0
      %v925 = vsel %vm560, %v414, 0
      %v928 = vsel %vm560, %v415, 0
      %v931 = vsel %vm560, %v416, 0
      %v934 = vsel %vm560, %v417, 0
      %v937 = vsel %vm560, %v418, 0
      %v940 = vsel %vm560, %v419, 0
      %v943 = vsel %vm560, %v420, 0
      %v946 = vsel %vm560, %v421, 0
      %v949 = vsel %vm560, %v422, 0
      %v952 = vsel %vm560, %v423, 0
      %v955 = vsel %vm560, %v424, 0
      %v958 = vsel %vm560, %v425, 0
      %v961 = vsel %vm560, %v426, 0
      %v964 = vsel %vm560, %v427, 0
      %v967 = vsel %vm560, %v428, 0
      %v970 = vsel %vm560, %v429, 0
      %v973 = vsel %vm560, %v430, 0
      %v976 = vsel %vm560, %v431, 0
      %v979 = vsel %vm560, %v432, 0
      %v982 = vsel %vm560, %v433, 0
      %v985 = vsel %vm560, %v434, 0
      %v988 = vsel %vm560, %v435, 0
      %v991 = vsel %vm560, %v436, 0
      %v994 = vsel %vm560, %v437, 0
      %v997 = vsel %vm560, %v438, 0
      %v1000 = vsel %vm560, %v439, 0
      %v1003 = vsel %vm560, %v440, 0
      %v1006 = vsel %vm560, %v441, 0
      %v1009 = vsel %vm560, %v442, 0
      %v1012 = vsel %vm560, %v443, 0
      %v1015 = vsel %vm560, %v444, 0
      %v1018 = vsel %vm560, %v445, 0
      %v1021 = vsel %vm560, %v446, 0
      %v1024 = vsel %vm560, %v447, 0
      %v1027 = vsel %vm560, %v448, 0
      %v1030 = vsel %vm560, %v449, 0
      %v1033 = vsel %vm560, %v450, 0
      %v1036 = vsel %vm560, %v451, 0
      %v1039 = vsel %vm560, %v452, 0
      %v1042 = vsel %vm560, %v453, 0
      %v1045 = vsel %vm560, %v454, 0
      %v1048 = vsel %vm560, %v455, 0
      %v1051 = vsel %vm560, %v456, 0
      %v1054 = vsel %vm560, %v457, 0
      %v1057 = vsel %vm560, %v458, 0
      %v1060 = vsel %vm560, %v459, 0
      %v1063 = vsel %vm560, %v460, 0
      %v1066 = vsel %vm560, %v461, 0
      %v1069 = vsel %vm560, %v462, 0
      %v1072 = vsel %vm560, %v463, 0
      %v1075 = vsel %vm560, %v464, 0
      %v1078 = vsel %vm560, %v465, 0
      %v1081 = vsel %vm560, %v466, 0
      %v1084 = vsel %vm560, %v467, 0
      %v1087 = vsel %vm560, %v468, 0
      %v1090 = vsel %vm560, %v469, 0
      %v1093 = vsel %vm560, %v470, 0
      %v1096 = vsel %vm560, %v471, 0
      %v1099 = vsel %vm560, %v472, 0
      %v1102 = vsel %vm560, %v473, 0
      %v1105 = vsel %vm560, %v474, 0
      %v1108 = vsel %vm560, %v475, 0
      %v1111 = vsel %vm560, %v476, 0
      %v1114 = vsel %vm560, %v477, 0
      %v1117 = vsel %vm560, %v478, 0
      %v1120 = vsel %vm560, %v479, 0
      %v1123 = vsel %vm560, %v480, 0
      %v1126 = vsel %vm560, %v481, 0
      %v1129 = vsel %vm560, %v482, 0
      %v1132 = vsel %vm560, %v483, 0
      %v1135 = vsel %vm560, %v484, 0
      %v1138 = vsel %vm560, %v485, 0
      %v1141 = vsel %vm560, %v486, 0
      %v1144 = vsel %vm560, %v487, 0
      %v1147 = vsel %vm560, %v488, 0
      %v1150 = vsel %vm560, %v489, 0
      %v1153 = vsel %vm560, %v490, 0
      %v1156 = vsel %vm560, %v491, 0
      %v1159 = vsel %vm560, %v492, 0
      %v1162 = vsel %vm560, %v493, 0
      %v1165 = vsel %vm560, %v494, 0
      %v1168 = vsel %vm560, %v495, 0
      %v1171 = vsel %vm560, %v496, 0
      %v1174 = vsel %vm560, %v497, 0
      %v1177 = vsel %vm560, %v498, 0
      %v1180 = vsel %vm560, %v499, 0
      %v1183 = vsel %vm560, %v500, 0
      %v1186 = vsel %vm560, %v501, 0
      %v1189 = vsel %vm560, %v502, 0
      %v1192 = vsel %vm560, %v503, 0
      %v1195 = vsel %vm560, %v504, 0
      %v1198 = vsel %vm560, %v505, 0
      %v1201 = vsel %vm560, %v506, 0
      %v1204 = vsel %vm560, %v507, 0
      %v1207 = vsel %vm560, %v508, 0
      %v1210 = vsel %vm560, %v509, 0
      %v1213 = vsel %vm560, %v510, 0
      %v1216 = vsel %vm560, %v511, 0
      %v1219 = vsel %vm560, %v512, 0
      %v1222 = vsel %vm560, %v513, 0
      %v1225 = vsel %vm560, %v514, 0
      %v1228 = vsel %vm560, %v515, 0
      %v1231 = vsel %vm560, %v516, 0
      %v1234 = vsel %vm560, %v517, 0
      %v1237 = vsel %vm560, %v518, 0
      %v1240 = vsel %vm560, %v519, 0
      %v1243 = vsel %vm560, %v520, 0
      %v1246 = vsel %vm560, %v521, 0
      %v1249 = vsel %vm560, %v522, 0
      %v1252 = vsel %vm560, %v523, 0
      %v1255 = vsel %vm560, %v524, 0
      %v1258 = vsel %vm560, %v525, 0
      %v1261 = vsel %vm560, %v526, 0
      %v1264 = vsel %vm560, %v527, 0
      %v1267 = vsel %vm560, %v528, 0
      %v1270 = vsel %vm560, %v529, 0
      %v1273 = vsel %vm560, %v530, 0
      %v1276 = vsel %vm560, %v531, 0
      %v1279 = vsel %vm560, %v532, 0
      %v1282 = vsel %vm560, %v533, 0
      %v1285 = vsel %vm560, %v534, 0
      %v1288 = vsel %vm560, %v535, 0
      %v1291 = vsel %vm560, %v536, 0
      %v1294 = vsel %vm560, %v537, 0
      %v1297 = vsel %vm560, %v538, 0
      %v1300 = vsel %vm560, %v539, 0
      %v1303 = vsel %vm560, %v540, 0
      %v1306 = vsel %vm560, %v541, 0
      %v1309 = vsel %vm560, %v542, 0
      %v1312 = vsel %vm560, %v543, 0
      %v1315 = vsel %vm560, %v544, 0
      %v1318 = vsel %vm560, %v545, 0
      %v1321 = vsel %vm560, %v546, 0
      %v1324 = vsel %vm560, %v547, 0
      %v1327 = vsel %vm560, %v548, 0
      %1329 = vmatprep.subr.mxu0 0.0
      %1330 = vmatpush1.msra.mxu0 %v549
      %1331 = vmatprep.subr.mxu0 0.0
      %1332 = vmatpush1.msra.mxu0 %v550
      %1333 = vmatprep.subr.mxu0 0.0
      %1334 = vmatpush1.msra.mxu0 %v551
      %1335 = vmatprep.subr.mxu0 0.0
      %1336 = vmatpush1.msra.mxu0 %v552
      %1337 = vmatprep.subr.mxu0 0.0
      %1338 = vmatpush1.msra.mxu0 0.0
      %1339 = vmatprep.subr.mxu0 0.0
      %1340 = vmatpush1.msra.mxu0 0.0
      %1341 = vmatprep.subr.mxu0 0.0
      %1342 = vmatpush1.msra.mxu0 0.0
      %1343 = vmatprep.subr.mxu0 0.0
      %1344 = vmatpush1.msra.mxu0 0.0
      %1345 = vmatprep.subr.mxu0 0.0
      %1346 = vmatpush1.msra.mxu0 0.0
      %1347 = vmatprep.subr.mxu0 0.0
      %1348 = vmatpush1.msra.mxu0 0.0
      %1349 = vmatprep.subr.mxu0 0.0
      %1350 = vmatpush1.msra.mxu0 0.0
      %1351 = vmatprep.subr.mxu0 0.0
      %1352 = vmatpush1.msra.mxu0 0.0
      %1353 = vmatprep.subr.mxu0 0.0
      %1354 = vmatpush1.msra.mxu0 0.0
      %1355 = vmatprep.subr.mxu0 0.0
      %1356 = vmatpush1.msra.mxu0 0.0
      %1357 = vmatprep.subr.mxu0 0.0
      %1358 = vmatpush1.msra.mxu0 0.0
      %1359 = vmatprep.subr.mxu0 0.0
      %1360 = vmatpush1.msra.mxu0 0.0
      %1361 = vmatprep.subr.mxu0 0.0
      %1362 = vmatpush1.msra.mxu0 0.0
      %1363 = vmatprep.subr.mxu0 0.0
      %1364 = vmatpush1.msra.mxu0 0.0
      %1365 = vmatprep.subr.mxu0 0.0
      %1366 = vmatpush1.msra.mxu0 0.0
      %1367 = vmatprep.subr.mxu0 0.0
      %1368 = vmatpush1.msra.mxu0 0.0
      %1369 = vmatprep.subr.mxu0 0.0
      %1370 = vmatpush1.msra.mxu0 0.0
      %1371 = vmatprep.subr.mxu0 0.0
      %1372 = vmatpush1.msra.mxu0 0.0
      %1373 = vmatprep.subr.mxu0 0.0
      %1374 = vmatpush1.msra.mxu0 0.0
      %1375 = vmatprep.subr.mxu0 0.0
      %1376 = vmatpush1.msra.mxu0 0.0
      %1377 = vmatprep.subr.mxu0 0.0
      %1378 = vmatpush1.msra.mxu0 0.0
      %1379 = vmatprep.subr.mxu0 0.0
      %1380 = vmatpush1.msra.mxu0 0.0
      %1381 = vmatprep.subr.mxu0 0.0
      %1382 = vmatpush1.msra.mxu0 0.0
      %1383 = vmatprep.subr.mxu0 0.0
      %1384 = vmatpush1.msra.mxu0 0.0
      %1385 = vmatprep.subr.mxu0 0.0
      %1386 = vmatpush1.msra.mxu0 0.0
      %1387 = vmatprep.subr.mxu0 0.0
      %1388 = vmatpush1.msra.mxu0 0.0
      %1389 = vmatprep.subr.mxu0 0.0
      %1390 = vmatpush1.msra.mxu0 0.0
      %1391 = vmatprep.subr.mxu0 0.0
      %1392 = vmatpush1.msra.mxu0 0.0
      %1393 = vmatprep.mubr.f32.mxu0 0.0
      %1394 = vmatmul.mubr.f32.gmra.mrb[0].mxu0 %v562
      %v1395 = vpop.f32.mrb[0].mxu0
      %v1396 = vadd.f32 %v558, %v1395
      %v1397 = vpop.f32.mrb[0].mxu0
      %1398 = vmatprep.mubr.f32.mxu0 0.0
      %1399 = vmatmul.mubr.f32.gmra.mrb[0].mxu0 %v565
      %v1400 = vpop.f32.mrb[0].mxu0
      %v1401 = vadd.f32 %v558, %v1400
      %v1402 = vpop.f32.mrb[0].mxu0
      %1403 = vmatprep.mubr.f32.mxu0 0.0
      %1404 = vmatmul.mubr.f32.gmra.mrb[0].mxu0 %v568
      %v1405 = vpop.f32.mrb[0].mxu0
      %v1406 = vadd.f32 %v558, %v1405
      %v1407 = vpop.f32.mrb[0].mxu0
      %1408 = vmatprep.mubr.f32.mxu0 0.0
      %1409 = vmatmul.mubr.f32.gmra.mrb[0].mxu0 %v571
      %v1410 = vpop.f32.mrb[0].mxu0
      %v1411 = vadd.f32 %v558, %v1410
      %v1412 = vpop.f32.mrb[0].mxu0
      %1413 = vmatprep.mubr.f32.mxu0 0.0
      %1414 = vmatmul.mubr.f32.gmra.mrb[0].mxu0 %v574
      %v1415 = vpop.f32.mrb[0].mxu0
      %v1416 = vadd.f32 %v558, %v1415
      %v1417 = vpop.f32.mrb[0].mxu0
      %1418 = vmatprep.mubr.f32.mxu0 0.0
      %1419 = vmatmul.mubr.f32.gmra.mrb[0].mxu0 %v577
      %v1420 = vpop.f32.mrb[0].mxu0
      %v1421 = vadd.f32 %v558, %v1420
      %v1422 = vpop.f32.mrb[0].mxu0
      %1423 = vmatprep.mubr.f32.mxu0 0.0
      %1424 = vmatmul.mubr.f32.gmra.mrb[0].mxu0 %v580
      %v1425 = vpop.f32.mrb[0].mxu0
      %v1426 = vadd.f32 %v558, %v1425
      %v1427 = vpop.f32.mrb[0].mxu0
      %1428 = vmatprep.mubr.f32.mxu0 0.0
      %1429 = vmatmul.mubr.f32.gmra.mrb[0].mxu0 %v583
      %v1430 = vpop.f32.mrb[0].mxu0
      %v1431 = vadd.f32 %v558, %v1430
      %v1432 = vpop.f32.mrb[0].mxu0
      %1433 = vmatprep.mubr.f32.mxu0 0.0
      %1434 = vmatmul.mubr.f32.gmra.mrb[0].mxu0 %v586
      %v1435 = vpop.f32.mrb[0].mxu0
      %v1436 = vadd.f32 %v558, %v1435
      %v1437 = vpop.f32.mrb[0].mxu0
      %1438 = vmatprep.mubr.f32.mxu0 0.0
      %1439 = vmatmul.mubr.f32.gmra.mrb[0].mxu0 %v589
      %v1440 = vpop.f32.mrb[0].mxu0
      %v1441 = vadd.f32 %v558, %v1440
      %v1442 = vpop.f32.mrb[0].mxu0
      %1443 = vmatprep.mubr.f32.mxu0 0.0
      %1444 = vmatmul.mubr.f32.gmra.mrb[0].mxu0 %v592
      %v1445 = vpop.f32.mrb[0].mxu0
      %v1446 = vadd.f32 %v558, %v1445
      %v1447 = vpop.f32.mrb[0].mxu0
      %1448 = vmatprep.mubr.f32.mxu0 0.0
      %1449 = vmatmul.mubr.f32.gmra.mrb[0].mxu0 %v595
      %v1450 = vpop.f32.mrb[0].mxu0
      %v1451 = vadd.f32 %v558, %v1450
      %v1452 = vpop.f32.mrb[0].mxu0
      %1453 = vmatprep.mubr.f32.mxu0 0.0
      %1454 = vmatmul.mubr.f32.gmra.mrb[0].mxu0 %v598
      %v1455 = vpop.f32.mrb[0].mxu0
      %v1456 = vadd.f32 %v558, %v1455
      %v1457 = vpop.f32.mrb[0].mxu0
      %1458 = vmatprep.mubr.f32.mxu0 0.0
      %1459 = vmatmul.mubr.f32.gmra.mrb[0].mxu0 %v601
      %v1460 = vpop.f32.mrb[0].mxu0
      %v1461 = vadd.f32 %v558, %v1460
      %v1462 = vpop.f32.mrb[0].mxu0
      %1463 = vmatprep.mubr.f32.mxu0 0.0
      %1464 = vmatmul.mubr.f32.gmra.mrb[0].mxu0 %v604
      %v1465 = vpop.f32.mrb[0].mxu0
      %v1466 = vadd.f32 %v558, %v1465
      %v1467 = vpop.f32.mrb[0].mxu0
      %1468 = vmatprep.mubr.f32.mxu0 0.0
      %1469 = vmatmul.mubr.f32.gmra.mrb[0].mxu0 %v607
      %v1470 = vpop.f32.mrb[0].mxu0
      %v1471 = vadd.f32 %v558, %v1470
      %v1472 = vpop.f32.mrb[0].mxu0
      %1473 = vmatprep.mubr.f32.mxu0 0.0
      %1474 = vmatmul.mubr.f32.gmra.mrb[0].mxu0 %v610
      %v1475 = vpop.f32.mrb[0].mxu0
      %v1476 = vadd.f32 %v558, %v1475
      %v1477 = vpop.f32.mrb[0].mxu0
      %1478 = vmatprep.mubr.f32.mxu0 0.0
      %1479 = vmatmul.mubr.f32.gmra.mrb[0].mxu0 %v613
      %v1480 = vpop.f32.mrb[0].mxu0
      %v1481 = vadd.f32 %v558, %v1480
      %v1482 = vpop.f32.mrb[0].mxu0
      %1483 = vmatprep.mubr.f32.mxu0 0.0
      %1484 = vmatmul.mubr.f32.gmra.mrb[0].mxu0 %v616
      %v1485 = vpop.f32.mrb[0].mxu0
      %v1486 = vadd.f32 %v558, %v1485
      %v1487 = vpop.f32.mrb[0].mxu0
      %1488 = vmatprep.mubr.f32.mxu0 0.0
      %1489 = vmatmul.mubr.f32.gmra.mrb[0].mxu0 %v619
      %v1490 = vpop.f32.mrb[0].mxu0
      %v1491 = vadd.f32 %v558, %v1490
      %v1492 = vpop.f32.mrb[0].mxu0
      %1493 = vmatprep.mubr.f32.mxu0 0.0
      %1494 = vmatmul.mubr.f32.gmra.mrb[0].mxu0 %v622
      %v1495 = vpop.f32.mrb[0].mxu0
      %v1496 = vadd.f32 %v558, %v1495
      %v1497 = vpop.f32.mrb[0].mxu0
      %1498 = vmatprep.mubr.f32.mxu0 0.0
      %1499 = vmatmul.mubr.f32.gmra.mrb[0].mxu0 %v625
      %v1500 = vpop.f32.mrb[0].mxu0
      %v1501 = vadd.f32 %v558, %v1500
      %v1502 = vpop.f32.mrb[0].mxu0
      %1503 = vmatprep.mubr.f32.mxu0 0.0
      %1504 = vmatmul.mubr.f32.gmra.mrb[0].mxu0 %v628
      %v1505 = vpop.f32.mrb[0].mxu0
      %v1506 = vadd.f32 %v558, %v1505
      %v1507 = vpop.f32.mrb[0].mxu0
      %1508 = vmatprep.mubr.f32.mxu0 0.0
      %1509 = vmatmul.mubr.f32.gmra.mrb[0].mxu0 %v631
      %v1510 = vpop.f32.mrb[0].mxu0
      %v1511 = vadd.f32 %v558, %v1510
      %v1512 = vpop.f32.mrb[0].mxu0
      %1513 = vmatprep.mubr.f32.mxu0 0.0
      %1514 = vmatmul.mubr.f32.gmra.mrb[0].mxu0 %v634
      %v1515 = vpop.f32.mrb[0].mxu0
      %v1516 = vadd.f32 %v558, %v1515
      %v1517 = vpop.f32.mrb[0].mxu0
      %1518 = vmatprep.mubr.f32.mxu0 0.0
      %1519 = vmatmul.mubr.f32.gmra.mrb[0].mxu0 %v637
      %v1520 = vpop.f32.mrb[0].mxu0
      %v1521 = vadd.f32 %v558, %v1520
      %v1522 = vpop.f32.mrb[0].mxu0
      %1523 = vmatprep.mubr.f32.mxu0 0.0
      %1524 = vmatmul.mubr.f32.gmra.mrb[0].mxu0 %v640
      %v1525 = vpop.f32.mrb[0].mxu0
      %v1526 = vadd.f32 %v558, %v1525
      %v1527 = vpop.f32.mrb[0].mxu0
      %1528 = vmatprep.mubr.f32.mxu0 0.0
      %1529 = vmatmul.mubr.f32.gmra.mrb[0].mxu0 %v643
      %v1530 = vpop.f32.mrb[0].mxu0
      %v1531 = vadd.f32 %v558, %v1530
      %v1532 = vpop.f32.mrb[0].mxu0
      %1533 = vmatprep.mubr.f32.mxu0 0.0
      %1534 = vmatmul.mubr.f32.gmra.mrb[0].mxu0 %v646
      %v1535 = vpop.f32.mrb[0].mxu0
      %v1536 = vadd.f32 %v558, %v1535
      %v1537 = vpop.f32.mrb[0].mxu0
      %1538 = vmatprep.mubr.f32.mxu0 0.0
      %1539 = vmatmul.mubr.f32.gmra.mrb[0].mxu0 %v649
      %v1540 = vpop.f32.mrb[0].mxu0
      %v1541 = vadd.f32 %v558, %v1540
      %v1542 = vpop.f32.mrb[0].mxu0
      %1543 = vmatprep.mubr.f32.mxu0 0.0
      %1544 = vmatmul.mubr.f32.gmra.mrb[0].mxu0 %v652
      %v1545 = vpop.f32.mrb[0].mxu0
      %v1546 = vadd.f32 %v558, %v1545
      %v1547 = vpop.f32.mrb[0].mxu0
      %1548 = vmatprep.mubr.f32.mxu0 0.0
      %1549 = vmatmul.mubr.f32.gmra.mrb[0].mxu0 %v655
      %v1550 = vpop.f32.mrb[0].mxu0
      %v1551 = vadd.f32 %v558, %v1550
      %v1552 = vpop.f32.mrb[0].mxu0
      %1553 = vmatprep.mubr.f32.mxu0 0.0
      %1554 = vmatmul.mubr.f32.gmra.mrb[0].mxu0 %v658
      %v1555 = vpop.f32.mrb[0].mxu0
      %v1556 = vadd.f32 %v558, %v1555
      %v1557 = vpop.f32.mrb[0].mxu0
      %1558 = vmatprep.mubr.f32.mxu0 0.0
      %1559 = vmatmul.mubr.f32.gmra.mrb[0].mxu0 %v661
      %v1560 = vpop.f32.mrb[0].mxu0
      %v1561 = vadd.f32 %v558, %v1560
      %v1562 = vpop.f32.mrb[0].mxu0
      %1563 = vmatprep.mubr.f32.mxu0 0.0
      %1564 = vmatmul.mubr.f32.gmra.mrb[0].mxu0 %v664
      %v1565 = vpop.f32.mrb[0].mxu0
      %v1566 = vadd.f32 %v558, %v1565
      %v1567 = vpop.f32.mrb[0].mxu0
      %1568 = vmatprep.mubr.f32.mxu0 0.0
      %1569 = vmatmul.mubr.f32.gmra.mrb[0].mxu0 %v667
      %v1570 = vpop.f32.mrb[0].mxu0
      %v1571 = vadd.f32 %v558, %v1570
      %v1572 = vpop.f32.mrb[0].mxu0
      %1573 = vmatprep.mubr.f32.mxu0 0.0
      %1574 = vmatmul.mubr.f32.gmra.mrb[0].mxu0 %v670
      %v1575 = vpop.f32.mrb[0].mxu0
      %v1576 = vadd.f32 %v558, %v1575
      %v1577 = vpop.f32.mrb[0].mxu0
      %1578 = vmatprep.mubr.f32.mxu0 0.0
      %1579 = vmatmul.mubr.f32.gmra.mrb[0].mxu0 %v673
      %v1580 = vpop.f32.mrb[0].mxu0
      %v1581 = vadd.f32 %v558, %v1580
      %v1582 = vpop.f32.mrb[0].mxu0
      %1583 = vmatprep.mubr.f32.mxu0 0.0
      %1584 = vmatmul.mubr.f32.gmra.mrb[0].mxu0 %v676
      %v1585 = vpop.f32.mrb[0].mxu0
      %v1586 = vadd.f32 %v558, %v1585
      %v1587 = vpop.f32.mrb[0].mxu0
      %1588 = vmatprep.mubr.f32.mxu0 0.0
      %1589 = vmatmul.mubr.f32.gmra.mrb[0].mxu0 %v679
      %v1590 = vpop.f32.mrb[0].mxu0
      %v1591 = vadd.f32 %v558, %v1590
      %v1592 = vpop.f32.mrb[0].mxu0
      %1593 = vmatprep.mubr.f32.mxu0 0.0
      %1594 = vmatmul.mubr.f32.gmra.mrb[0].mxu0 %v682
      %v1595 = vpop.f32.mrb[0].mxu0
      %v1596 = vadd.f32 %v558, %v1595
      %v1597 = vpop.f32.mrb[0].mxu0
      %1598 = vmatprep.mubr.f32.mxu0 0.0
      %1599 = vmatmul.mubr.f32.gmra.mrb[0].mxu0 %v685
      %v1600 = vpop.f32.mrb[0].mxu0
      %v1601 = vadd.f32 %v558, %v1600
      %v1602 = vpop.f32.mrb[0].mxu0
      %1603 = vmatprep.mubr.f32.mxu0 0.0
      %1604 = vmatmul.mubr.f32.gmra.mrb[0].mxu0 %v688
      %v1605 = vpop.f32.mrb[0].mxu0
      %v1606 = vadd.f32 %v558, %v1605
      %v1607 = vpop.f32.mrb[0].mxu0
      %1608 = vmatprep.mubr.f32.mxu0 0.0
      %1609 = vmatmul.mubr.f32.gmra.mrb[0].mxu0 %v691
      %v1610 = vpop.f32.mrb[0].mxu0
      %v1611 = vadd.f32 %v558, %v1610
      %v1612 = vpop.f32.mrb[0].mxu0
      %1613 = vmatprep.mubr.f32.mxu0 0.0
      %1614 = vmatmul.mubr.f32.gmra.mrb[0].mxu0 %v694
      %v1615 = vpop.f32.mrb[0].mxu0
      %v1616 = vadd.f32 %v558, %v1615
      %v1617 = vpop.f32.mrb[0].mxu0
      %1618 = vmatprep.mubr.f32.mxu0 0.0
      %1619 = vmatmul.mubr.f32.gmra.mrb[0].mxu0 %v697
      %v1620 = vpop.f32.mrb[0].mxu0
      %v1621 = vadd.f32 %v558, %v1620
      %v1622 = vpop.f32.mrb[0].mxu0
      %1623 = vmatprep.mubr.f32.mxu0 0.0
      %1624 = vmatmul.mubr.f32.gmra.mrb[0].mxu0 %v700
      %v1625 = vpop.f32.mrb[0].mxu0
      %v1626 = vadd.f32 %v558, %v1625
      %v1627 = vpop.f32.mrb[0].mxu0
      %1628 = vmatprep.mubr.f32.mxu0 0.0
      %1629 = vmatmul.mubr.f32.gmra.mrb[0].mxu0 %v703
      %v1630 = vpop.f32.mrb[0].mxu0
      %v1631 = vadd.f32 %v558, %v1630
      %v1632 = vpop.f32.mrb[0].mxu0
      %1633 = vmatprep.mubr.f32.mxu0 0.0
      %1634 = vmatmul.mubr.f32.gmra.mrb[0].mxu0 %v706
      %v1635 = vpop.f32.mrb[0].mxu0
      %v1636 = vadd.f32 %v558, %v1635
      %v1637 = vpop.f32.mrb[0].mxu0
      %1638 = vmatprep.mubr.f32.mxu0 0.0
      %1639 = vmatmul.mubr.f32.gmra.mrb[0].mxu0 %v709
      %v1640 = vpop.f32.mrb[0].mxu0
      %v1641 = vadd.f32 %v558, %v1640
      %v1642 = vpop.f32.mrb[0].mxu0
      %1643 = vmatprep.mubr.f32.mxu0 0.0
      %1644 = vmatmul.mubr.f32.gmra.mrb[0].mxu0 %v712
      %v1645 = vpop.f32.mrb[0].mxu0
      %v1646 = vadd.f32 %v558, %v1645
      %v1647 = vpop.f32.mrb[0].mxu0
      %1648 = vmatprep.mubr.f32.mxu0 0.0
      %1649 = vmatmul.mubr.f32.gmra.mrb[0].mxu0 %v715
      %v1650 = vpop.f32.mrb[0].mxu0
      %v1651 = vadd.f32 %v558, %v1650
      %v1652 = vpop.f32.mrb[0].mxu0
      %1653 = vmatprep.mubr.f32.mxu0 0.0
      %1654 = vmatmul.mubr.f32.gmra.mrb[0].mxu0 %v718
      %v1655 = vpop.f32.mrb[0].mxu0
      %v1656 = vadd.f32 %v558, %v1655
      %v1657 = vpop.f32.mrb[0].mxu0
      %1658 = vmatprep.mubr.f32.mxu0 0.0
      %1659 = vmatmul.mubr.f32.gmra.mrb[0].mxu0 %v721
      %v1660 = vpop.f32.mrb[0].mxu0
      %v1661 = vadd.f32 %v558, %v1660
      %v1662 = vpop.f32.mrb[0].mxu0
      %1663 = vmatprep.mubr.f32.mxu0 0.0
      %1664 = vmatmul.mubr.f32.gmra.mrb[0].mxu0 %v724
      %v1665 = vpop.f32.mrb[0].mxu0
      %v1666 = vadd.f32 %v558, %v1665
      %v1667 = vpop.f32.mrb[0].mxu0
      %1668 = vmatprep.mubr.f32.mxu0 0.0
      %1669 = vmatmul.mubr.f32.gmra.mrb[0].mxu0 %v727
      %v1670 = vpop.f32.mrb[0].mxu0
      %v1671 = vadd.f32 %v558, %v1670
      %v1672 = vpop.f32.mrb[0].mxu0
      %1673 = vmatprep.mubr.f32.mxu0 0.0
      %1674 = vmatmul.mubr.f32.gmra.mrb[0].mxu0 %v730
      %v1675 = vpop.f32.mrb[0].mxu0
      %v1676 = vadd.f32 %v558, %v1675
      %v1677 = vpop.f32.mrb[0].mxu0
      %1678 = vmatprep.mubr.f32.mxu0 0.0
      %1679 = vmatmul.mubr.f32.gmra.mrb[0].mxu0 %v733
      %v1680 = vpop.f32.mrb[0].mxu0
      %v1681 = vadd.f32 %v558, %v1680
      %v1682 = vpop.f32.mrb[0].mxu0
      %1683 = vmatprep.mubr.f32.mxu0 0.0
      %1684 = vmatmul.mubr.f32.gmra.mrb[0].mxu0 %v736
      %v1685 = vpop.f32.mrb[0].mxu0
      %v1686 = vadd.f32 %v558, %v1685
      %v1687 = vpop.f32.mrb[0].mxu0
      %1688 = vmatprep.mubr.f32.mxu0 0.0
      %1689 = vmatmul.mubr.f32.gmra.mrb[0].mxu0 %v739
      %v1690 = vpop.f32.mrb[0].mxu0
      %v1691 = vadd.f32 %v558, %v1690
      %v1692 = vpop.f32.mrb[0].mxu0
      %1693 = vmatprep.mubr.f32.mxu0 0.0
      %1694 = vmatmul.mubr.f32.gmra.mrb[0].mxu0 %v742
      %v1695 = vpop.f32.mrb[0].mxu0
      %v1696 = vadd.f32 %v558, %v1695
      %v1697 = vpop.f32.mrb[0].mxu0
      %1698 = vmatprep.mubr.f32.mxu0 0.0
      %1699 = vmatmul.mubr.f32.gmra.mrb[0].mxu0 %v745
      %v1700 = vpop.f32.mrb[0].mxu0
      %v1701 = vadd.f32 %v558, %v1700
      %v1702 = vpop.f32.mrb[0].mxu0
      %1703 = vmatprep.mubr.f32.mxu0 0.0
      %1704 = vmatmul.mubr.f32.gmra.mrb[0].mxu0 %v748
      %v1705 = vpop.f32.mrb[0].mxu0
      %v1706 = vadd.f32 %v558, %v1705
      %v1707 = vpop.f32.mrb[0].mxu0
      %1708 = vmatprep.mubr.f32.mxu0 0.0
      %1709 = vmatmul.mubr.f32.gmra.mrb[0].mxu0 %v751
      %v1710 = vpop.f32.mrb[0].mxu0
      %v1711 = vadd.f32 %v558, %v1710
      %v1712 = vpop.f32.mrb[0].mxu0
      %1713 = vmatprep.mubr.f32.mxu0 0.0
      %1714 = vmatmul.mubr.f32.gmra.mrb[0].mxu0 %v754
      %v1715 = vpop.f32.mrb[0].mxu0
      %v1716 = vadd.f32 %v558, %v1715
      %v1717 = vpop.f32.mrb[0].mxu0
      %1718 = vmatprep.mubr.f32.mxu0 0.0
      %1719 = vmatmul.mubr.f32.gmra.mrb[0].mxu0 %v757
      %v1720 = vpop.f32.mrb[0].mxu0
      %v1721 = vadd.f32 %v558, %v1720
      %v1722 = vpop.f32.mrb[0].mxu0
      %1723 = vmatprep.mubr.f32.mxu0 0.0
      %1724 = vmatmul.mubr.f32.gmra.mrb[0].mxu0 %v760
      %v1725 = vpop.f32.mrb[0].mxu0
      %v1726 = vadd.f32 %v558, %v1725
      %v1727 = vpop.f32.mrb[0].mxu0
      %1728 = vmatprep.mubr.f32.mxu0 0.0
      %1729 = vmatmul.mubr.f32.gmra.mrb[0].mxu0 %v763
      %v1730 = vpop.f32.mrb[0].mxu0
      %v1731 = vadd.f32 %v558, %v1730
      %v1732 = vpop.f32.mrb[0].mxu0
      %1733 = vmatprep.mubr.f32.mxu0 0.0
      %1734 = vmatmul.mubr.f32.gmra.mrb[0].mxu0 %v766
      %v1735 = vpop.f32.mrb[0].mxu0
      %v1736 = vadd.f32 %v558, %v1735
      %v1737 = vpop.f32.mrb[0].mxu0
      %1738 = vmatprep.mubr.f32.mxu0 0.0
      %1739 = vmatmul.mubr.f32.gmra.mrb[0].mxu0 %v769
      %v1740 = vpop.f32.mrb[0].mxu0
      %v1741 = vadd.f32 %v558, %v1740
      %v1742 = vpop.f32.mrb[0].mxu0
      %1743 = vmatprep.mubr.f32.mxu0 0.0
      %1744 = vmatmul.mubr.f32.gmra.mrb[0].mxu0 %v772
      %v1745 = vpop.f32.mrb[0].mxu0
      %v1746 = vadd.f32 %v558, %v1745
      %v1747 = vpop.f32.mrb[0].mxu0
      %1748 = vmatprep.mubr.f32.mxu0 0.0
      %1749 = vmatmul.mubr.f32.gmra.mrb[0].mxu0 %v775
      %v1750 = vpop.f32.mrb[0].mxu0
      %v1751 = vadd.f32 %v558, %v1750
      %v1752 = vpop.f32.mrb[0].mxu0
      %1753 = vmatprep.mubr.f32.mxu0 0.0
      %1754 = vmatmul.mubr.f32.gmra.mrb[0].mxu0 %v778
      %v1755 = vpop.f32.mrb[0].mxu0
      %v1756 = vadd.f32 %v558, %v1755
      %v1757 = vpop.f32.mrb[0].mxu0
      %1758 = vmatprep.mubr.f32.mxu0 0.0
      %1759 = vmatmul.mubr.f32.gmra.mrb[0].mxu0 %v781
      %v1760 = vpop.f32.mrb[0].mxu0
      %v1761 = vadd.f32 %v558, %v1760
      %v1762 = vpop.f32.mrb[0].mxu0
      %1763 = vmatprep.mubr.f32.mxu0 0.0
      %1764 = vmatmul.mubr.f32.gmra.mrb[0].mxu0 %v784
      %v1765 = vpop.f32.mrb[0].mxu0
      %v1766 = vadd.f32 %v558, %v1765
      %v1767 = vpop.f32.mrb[0].mxu0
      %1768 = vmatprep.mubr.f32.mxu0 0.0
      %1769 = vmatmul.mubr.f32.gmra.mrb[0].mxu0 %v787
      %v1770 = vpop.f32.mrb[0].mxu0
      %v1771 = vadd.f32 %v558, %v1770
      %v1772 = vpop.f32.mrb[0].mxu0
      %1773 = vmatprep.mubr.f32.mxu0 0.0
      %1774 = vmatmul.mubr.f32.gmra.mrb[0].mxu0 %v790
      %v1775 = vpop.f32.mrb[0].mxu0
      %v1776 = vadd.f32 %v558, %v1775
      %v1777 = vpop.f32.mrb[0].mxu0
      %1778 = vmatprep.mubr.f32.mxu0 0.0
      %1779 = vmatmul.mubr.f32.gmra.mrb[0].mxu0 %v793
      %v1780 = vpop.f32.mrb[0].mxu0
      %v1781 = vadd.f32 %v558, %v1780
      %v1782 = vpop.f32.mrb[0].mxu0
      %1783 = vmatprep.mubr.f32.mxu0 0.0
      %1784 = vmatmul.mubr.f32.gmra.mrb[0].mxu0 %v796
      %v1785 = vpop.f32.mrb[0].mxu0
      %v1786 = vadd.f32 %v558, %v1785
      %v1787 = vpop.f32.mrb[0].mxu0
      %1788 = vmatprep.mubr.f32.mxu0 0.0
      %1789 = vmatmul.mubr.f32.gmra.mrb[0].mxu0 %v799
      %v1790 = vpop.f32.mrb[0].mxu0
      %v1791 = vadd.f32 %v558, %v1790
      %v1792 = vpop.f32.mrb[0].mxu0
      %1793 = vmatprep.mubr.f32.mxu0 0.0
      %1794 = vmatmul.mubr.f32.gmra.mrb[0].mxu0 %v802
      %v1795 = vpop.f32.mrb[0].mxu0
      %v1796 = vadd.f32 %v558, %v1795
      %v1797 = vpop.f32.mrb[0].mxu0
      %1798 = vmatprep.mubr.f32.mxu0 0.0
      %1799 = vmatmul.mubr.f32.gmra.mrb[0].mxu0 %v805
      %v1800 = vpop.f32.mrb[0].mxu0
      %v1801 = vadd.f32 %v558, %v1800
      %v1802 = vpop.f32.mrb[0].mxu0
      %1803 = vmatprep.mubr.f32.mxu0 0.0
      %1804 = vmatmul.mubr.f32.gmra.mrb[0].mxu0 %v808
      %v1805 = vpop.f32.mrb[0].mxu0
      %v1806 = vadd.f32 %v558, %v1805
      %v1807 = vpop.f32.mrb[0].mxu0
      %1808 = vmatprep.mubr.f32.mxu0 0.0
      %1809 = vmatmul.mubr.f32.gmra.mrb[0].mxu0 %v811
      %v1810 = vpop.f32.mrb[0].mxu0
      %v1811 = vadd.f32 %v558, %v1810
      %v1812 = vpop.f32.mrb[0].mxu0
      %1813 = vmatprep.mubr.f32.mxu0 0.0
      %1814 = vmatmul.mubr.f32.gmra.mrb[0].mxu0 %v814
      %v1815 = vpop.f32.mrb[0].mxu0
      %v1816 = vadd.f32 %v558, %v1815
      %v1817 = vpop.f32.mrb[0].mxu0
      %1818 = vmatprep.mubr.f32.mxu0 0.0
      %1819 = vmatmul.mubr.f32.gmra.mrb[0].mxu0 %v817
      %v1820 = vpop.f32.mrb[0].mxu0
      %v1821 = vadd.f32 %v558, %v1820
      %v1822 = vpop.f32.mrb[0].mxu0
      %1823 = vmatprep.mubr.f32.mxu0 0.0
      %1824 = vmatmul.mubr.f32.gmra.mrb[0].mxu0 %v820
      %v1825 = vpop.f32.mrb[0].mxu0
      %v1826 = vadd.f32 %v558, %v1825
      %v1827 = vpop.f32.mrb[0].mxu0
      %1828 = vmatprep.mubr.f32.mxu0 0.0
      %1829 = vmatmul.mubr.f32.gmra.mrb[0].mxu0 %v823
      %v1830 = vpop.f32.mrb[0].mxu0
      %v1831 = vadd.f32 %v558, %v1830
      %v1832 = vpop.f32.mrb[0].mxu0
      %1833 = vmatprep.mubr.f32.mxu0 0.0
      %1834 = vmatmul.mubr.f32.gmra.mrb[0].mxu0 %v826
      %v1835 = vpop.f32.mrb[0].mxu0
      %v1836 = vadd.f32 %v558, %v1835
      %v1837 = vpop.f32.mrb[0].mxu0
      %1838 = vmatprep.mubr.f32.mxu0 0.0
      %1839 = vmatmul.mubr.f32.gmra.mrb[0].mxu0 %v829
      %v1840 = vpop.f32.mrb[0].mxu0
      %v1841 = vadd.f32 %v558, %v1840
      %v1842 = vpop.f32.mrb[0].mxu0
      %1843 = vmatprep.mubr.f32.mxu0 0.0
      %1844 = vmatmul.mubr.f32.gmra.mrb[0].mxu0 %v832
      %v1845 = vpop.f32.mrb[0].mxu0
      %v1846 = vadd.f32 %v558, %v1845
      %v1847 = vpop.f32.mrb[0].mxu0
      %1848 = vmatprep.mubr.f32.mxu0 0.0
      %1849 = vmatmul.mubr.f32.gmra.mrb[0].mxu0 %v835
      %v1850 = vpop.f32.mrb[0].mxu0
      %v1851 = vadd.f32 %v558, %v1850
      %v1852 = vpop.f32.mrb[0].mxu0
      %1853 = vmatprep.mubr.f32.mxu0 0.0
      %1854 = vmatmul.mubr.f32.gmra.mrb[0].mxu0 %v838
      %v1855 = vpop.f32.mrb[0].mxu0
      %v1856 = vadd.f32 %v558, %v1855
      %v1857 = vpop.f32.mrb[0].mxu0
      %1858 = vmatprep.mubr.f32.mxu0 0.0
      %1859 = vmatmul.mubr.f32.gmra.mrb[0].mxu0 %v841
      %v1860 = vpop.f32.mrb[0].mxu0
      %v1861 = vadd.f32 %v558, %v1860
      %v1862 = vpop.f32.mrb[0].mxu0
      %1863 = vmatprep.mubr.f32.mxu0 0.0
      %1864 = vmatmul.mubr.f32.gmra.mrb[0].mxu0 %v844
      %v1865 = vpop.f32.mrb[0].mxu0
      %v1866 = vadd.f32 %v558, %v1865
      %v1867 = vpop.f32.mrb[0].mxu0
      %1868 = vmatprep.mubr.f32.mxu0 0.0
      %1869 = vmatmul.mubr.f32.gmra.mrb[0].mxu0 %v847
      %v1870 = vpop.f32.mrb[0].mxu0
      %v1871 = vadd.f32 %v558, %v1870
      %v1872 = vpop.f32.mrb[0].mxu0
      %1873 = vmatprep.mubr.f32.mxu0 0.0
      %1874 = vmatmul.mubr.f32.gmra.mrb[0].mxu0 %v850
      %v1875 = vpop.f32.mrb[0].mxu0
      %v1876 = vadd.f32 %v558, %v1875
      %v1877 = vpop.f32.mrb[0].mxu0
      %1878 = vmatprep.mubr.f32.mxu0 0.0
      %1879 = vmatmul.mubr.f32.gmra.mrb[0].mxu0 %v853
      %v1880 = vpop.f32.mrb[0].mxu0
      %v1881 = vadd.f32 %v558, %v1880
      %v1882 = vpop.f32.mrb[0].mxu0
      %1883 = vmatprep.mubr.f32.mxu0 0.0
      %1884 = vmatmul.mubr.f32.gmra.mrb[0].mxu0 %v856
      %v1885 = vpop.f32.mrb[0].mxu0
      %v1886 = vadd.f32 %v558, %v1885
      %v1887 = vpop.f32.mrb[0].mxu0
      %1888 = vmatprep.mubr.f32.mxu0 0.0
      %1889 = vmatmul.mubr.f32.gmra.mrb[0].mxu0 %v859
      %v1890 = vpop.f32.mrb[0].mxu0
      %v1891 = vadd.f32 %v558, %v1890
      %v1892 = vpop.f32.mrb[0].mxu0
      %1893 = vmatprep.mubr.f32.mxu0 0.0
      %1894 = vmatmul.mubr.f32.gmra.mrb[0].mxu0 %v862
      %v1895 = vpop.f32.mrb[0].mxu0
      %v1896 = vadd.f32 %v558, %v1895
      %v1897 = vpop.f32.mrb[0].mxu0
      %1898 = vmatprep.mubr.f32.mxu0 0.0
      %1899 = vmatmul.mubr.f32.gmra.mrb[0].mxu0 %v865
      %v1900 = vpop.f32.mrb[0].mxu0
      %v1901 = vadd.f32 %v558, %v1900
      %v1902 = vpop.f32.mrb[0].mxu0
      %1903 = vmatprep.mubr.f32.mxu0 0.0
      %1904 = vmatmul.mubr.f32.gmra.mrb[0].mxu0 %v868
      %v1905 = vpop.f32.mrb[0].mxu0
      %v1906 = vadd.f32 %v558, %v1905
      %v1907 = vpop.f32.mrb[0].mxu0
      %1908 = vmatprep.mubr.f32.mxu0 0.0
      %1909 = vmatmul.mubr.f32.gmra.mrb[0].mxu0 %v871
      %v1910 = vpop.f32.mrb[0].mxu0
      %v1911 = vadd.f32 %v558, %v1910
      %v1912 = vpop.f32.mrb[0].mxu0
      %1913 = vmatprep.mubr.f32.mxu0 0.0
      %1914 = vmatmul.mubr.f32.gmra.mrb[0].mxu0 %v874
      %v1915 = vpop.f32.mrb[0].mxu0
      %v1916 = vadd.f32 %v558, %v1915
      %v1917 = vpop.f32.mrb[0].mxu0
      %1918 = vmatprep.mubr.f32.mxu0 0.0
      %1919 = vmatmul.mubr.f32.gmra.mrb[0].mxu0 %v877
      %v1920 = vpop.f32.mrb[0].mxu0
      %v1921 = vadd.f32 %v558, %v1920
      %v1922 = vpop.f32.mrb[0].mxu0
      %1923 = vmatprep.mubr.f32.mxu0 0.0
      %1924 = vmatmul.mubr.f32.gmra.mrb[0].mxu0 %v880
      %v1925 = vpop.f32.mrb[0].mxu0
      %v1926 = vadd.f32 %v558, %v1925
      %v1927 = vpop.f32.mrb[0].mxu0
      %1928 = vmatprep.mubr.f32.mxu0 0.0
      %1929 = vmatmul.mubr.f32.gmra.mrb[0].mxu0 %v883
      %v1930 = vpop.f32.mrb[0].mxu0
      %v1931 = vadd.f32 %v558, %v1930
      %v1932 = vpop.f32.mrb[0].mxu0
      %1933 = vmatprep.mubr.f32.mxu0 0.0
      %1934 = vmatmul.mubr.f32.gmra.mrb[0].mxu0 %v886
      %v1935 = vpop.f32.mrb[0].mxu0
      %v1936 = vadd.f32 %v558, %v1935
      %v1937 = vpop.f32.mrb[0].mxu0
      %1938 = vmatprep.mubr.f32.mxu0 0.0
      %1939 = vmatmul.mubr.f32.gmra.mrb[0].mxu0 %v889
      %v1940 = vpop.f32.mrb[0].mxu0
      %v1941 = vadd.f32 %v558, %v1940
      %v1942 = vpop.f32.mrb[0].mxu0
      %1943 = vmatprep.mubr.f32.mxu0 0.0
      %1944 = vmatmul.mubr.f32.gmra.mrb[0].mxu0 %v892
      %v1945 = vpop.f32.mrb[0].mxu0
      %v1946 = vadd.f32 %v558, %v1945
      %v1947 = vpop.f32.mrb[0].mxu0
      %1948 = vmatprep.mubr.f32.mxu0 0.0
      %1949 = vmatmul.mubr.f32.gmra.mrb[0].mxu0 %v895
      %v1950 = vpop.f32.mrb[0].mxu0
      %v1951 = vadd.f32 %v558, %v1950
      %v1952 = vpop.f32.mrb[0].mxu0
      %1953 = vmatprep.mubr.f32.mxu0 0.0
      %1954 = vmatmul.mubr.f32.gmra.mrb[0].mxu0 %v898
      %v1955 = vpop.f32.mrb[0].mxu0
      %v1956 = vadd.f32 %v558, %v1955
      %v1957 = vpop.f32.mrb[0].mxu0
      %1958 = vmatprep.mubr.f32.mxu0 0.0
      %1959 = vmatmul.mubr.f32.gmra.mrb[0].mxu0 %v901
      %v1960 = vpop.f32.mrb[0].mxu0
      %v1961 = vadd.f32 %v558, %v1960
      %v1962 = vpop.f32.mrb[0].mxu0
      %1963 = vmatprep.mubr.f32.mxu0 0.0
      %1964 = vmatmul.mubr.f32.gmra.mrb[0].mxu0 %v904
      %v1965 = vpop.f32.mrb[0].mxu0
      %v1966 = vadd.f32 %v558, %v1965
      %v1967 = vpop.f32.mrb[0].mxu0
      %1968 = vmatprep.mubr.f32.mxu0 0.0
      %1969 = vmatmul.mubr.f32.gmra.mrb[0].mxu0 %v907
      %v1970 = vpop.f32.mrb[0].mxu0
      %v1971 = vadd.f32 %v558, %v1970
      %v1972 = vpop.f32.mrb[0].mxu0
      %1973 = vmatprep.mubr.f32.mxu0 0.0
      %1974 = vmatmul.mubr.f32.gmra.mrb[0].mxu0 %v910
      %v1975 = vpop.f32.mrb[0].mxu0
      %v1976 = vadd.f32 %v558, %v1975
      %v1977 = vpop.f32.mrb[0].mxu0
      %1978 = vmatprep.mubr.f32.mxu0 0.0
      %1979 = vmatmul.mubr.f32.gmra.mrb[0].mxu0 %v913
      %v1980 = vpop.f32.mrb[0].mxu0
      %v1981 = vadd.f32 %v558, %v1980
      %v1982 = vpop.f32.mrb[0].mxu0
      %1983 = vmatprep.mubr.f32.mxu0 0.0
      %1984 = vmatmul.mubr.f32.gmra.mrb[0].mxu0 %v916
      %v1985 = vpop.f32.mrb[0].mxu0
      %v1986 = vadd.f32 %v558, %v1985
      %v1987 = vpop.f32.mrb[0].mxu0
      %1988 = vmatprep.mubr.f32.mxu0 0.0
      %1989 = vmatmul.mubr.f32.gmra.mrb[0].mxu0 %v919
      %v1990 = vpop.f32.mrb[0].mxu0
      %v1991 = vadd.f32 %v558, %v1990
      %v1992 = vpop.f32.mrb[0].mxu0
      %1993 = vmatprep.mubr.f32.mxu0 0.0
      %1994 = vmatmul.mubr.f32.gmra.mrb[0].mxu0 %v922
      %v1995 = vpop.f32.mrb[0].mxu0
      %v1996 = vadd.f32 %v558, %v1995
      %v1997 = vpop.f32.mrb[0].mxu0
      %1998 = vmatprep.mubr.f32.mxu0 0.0
      %1999 = vmatmul.mubr.f32.gmra.mrb[0].mxu0 %v925
      %v2000 = vpop.f32.mrb[0].mxu0
      %v2001 = vadd.f32 %v558, %v2000
      %v2002 = vpop.f32.mrb[0].mxu0
      %2003 = vmatprep.mubr.f32.mxu0 0.0
      %2004 = vmatmul.mubr.f32.gmra.mrb[0].mxu0 %v928
      %v2005 = vpop.f32.mrb[0].mxu0
      %v2006 = vadd.f32 %v558, %v2005
      %v2007 = vpop.f32.mrb[0].mxu0
      %2008 = vmatprep.mubr.f32.mxu0 0.0
      %2009 = vmatmul.mubr.f32.gmra.mrb[0].mxu0 %v931
      %v2010 = vpop.f32.mrb[0].mxu0
      %v2011 = vadd.f32 %v558, %v2010
      %v2012 = vpop.f32.mrb[0].mxu0
      %2013 = vmatprep.mubr.f32.mxu0 0.0
      %2014 = vmatmul.mubr.f32.gmra.mrb[0].mxu0 %v934
      %v2015 = vpop.f32.mrb[0].mxu0
      %v2016 = vadd.f32 %v558, %v2015
      %v2017 = vpop.f32.mrb[0].mxu0
      %2018 = vmatprep.mubr.f32.mxu0 0.0
      %2019 = vmatmul.mubr.f32.gmra.mrb[0].mxu0 %v937
      %v2020 = vpop.f32.mrb[0].mxu0
      %v2021 = vadd.f32 %v558, %v2020
      %v2022 = vpop.f32.mrb[0].mxu0
      %2023 = vmatprep.mubr.f32.mxu0 0.0
      %2024 = vmatmul.mubr.f32.gmra.mrb[0].mxu0 %v940
      %v2025 = vpop.f32.mrb[0].mxu0
      %v2026 = vadd.f32 %v558, %v2025
      %v2027 = vpop.f32.mrb[0].mxu0
      %2028 = vmatprep.mubr.f32.mxu0 0.0
      %2029 = vmatmul.mubr.f32.gmra.mrb[0].mxu0 %v943
      %v2030 = vpop.f32.mrb[0].mxu0
      %v2031 = vadd.f32 %v558, %v2030
      %v2032 = vpop.f32.mrb[0].mxu0
      %2033 = vmatprep.mubr.f32.mxu0 0.0
      %2034 = vmatmul.mubr.f32.gmra.mrb[0].mxu0 %v946
      %v2035 = vpop.f32.mrb[0].mxu0
      %v2036 = vadd.f32 %v558, %v2035
      %v2037 = vpop.f32.mrb[0].mxu0
      %2038 = vmatprep.mubr.f32.mxu0 0.0
      %2039 = vmatmul.mubr.f32.gmra.mrb[0].mxu0 %v949
      %v2040 = vpop.f32.mrb[0].mxu0
      %v2041 = vadd.f32 %v558, %v2040
      %v2042 = vpop.f32.mrb[0].mxu0
      %2043 = vmatprep.mubr.f32.mxu0 0.0
      %2044 = vmatmul.mubr.f32.gmra.mrb[0].mxu0 %v952
      %v2045 = vpop.f32.mrb[0].mxu0
      %v2046 = vadd.f32 %v558, %v2045
      %v2047 = vpop.f32.mrb[0].mxu0
      %2048 = vmatprep.mubr.f32.mxu0 0.0
      %2049 = vmatmul.mubr.f32.gmra.mrb[0].mxu0 %v955
      %v2050 = vpop.f32.mrb[0].mxu0
      %v2051 = vadd.f32 %v558, %v2050
      %v2052 = vpop.f32.mrb[0].mxu0
      %2053 = vmatprep.mubr.f32.mxu0 0.0
      %2054 = vmatmul.mubr.f32.gmra.mrb[0].mxu0 %v958
      %v2055 = vpop.f32.mrb[0].mxu0
      %v2056 = vadd.f32 %v558, %v2055
      %v2057 = vpop.f32.mrb[0].mxu0
      %2058 = vmatprep.mubr.f32.mxu0 0.0
      %2059 = vmatmul.mubr.f32.gmra.mrb[0].mxu0 %v961
      %v2060 = vpop.f32.mrb[0].mxu0
      %v2061 = vadd.f32 %v558, %v2060
      %v2062 = vpop.f32.mrb[0].mxu0
      %2063 = vmatprep.mubr.f32.mxu0 0.0
      %2064 = vmatmul.mubr.f32.gmra.mrb[0].mxu0 %v964
      %v2065 = vpop.f32.mrb[0].mxu0
      %v2066 = vadd.f32 %v558, %v2065
      %v2067 = vpop.f32.mrb[0].mxu0
      %2068 = vmatprep.mubr.f32.mxu0 0.0
      %2069 = vmatmul.mubr.f32.gmra.mrb[0].mxu0 %v967
      %v2070 = vpop.f32.mrb[0].mxu0
      %v2071 = vadd.f32 %v558, %v2070
      %v2072 = vpop.f32.mrb[0].mxu0
      %2073 = vmatprep.mubr.f32.mxu0 0.0
      %2074 = vmatmul.mubr.f32.gmra.mrb[0].mxu0 %v970
      %v2075 = vpop.f32.mrb[0].mxu0
      %v2076 = vadd.f32 %v558, %v2075
      %v2077 = vpop.f32.mrb[0].mxu0
      %2078 = vmatprep.mubr.f32.mxu0 0.0
      %2079 = vmatmul.mubr.f32.gmra.mrb[0].mxu0 %v973
      %v2080 = vpop.f32.mrb[0].mxu0
      %v2081 = vadd.f32 %v558, %v2080
      %v2082 = vpop.f32.mrb[0].mxu0
      %2083 = vmatprep.mubr.f32.mxu0 0.0
      %2084 = vmatmul.mubr.f32.gmra.mrb[0].mxu0 %v976
      %v2085 = vpop.f32.mrb[0].mxu0
      %v2086 = vadd.f32 %v558, %v2085
      %v2087 = vpop.f32.mrb[0].mxu0
      %2088 = vmatprep.mubr.f32.mxu0 0.0
      %2089 = vmatmul.mubr.f32.gmra.mrb[0].mxu0 %v979
      %v2090 = vpop.f32.mrb[0].mxu0
      %v2091 = vadd.f32 %v558, %v2090
      %v2092 = vpop.f32.mrb[0].mxu0
      %2093 = vmatprep.mubr.f32.mxu0 0.0
      %2094 = vmatmul.mubr.f32.gmra.mrb[0].mxu0 %v982
      %v2095 = vpop.f32.mrb[0].mxu0
      %v2096 = vadd.f32 %v558, %v2095
      %v2097 = vpop.f32.mrb[0].mxu0
      %2098 = vmatprep.mubr.f32.mxu0 0.0
      %2099 = vmatmul.mubr.f32.gmra.mrb[0].mxu0 %v985
      %v2100 = vpop.f32.mrb[0].mxu0
      %v2101 = vadd.f32 %v558, %v2100
      %v2102 = vpop.f32.mrb[0].mxu0
      %2103 = vmatprep.mubr.f32.mxu0 0.0
      %2104 = vmatmul.mubr.f32.gmra.mrb[0].mxu0 %v988
      %v2105 = vpop.f32.mrb[0].mxu0
      %v2106 = vadd.f32 %v558, %v2105
      %v2107 = vpop.f32.mrb[0].mxu0
      %2108 = vmatprep.mubr.f32.mxu0 0.0
      %2109 = vmatmul.mubr.f32.gmra.mrb[0].mxu0 %v991
      %v2110 = vpop.f32.mrb[0].mxu0
      %v2111 = vadd.f32 %v558, %v2110
      %v2112 = vpop.f32.mrb[0].mxu0
      %2113 = vmatprep.mubr.f32.mxu0 0.0
      %2114 = vmatmul.mubr.f32.gmra.mrb[0].mxu0 %v994
      %v2115 = vpop.f32.mrb[0].mxu0
      %v2116 = vadd.f32 %v558, %v2115
      %v2117 = vpop.f32.mrb[0].mxu0
      %2118 = vmatprep.mubr.f32.mxu0 0.0
      %2119 = vmatmul.mubr.f32.gmra.mrb[0].mxu0 %v997
      %v2120 = vpop.f32.mrb[0].mxu0
      %v2121 = vadd.f32 %v558, %v2120
      %v2122 = vpop.f32.mrb[0].mxu0
      %2123 = vmatprep.mubr.f32.mxu0 0.0
      %2124 = vmatmul.mubr.f32.gmra.mrb[0].mxu0 %v1000
      %v2125 = vpop.f32.mrb[0].mxu0
      %v2126 = vadd.f32 %v558, %v2125
      %v2127 = vpop.f32.mrb[0].mxu0
      %2128 = vmatprep.mubr.f32.mxu0 0.0
      %2129 = vmatmul.mubr.f32.gmra.mrb[0].mxu0 %v1003
      %v2130 = vpop.f32.mrb[0].mxu0
      %v2131 = vadd.f32 %v558, %v2130
      %v2132 = vpop.f32.mrb[0].mxu0
      %2133 = vmatprep.mubr.f32.mxu0 0.0
      %2134 = vmatmul.mubr.f32.gmra.mrb[0].mxu0 %v1006
      %v2135 = vpop.f32.mrb[0].mxu0
      %v2136 = vadd.f32 %v558, %v2135
      %v2137 = vpop.f32.mrb[0].mxu0
      %2138 = vmatprep.mubr.f32.mxu0 0.0
      %2139 = vmatmul.mubr.f32.gmra.mrb[0].mxu0 %v1009
      %v2140 = vpop.f32.mrb[0].mxu0
      %v2141 = vadd.f32 %v558, %v2140
      %v2142 = vpop.f32.mrb[0].mxu0
      %2143 = vmatprep.mubr.f32.mxu0 0.0
      %2144 = vmatmul.mubr.f32.gmra.mrb[0].mxu0 %v1012
      %v2145 = vpop.f32.mrb[0].mxu0
      %v2146 = vadd.f32 %v558, %v2145
      %v2147 = vpop.f32.mrb[0].mxu0
      %2148 = vmatprep.mubr.f32.mxu0 0.0
      %2149 = vmatmul.mubr.f32.gmra.mrb[0].mxu0 %v1015
      %v2150 = vpop.f32.mrb[0].mxu0
      %v2151 = vadd.f32 %v558, %v2150
      %v2152 = vpop.f32.mrb[0].mxu0
      %2153 = vmatprep.mubr.f32.mxu0 0.0
      %2154 = vmatmul.mubr.f32.gmra.mrb[0].mxu0 %v1018
      %v2155 = vpop.f32.mrb[0].mxu0
      %v2156 = vadd.f32 %v558, %v2155
      %v2157 = vpop.f32.mrb[0].mxu0
      %2158 = vmatprep.mubr.f32.mxu0 0.0
      %2159 = vmatmul.mubr.f32.gmra.mrb[0].mxu0 %v1021
      %v2160 = vpop.f32.mrb[0].mxu0
      %v2161 = vadd.f32 %v558, %v2160
      %v2162 = vpop.f32.mrb[0].mxu0
      %2163 = vmatprep.mubr.f32.mxu0 0.0
      %2164 = vmatmul.mubr.f32.gmra.mrb[0].mxu0 %v1024
      %v2165 = vpop.f32.mrb[0].mxu0
      %v2166 = vadd.f32 %v558, %v2165
      %v2167 = vpop.f32.mrb[0].mxu0
      %2168 = vmatprep.mubr.f32.mxu0 0.0
      %2169 = vmatmul.mubr.f32.gmra.mrb[0].mxu0 %v1027
      %v2170 = vpop.f32.mrb[0].mxu0
      %v2171 = vadd.f32 %v558, %v2170
      %v2172 = vpop.f32.mrb[0].mxu0
      %2173 = vmatprep.mubr.f32.mxu0 0.0
      %2174 = vmatmul.mubr.f32.gmra.mrb[0].mxu0 %v1030
      %v2175 = vpop.f32.mrb[0].mxu0
      %v2176 = vadd.f32 %v558, %v2175
      %v2177 = vpop.f32.mrb[0].mxu0
      %2178 = vmatprep.mubr.f32.mxu0 0.0
      %2179 = vmatmul.mubr.f32.gmra.mrb[0].mxu0 %v1033
      %v2180 = vpop.f32.mrb[0].mxu0
      %v2181 = vadd.f32 %v558, %v2180
      %v2182 = vpop.f32.mrb[0].mxu0
      %2183 = vmatprep.mubr.f32.mxu0 0.0
      %2184 = vmatmul.mubr.f32.gmra.mrb[0].mxu0 %v1036
      %v2185 = vpop.f32.mrb[0].mxu0
      %v2186 = vadd.f32 %v558, %v2185
      %v2187 = vpop.f32.mrb[0].mxu0
      %2188 = vmatprep.mubr.f32.mxu0 0.0
      %2189 = vmatmul.mubr.f32.gmra.mrb[0].mxu0 %v1039
      %v2190 = vpop.f32.mrb[0].mxu0
      %v2191 = vadd.f32 %v558, %v2190
      %v2192 = vpop.f32.mrb[0].mxu0
      %2193 = vmatprep.mubr.f32.mxu0 0.0
      %2194 = vmatmul.mubr.f32.gmra.mrb[0].mxu0 %v1042
      %v2195 = vpop.f32.mrb[0].mxu0
      %v2196 = vadd.f32 %v558, %v2195
      %v2197 = vpop.f32.mrb[0].mxu0
      %2198 = vmatprep.mubr.f32.mxu0 0.0
      %2199 = vmatmul.mubr.f32.gmra.mrb[0].mxu0 %v1045
      %v2200 = vpop.f32.mrb[0].mxu0
      %v2201 = vadd.f32 %v558, %v2200
      %v2202 = vpop.f32.mrb[0].mxu0
      %2203 = vmatprep.mubr.f32.mxu0 0.0
      %2204 = vmatmul.mubr.f32.gmra.mrb[0].mxu0 %v1048
      %v2205 = vpop.f32.mrb[0].mxu0
      %v2206 = vadd.f32 %v558, %v2205
      %v2207 = vpop.f32.mrb[0].mxu0
      %2208 = vmatprep.mubr.f32.mxu0 0.0
      %2209 = vmatmul.mubr.f32.gmra.mrb[0].mxu0 %v1051
      %v2210 = vpop.f32.mrb[0].mxu0
      %v2211 = vadd.f32 %v558, %v2210
      %v2212 = vpop.f32.mrb[0].mxu0
      %2213 = vmatprep.mubr.f32.mxu0 0.0
      %2214 = vmatmul.mubr.f32.gmra.mrb[0].mxu0 %v1054
      %v2215 = vpop.f32.mrb[0].mxu0
      %v2216 = vadd.f32 %v558, %v2215
      %v2217 = vpop.f32.mrb[0].mxu0
      %2218 = vmatprep.mubr.f32.mxu0 0.0
      %2219 = vmatmul.mubr.f32.gmra.mrb[0].mxu0 %v1057
      %v2220 = vpop.f32.mrb[0].mxu0
      %v2221 = vadd.f32 %v558, %v2220
      %v2222 = vpop.f32.mrb[0].mxu0
      %2223 = vmatprep.mubr.f32.mxu0 0.0
      %2224 = vmatmul.mubr.f32.gmra.mrb[0].mxu0 %v1060
      %v2225 = vpop.f32.mrb[0].mxu0
      %v2226 = vadd.f32 %v558, %v2225
      %v2227 = vpop.f32.mrb[0].mxu0
      %2228 = vmatprep.mubr.f32.mxu0 0.0
      %2229 = vmatmul.mubr.f32.gmra.mrb[0].mxu0 %v1063
      %v2230 = vpop.f32.mrb[0].mxu0
      %v2231 = vadd.f32 %v558, %v2230
      %v2232 = vpop.f32.mrb[0].mxu0
      %2233 = vmatprep.mubr.f32.mxu0 0.0
      %2234 = vmatmul.mubr.f32.gmra.mrb[0].mxu0 %v1066
      %v2235 = vpop.f32.mrb[0].mxu0
      %v2236 = vadd.f32 %v558, %v2235
      %v2237 = vpop.f32.mrb[0].mxu0
      %2238 = vmatprep.mubr.f32.mxu0 0.0
      %2239 = vmatmul.mubr.f32.gmra.mrb[0].mxu0 %v1069
      %v2240 = vpop.f32.mrb[0].mxu0
      %v2241 = vadd.f32 %v558, %v2240
      %v2242 = vpop.f32.mrb[0].mxu0
      %2243 = vmatprep.mubr.f32.mxu0 0.0
      %2244 = vmatmul.mubr.f32.gmra.mrb[0].mxu0 %v1072
      %v2245 = vpop.f32.mrb[0].mxu0
      %v2246 = vadd.f32 %v558, %v2245
      %v2247 = vpop.f32.mrb[0].mxu0
      %2248 = vmatprep.mubr.f32.mxu0 0.0
      %2249 = vmatmul.mubr.f32.gmra.mrb[0].mxu0 %v1075
      %v2250 = vpop.f32.mrb[0].mxu0
      %v2251 = vadd.f32 %v558, %v2250
      %v2252 = vpop.f32.mrb[0].mxu0
      %2253 = vmatprep.mubr.f32.mxu0 0.0
      %2254 = vmatmul.mubr.f32.gmra.mrb[0].mxu0 %v1078
      %v2255 = vpop.f32.mrb[0].mxu0
      %v2256 = vadd.f32 %v558, %v2255
      %v2257 = vpop.f32.mrb[0].mxu0
      %2258 = vmatprep.mubr.f32.mxu0 0.0
      %2259 = vmatmul.mubr.f32.gmra.mrb[0].mxu0 %v1081
      %v2260 = vpop.f32.mrb[0].mxu0
      %v2261 = vadd.f32 %v558, %v2260
      %v2262 = vpop.f32.mrb[0].mxu0
      %2263 = vmatprep.mubr.f32.mxu0 0.0
      %2264 = vmatmul.mubr.f32.gmra.mrb[0].mxu0 %v1084
      %v2265 = vpop.f32.mrb[0].mxu0
      %v2266 = vadd.f32 %v558, %v2265
      %v2267 = vpop.f32.mrb[0].mxu0
      %2268 = vmatprep.mubr.f32.mxu0 0.0
      %2269 = vmatmul.mubr.f32.gmra.mrb[0].mxu0 %v1087
      %v2270 = vpop.f32.mrb[0].mxu0
      %v2271 = vadd.f32 %v558, %v2270
      %v2272 = vpop.f32.mrb[0].mxu0
      %2273 = vmatprep.mubr.f32.mxu0 0.0
      %2274 = vmatmul.mubr.f32.gmra.mrb[0].mxu0 %v1090
      %v2275 = vpop.f32.mrb[0].mxu0
      %v2276 = vadd.f32 %v558, %v2275
      %v2277 = vpop.f32.mrb[0].mxu0
      %2278 = vmatprep.mubr.f32.mxu0 0.0
      %2279 = vmatmul.mubr.f32.gmra.mrb[0].mxu0 %v1093
      %v2280 = vpop.f32.mrb[0].mxu0
      %v2281 = vadd.f32 %v558, %v2280
      %v2282 = vpop.f32.mrb[0].mxu0
      %2283 = vmatprep.mubr.f32.mxu0 0.0
      %2284 = vmatmul.mubr.f32.gmra.mrb[0].mxu0 %v1096
      %v2285 = vpop.f32.mrb[0].mxu0
      %v2286 = vadd.f32 %v558, %v2285
      %v2287 = vpop.f32.mrb[0].mxu0
      %2288 = vmatprep.mubr.f32.mxu0 0.0
      %2289 = vmatmul.mubr.f32.gmra.mrb[0].mxu0 %v1099
      %v2290 = vpop.f32.mrb[0].mxu0
      %v2291 = vadd.f32 %v558, %v2290
      %v2292 = vpop.f32.mrb[0].mxu0
      %2293 = vmatprep.mubr.f32.mxu0 0.0
      %2294 = vmatmul.mubr.f32.gmra.mrb[0].mxu0 %v1102
      %v2295 = vpop.f32.mrb[0].mxu0
      %v2296 = vadd.f32 %v558, %v2295
      %v2297 = vpop.f32.mrb[0].mxu0
      %2298 = vmatprep.mubr.f32.mxu0 0.0
      %2299 = vmatmul.mubr.f32.gmra.mrb[0].mxu0 %v1105
      %v2300 = vpop.f32.mrb[0].mxu0
      %v2301 = vadd.f32 %v558, %v2300
      %v2302 = vpop.f32.mrb[0].mxu0
      %2303 = vmatprep.mubr.f32.mxu0 0.0
      %2304 = vmatmul.mubr.f32.gmra.mrb[0].mxu0 %v1108
      %v2305 = vpop.f32.mrb[0].mxu0
      %v2306 = vadd.f32 %v558, %v2305
      %v2307 = vpop.f32.mrb[0].mxu0
      %2308 = vmatprep.mubr.f32.mxu0 0.0
      %2309 = vmatmul.mubr.f32.gmra.mrb[0].mxu0 %v1111
      %v2310 = vpop.f32.mrb[0].mxu0
      %v2311 = vadd.f32 %v558, %v2310
      %v2312 = vpop.f32.mrb[0].mxu0
      %2313 = vmatprep.mubr.f32.mxu0 0.0
      %2314 = vmatmul.mubr.f32.gmra.mrb[0].mxu0 %v1114
      %v2315 = vpop.f32.mrb[0].mxu0
      %v2316 = vadd.f32 %v558, %v2315
      %v2317 = vpop.f32.mrb[0].mxu0
      %2318 = vmatprep.mubr.f32.mxu0 0.0
      %2319 = vmatmul.mubr.f32.gmra.mrb[0].mxu0 %v1117
      %v2320 = vpop.f32.mrb[0].mxu0
      %v2321 = vadd.f32 %v558, %v2320
      %v2322 = vpop.f32.mrb[0].mxu0
      %2323 = vmatprep.mubr.f32.mxu0 0.0
      %2324 = vmatmul.mubr.f32.gmra.mrb[0].mxu0 %v1120
      %v2325 = vpop.f32.mrb[0].mxu0
      %v2326 = vadd.f32 %v558, %v2325
      %v2327 = vpop.f32.mrb[0].mxu0
      %2328 = vmatprep.mubr.f32.mxu0 0.0
      %2329 = vmatmul.mubr.f32.gmra.mrb[0].mxu0 %v1123
      %v2330 = vpop.f32.mrb[0].mxu0
      %v2331 = vadd.f32 %v558, %v2330
      %v2332 = vpop.f32.mrb[0].mxu0
      %2333 = vmatprep.mubr.f32.mxu0 0.0
      %2334 = vmatmul.mubr.f32.gmra.mrb[0].mxu0 %v1126
      %v2335 = vpop.f32.mrb[0].mxu0
      %v2336 = vadd.f32 %v558, %v2335
      %v2337 = vpop.f32.mrb[0].mxu0
      %2338 = vmatprep.mubr.f32.mxu0 0.0
      %2339 = vmatmul.mubr.f32.gmra.mrb[0].mxu0 %v1129
      %v2340 = vpop.f32.mrb[0].mxu0
      %v2341 = vadd.f32 %v558, %v2340
      %v2342 = vpop.f32.mrb[0].mxu0
      %2343 = vmatprep.mubr.f32.mxu0 0.0
      %2344 = vmatmul.mubr.f32.gmra.mrb[0].mxu0 %v1132
      %v2345 = vpop.f32.mrb[0].mxu0
      %v2346 = vadd.f32 %v558, %v2345
      %v2347 = vpop.f32.mrb[0].mxu0
      %2348 = vmatprep.mubr.f32.mxu0 0.0
      %2349 = vmatmul.mubr.f32.gmra.mrb[0].mxu0 %v1135
      %v2350 = vpop.f32.mrb[0].mxu0
      %v2351 = vadd.f32 %v558, %v2350
      %v2352 = vpop.f32.mrb[0].mxu0
      %2353 = vmatprep.mubr.f32.mxu0 0.0
      %2354 = vmatmul.mubr.f32.gmra.mrb[0].mxu0 %v1138
      %v2355 = vpop.f32.mrb[0].mxu0
      %v2356 = vadd.f32 %v558, %v2355
      %v2357 = vpop.f32.mrb[0].mxu0
      %2358 = vmatprep.mubr.f32.mxu0 0.0
      %2359 = vmatmul.mubr.f32.gmra.mrb[0].mxu0 %v1141
      %v2360 = vpop.f32.mrb[0].mxu0
      %v2361 = vadd.f32 %v558, %v2360
      %v2362 = vpop.f32.mrb[0].mxu0
      %2363 = vmatprep.mubr.f32.mxu0 0.0
      %2364 = vmatmul.mubr.f32.gmra.mrb[0].mxu0 %v1144
      %v2365 = vpop.f32.mrb[0].mxu0
      %v2366 = vadd.f32 %v558, %v2365
      %v2367 = vpop.f32.mrb[0].mxu0
      %2368 = vmatprep.mubr.f32.mxu0 0.0
      %2369 = vmatmul.mubr.f32.gmra.mrb[0].mxu0 %v1147
      %v2370 = vpop.f32.mrb[0].mxu0
      %v2371 = vadd.f32 %v558, %v2370
      %v2372 = vpop.f32.mrb[0].mxu0
      %2373 = vmatprep.mubr.f32.mxu0 0.0
      %2374 = vmatmul.mubr.f32.gmra.mrb[0].mxu0 %v1150
      %v2375 = vpop.f32.mrb[0].mxu0
      %v2376 = vadd.f32 %v558, %v2375
      %v2377 = vpop.f32.mrb[0].mxu0
      %2378 = vmatprep.mubr.f32.mxu0 0.0
      %2379 = vmatmul.mubr.f32.gmra.mrb[0].mxu0 %v1153
      %v2380 = vpop.f32.mrb[0].mxu0
      %v2381 = vadd.f32 %v558, %v2380
      %v2382 = vpop.f32.mrb[0].mxu0
      %2383 = vmatprep.mubr.f32.mxu0 0.0
      %2384 = vmatmul.mubr.f32.gmra.mrb[0].mxu0 %v1156
      %v2385 = vpop.f32.mrb[0].mxu0
      %v2386 = vadd.f32 %v558, %v2385
      %v2387 = vpop.f32.mrb[0].mxu0
      %2388 = vmatprep.mubr.f32.mxu0 0.0
      %2389 = vmatmul.mubr.f32.gmra.mrb[0].mxu0 %v1159
      %v2390 = vpop.f32.mrb[0].mxu0
      %v2391 = vadd.f32 %v558, %v2390
      %v2392 = vpop.f32.mrb[0].mxu0
      %2393 = vmatprep.mubr.f32.mxu0 0.0
      %2394 = vmatmul.mubr.f32.gmra.mrb[0].mxu0 %v1162
      %v2395 = vpop.f32.mrb[0].mxu0
      %v2396 = vadd.f32 %v558, %v2395
      %v2397 = vpop.f32.mrb[0].mxu0
      %2398 = vmatprep.mubr.f32.mxu0 0.0
      %2399 = vmatmul.mubr.f32.gmra.mrb[0].mxu0 %v1165
      %v2400 = vpop.f32.mrb[0].mxu0
      %v2401 = vadd.f32 %v558, %v2400
      %v2402 = vpop.f32.mrb[0].mxu0
      %2403 = vmatprep.mubr.f32.mxu0 0.0
      %2404 = vmatmul.mubr.f32.gmra.mrb[0].mxu0 %v1168
      %v2405 = vpop.f32.mrb[0].mxu0
      %v2406 = vadd.f32 %v558, %v2405
      %v2407 = vpop.f32.mrb[0].mxu0
      %2408 = vmatprep.mubr.f32.mxu0 0.0
      %2409 = vmatmul.mubr.f32.gmra.mrb[0].mxu0 %v1171
      %v2410 = vpop.f32.mrb[0].mxu0
      %v2411 = vadd.f32 %v558, %v2410
      %v2412 = vpop.f32.mrb[0].mxu0
      %2413 = vmatprep.mubr.f32.mxu0 0.0
      %2414 = vmatmul.mubr.f32.gmra.mrb[0].mxu0 %v1174
      %v2415 = vpop.f32.mrb[0].mxu0
      %v2416 = vadd.f32 %v558, %v2415
      %v2417 = vpop.f32.mrb[0].mxu0
      %2418 = vmatprep.mubr.f32.mxu0 0.0
      %2419 = vmatmul.mubr.f32.gmra.mrb[0].mxu0 %v1177
      %v2420 = vpop.f32.mrb[0].mxu0
      %v2421 = vadd.f32 %v558, %v2420
      %v2422 = vpop.f32.mrb[0].mxu0
      %2423 = vmatprep.mubr.f32.mxu0 0.0
      %2424 = vmatmul.mubr.f32.gmra.mrb[0].mxu0 %v1180
      %v2425 = vpop.f32.mrb[0].mxu0
      %v2426 = vadd.f32 %v558, %v2425
      %v2427 = vpop.f32.mrb[0].mxu0
      %2428 = vmatprep.mubr.f32.mxu0 0.0
      %2429 = vmatmul.mubr.f32.gmra.mrb[0].mxu0 %v1183
      %v2430 = vpop.f32.mrb[0].mxu0
      %v2431 = vadd.f32 %v558, %v2430
      %v2432 = vpop.f32.mrb[0].mxu0
      %2433 = vmatprep.mubr.f32.mxu0 0.0
      %2434 = vmatmul.mubr.f32.gmra.mrb[0].mxu0 %v1186
      %v2435 = vpop.f32.mrb[0].mxu0
      %v2436 = vadd.f32 %v558, %v2435
      %v2437 = vpop.f32.mrb[0].mxu0
      %2438 = vmatprep.mubr.f32.mxu0 0.0
      %2439 = vmatmul.mubr.f32.gmra.mrb[0].mxu0 %v1189
      %v2440 = vpop.f32.mrb[0].mxu0
      %v2441 = vadd.f32 %v558, %v2440
      %v2442 = vpop.f32.mrb[0].mxu0
      %2443 = vmatprep.mubr.f32.mxu0 0.0
      %2444 = vmatmul.mubr.f32.gmra.mrb[0].mxu0 %v1192
      %v2445 = vpop.f32.mrb[0].mxu0
      %v2446 = vadd.f32 %v558, %v2445
      %v2447 = vpop.f32.mrb[0].mxu0
      %2448 = vmatprep.mubr.f32.mxu0 0.0
      %2449 = vmatmul.mubr.f32.gmra.mrb[0].mxu0 %v1195
      %v2450 = vpop.f32.mrb[0].mxu0
      %v2451 = vadd.f32 %v558, %v2450
      %v2452 = vpop.f32.mrb[0].mxu0
      %2453 = vmatprep.mubr.f32.mxu0 0.0
      %2454 = vmatmul.mubr.f32.gmra.mrb[0].mxu0 %v1198
      %v2455 = vpop.f32.mrb[0].mxu0
      %v2456 = vadd.f32 %v558, %v2455
      %v2457 = vpop.f32.mrb[0].mxu0
      %2458 = vmatprep.mubr.f32.mxu0 0.0
      %2459 = vmatmul.mubr.f32.gmra.mrb[0].mxu0 %v1201
      %v2460 = vpop.f32.mrb[0].mxu0
      %v2461 = vadd.f32 %v558, %v2460
      %v2462 = vpop.f32.mrb[0].mxu0
      %2463 = vmatprep.mubr.f32.mxu0 0.0
      %2464 = vmatmul.mubr.f32.gmra.mrb[0].mxu0 %v1204
      %v2465 = vpop.f32.mrb[0].mxu0
      %v2466 = vadd.f32 %v558, %v2465
      %v2467 = vpop.f32.mrb[0].mxu0
      %2468 = vmatprep.mubr.f32.mxu0 0.0
      %2469 = vmatmul.mubr.f32.gmra.mrb[0].mxu0 %v1207
      %v2470 = vpop.f32.mrb[0].mxu0
      %v2471 = vadd.f32 %v558, %v2470
      %v2472 = vpop.f32.mrb[0].mxu0
      %2473 = vmatprep.mubr.f32.mxu0 0.0
      %2474 = vmatmul.mubr.f32.gmra.mrb[0].mxu0 %v1210
      %v2475 = vpop.f32.mrb[0].mxu0
      %v2476 = vadd.f32 %v558, %v2475
      %v2477 = vpop.f32.mrb[0].mxu0
      %2478 = vmatprep.mubr.f32.mxu0 0.0
      %2479 = vmatmul.mubr.f32.gmra.mrb[0].mxu0 %v1213
      %v2480 = vpop.f32.mrb[0].mxu0
      %v2481 = vadd.f32 %v558, %v2480
      %v2482 = vpop.f32.mrb[0].mxu0
      %2483 = vmatprep.mubr.f32.mxu0 0.0
      %2484 = vmatmul.mubr.f32.gmra.mrb[0].mxu0 %v1216
      %v2485 = vpop.f32.mrb[0].mxu0
      %v2486 = vadd.f32 %v558, %v2485
      %v2487 = vpop.f32.mrb[0].mxu0
      %2488 = vmatprep.mubr.f32.mxu0 0.0
      %2489 = vmatmul.mubr.f32.gmra.mrb[0].mxu0 %v1219
      %v2490 = vpop.f32.mrb[0].mxu0
      %v2491 = vadd.f32 %v558, %v2490
      %v2492 = vpop.f32.mrb[0].mxu0
      %2493 = vmatprep.mubr.f32.mxu0 0.0
      %2494 = vmatmul.mubr.f32.gmra.mrb[0].mxu0 %v1222
      %v2495 = vpop.f32.mrb[0].mxu0
      %v2496 = vadd.f32 %v558, %v2495
      %v2497 = vpop.f32.mrb[0].mxu0
      %2498 = vmatprep.mubr.f32.mxu0 0.0
      %2499 = vmatmul.mubr.f32.gmra.mrb[0].mxu0 %v1225
      %v2500 = vpop.f32.mrb[0].mxu0
      %v2501 = vadd.f32 %v558, %v2500
      %v2502 = vpop.f32.mrb[0].mxu0
      %2503 = vmatprep.mubr.f32.mxu0 0.0
      %2504 = vmatmul.mubr.f32.gmra.mrb[0].mxu0 %v1228
      %v2505 = vpop.f32.mrb[0].mxu0
      %v2506 = vadd.f32 %v558, %v2505
      %v2507 = vpop.f32.mrb[0].mxu0
      %2508 = vmatprep.mubr.f32.mxu0 0.0
      %2509 = vmatmul.mubr.f32.gmra.mrb[0].mxu0 %v1231
      %v2510 = vpop.f32.mrb[0].mxu0
      %v2511 = vadd.f32 %v558, %v2510
      %v2512 = vpop.f32.mrb[0].mxu0
      %2513 = vmatprep.mubr.f32.mxu0 0.0
      %2514 = vmatmul.mubr.f32.gmra.mrb[0].mxu0 %v1234
      %v2515 = vpop.f32.mrb[0].mxu0
      %v2516 = vadd.f32 %v558, %v2515
      %v2517 = vpop.f32.mrb[0].mxu0
      %2518 = vmatprep.mubr.f32.mxu0 0.0
      %2519 = vmatmul.mubr.f32.gmra.mrb[0].mxu0 %v1237
      %v2520 = vpop.f32.mrb[0].mxu0
      %v2521 = vadd.f32 %v558, %v2520
      %v2522 = vpop.f32.mrb[0].mxu0
      %2523 = vmatprep.mubr.f32.mxu0 0.0
      %2524 = vmatmul.mubr.f32.gmra.mrb[0].mxu0 %v1240
      %v2525 = vpop.f32.mrb[0].mxu0
      %v2526 = vadd.f32 %v558, %v2525
      %v2527 = vpop.f32.mrb[0].mxu0
      %2528 = vmatprep.mubr.f32.mxu0 0.0
      %2529 = vmatmul.mubr.f32.gmra.mrb[0].mxu0 %v1243
      %v2530 = vpop.f32.mrb[0].mxu0
      %v2531 = vadd.f32 %v558, %v2530
      %v2532 = vpop.f32.mrb[0].mxu0
      %2533 = vmatprep.mubr.f32.mxu0 0.0
      %2534 = vmatmul.mubr.f32.gmra.mrb[0].mxu0 %v1246
      %v2535 = vpop.f32.mrb[0].mxu0
      %v2536 = vadd.f32 %v558, %v2535
      %v2537 = vpop.f32.mrb[0].mxu0
      %2538 = vmatprep.mubr.f32.mxu0 0.0
      %2539 = vmatmul.mubr.f32.gmra.mrb[0].mxu0 %v1249
      %v2540 = vpop.f32.mrb[0].mxu0
      %v2541 = vadd.f32 %v558, %v2540
      %v2542 = vpop.f32.mrb[0].mxu0
      %2543 = vmatprep.mubr.f32.mxu0 0.0
      %2544 = vmatmul.mubr.f32.gmra.mrb[0].mxu0 %v1252
      %v2545 = vpop.f32.mrb[0].mxu0
      %v2546 = vadd.f32 %v558, %v2545
      %v2547 = vpop.f32.mrb[0].mxu0
      %2548 = vmatprep.mubr.f32.mxu0 0.0
      %2549 = vmatmul.mubr.f32.gmra.mrb[0].mxu0 %v1255
      %v2550 = vpop.f32.mrb[0].mxu0
      %v2551 = vadd.f32 %v558, %v2550
      %v2552 = vpop.f32.mrb[0].mxu0
      %2553 = vmatprep.mubr.f32.mxu0 0.0
      %2554 = vmatmul.mubr.f32.gmra.mrb[0].mxu0 %v1258
      %v2555 = vpop.f32.mrb[0].mxu0
      %v2556 = vadd.f32 %v558, %v2555
      %v2557 = vpop.f32.mrb[0].mxu0
      %2558 = vmatprep.mubr.f32.mxu0 0.0
      %2559 = vmatmul.mubr.f32.gmra.mrb[0].mxu0 %v1261
      %v2560 = vpop.f32.mrb[0].mxu0
      %v2561 = vadd.f32 %v558, %v2560
      %v2562 = vpop.f32.mrb[0].mxu0
      %2563 = vmatprep.mubr.f32.mxu0 0.0
      %2564 = vmatmul.mubr.f32.gmra.mrb[0].mxu0 %v1264
      %v2565 = vpop.f32.mrb[0].mxu0
      %v2566 = vadd.f32 %v558, %v2565
      %v2567 = vpop.f32.mrb[0].mxu0
      %2568 = vmatprep.mubr.f32.mxu0 0.0
      %2569 = vmatmul.mubr.f32.gmra.mrb[0].mxu0 %v1267
      %v2570 = vpop.f32.mrb[0].mxu0
      %v2571 = vadd.f32 %v558, %v2570
      %v2572 = vpop.f32.mrb[0].mxu0
      %2573 = vmatprep.mubr.f32.mxu0 0.0
      %2574 = vmatmul.mubr.f32.gmra.mrb[0].mxu0 %v1270
      %v2575 = vpop.f32.mrb[0].mxu0
      %v2576 = vadd.f32 %v558, %v2575
      %v2577 = vpop.f32.mrb[0].mxu0
      %2578 = vmatprep.mubr.f32.mxu0 0.0
      %2579 = vmatmul.mubr.f32.gmra.mrb[0].mxu0 %v1273
      %v2580 = vpop.f32.mrb[0].mxu0
      %v2581 = vadd.f32 %v558, %v2580
      %v2582 = vpop.f32.mrb[0].mxu0
      %2583 = vmatprep.mubr.f32.mxu0 0.0
      %2584 = vmatmul.mubr.f32.gmra.mrb[0].mxu0 %v1276
      %v2585 = vpop.f32.mrb[0].mxu0
      %v2586 = vadd.f32 %v558, %v2585
      %v2587 = vpop.f32.mrb[0].mxu0
      %2588 = vmatprep.mubr.f32.mxu0 0.0
      %2589 = vmatmul.mubr.f32.gmra.mrb[0].mxu0 %v1279
      %v2590 = vpop.f32.mrb[0].mxu0
      %v2591 = vadd.f32 %v558, %v2590
      %v2592 = vpop.f32.mrb[0].mxu0
      %2593 = vmatprep.mubr.f32.mxu0 0.0
      %2594 = vmatmul.mubr.f32.gmra.mrb[0].mxu0 %v1282
      %v2595 = vpop.f32.mrb[0].mxu0
      %v2596 = vadd.f32 %v558, %v2595
      %v2597 = vpop.f32.mrb[0].mxu0
      %2598 = vmatprep.mubr.f32.mxu0 0.0
      %2599 = vmatmul.mubr.f32.gmra.mrb[0].mxu0 %v1285
      %v2600 = vpop.f32.mrb[0].mxu0
      %v2601 = vadd.f32 %v558, %v2600
      %v2602 = vpop.f32.mrb[0].mxu0
      %2603 = vmatprep.mubr.f32.mxu0 0.0
      %2604 = vmatmul.mubr.f32.gmra.mrb[0].mxu0 %v1288
      %v2605 = vpop.f32.mrb[0].mxu0
      %v2606 = vadd.f32 %v558, %v2605
      %v2607 = vpop.f32.mrb[0].mxu0
      %2608 = vmatprep.mubr.f32.mxu0 0.0
      %2609 = vmatmul.mubr.f32.gmra.mrb[0].mxu0 %v1291
      %v2610 = vpop.f32.mrb[0].mxu0
      %v2611 = vadd.f32 %v558, %v2610
      %v2612 = vpop.f32.mrb[0].mxu0
      %2613 = vmatprep.mubr.f32.mxu0 0.0
      %2614 = vmatmul.mubr.f32.gmra.mrb[0].mxu0 %v1294
      %v2615 = vpop.f32.mrb[0].mxu0
      %v2616 = vadd.f32 %v558, %v2615
      %v2617 = vpop.f32.mrb[0].mxu0
      %2618 = vmatprep.mubr.f32.mxu0 0.0
      %2619 = vmatmul.mubr.f32.gmra.mrb[0].mxu0 %v1297
      %v2620 = vpop.f32.mrb[0].mxu0
      %v2621 = vadd.f32 %v558, %v2620
      %v2622 = vpop.f32.mrb[0].mxu0
      %2623 = vmatprep.mubr.f32.mxu0 0.0
      %2624 = vmatmul.mubr.f32.gmra.mrb[0].mxu0 %v1300
      %v2625 = vpop.f32.mrb[0].mxu0
      %v2626 = vadd.f32 %v558, %v2625
      %v2627 = vpop.f32.mrb[0].mxu0
      %2628 = vmatprep.mubr.f32.mxu0 0.0
      %2629 = vmatmul.mubr.f32.gmra.mrb[0].mxu0 %v1303
      %v2630 = vpop.f32.mrb[0].mxu0
      %v2631 = vadd.f32 %v558, %v2630
      %v2632 = vpop.f32.mrb[0].mxu0
      %2633 = vmatprep.mubr.f32.mxu0 0.0
      %2634 = vmatmul.mubr.f32.gmra.mrb[0].mxu0 %v1306
      %v2635 = vpop.f32.mrb[0].mxu0
      %v2636 = vadd.f32 %v558, %v2635
      %v2637 = vpop.f32.mrb[0].mxu0
      %2638 = vmatprep.mubr.f32.mxu0 0.0
      %2639 = vmatmul.mubr.f32.gmra.mrb[0].mxu0 %v1309
      %v2640 = vpop.f32.mrb[0].mxu0
      %v2641 = vadd.f32 %v558, %v2640
      %v2642 = vpop.f32.mrb[0].mxu0
      %2643 = vmatprep.mubr.f32.mxu0 0.0
      %2644 = vmatmul.mubr.f32.gmra.mrb[0].mxu0 %v1312
      %v2645 = vpop.f32.mrb[0].mxu0
      %v2646 = vadd.f32 %v558, %v2645
      %v2647 = vpop.f32.mrb[0].mxu0
      %2648 = vmatprep.mubr.f32.mxu0 0.0
      %2649 = vmatmul.mubr.f32.gmra.mrb[0].mxu0 %v1315
      %v2650 = vpop.f32.mrb[0].mxu0
      %v2651 = vadd.f32 %v558, %v2650
      %v2652 = vpop.f32.mrb[0].mxu0
      %2653 = vmatprep.mubr.f32.mxu0 0.0
      %2654 = vmatmul.mubr.f32.gmra.mrb[0].mxu0 %v1318
      %v2655 = vpop.f32.mrb[0].mxu0
      %v2656 = vadd.f32 %v558, %v2655
      %v2657 = vpop.f32.mrb[0].mxu0
      %2658 = vmatprep.mubr.f32.mxu0 0.0
      %2659 = vmatmul.mubr.f32.gmra.mrb[0].mxu0 %v1321
      %v2660 = vpop.f32.mrb[0].mxu0
      %v2661 = vadd.f32 %v558, %v2660
      %v2662 = vpop.f32.mrb[0].mxu0
      %2663 = vmatprep.mubr.f32.mxu0 0.0
      %2664 = vmatmul.mubr.f32.gmra.mrb[0].mxu0 %v1324
      %v2665 = vpop.f32.mrb[0].mxu0
      %v2666 = vadd.f32 %v558, %v2665
      %v2667 = vpop.f32.mrb[0].mxu0
      %2668 = vmatprep.mubr.f32.mxu0 0.0
      %2669 = vmatmul.mubr.f32.gmra.mrb[0].mxu0 %v1327
      %v2670 = vpop.f32.mrb[0].mxu0
      %v2671 = vadd.f32 %v558, %v2670
      %v2672 = vpop.f32.mrb[0].mxu0
      %2673 = vdwg.mxu0
      %v2674 = vmax.f32 %v1396, 0.0
      %v2675 = vmax.f32 %v1401, 0.0
      %v2676 = vmax.f32 %v1406, 0.0
      %v2677 = vmax.f32 %v1411, 0.0
      %v2678 = vmax.f32 %v1416, 0.0
      %v2679 = vmax.f32 %v1421, 0.0
      %v2680 = vmax.f32 %v1426, 0.0
      %v2681 = vmax.f32 %v1431, 0.0
      %v2682 = vmax.f32 %v1436, 0.0
      %v2683 = vmax.f32 %v1441, 0.0
      %v2684 = vmax.f32 %v1446, 0.0
      %v2685 = vmax.f32 %v1451, 0.0
      %v2686 = vmax.f32 %v1456, 0.0
      %v2687 = vmax.f32 %v1461, 0.0
      %v2688 = vmax.f32 %v1466, 0.0
      %v2689 = vmax.f32 %v1471, 0.0
      %v2690 = vmax.f32 %v1476, 0.0
      %v2691 = vmax.f32 %v1481, 0.0
      %v2692 = vmax.f32 %v1486, 0.0
      %v2693 = vmax.f32 %v1491, 0.0
      %v2694 = vmax.f32 %v1496, 0.0
      %v2695 = vmax.f32 %v1501, 0.0
      %v2696 = vmax.f32 %v1506, 0.0
      %v2697 = vmax.f32 %v1511, 0.0
      %v2698 = vmax.f32 %v1516, 0.0
      %v2699 = vmax.f32 %v1521, 0.0
      %v2700 = vmax.f32 %v1526, 0.0
      %v2701 = vmax.f32 %v1531, 0.0
      %v2702 = vmax.f32 %v1536, 0.0
      %v2703 = vmax.f32 %v1541, 0.0
      %v2704 = vmax.f32 %v1546, 0.0
      %v2705 = vmax.f32 %v1551, 0.0
      %v2706 = vmax.f32 %v1556, 0.0
      %v2707 = vmax.f32 %v1561, 0.0
      %v2708 = vmax.f32 %v1566, 0.0
      %v2709 = vmax.f32 %v1571, 0.0
      %v2710 = vmax.f32 %v1576, 0.0
      %v2711 = vmax.f32 %v1581, 0.0
      %v2712 = vmax.f32 %v1586, 0.0
      %v2713 = vmax.f32 %v1591, 0.0
      %v2714 = vmax.f32 %v1596, 0.0
      %v2715 = vmax.f32 %v1601, 0.0
      %v2716 = vmax.f32 %v1606, 0.0
      %v2717 = vmax.f32 %v1611, 0.0
      %v2718 = vmax.f32 %v1616, 0.0
      %v2719 = vmax.f32 %v1621, 0.0
      %v2720 = vmax.f32 %v1626, 0.0
      %v2721 = vmax.f32 %v1631, 0.0
      %v2722 = vmax.f32 %v1636, 0.0
      %v2723 = vmax.f32 %v1641, 0.0
      %v2724 = vmax.f32 %v1646, 0.0
      %v2725 = vmax.f32 %v1651, 0.0
      %v2726 = vmax.f32 %v1656, 0.0
      %v2727 = vmax.f32 %v1661, 0.0
      %v2728 = vmax.f32 %v1666, 0.0
      %v2729 = vmax.f32 %v1671, 0.0
      %v2730 = vmax.f32 %v1676, 0.0
      %v2731 = vmax.f32 %v1681, 0.0
      %v2732 = vmax.f32 %v1686, 0.0
      %v2733 = vmax.f32 %v1691, 0.0
      %v2734 = vmax.f32 %v1696, 0.0
      %v2735 = vmax.f32 %v1701, 0.0
      %v2736 = vmax.f32 %v1706, 0.0
      %v2737 = vmax.f32 %v1711, 0.0
      %v2738 = vmax.f32 %v1716, 0.0
      %v2739 = vmax.f32 %v1721, 0.0
      %v2740 = vmax.f32 %v1726, 0.0
      %v2741 = vmax.f32 %v1731, 0.0
      %v2742 = vmax.f32 %v1736, 0.0
      %v2743 = vmax.f32 %v1741, 0.0
      %v2744 = vmax.f32 %v1746, 0.0
      %v2745 = vmax.f32 %v1751, 0.0
      %v2746 = vmax.f32 %v1756, 0.0
      %v2747 = vmax.f32 %v1761, 0.0
      %v2748 = vmax.f32 %v1766, 0.0
      %v2749 = vmax.f32 %v1771, 0.0
      %v2750 = vmax.f32 %v1776, 0.0
      %v2751 = vmax.f32 %v1781, 0.0
      %v2752 = vmax.f32 %v1786, 0.0
      %v2753 = vmax.f32 %v1791, 0.0
      %v2754 = vmax.f32 %v1796, 0.0
      %v2755 = vmax.f32 %v1801, 0.0
      %v2756 = vmax.f32 %v1806, 0.0
      %v2757 = vmax.f32 %v1811, 0.0
      %v2758 = vmax.f32 %v1816, 0.0
      %v2759 = vmax.f32 %v1821, 0.0
      %v2760 = vmax.f32 %v1826, 0.0
      %v2761 = vmax.f32 %v1831, 0.0
      %v2762 = vmax.f32 %v1836, 0.0
      %v2763 = vmax.f32 %v1841, 0.0
      %v2764 = vmax.f32 %v1846, 0.0
      %v2765 = vmax.f32 %v1851, 0.0
      %v2766 = vmax.f32 %v1856, 0.0
      %v2767 = vmax.f32 %v1861, 0.0
      %v2768 = vmax.f32 %v1866, 0.0
      %v2769 = vmax.f32 %v1871, 0.0
      %v2770 = vmax.f32 %v1876, 0.0
      %v2771 = vmax.f32 %v1881, 0.0
      %v2772 = vmax.f32 %v1886, 0.0
      %v2773 = vmax.f32 %v1891, 0.0
      %v2774 = vmax.f32 %v1896, 0.0
      %v2775 = vmax.f32 %v1901, 0.0
      %v2776 = vmax.f32 %v1906, 0.0
      %v2777 = vmax.f32 %v1911, 0.0
      %v2778 = vmax.f32 %v1916, 0.0
      %v2779 = vmax.f32 %v1921, 0.0
      %v2780 = vmax.f32 %v1926, 0.0
      %v2781 = vmax.f32 %v1931, 0.0
      %v2782 = vmax.f32 %v1936, 0.0
      %v2783 = vmax.f32 %v1941, 0.0
      %v2784 = vmax.f32 %v1946, 0.0
      %v2785 = vmax.f32 %v1951, 0.0
      %v2786 = vmax.f32 %v1956, 0.0
      %v2787 = vmax.f32 %v1961, 0.0
      %v2788 = vmax.f32 %v1966, 0.0
      %v2789 = vmax.f32 %v1971, 0.0
      %v2790 = vmax.f32 %v1976, 0.0
      %v2791 = vmax.f32 %v1981, 0.0
      %v2792 = vmax.f32 %v1986, 0.0
      %v2793 = vmax.f32 %v1991, 0.0
      %v2794 = vmax.f32 %v1996, 0.0
      %v2795 = vmax.f32 %v2001, 0.0
      %v2796 = vmax.f32 %v2006, 0.0
      %v2797 = vmax.f32 %v2011, 0.0
      %v2798 = vmax.f32 %v2016, 0.0
      %v2799 = vmax.f32 %v2021, 0.0
      %v2800 = vmax.f32 %v2026, 0.0
      %v2801 = vmax.f32 %v2031, 0.0
      %v2802 = vmax.f32 %v2036, 0.0
      %v2803 = vmax.f32 %v2041, 0.0
      %v2804 = vmax.f32 %v2046, 0.0
      %v2805 = vmax.f32 %v2051, 0.0
      %v2806 = vmax.f32 %v2056, 0.0
      %v2807 = vmax.f32 %v2061, 0.0
      %v2808 = vmax.f32 %v2066, 0.0
      %v2809 = vmax.f32 %v2071, 0.0
      %v2810 = vmax.f32 %v2076, 0.0
      %v2811 = vmax.f32 %v2081, 0.0
      %v2812 = vmax.f32 %v2086, 0.0
      %v2813 = vmax.f32 %v2091, 0.0
      %v2814 = vmax.f32 %v2096, 0.0
      %v2815 = vmax.f32 %v2101, 0.0
      %v2816 = vmax.f32 %v2106, 0.0
      %v2817 = vmax.f32 %v2111, 0.0
      %v2818 = vmax.f32 %v2116, 0.0
      %v2819 = vmax.f32 %v2121, 0.0
      %v2820 = vmax.f32 %v2126, 0.0
      %v2821 = vmax.f32 %v2131, 0.0
      %v2822 = vmax.f32 %v2136, 0.0
      %v2823 = vmax.f32 %v2141, 0.0
      %v2824 = vmax.f32 %v2146, 0.0
      %v2825 = vmax.f32 %v2151, 0.0
      %v2826 = vmax.f32 %v2156, 0.0
      %v2827 = vmax.f32 %v2161, 0.0
      %v2828 = vmax.f32 %v2166, 0.0
      %v2829 = vmax.f32 %v2171, 0.0
      %v2830 = vmax.f32 %v2176, 0.0
      %v2831 = vmax.f32 %v2181, 0.0
      %v2832 = vmax.f32 %v2186, 0.0
      %v2833 = vmax.f32 %v2191, 0.0
      %v2834 = vmax.f32 %v2196, 0.0
      %v2835 = vmax.f32 %v2201, 0.0
      %v2836 = vmax.f32 %v2206, 0.0
      %v2837 = vmax.f32 %v2211, 0.0
      %v2838 = vmax.f32 %v2216, 0.0
      %v2839 = vmax.f32 %v2221, 0.0
      %v2840 = vmax.f32 %v2226, 0.0
      %v2841 = vmax.f32 %v2231, 0.0
      %v2842 = vmax.f32 %v2236, 0.0
      %v2843 = vmax.f32 %v2241, 0.0
      %v2844 = vmax.f32 %v2246, 0.0
      %v2845 = vmax.f32 %v2251, 0.0
      %v2846 = vmax.f32 %v2256, 0.0
      %v2847 = vmax.f32 %v2261, 0.0
      %v2848 = vmax.f32 %v2266, 0.0
      %v2849 = vmax.f32 %v2271, 0.0
      %v2850 = vmax.f32 %v2276, 0.0
      %v2851 = vmax.f32 %v2281, 0.0
      %v2852 = vmax.f32 %v2286, 0.0
      %v2853 = vmax.f32 %v2291, 0.0
      %v2854 = vmax.f32 %v2296, 0.0
      %v2855 = vmax.f32 %v2301, 0.0
      %v2856 = vmax.f32 %v2306, 0.0
      %v2857 = vmax.f32 %v2311, 0.0
      %v2858 = vmax.f32 %v2316, 0.0
      %v2859 = vmax.f32 %v2321, 0.0
      %v2860 = vmax.f32 %v2326, 0.0
      %v2861 = vmax.f32 %v2331, 0.0
      %v2862 = vmax.f32 %v2336, 0.0
      %v2863 = vmax.f32 %v2341, 0.0
      %v2864 = vmax.f32 %v2346, 0.0
      %v2865 = vmax.f32 %v2351, 0.0
      %v2866 = vmax.f32 %v2356, 0.0
      %v2867 = vmax.f32 %v2361, 0.0
      %v2868 = vmax.f32 %v2366, 0.0
      %v2869 = vmax.f32 %v2371, 0.0
      %v2870 = vmax.f32 %v2376, 0.0
      %v2871 = vmax.f32 %v2381, 0.0
      %v2872 = vmax.f32 %v2386, 0.0
      %v2873 = vmax.f32 %v2391, 0.0
      %v2874 = vmax.f32 %v2396, 0.0
      %v2875 = vmax.f32 %v2401, 0.0
      %v2876 = vmax.f32 %v2406, 0.0
      %v2877 = vmax.f32 %v2411, 0.0
      %v2878 = vmax.f32 %v2416, 0.0
      %v2879 = vmax.f32 %v2421, 0.0
      %v2880 = vmax.f32 %v2426, 0.0
      %v2881 = vmax.f32 %v2431, 0.0
      %v2882 = vmax.f32 %v2436, 0.0
      %v2883 = vmax.f32 %v2441, 0.0
      %v2884 = vmax.f32 %v2446, 0.0
      %v2885 = vmax.f32 %v2451, 0.0
      %v2886 = vmax.f32 %v2456, 0.0
      %v2887 = vmax.f32 %v2461, 0.0
      %v2888 = vmax.f32 %v2466, 0.0
      %v2889 = vmax.f32 %v2471, 0.0
      %v2890 = vmax.f32 %v2476, 0.0
      %v2891 = vmax.f32 %v2481, 0.0
      %v2892 = vmax.f32 %v2486, 0.0
      %v2893 = vmax.f32 %v2491, 0.0
      %v2894 = vmax.f32 %v2496, 0.0
      %v2895 = vmax.f32 %v2501, 0.0
      %v2896 = vmax.f32 %v2506, 0.0
      %v2897 = vmax.f32 %v2511, 0.0
      %v2898 = vmax.f32 %v2516, 0.0
      %v2899 = vmax.f32 %v2521, 0.0
      %v2900 = vmax.f32 %v2526, 0.0
      %v2901 = vmax.f32 %v2531, 0.0
      %v2902 = vmax.f32 %v2536, 0.0
      %v2903 = vmax.f32 %v2541, 0.0
      %v2904 = vmax.f32 %v2546, 0.0
      %v2905 = vmax.f32 %v2551, 0.0
      %v2906 = vmax.f32 %v2556, 0.0
      %v2907 = vmax.f32 %v2561, 0.0
      %v2908 = vmax.f32 %v2566, 0.0
      %v2909 = vmax.f32 %v2571, 0.0
      %v2910 = vmax.f32 %v2576, 0.0
      %v2911 = vmax.f32 %v2581, 0.0
      %v2912 = vmax.f32 %v2586, 0.0
      %v2913 = vmax.f32 %v2591, 0.0
      %v2914 = vmax.f32 %v2596, 0.0
      %v2915 = vmax.f32 %v2601, 0.0
      %v2916 = vmax.f32 %v2606, 0.0
      %v2917 = vmax.f32 %v2611, 0.0
      %v2918 = vmax.f32 %v2616, 0.0
      %v2919 = vmax.f32 %v2621, 0.0
      %v2920 = vmax.f32 %v2626, 0.0
      %v2921 = vmax.f32 %v2631, 0.0
      %v2922 = vmax.f32 %v2636, 0.0
      %v2923 = vmax.f32 %v2641, 0.0
      %v2924 = vmax.f32 %v2646, 0.0
      %v2925 = vmax.f32 %v2651, 0.0
      %v2926 = vmax.f32 %v2656, 0.0
      %v2927 = vmax.f32 %v2661, 0.0
      %v2928 = vmax.f32 %v2666, 0.0
      %v2929 = vmax.f32 %v2671, 0.0
      %v2930 = vadd.f32 %v2674, %v2675
      %v2931 = vadd.f32 %v2930, %v2676
      %v2932 = vadd.f32 %v2931, %v2677
      %v2933 = vadd.f32 %v2932, %v2678
      %v2934 = vadd.f32 %v2933, %v2679
      %v2935 = vadd.f32 %v2934, %v2680
      %v2936 = vadd.f32 %v2935, %v2681
      %v2937 = vadd.f32 %v2936, %v2682
      %v2938 = vadd.f32 %v2937, %v2683
      %v2939 = vadd.f32 %v2938, %v2684
      %v2940 = vadd.f32 %v2939, %v2685
      %v2941 = vadd.f32 %v2940, %v2686
      %v2942 = vadd.f32 %v2941, %v2687
      %v2943 = vadd.f32 %v2942, %v2688
      %v2944 = vadd.f32 %v2943, %v2689
      %v2945 = vadd.f32 %v2944, %v2690
      %v2946 = vadd.f32 %v2945, %v2691
      %v2947 = vadd.f32 %v2946, %v2692
      %v2948 = vadd.f32 %v2947, %v2693
      %v2949 = vadd.f32 %v2948, %v2694
      %v2950 = vadd.f32 %v2949, %v2695
      %v2951 = vadd.f32 %v2950, %v2696
      %v2952 = vadd.f32 %v2951, %v2697
      %v2953 = vadd.f32 %v2952, %v2698
      %v2954 = vadd.f32 %v2953, %v2699
      %v2955 = vadd.f32 %v2954, %v2700
      %v2956 = vadd.f32 %v2955, %v2701
      %v2957 = vadd.f32 %v2956, %v2702
      %v2958 = vadd.f32 %v2957, %v2703
      %v2959 = vadd.f32 %v2958, %v2704
      %v2960 = vadd.f32 %v2959, %v2705
      %v2961 = vrot.slane %v2960, 4
      %v2962 = vadd.f32 %v2960, %v2961
      %v2963 = vrot.slane %v2962, 2
      %v2964 = vadd.f32 %v2962, %v2963
      %v2965 = vrot.slane %v2964, 1
      %v2966 = vadd.f32 %v2964, %v2965
      %v2967 = vadd.f32 %v2706, %v2707
      %v2968 = vadd.f32 %v2967, %v2708
      %v2969 = vadd.f32 %v2968, %v2709
      %v2970 = vadd.f32 %v2969, %v2710
      %v2971 = vadd.f32 %v2970, %v2711
      %v2972 = vadd.f32 %v2971, %v2712
      %v2973 = vadd.f32 %v2972, %v2713
      %v2974 = vadd.f32 %v2973, %v2714
      %v2975 = vadd.f32 %v2974, %v2715
      %v2976 = vadd.f32 %v2975, %v2716
      %v2977 = vadd.f32 %v2976, %v2717
      %v2978 = vadd.f32 %v2977, %v2718
      %v2979 = vadd.f32 %v2978, %v2719
      %v2980 = vadd.f32 %v2979, %v2720
      %v2981 = vadd.f32 %v2980, %v2721
      %v2982 = vadd.f32 %v2981, %v2722
      %v2983 = vadd.f32 %v2982, %v2723
      %v2984 = vadd.f32 %v2983, %v2724
      %v2985 = vadd.f32 %v2984, %v2725
      %v2986 = vadd.f32 %v2985, %v2726
      %v2987 = vadd.f32 %v2986, %v2727
      %v2988 = vadd.f32 %v2987, %v2728
      %v2989 = vadd.f32 %v2988, %v2729
      %v2990 = vadd.f32 %v2989, %v2730
      %v2991 = vadd.f32 %v2990, %v2731
      %v2992 = vadd.f32 %v2991, %v2732
      %v2993 = vadd.f32 %v2992, %v2733
      %v2994 = vadd.f32 %v2993, %v2734
      %v2995 = vadd.f32 %v2994, %v2735
      %v2996 = vadd.f32 %v2995, %v2736
      %v2997 = vadd.f32 %v2996, %v2737
      %v2998 = vrot.slane %v2997, 4
      %v2999 = vadd.f32 %v2997, %v2998
      %v3000 = vrot.slane %v2999, 2
      %v3001 = vadd.f32 %v2999, %v3000
      %v3002 = vrot.slane %v3001, 1
      %v3003 = vadd.f32 %v3001, %v3002
      %v3004 = vadd.f32 %v2738, %v2739
      %v3005 = vadd.f32 %v3004, %v2740
      %v3006 = vadd.f32 %v3005, %v2741
      %v3007 = vadd.f32 %v3006, %v2742
      %v3008 = vadd.f32 %v3007, %v2743
      %v3009 = vadd.f32 %v3008, %v2744
      %v3010 = vadd.f32 %v3009, %v2745
      %v3011 = vadd.f32 %v3010, %v2746
      %v3012 = vadd.f32 %v3011, %v2747
      %v3013 = vadd.f32 %v3012, %v2748
      %v3014 = vadd.f32 %v3013, %v2749
      %v3015 = vadd.f32 %v3014, %v2750
      %v3016 = vadd.f32 %v3015, %v2751
      %v3017 = vadd.f32 %v3016, %v2752
      %v3018 = vadd.f32 %v3017, %v2753
      %v3019 = vadd.f32 %v3018, %v2754
      %v3020 = vadd.f32 %v3019, %v2755
      %v3021 = vadd.f32 %v3020, %v2756
      %v3022 = vadd.f32 %v3021, %v2757
      %v3023 = vadd.f32 %v3022, %v2758
      %v3024 = vadd.f32 %v3023, %v2759
      %v3025 = vadd.f32 %v3024, %v2760
      %v3026 = vadd.f32 %v3025, %v2761
      %v3027 = vadd.f32 %v3026, %v2762
      %v3028 = vadd.f32 %v3027, %v2763
      %v3029 = vadd.f32 %v3028, %v2764
      %v3030 = vadd.f32 %v3029, %v2765
      %v3031 = vadd.f32 %v3030, %v2766
      %v3032 = vadd.f32 %v3031, %v2767
      %v3033 = vadd.f32 %v3032, %v2768
      %v3034 = vadd.f32 %v3033, %v2769
      %v3035 = vrot.slane %v3034, 4
      %v3036 = vadd.f32 %v3034, %v3035
      %v3037 = vrot.slane %v3036, 2
      %v3038 = vadd.f32 %v3036, %v3037
      %v3039 = vrot.slane %v3038, 1
      %v3040 = vadd.f32 %v3038, %v3039
      %v3041 = vadd.f32 %v2770, %v2771
      %v3042 = vadd.f32 %v3041, %v2772
      %v3043 = vadd.f32 %v3042, %v2773
      %v3044 = vadd.f32 %v3043, %v2774
      %v3045 = vadd.f32 %v3044, %v2775
      %v3046 = vadd.f32 %v3045, %v2776
      %v3047 = vadd.f32 %v3046, %v2777
      %v3048 = vadd.f32 %v3047, %v2778
      %v3049 = vadd.f32 %v3048, %v2779
      %v3050 = vadd.f32 %v3049, %v2780
      %v3051 = vadd.f32 %v3050, %v2781
      %v3052 = vadd.f32 %v3051, %v2782
      %v3053 = vadd.f32 %v3052, %v2783
      %v3054 = vadd.f32 %v3053, %v2784
      %v3055 = vadd.f32 %v3054, %v2785
      %v3056 = vadd.f32 %v3055, %v2786
      %v3057 = vadd.f32 %v3056, %v2787
      %v3058 = vadd.f32 %v3057, %v2788
      %v3059 = vadd.f32 %v3058, %v2789
      %v3060 = vadd.f32 %v3059, %v2790
      %v3061 = vadd.f32 %v3060, %v2791
      %v3062 = vadd.f32 %v3061, %v2792
      %v3063 = vadd.f32 %v3062, %v2793
      %v3064 = vadd.f32 %v3063, %v2794
      %v3065 = vadd.f32 %v3064, %v2795
      %v3066 = vadd.f32 %v3065, %v2796
      %v3067 = vadd.f32 %v3066, %v2797
      %v3068 = vadd.f32 %v3067, %v2798
      %v3069 = vadd.f32 %v3068, %v2799
      %v3070 = vadd.f32 %v3069, %v2800
      %v3071 = vadd.f32 %v3070, %v2801
      %v3072 = vrot.slane %v3071, 4
      %v3073 = vadd.f32 %v3071, %v3072
      %v3074 = vrot.slane %v3073, 2
      %v3075 = vadd.f32 %v3073, %v3074
      %v3076 = vrot.slane %v3075, 1
      %v3077 = vadd.f32 %v3075, %v3076
      %v3078 = vadd.f32 %v2802, %v2803
      %v3079 = vadd.f32 %v3078, %v2804
      %v3080 = vadd.f32 %v3079, %v2805
      %v3081 = vadd.f32 %v3080, %v2806
      %v3082 = vadd.f32 %v3081, %v2807
      %v3083 = vadd.f32 %v3082, %v2808
      %v3084 = vadd.f32 %v3083, %v2809
      %v3085 = vadd.f32 %v3084, %v2810
      %v3086 = vadd.f32 %v3085, %v2811
      %v3087 = vadd.f32 %v3086, %v2812
      %v3088 = vadd.f32 %v3087, %v2813
      %v3089 = vadd.f32 %v3088, %v2814
      %v3090 = vadd.f32 %v3089, %v2815
      %v3091 = vadd.f32 %v3090, %v2816
      %v3092 = vadd.f32 %v3091, %v2817
      %v3093 = vadd.f32 %v3092, %v2818
      %v3094 = vadd.f32 %v3093, %v2819
      %v3095 = vadd.f32 %v3094, %v2820
      %v3096 = vadd.f32 %v3095, %v2821
      %v3097 = vadd.f32 %v3096, %v2822
      %v3098 = vadd.f32 %v3097, %v2823
      %v3099 = vadd.f32 %v3098, %v2824
      %v3100 = vadd.f32 %v3099, %v2825
      %v3101 = vadd.f32 %v3100, %v2826
      %v3102 = vadd.f32 %v3101, %v2827
      %v3103 = vadd.f32 %v3102, %v2828
      %v3104 = vadd.f32 %v3103, %v2829
      %v3105 = vadd.f32 %v3104, %v2830
      %v3106 = vadd.f32 %v3105, %v2831
      %v3107 = vadd.f32 %v3106, %v2832
      %v3108 = vadd.f32 %v3107, %v2833
      %v3109 = vrot.slane %v3108, 4
      %v3110 = vadd.f32 %v3108, %v3109
      %v3111 = vrot.slane %v3110, 2
      %v3112 = vadd.f32 %v3110, %v3111
      %v3113 = vrot.slane %v3112, 1
      %v3114 = vadd.f32 %v3112, %v3113
      %v3115 = vadd.f32 %v2834, %v2835
      %v3116 = vadd.f32 %v3115, %v2836
      %v3117 = vadd.f32 %v3116, %v2837
      %v3118 = vadd.f32 %v3117, %v2838
      %v3119 = vadd.f32 %v3118, %v2839
      %v3120 = vadd.f32 %v3119, %v2840
      %v3121 = vadd.f32 %v3120, %v2841
      %v3122 = vadd.f32 %v3121, %v2842
      %v3123 = vadd.f32 %v3122, %v2843
      %v3124 = vadd.f32 %v3123, %v2844
      %v3125 = vadd.f32 %v3124, %v2845
      %v3126 = vadd.f32 %v3125, %v2846
      %v3127 = vadd.f32 %v3126, %v2847
      %v3128 = vadd.f32 %v3127, %v2848
      %v3129 = vadd.f32 %v3128, %v2849
      %v3130 = vadd.f32 %v3129, %v2850
      %v3131 = vadd.f32 %v3130, %v2851
      %v3132 = vadd.f32 %v3131, %v2852
      %v3133 = vadd.f32 %v3132, %v2853
      %v3134 = vadd.f32 %v3133, %v2854
      %v3135 = vadd.f32 %v3134, %v2855
      %v3136 = vadd.f32 %v3135, %v2856
      %v3137 = vadd.f32 %v3136, %v2857
      %v3138 = vadd.f32 %v3137, %v2858
      %v3139 = vadd.f32 %v3138, %v2859
      %v3140 = vadd.f32 %v3139, %v2860
      %v3141 = vadd.f32 %v3140, %v2861
      %v3142 = vadd.f32 %v3141, %v2862
      %v3143 = vadd.f32 %v3142, %v2863
      %v3144 = vadd.f32 %v3143, %v2864
      %v3145 = vadd.f32 %v3144, %v2865
      %v3146 = vrot.slane %v3145, 4
      %v3147 = vadd.f32 %v3145, %v3146
      %v3148 = vrot.slane %v3147, 2
      %v3149 = vadd.f32 %v3147, %v3148
      %v3150 = vrot.slane %v3149, 1
      %v3151 = vadd.f32 %v3149, %v3150
      %v3152 = vadd.f32 %v2866, %v2867
      %v3153 = vadd.f32 %v3152, %v2868
      %v3154 = vadd.f32 %v3153, %v2869
      %v3155 = vadd.f32 %v3154, %v2870
      %v3156 = vadd.f32 %v3155, %v2871
      %v3157 = vadd.f32 %v3156, %v2872
      %v3158 = vadd.f32 %v3157, %v2873
      %v3159 = vadd.f32 %v3158, %v2874
      %v3160 = vadd.f32 %v3159, %v2875
      %v3161 = vadd.f32 %v3160, %v2876
      %v3162 = vadd.f32 %v3161, %v2877
      %v3163 = vadd.f32 %v3162, %v2878
      %v3164 = vadd.f32 %v3163, %v2879
      %v3165 = vadd.f32 %v3164, %v2880
      %v3166 = vadd.f32 %v3165, %v2881
      %v3167 = vadd.f32 %v3166, %v2882
      %v3168 = vadd.f32 %v3167, %v2883
      %v3169 = vadd.f32 %v3168, %v2884
      %v3170 = vadd.f32 %v3169, %v2885
      %v3171 = vadd.f32 %v3170, %v2886
      %v3172 = vadd.f32 %v3171, %v2887
      %v3173 = vadd.f32 %v3172, %v2888
      %v3174 = vadd.f32 %v3173, %v2889
      %v3175 = vadd.f32 %v3174, %v2890
      %v3176 = vadd.f32 %v3175, %v2891
      %v3177 = vadd.f32 %v3176, %v2892
      %v3178 = vadd.f32 %v3177, %v2893
      %v3179 = vadd.f32 %v3178, %v2894
      %v3180 = vadd.f32 %v3179, %v2895
      %v3181 = vadd.f32 %v3180, %v2896
      %v3182 = vadd.f32 %v3181, %v2897
      %v3183 = vrot.slane %v3182, 4
      %v3184 = vadd.f32 %v3182, %v3183
      %v3185 = vrot.slane %v3184, 2
      %v3186 = vadd.f32 %v3184, %v3185
      %v3187 = vrot.slane %v3186, 1
      %v3188 = vadd.f32 %v3186, %v3187
      %v3189 = vadd.f32 %v2898, %v2899
      %v3190 = vadd.f32 %v3189, %v2900
      %v3191 = vadd.f32 %v3190, %v2901
      %v3192 = vadd.f32 %v3191, %v2902
      %v3193 = vadd.f32 %v3192, %v2903
      %v3194 = vadd.f32 %v3193, %v2904
      %v3195 = vadd.f32 %v3194, %v2905
      %v3196 = vadd.f32 %v3195, %v2906
      %v3197 = vadd.f32 %v3196, %v2907
      %v3198 = vadd.f32 %v3197, %v2908
      %v3199 = vadd.f32 %v3198, %v2909
      %v3200 = vadd.f32 %v3199, %v2910
      %v3201 = vadd.f32 %v3200, %v2911
      %v3202 = vadd.f32 %v3201, %v2912
      %v3203 = vadd.f32 %v3202, %v2913
      %v3204 = vadd.f32 %v3203, %v2914
      %v3205 = vadd.f32 %v3204, %v2915
      %v3206 = vadd.f32 %v3205, %v2916
      %v3207 = vadd.f32 %v3206, %v2917
      %v3208 = vadd.f32 %v3207, %v2918
      %v3209 = vadd.f32 %v3208, %v2919
      %v3210 = vadd.f32 %v3209, %v2920
      %v3211 = vadd.f32 %v3210, %v2921
      %v3212 = vadd.f32 %v3211, %v2922
      %v3213 = vadd.f32 %v3212, %v2923
      %v3214 = vadd.f32 %v3213, %v2924
      %v3215 = vadd.f32 %v3214, %v2925
      %v3216 = vadd.f32 %v3215, %v2926
      %v3217 = vadd.f32 %v3216, %v2927
      %v3218 = vadd.f32 %v3217, %v2928
      %v3219 = vadd.f32 %v3218, %v2929
      %v3220 = vrot.slane %v3219, 4
      %v3221 = vadd.f32 %v3219, %v3220
      %v3222 = vrot.slane %v3221, 2
      %v3223 = vadd.f32 %v3221, %v3222
      %v3224 = vrot.slane %v3223, 1
      %v3225 = vadd.f32 %v3223, %v3224
      %v3226 = vmul.f32 %v2966, 0.00390625
      %v3227 = vmul.f32 %v3003, 0.00390625
      %v3228 = vmul.f32 %v3040, 0.00390625
      %v3229 = vmul.f32 %v3077, 0.00390625
      %v3230 = vmul.f32 %v3114, 0.00390625
      %v3231 = vmul.f32 %v3151, 0.00390625
      %v3232 = vmul.f32 %v3188, 0.00390625
      %v3233 = vmul.f32 %v3225, 0.00390625
      %s3234 = smul.u32 %s19, 8
      %vm3243 = vcmask 1041409
      %v3244 = vsel %vm3243, %v3227, %v3226
      %vm3245 = vcmask 1042434
      %v3246 = vsel %vm3245, %v3228, %v3244
      %vm3247 = vcmask 1043459
      %v3248 = vsel %vm3247, %v3229, %v3246
      %vm3249 = vcmask 1044484
      %v3250 = vsel %vm3249, %v3230, %v3248
      %vm3251 = vcmask 1045509
      %v3252 = vsel %vm3251, %v3231, %v3250
      %vm3253 = vcmask 1046534
      %v3254 = vsel %vm3253, %v3232, %v3252
      %vm3255 = vcmask 1047559
      %v3256 = vsel %vm3255, %v3233, %v3254
      %s3258 = scalar_lea.vmem [#allocation2], %s3234
      %3259 = vst [vmem:[%s3258] sm:$0xff] %v3256
      %p3260 = scmp.eq.s32.totalorder %s19, 1
      // Predicated region
      $region53: #{kart_model8_forward.2} parent=51 // pred_check
        %p3261 = pneg %p3260
      $region54: #{kart_model8_forward.2} parent=51 // pred_check_branch
        %3263 = sbr.rel (%p3261) target = $region56
      $region55: #{kart_model8_forward.2} parent=51 // pred_region
        %v3264 = vld [vmem:[#allocation2] sm:$0xff]
        %v3265 = vld [vmem:[#allocation2 + $0x8] sm:$0xff]
        %v3266 = vld [vmem:[%s3] sm:$0xff]
        %v3267 = vld [vmem:[%s3 + $0x8] sm:$0xff]
        %v3268 = vld [vmem:[%s3 + $0x10] sm:$0xff]
        %v3269 = vld [vmem:[%s3 + $0x18] sm:$0xff]
        %v3270 = vld [vmem:[%s3 + $0x20] sm:$0xff]
        %v3271 = vld [vmem:[%s3 + $0x28] sm:$0xff]
        %v3272 = vld [vmem:[%s3 + $0x30] sm:$0xff]
        %v3273 = vld [vmem:[%s3 + $0x38] sm:$0xff]
        %v3274 = vld [vmem:[%s3 + $0x40] sm:$0xff]
        %v3275 = vld [vmem:[%s3 + $0x48] sm:$0xff]
        %v3276 = vld [vmem:[%s3 + $0x50] sm:$0xff]
        %v3277 = vld [vmem:[%s3 + $0x58] sm:$0xff]
        %v3278 = vld [vmem:[%s3 + $0x60] sm:$0xff]
        %v3279 = vld [vmem:[%s3 + $0x68] sm:$0xff]
        %v3280 = vld [vmem:[%s3 + $0x70] sm:$0xff]
        %v3281 = vld [vmem:[%s3 + $0x78] sm:$0xff]
        %v3282 = vld [vmem:[%s3 + $0x80] sm:$0xff]
        %v3283 = vld [vmem:[%s3 + $0x88] sm:$0xff]
        %v3284 = vld [vmem:[%s3 + $0x90] sm:$0xff]
        %v3285 = vld [vmem:[%s3 + $0x98] sm:$0xff]
        %v3286 = vld [vmem:[%s3 + $0xa0] sm:$0xff]
        %v3287 = vld [vmem:[%s3 + $0xa8] sm:$0xff]
        %v3288 = vld [vmem:[%s3 + $0xb0] sm:$0xff]
        %v3289 = vld [vmem:[%s3 + $0xb8] sm:$0xff]
        %v3290 = vld [vmem:[%s3 + $0xc0] sm:$0xff]
        %v3291 = vld [vmem:[%s3 + $0xc8] sm:$0xff]
        %v3292 = vld [vmem:[%s3 + $0xd0] sm:$0xff]
        %v3293 = vld [vmem:[%s3 + $0xd8] sm:$0xff]
        %v3294 = vld [vmem:[%s3 + $0xe0] sm:$0xff]
        %v3295 = vld [vmem:[%s3 + $0xe8] sm:$0xff]
        %v3296 = vld [vmem:[%s3 + $0xf0] sm:$0xff]
        %v3297 = vld [vmem:[%s3 + $0xf8] sm:$0xff]
        %v3298 = vld [vmem:[%s3 + $0x100] sm:$0xff]
        %v3299 = vld [vmem:[%s3 + $0x108] sm:$0xff]
        %v3300 = vld [vmem:[%s3 + $0x110] sm:$0xff]
        %v3301 = vld [vmem:[%s3 + $0x118] sm:$0xff]
        %v3302 = vld [vmem:[%s3 + $0x120] sm:$0xff]
        %v3303 = vld [vmem:[%s3 + $0x128] sm:$0xff]
        %v3304 = vld [vmem:[%s3 + $0x130] sm:$0xff]
        %v3305 = vld [vmem:[%s3 + $0x138] sm:$0xff]
        %v3306 = vld [vmem:[%s3 + $0x140] sm:$0xff]
        %v3307 = vld [vmem:[%s3 + $0x148] sm:$0xff]
        %v3308 = vld [vmem:[%s3 + $0x150] sm:$0xff]
        %v3309 = vld [vmem:[%s3 + $0x158] sm:$0xff]
        %v3310 = vld [vmem:[%s3 + $0x160] sm:$0xff]
        %v3311 = vld [vmem:[%s3 + $0x168] sm:$0xff]
        %v3312 = vld [vmem:[%s3 + $0x170] sm:$0xff]
        %v3313 = vld [vmem:[%s3 + $0x178] sm:$0xff]
        %v3314 = vld [vmem:[%s3 + $0x180] sm:$0xff]
        %v3315 = vld [vmem:[%s3 + $0x188] sm:$0xff]
        %v3316 = vld [vmem:[%s3 + $0x190] sm:$0xff]
        %v3317 = vld [vmem:[%s3 + $0x198] sm:$0xff]
        %v3318 = vld [vmem:[%s3 + $0x1a0] sm:$0xff]
        %v3319 = vld [vmem:[%s3 + $0x1a8] sm:$0xff]
        %v3320 = vld [vmem:[%s3 + $0x1b0] sm:$0xff]
        %v3321 = vld [vmem:[%s3 + $0x1b8] sm:$0xff]
        %v3322 = vld [vmem:[%s3 + $0x1c0] sm:$0xff]
        %v3323 = vld [vmem:[%s3 + $0x1c8] sm:$0xff]
        %v3324 = vld [vmem:[%s3 + $0x1d0] sm:$0xff]
        %v3325 = vld [vmem:[%s3 + $0x1d8] sm:$0xff]
        %v3326 = vld [vmem:[%s3 + $0x1e0] sm:$0xff]
        %v3327 = vld [vmem:[%s3 + $0x1e8] sm:$0xff]
        %v3328 = vld [vmem:[%s3 + $0x1f0] sm:$0xff]
        %v3329 = vld [vmem:[%s3 + $0x1f8] sm:$0xff]
        %v3330 = vld [vmem:[%s3 + $0x200] sm:$0xff]
        %v3331 = vld [vmem:[%s3 + $0x208] sm:$0xff]
        %v3332 = vld [vmem:[%s3 + $0x210] sm:$0xff]
        %v3333 = vld [vmem:[%s3 + $0x218] sm:$0xff]
        %v3334 = vld [vmem:[%s3 + $0x220] sm:$0xff]
        %v3335 = vld [vmem:[%s3 + $0x228] sm:$0xff]
        %v3336 = vld [vmem:[%s3 + $0x230] sm:$0xff]
        %v3337 = vld [vmem:[%s3 + $0x238] sm:$0xff]
        %v3338 = vld [vmem:[%s3 + $0x240] sm:$0xff]
        %v3339 = vld [vmem:[%s3 + $0x248] sm:$0xff]
        %v3340 = vld [vmem:[%s3 + $0x250] sm:$0xff]
        %v3341 = vld [vmem:[%s3 + $0x258] sm:$0xff]
        %v3342 = vld [vmem:[%s3 + $0x260] sm:$0xff]
        %v3343 = vld [vmem:[%s3 + $0x268] sm:$0xff]
        %v3344 = vld [vmem:[%s3 + $0x270] sm:$0xff]
        %v3345 = vld [vmem:[%s3 + $0x278] sm:$0xff]
        %v3346 = vld [vmem:[%s3 + $0x280] sm:$0xff]
        %v3347 = vld [vmem:[%s3 + $0x288] sm:$0xff]
        %v3348 = vld [vmem:[%s3 + $0x290] sm:$0xff]
        %v3349 = vld [vmem:[%s3 + $0x298] sm:$0xff]
        %v3350 = vld [vmem:[%s3 + $0x2a0] sm:$0xff]
        %v3351 = vld [vmem:[%s3 + $0x2a8] sm:$0xff]
        %v3352 = vld [vmem:[%s3 + $0x2b0] sm:$0xff]
        %v3353 = vld [vmem:[%s3 + $0x2b8] sm:$0xff]
        %v3354 = vld [vmem:[%s3 + $0x2c0] sm:$0xff]
        %v3355 = vld [vmem:[%s3 + $0x2c8] sm:$0xff]
        %v3356 = vld [vmem:[%s3 + $0x2d0] sm:$0xff]
        %v3357 = vld [vmem:[%s3 + $0x2d8] sm:$0xff]
        %v3358 = vld [vmem:[%s3 + $0x2e0] sm:$0xff]
        %v3359 = vld [vmem:[%s3 + $0x2e8] sm:$0xff]
        %v3360 = vld [vmem:[%s3 + $0x2f0] sm:$0xff]
        %v3361 = vld [vmem:[%s3 + $0x2f8] sm:$0xff]
        %v3362 = vld [vmem:[%s3 + $0x300] sm:$0xff]
        %v3363 = vld [vmem:[%s3 + $0x308] sm:$0xff]
        %v3364 = vld [vmem:[%s3 + $0x310] sm:$0xff]
        %v3365 = vld [vmem:[%s3 + $0x318] sm:$0xff]
        %v3366 = vld [vmem:[%s3 + $0x320] sm:$0xff]
        %v3367 = vld [vmem:[%s3 + $0x328] sm:$0xff]
        %v3368 = vld [vmem:[%s3 + $0x330] sm:$0xff]
        %v3369 = vld [vmem:[%s3 + $0x338] sm:$0xff]
        %v3370 = vld [vmem:[%s3 + $0x340] sm:$0xff]
        %v3371 = vld [vmem:[%s3 + $0x348] sm:$0xff]
        %v3372 = vld [vmem:[%s3 + $0x350] sm:$0xff]
        %v3373 = vld [vmem:[%s3 + $0x358] sm:$0xff]
        %v3374 = vld [vmem:[%s3 + $0x360] sm:$0xff]
        %v3375 = vld [vmem:[%s3 + $0x368] sm:$0xff]
        %v3376 = vld [vmem:[%s3 + $0x370] sm:$0xff]
        %v3377 = vld [vmem:[%s3 + $0x378] sm:$0xff]
        %v3378 = vld [vmem:[%s3 + $0x380] sm:$0xff]
        %v3379 = vld [vmem:[%s3 + $0x388] sm:$0xff]
        %v3380 = vld [vmem:[%s3 + $0x390] sm:$0xff]
        %v3381 = vld [vmem:[%s3 + $0x398] sm:$0xff]
        %v3382 = vld [vmem:[%s3 + $0x3a0] sm:$0xff]
        %v3383 = vld [vmem:[%s3 + $0x3a8] sm:$0xff]
        %v3384 = vld [vmem:[%s3 + $0x3b0] sm:$0xff]
        %v3385 = vld [vmem:[%s3 + $0x3b8] sm:$0xff]
        %v3386 = vld [vmem:[%s3 + $0x3c0] sm:$0xff]
        %v3387 = vld [vmem:[%s3 + $0x3c8] sm:$0xff]
        %v3388 = vld [vmem:[%s3 + $0x3d0] sm:$0xff]
        %v3389 = vld [vmem:[%s3 + $0x3d8] sm:$0xff]
        %v3390 = vld [vmem:[%s3 + $0x3e0] sm:$0xff]
        %v3391 = vld [vmem:[%s3 + $0x3e8] sm:$0xff]
        %v3392 = vld [vmem:[%s3 + $0x3f0] sm:$0xff]
        %v3393 = vld [vmem:[%s3 + $0x3f8] sm:$0xff]
        %v3394 = vld [vmem:[%s3 + $0x400] sm:$0xff]
        %v3395 = vld [vmem:[%s3 + $0x408] sm:$0xff]
        %v3396 = vld [vmem:[%s3 + $0x410] sm:$0xff]
        %v3397 = vld [vmem:[%s3 + $0x418] sm:$0xff]
        %v3398 = vld [vmem:[%s3 + $0x420] sm:$0xff]
        %v3399 = vld [vmem:[%s3 + $0x428] sm:$0xff]
        %v3400 = vld [vmem:[%s3 + $0x430] sm:$0xff]
        %v3401 = vld [vmem:[%s3 + $0x438] sm:$0xff]
        %v3402 = vld [vmem:[%s3 + $0x440] sm:$0xff]
        %v3403 = vld [vmem:[%s3 + $0x448] sm:$0xff]
        %v3404 = vld [vmem:[%s3 + $0x450] sm:$0xff]
        %v3405 = vld [vmem:[%s3 + $0x458] sm:$0xff]
        %v3406 = vld [vmem:[%s3 + $0x460] sm:$0xff]
        %v3407 = vld [vmem:[%s3 + $0x468] sm:$0xff]
        %v3408 = vld [vmem:[%s3 + $0x470] sm:$0xff]
        %v3409 = vld [vmem:[%s3 + $0x478] sm:$0xff]
        %v3410 = vld [vmem:[%s3 + $0x480] sm:$0xff]
        %v3411 = vld [vmem:[%s3 + $0x488] sm:$0xff]
        %v3412 = vld [vmem:[%s3 + $0x490] sm:$0xff]
        %v3413 = vld [vmem:[%s3 + $0x498] sm:$0xff]
        %v3414 = vld [vmem:[%s3 + $0x4a0] sm:$0xff]
        %v3415 = vld [vmem:[%s3 + $0x4a8] sm:$0xff]
        %v3416 = vld [vmem:[%s3 + $0x4b0] sm:$0xff]
        %v3417 = vld [vmem:[%s3 + $0x4b8] sm:$0xff]
        %v3418 = vld [vmem:[%s3 + $0x4c0] sm:$0xff]
        %v3419 = vld [vmem:[%s3 + $0x4c8] sm:$0xff]
        %v3420 = vld [vmem:[%s3 + $0x4d0] sm:$0xff]
        %v3421 = vld [vmem:[%s3 + $0x4d8] sm:$0xff]
        %v3422 = vld [vmem:[%s3 + $0x4e0] sm:$0xff]
        %v3423 = vld [vmem:[%s3 + $0x4e8] sm:$0xff]
        %v3424 = vld [vmem:[%s3 + $0x4f0] sm:$0xff]
        %v3425 = vld [vmem:[%s3 + $0x4f8] sm:$0xff]
        %v3426 = vld [vmem:[%s3 + $0x500] sm:$0xff]
        %v3427 = vld [vmem:[%s3 + $0x508] sm:$0xff]
        %v3428 = vld [vmem:[%s3 + $0x510] sm:$0xff]
        %v3429 = vld [vmem:[%s3 + $0x518] sm:$0xff]
        %v3430 = vld [vmem:[%s3 + $0x520] sm:$0xff]
        %v3431 = vld [vmem:[%s3 + $0x528] sm:$0xff]
        %v3432 = vld [vmem:[%s3 + $0x530] sm:$0xff]
        %v3433 = vld [vmem:[%s3 + $0x538] sm:$0xff]
        %v3434 = vld [vmem:[%s3 + $0x540] sm:$0xff]
        %v3435 = vld [vmem:[%s3 + $0x548] sm:$0xff]
        %v3436 = vld [vmem:[%s3 + $0x550] sm:$0xff]
        %v3437 = vld [vmem:[%s3 + $0x558] sm:$0xff]
        %v3438 = vld [vmem:[%s3 + $0x560] sm:$0xff]
        %v3439 = vld [vmem:[%s3 + $0x568] sm:$0xff]
        %v3440 = vld [vmem:[%s3 + $0x570] sm:$0xff]
        %v3441 = vld [vmem:[%s3 + $0x578] sm:$0xff]
        %v3442 = vld [vmem:[%s3 + $0x580] sm:$0xff]
        %v3443 = vld [vmem:[%s3 + $0x588] sm:$0xff]
        %v3444 = vld [vmem:[%s3 + $0x590] sm:$0xff]
        %v3445 = vld [vmem:[%s3 + $0x598] sm:$0xff]
        %v3446 = vld [vmem:[%s3 + $0x5a0] sm:$0xff]
        %v3447 = vld [vmem:[%s3 + $0x5a8] sm:$0xff]
        %v3448 = vld [vmem:[%s3 + $0x5b0] sm:$0xff]
        %v3449 = vld [vmem:[%s3 + $0x5b8] sm:$0xff]
        %v3450 = vld [vmem:[%s3 + $0x5c0] sm:$0xff]
        %v3451 = vld [vmem:[%s3 + $0x5c8] sm:$0xff]
        %v3452 = vld [vmem:[%s3 + $0x5d0] sm:$0xff]
        %v3453 = vld [vmem:[%s3 + $0x5d8] sm:$0xff]
        %v3454 = vld [vmem:[%s3 + $0x5e0] sm:$0xff]
        %v3455 = vld [vmem:[%s3 + $0x5e8] sm:$0xff]
        %v3456 = vld [vmem:[%s3 + $0x5f0] sm:$0xff]
        %v3457 = vld [vmem:[%s3 + $0x5f8] sm:$0xff]
        %v3458 = vld [vmem:[%s3 + $0x600] sm:$0xff]
        %v3459 = vld [vmem:[%s3 + $0x608] sm:$0xff]
        %v3460 = vld [vmem:[%s3 + $0x610] sm:$0xff]
        %v3461 = vld [vmem:[%s3 + $0x618] sm:$0xff]
        %v3462 = vld [vmem:[%s3 + $0x620] sm:$0xff]
        %v3463 = vld [vmem:[%s3 + $0x628] sm:$0xff]
        %v3464 = vld [vmem:[%s3 + $0x630] sm:$0xff]
        %v3465 = vld [vmem:[%s3 + $0x638] sm:$0xff]
        %v3466 = vld [vmem:[%s3 + $0x640] sm:$0xff]
        %v3467 = vld [vmem:[%s3 + $0x648] sm:$0xff]
        %v3468 = vld [vmem:[%s3 + $0x650] sm:$0xff]
        %v3469 = vld [vmem:[%s3 + $0x658] sm:$0xff]
        %v3470 = vld [vmem:[%s3 + $0x660] sm:$0xff]
        %v3471 = vld [vmem:[%s3 + $0x668] sm:$0xff]
        %v3472 = vld [vmem:[%s3 + $0x670] sm:$0xff]
        %v3473 = vld [vmem:[%s3 + $0x678] sm:$0xff]
        %v3474 = vld [vmem:[%s3 + $0x680] sm:$0xff]
        %v3475 = vld [vmem:[%s3 + $0x688] sm:$0xff]
        %v3476 = vld [vmem:[%s3 + $0x690] sm:$0xff]
        %v3477 = vld [vmem:[%s3 + $0x698] sm:$0xff]
        %v3478 = vld [vmem:[%s3 + $0x6a0] sm:$0xff]
        %v3479 = vld [vmem:[%s3 + $0x6a8] sm:$0xff]
        %v3480 = vld [vmem:[%s3 + $0x6b0] sm:$0xff]
        %v3481 = vld [vmem:[%s3 + $0x6b8] sm:$0xff]
        %v3482 = vld [vmem:[%s3 + $0x6c0] sm:$0xff]
        %v3483 = vld [vmem:[%s3 + $0x6c8] sm:$0xff]
        %v3484 = vld [vmem:[%s3 + $0x6d0] sm:$0xff]
        %v3485 = vld [vmem:[%s3 + $0x6d8] sm:$0xff]
        %v3486 = vld [vmem:[%s3 + $0x6e0] sm:$0xff]
        %v3487 = vld [vmem:[%s3 + $0x6e8] sm:$0xff]
        %v3488 = vld [vmem:[%s3 + $0x6f0] sm:$0xff]
        %v3489 = vld [vmem:[%s3 + $0x6f8] sm:$0xff]
        %v3490 = vld [vmem:[%s3 + $0x700] sm:$0xff]
        %v3491 = vld [vmem:[%s3 + $0x708] sm:$0xff]
        %v3492 = vld [vmem:[%s3 + $0x710] sm:$0xff]
        %v3493 = vld [vmem:[%s3 + $0x718] sm:$0xff]
        %v3494 = vld [vmem:[%s3 + $0x720] sm:$0xff]
        %v3495 = vld [vmem:[%s3 + $0x728] sm:$0xff]
        %v3496 = vld [vmem:[%s3 + $0x730] sm:$0xff]
        %v3497 = vld [vmem:[%s3 + $0x738] sm:$0xff]
        %v3498 = vld [vmem:[%s3 + $0x740] sm:$0xff]
        %v3499 = vld [vmem:[%s3 + $0x748] sm:$0xff]
        %v3500 = vld [vmem:[%s3 + $0x750] sm:$0xff]
        %v3501 = vld [vmem:[%s3 + $0x758] sm:$0xff]
        %v3502 = vld [vmem:[%s3 + $0x760] sm:$0xff]
        %v3503 = vld [vmem:[%s3 + $0x768] sm:$0xff]
        %v3504 = vld [vmem:[%s3 + $0x770] sm:$0xff]
        %v3505 = vld [vmem:[%s3 + $0x778] sm:$0xff]
        %v3506 = vld [vmem:[%s3 + $0x780] sm:$0xff]
        %v3507 = vld [vmem:[%s3 + $0x788] sm:$0xff]
        %v3508 = vld [vmem:[%s3 + $0x790] sm:$0xff]
        %v3509 = vld [vmem:[%s3 + $0x798] sm:$0xff]
        %v3510 = vld [vmem:[%s3 + $0x7a0] sm:$0xff]
        %v3511 = vld [vmem:[%s3 + $0x7a8] sm:$0xff]
        %v3512 = vld [vmem:[%s3 + $0x7b0] sm:$0xff]
        %v3513 = vld [vmem:[%s3 + $0x7b8] sm:$0xff]
        %v3514 = vld [vmem:[%s3 + $0x7c0] sm:$0xff]
        %v3515 = vld [vmem:[%s3 + $0x7c8] sm:$0xff]
        %v3516 = vld [vmem:[%s3 + $0x7d0] sm:$0xff]
        %v3517 = vld [vmem:[%s3 + $0x7d8] sm:$0xff]
        %v3518 = vld [vmem:[%s3 + $0x7e0] sm:$0xff]
        %v3519 = vld [vmem:[%s3 + $0x7e8] sm:$0xff]
        %v3520 = vld [vmem:[%s3 + $0x7f0] sm:$0xff]
        %v3521 = vld [vmem:[%s3 + $0x7f8] sm:$0xff]
        %v3522 = vld [vmem:[%s4] sm:$0xff]
        %v3523 = vld [vmem:[%s4 + $0x8] sm:$0xff]
        %v3526 = vlaneseq
        %v3527 = vshrl.u32 %v3526, 7
        %v3528 = vsub.s32 0, %v3527
        %v3529 = vrot.slane %v3522, %v3528
        %v3530 = vlaneseq
        %v3531 = vshrl.u32 %v3530, 7
        %v3532 = vsub.s32 1, %v3531
        %v3533 = vrot.slane %v3522, %v3532
        %v3534 = vlaneseq
        %v3535 = vshrl.u32 %v3534, 7
        %v3536 = vsub.s32 2, %v3535
        %v3537 = vrot.slane %v3522, %v3536
        %v3538 = vlaneseq
        %v3539 = vshrl.u32 %v3538, 7
        %v3540 = vsub.s32 3, %v3539
        %v3541 = vrot.slane %v3522, %v3540
        %v3542 = vlaneseq
        %v3543 = vshrl.u32 %v3542, 7
        %v3544 = vsub.s32 4, %v3543
        %v3545 = vrot.slane %v3522, %v3544
        %v3546 = vlaneseq
        %v3547 = vshrl.u32 %v3546, 7
        %v3548 = vsub.s32 5, %v3547
        %v3549 = vrot.slane %v3522, %v3548
        %v3550 = vlaneseq
        %v3551 = vshrl.u32 %v3550, 7
        %v3552 = vsub.s32 6, %v3551
        %v3553 = vrot.slane %v3522, %v3552
        %v3554 = vlaneseq
        %v3555 = vshrl.u32 %v3554, 7
        %v3556 = vsub.s32 7, %v3555
        %v3557 = vrot.slane %v3522, %v3556
        %v3558 = vlaneseq
        %v3559 = vshrl.u32 %v3558, 7
        %v3560 = vsub.s32 0, %v3559
        %v3561 = vrot.slane %v3523, %v3560
        %v3562 = vlaneseq
        %v3563 = vshrl.u32 %v3562, 7
        %v3564 = vsub.s32 1, %v3563
        %v3565 = vrot.slane %v3523, %v3564
        %v3566 = vlaneseq
        %v3567 = vshrl.u32 %v3566, 7
        %v3568 = vsub.s32 2, %v3567
        %v3569 = vrot.slane %v3523, %v3568
        %v3570 = vlaneseq
        %v3571 = vshrl.u32 %v3570, 7
        %v3572 = vsub.s32 3, %v3571
        %v3573 = vrot.slane %v3523, %v3572
        %v3574 = vlaneseq
        %v3575 = vshrl.u32 %v3574, 7
        %v3576 = vsub.s32 4, %v3575
        %v3577 = vrot.slane %v3523, %v3576
        %v3578 = vlaneseq
        %v3579 = vshrl.u32 %v3578, 7
        %v3580 = vsub.s32 5, %v3579
        %v3581 = vrot.slane %v3523, %v3580
        %v3582 = vlaneseq
        %v3583 = vshrl.u32 %v3582, 7
        %v3584 = vsub.s32 6, %v3583
        %v3585 = vrot.slane %v3523, %v3584
        %v3586 = vlaneseq
        %v3587 = vshrl.u32 %v3586, 7
        %v3588 = vsub.s32 7, %v3587
        %v3589 = vrot.slane %v3523, %v3588
        %3606 = vmatprep.subr.mxu0 %v3267
        %3607 = vmatpush1.msra.mxu0 %v3266
        %3608 = vmatprep.subr.mxu0 %v3283
        %3609 = vmatpush1.msra.mxu0 %v3282
        %3610 = vmatprep.subr.mxu0 %v3299
        %3611 = vmatpush1.msra.mxu0 %v3298
        %3612 = vmatprep.subr.mxu0 %v3315
        %3613 = vmatpush1.msra.mxu0 %v3314
        %3614 = vmatprep.subr.mxu0 %v3331
        %3615 = vmatpush1.msra.mxu0 %v3330
        %3616 = vmatprep.subr.mxu0 %v3347
        %3617 = vmatpush1.msra.mxu0 %v3346
        %3618 = vmatprep.subr.mxu0 %v3363
        %3619 = vmatpush1.msra.mxu0 %v3362
        %3620 = vmatprep.subr.mxu0 %v3379
        %3621 = vmatpush1.msra.mxu0 %v3378
        %3622 = vmatprep.subr.mxu0 %v3395
        %3623 = vmatpush1.msra.mxu0 %v3394
        %3624 = vmatprep.subr.mxu0 %v3411
        %3625 = vmatpush1.msra.mxu0 %v3410
        %3626 = vmatprep.subr.mxu0 %v3427
        %3627 = vmatpush1.msra.mxu0 %v3426
        %3628 = vmatprep.subr.mxu0 %v3443
        %3629 = vmatpush1.msra.mxu0 %v3442
        %3630 = vmatprep.subr.mxu0 %v3459
        %3631 = vmatpush1.msra.mxu0 %v3458
        %3632 = vmatprep.subr.mxu0 %v3475
        %3633 = vmatpush1.msra.mxu0 %v3474
        %3634 = vmatprep.subr.mxu0 %v3491
        %3635 = vmatpush1.msra.mxu0 %v3490
        %3636 = vmatprep.subr.mxu0 %v3507
        %3637 = vmatpush1.msra.mxu0 %v3506
        %3638 = vmatprep.subr.mxu0 0.0
        %3639 = vmatpush1.msra.mxu0 0.0
        %3640 = vmatprep.subr.mxu0 0.0
        %3641 = vmatpush1.msra.mxu0 0.0
        %3642 = vmatprep.subr.mxu0 0.0
        %3643 = vmatpush1.msra.mxu0 0.0
        %3644 = vmatprep.subr.mxu0 0.0
        %3645 = vmatpush1.msra.mxu0 0.0
        %3646 = vmatprep.subr.mxu0 0.0
        %3647 = vmatpush1.msra.mxu0 0.0
        %3648 = vmatprep.subr.mxu0 0.0
        %3649 = vmatpush1.msra.mxu0 0.0
        %3650 = vmatprep.subr.mxu0 0.0
        %3651 = vmatpush1.msra.mxu0 0.0
        %3652 = vmatprep.subr.mxu0 0.0
        %3653 = vmatpush1.msra.mxu0 0.0
        %3654 = vmatprep.subr.mxu0 0.0
        %3655 = vmatpush1.msra.mxu0 0.0
        %3656 = vmatprep.subr.mxu0 0.0
        %3657 = vmatpush1.msra.mxu0 0.0
        %3658 = vmatprep.subr.mxu0 0.0
        %3659 = vmatpush1.msra.mxu0 0.0
        %3660 = vmatprep.subr.mxu0 0.0
        %3661 = vmatpush1.msra.mxu0 0.0
        %3662 = vmatprep.subr.mxu0 0.0
        %3663 = vmatpush1.msra.mxu0 0.0
        %3664 = vmatprep.subr.mxu0 0.0
        %3665 = vmatpush1.msra.mxu0 0.0
        %3666 = vmatprep.subr.mxu0 0.0
        %3667 = vmatpush1.msra.mxu0 0.0
        %3668 = vmatprep.subr.mxu0 0.0
        %3669 = vmatpush1.msra.mxu0 0.0
        %3670 = vmatprep.mubr.f32.mxu0 0.0
        %3671 = vmatmul.mubr.f32.gmra.mrb[0].mxu0 %v3264
        %v3672 = vpop.f32.mrb[0].mxu0
        %v3673 = vadd.f32 %v3529, %v3672
        %v3674 = vpop.f32.mrb[0].mxu0
        %v3675 = vadd.f32 %v3533, %v3674
        %3676 = vmatprep.mubr.f32.mxu0 0.0
        %3677 = vmatmul.mubr.f32.gmra.mrb[0].mxu0 %v3265
        %v3678 = vpop.f32.mrb[0].mxu0
        %v3679 = vadd.f32 %v3529, %v3678
        %v3680 = vpop.f32.mrb[0].mxu0
        %v3681 = vadd.f32 %v3533, %v3680
        %3682 = vdwg.mxu0
        %3683 = vmatprep.subr.mxu0 %v3269
        %3684 = vmatpush1.msra.mxu0 %v3268
        %3685 = vmatprep.subr.mxu0 %v3285
        %3686 = vmatpush1.msra.mxu0 %v3284
        %3687 = vmatprep.subr.mxu0 %v3301
        %3688 = vmatpush1.msra.mxu0 %v3300
        %3689 = vmatprep.subr.mxu0 %v3317
        %3690 = vmatpush1.msra.mxu0 %v3316
        %3691 = vmatprep.subr.mxu0 %v3333
        %3692 = vmatpush1.msra.mxu0 %v3332
        %3693 = vmatprep.subr.mxu0 %v3349
        %3694 = vmatpush1.msra.mxu0 %v3348
        %3695 = vmatprep.subr.mxu0 %v3365
        %3696 = vmatpush1.msra.mxu0 %v3364
        %3697 = vmatprep.subr.mxu0 %v3381
        %3698 = vmatpush1.msra.mxu0 %v3380
        %3699 = vmatprep.subr.mxu0 %v3397
        %3700 = vmatpush1.msra.mxu0 %v3396
        %3701 = vmatprep.subr.mxu0 %v3413
        %3702 = vmatpush1.msra.mxu0 %v3412
        %3703 = vmatprep.subr.mxu0 %v3429
        %3704 = vmatpush1.msra.mxu0 %v3428
        %3705 = vmatprep.subr.mxu0 %v3445
        %3706 = vmatpush1.msra.mxu0 %v3444
        %3707 = vmatprep.subr.mxu0 %v3461
        %3708 = vmatpush1.msra.mxu0 %v3460
        %3709 = vmatprep.subr.mxu0 %v3477
        %3710 = vmatpush1.msra.mxu0 %v3476
        %3711 = vmatprep.subr.mxu0 %v3493
        %3712 = vmatpush1.msra.mxu0 %v3492
        %3713 = vmatprep.subr.mxu0 %v3509
        %3714 = vmatpush1.msra.mxu0 %v3508
        %3715 = vmatprep.subr.mxu0 0.0
        %3716 = vmatpush1.msra.mxu0 0.0
        %3717 = vmatprep.subr.mxu0 0.0
        %3718 = vmatpush1.msra.mxu0 0.0
        %3719 = vmatprep.subr.mxu0 0.0
        %3720 = vmatpush1.msra.mxu0 0.0
        %3721 = vmatprep.subr.mxu0 0.0
        %3722 = vmatpush1.msra.mxu0 0.0
        %3723 = vmatprep.subr.mxu0 0.0
        %3724 = vmatpush1.msra.mxu0 0.0
        %3725 = vmatprep.subr.mxu0 0.0
        %3726 = vmatpush1.msra.mxu0 0.0
        %3727 = vmatprep.subr.mxu0 0.0
        %3728 = vmatpush1.msra.mxu0 0.0
        %3729 = vmatprep.subr.mxu0 0.0
        %3730 = vmatpush1.msra.mxu0 0.0
        %3731 = vmatprep.subr.mxu0 0.0
        %3732 = vmatpush1.msra.mxu0 0.0
        %3733 = vmatprep.subr.mxu0 0.0
        %3734 = vmatpush1.msra.mxu0 0.0
        %3735 = vmatprep.subr.mxu0 0.0
        %3736 = vmatpush1.msra.mxu0 0.0
        %3737 = vmatprep.subr.mxu0 0.0
        %3738 = vmatpush1.msra.mxu0 0.0
        %3739 = vmatprep.subr.mxu0 0.0
        %3740 = vmatpush1.msra.mxu0 0.0
        %3741 = vmatprep.subr.mxu0 0.0
        %3742 = vmatpush1.msra.mxu0 0.0
        %3743 = vmatprep.subr.mxu0 0.0
        %3744 = vmatpush1.msra.mxu0 0.0
        %3745 = vmatprep.subr.mxu0 0.0
        %3746 = vmatpush1.msra.mxu0 0.0
        %3747 = vmatprep.mubr.f32.mxu0 0.0
        %3748 = vmatmul.mubr.f32.gmra.mrb[0].mxu0 %v3264
        %v3749 = vpop.f32.mrb[0].mxu0
        %v3750 = vadd.f32 %v3537, %v3749
        %v3751 = vpop.f32.mrb[0].mxu0
        %v3752 = vadd.f32 %v3541, %v3751
        %3753 = vmatprep.mubr.f32.mxu0 0.0
        %3754 = vmatmul.mubr.f32.gmra.mrb[0].mxu0 %v3265
        %v3755 = vpop.f32.mrb[0].mxu0
        %v3756 = vadd.f32 %v3537, %v3755
        %v3757 = vpop.f32.mrb[0].mxu0
        %v3758 = vadd.f32 %v3541, %v3757
        %3759 = vdwg.mxu0
        %3760 = vmatprep.subr.mxu0 %v3271
        %3761 = vmatpush1.msra.mxu0 %v3270
        %3762 = vmatprep.subr.mxu0 %v3287
        %3763 = vmatpush1.msra.mxu0 %v3286
        %3764 = vmatprep.subr.mxu0 %v3303
        %3765 = vmatpush1.msra.mxu0 %v3302
        %3766 = vmatprep.subr.mxu0 %v3319
        %3767 = vmatpush1.msra.mxu0 %v3318
        %3768 = vmatprep.subr.mxu0 %v3335
        %3769 = vmatpush1.msra.mxu0 %v3334
        %3770 = vmatprep.subr.mxu0 %v3351
        %3771 = vmatpush1.msra.mxu0 %v3350
        %3772 = vmatprep.subr.mxu0 %v3367
        %3773 = vmatpush1.msra.mxu0 %v3366
        %3774 = vmatprep.subr.mxu0 %v3383
        %3775 = vmatpush1.msra.mxu0 %v3382
        %3776 = vmatprep.subr.mxu0 %v3399
        %3777 = vmatpush1.msra.mxu0 %v3398
        %3778 = vmatprep.subr.mxu0 %v3415
        %3779 = vmatpush1.msra.mxu0 %v3414
        %3780 = vmatprep.subr.mxu0 %v3431
        %3781 = vmatpush1.msra.mxu0 %v3430
        %3782 = vmatprep.subr.mxu0 %v3447
        %3783 = vmatpush1.msra.mxu0 %v3446
        %3784 = vmatprep.subr.mxu0 %v3463
        %3785 = vmatpush1.msra.mxu0 %v3462
        %3786 = vmatprep.subr.mxu0 %v3479
        %3787 = vmatpush1.msra.mxu0 %v3478
        %3788 = vmatprep.subr.mxu0 %v3495
        %3789 = vmatpush1.msra.mxu0 %v3494
        %3790 = vmatprep.subr.mxu0 %v3511
        %3791 = vmatpush1.msra.mxu0 %v3510
        %3792 = vmatprep.subr.mxu0 0.0
        %3793 = vmatpush1.msra.mxu0 0.0
        %3794 = vmatprep.subr.mxu0 0.0
        %3795 = vmatpush1.msra.mxu0 0.0
        %3796 = vmatprep.subr.mxu0 0.0
        %3797 = vmatpush1.msra.mxu0 0.0
        %3798 = vmatprep.subr.mxu0 0.0
        %3799 = vmatpush1.msra.mxu0 0.0
        %3800 = vmatprep.subr.mxu0 0.0
        %3801 = vmatpush1.msra.mxu0 0.0
        %3802 = vmatprep.subr.mxu0 0.0
        %3803 = vmatpush1.msra.mxu0 0.0
        %3804 = vmatprep.subr.mxu0 0.0
        %3805 = vmatpush1.msra.mxu0 0.0
        %3806 = vmatprep.subr.mxu0 0.0
        %3807 = vmatpush1.msra.mxu0 0.0
        %3808 = vmatprep.subr.mxu0 0.0
        %3809 = vmatpush1.msra.mxu0 0.0
        %3810 = vmatprep.subr.mxu0 0.0
        %3811 = vmatpush1.msra.mxu0 0.0
        %3812 = vmatprep.subr.mxu0 0.0
        %3813 = vmatpush1.msra.mxu0 0.0
        %3814 = vmatprep.subr.mxu0 0.0
        %3815 = vmatpush1.msra.mxu0 0.0
        %3816 = vmatprep.subr.mxu0 0.0
        %3817 = vmatpush1.msra.mxu0 0.0
        %3818 = vmatprep.subr.mxu0 0.0
        %3819 = vmatpush1.msra.mxu0 0.0
        %3820 = vmatprep.subr.mxu0 0.0
        %3821 = vmatpush1.msra.mxu0 0.0
        %3822 = vmatprep.subr.mxu0 0.0
        %3823 = vmatpush1.msra.mxu0 0.0
        %3824 = vmatprep.mubr.f32.mxu0 0.0
        %3825 = vmatmul.mubr.f32.gmra.mrb[0].mxu0 %v3264
        %v3826 = vpop.f32.mrb[0].mxu0
        %v3827 = vadd.f32 %v3545, %v3826
        %v3828 = vpop.f32.mrb[0].mxu0
        %v3829 = vadd.f32 %v3549, %v3828
        %3830 = vmatprep.mubr.f32.mxu0 0.0
        %3831 = vmatmul.mubr.f32.gmra.mrb[0].mxu0 %v3265
        %v3832 = vpop.f32.mrb[0].mxu0
        %v3833 = vadd.f32 %v3545, %v3832
        %v3834 = vpop.f32.mrb[0].mxu0
        %v3835 = vadd.f32 %v3549, %v3834
        %3836 = vdwg.mxu0
        %3837 = vmatprep.subr.mxu0 %v3273
        %3838 = vmatpush1.msra.mxu0 %v3272
        %3839 = vmatprep.subr.mxu0 %v3289
        %3840 = vmatpush1.msra.mxu0 %v3288
        %3841 = vmatprep.subr.mxu0 %v3305
        %3842 = vmatpush1.msra.mxu0 %v3304
        %3843 = vmatprep.subr.mxu0 %v3321
        %3844 = vmatpush1.msra.mxu0 %v3320
        %3845 = vmatprep.subr.mxu0 %v3337
        %3846 = vmatpush1.msra.mxu0 %v3336
        %3847 = vmatprep.subr.mxu0 %v3353
        %3848 = vmatpush1.msra.mxu0 %v3352
        %3849 = vmatprep.subr.mxu0 %v3369
        %3850 = vmatpush1.msra.mxu0 %v3368
        %3851 = vmatprep.subr.mxu0 %v3385
        %3852 = vmatpush1.msra.mxu0 %v3384
        %3853 = vmatprep.subr.mxu0 %v3401
        %3854 = vmatpush1.msra.mxu0 %v3400
        %3855 = vmatprep.subr.mxu0 %v3417
        %3856 = vmatpush1.msra.mxu0 %v3416
        %3857 = vmatprep.subr.mxu0 %v3433
        %3858 = vmatpush1.msra.mxu0 %v3432
        %3859 = vmatprep.subr.mxu0 %v3449
        %3860 = vmatpush1.msra.mxu0 %v3448
        %3861 = vmatprep.subr.mxu0 %v3465
        %3862 = vmatpush1.msra.mxu0 %v3464
        %3863 = vmatprep.subr.mxu0 %v3481
        %3864 = vmatpush1.msra.mxu0 %v3480
        %3865 = vmatprep.subr.mxu0 %v3497
        %3866 = vmatpush1.msra.mxu0 %v3496
        %3867 = vmatprep.subr.mxu0 %v3513
        %3868 = vmatpush1.msra.mxu0 %v3512
        %3869 = vmatprep.subr.mxu0 0.0
        %3870 = vmatpush1.msra.mxu0 0.0
        %3871 = vmatprep.subr.mxu0 0.0
        %3872 = vmatpush1.msra.mxu0 0.0
        %3873 = vmatprep.subr.mxu0 0.0
        %3874 = vmatpush1.msra.mxu0 0.0
        %3875 = vmatprep.subr.mxu0 0.0
        %3876 = vmatpush1.msra.mxu0 0.0
        %3877 = vmatprep.subr.mxu0 0.0
        %3878 = vmatpush1.msra.mxu0 0.0
        %3879 = vmatprep.subr.mxu0 0.0
        %3880 = vmatpush1.msra.mxu0 0.0
        %3881 = vmatprep.subr.mxu0 0.0
        %3882 = vmatpush1.msra.mxu0 0.0
        %3883 = vmatprep.subr.mxu0 0.0
        %3884 = vmatpush1.msra.mxu0 0.0
        %3885 = vmatprep.subr.mxu0 0.0
        %3886 = vmatpush1.msra.mxu0 0.0
        %3887 = vmatprep.subr.mxu0 0.0
        %3888 = vmatpush1.msra.mxu0 0.0
        %3889 = vmatprep.subr.mxu0 0.0
        %3890 = vmatpush1.msra.mxu0 0.0
        %3891 = vmatprep.subr.mxu0 0.0
        %3892 = vmatpush1.msra.mxu0 0.0
        %3893 = vmatprep.subr.mxu0 0.0
        %3894 = vmatpush1.msra.mxu0 0.0
        %3895 = vmatprep.subr.mxu0 0.0
        %3896 = vmatpush1.msra.mxu0 0.0
        %3897 = vmatprep.subr.mxu0 0.0
        %3898 = vmatpush1.msra.mxu0 0.0
        %3899 = vmatprep.subr.mxu0 0.0
        %3900 = vmatpush1.msra.mxu0 0.0
        %3901 = vmatprep.mubr.f32.mxu0 0.0
        %3902 = vmatmul.mubr.f32.gmra.mrb[0].mxu0 %v3264
        %v3903 = vpop.f32.mrb[0].mxu0
        %v3904 = vadd.f32 %v3553, %v3903
        %v3905 = vpop.f32.mrb[0].mxu0
        %v3906 = vadd.f32 %v3557, %v3905
        %3907 = vmatprep.mubr.f32.mxu0 0.0
        %3908 = vmatmul.mubr.f32.gmra.mrb[0].mxu0 %v3265
        %v3909 = vpop.f32.mrb[0].mxu0
        %v3910 = vadd.f32 %v3553, %v3909
        %v3911 = vpop.f32.mrb[0].mxu0
        %v3912 = vadd.f32 %v3557, %v3911
        %3913 = vdwg.mxu0
        %3914 = vmatprep.subr.mxu0 %v3275
        %3915 = vmatpush1.msra.mxu0 %v3274
        %3916 = vmatprep.subr.mxu0 %v3291
        %3917 = vmatpush1.msra.mxu0 %v3290
        %3918 = vmatprep.subr.mxu0 %v3307
        %3919 = vmatpush1.msra.mxu0 %v3306
        %3920 = vmatprep.subr.mxu0 %v3323
        %3921 = vmatpush1.msra.mxu0 %v3322
        %3922 = vmatprep.subr.mxu0 %v3339
        %3923 = vmatpush1.msra.mxu0 %v3338
        %3924 = vmatprep.subr.mxu0 %v3355
        %3925 = vmatpush1.msra.mxu0 %v3354
        %3926 = vmatprep.subr.mxu0 %v3371
        %3927 = vmatpush1.msra.mxu0 %v3370
        %3928 = vmatprep.subr.mxu0 %v3387
        %3929 = vmatpush1.msra.mxu0 %v3386
        %3930 = vmatprep.subr.mxu0 %v3403
        %3931 = vmatpush1.msra.mxu0 %v3402
        %3932 = vmatprep.subr.mxu0 %v3419
        %3933 = vmatpush1.msra.mxu0 %v3418
        %3934 = vmatprep.subr.mxu0 %v3435
        %3935 = vmatpush1.msra.mxu0 %v3434
        %3936 = vmatprep.subr.mxu0 %v3451
        %3937 = vmatpush1.msra.mxu0 %v3450
        %3938 = vmatprep.subr.mxu0 %v3467
        %3939 = vmatpush1.msra.mxu0 %v3466
        %3940 = vmatprep.subr.mxu0 %v3483
        %3941 = vmatpush1.msra.mxu0 %v3482
        %3942 = vmatprep.subr.mxu0 %v3499
        %3943 = vmatpush1.msra.mxu0 %v3498
        %3944 = vmatprep.subr.mxu0 %v3515
        %3945 = vmatpush1.msra.mxu0 %v3514
        %3946 = vmatprep.subr.mxu0 0.0
        %3947 = vmatpush1.msra.mxu0 0.0
        %3948 = vmatprep.subr.mxu0 0.0
        %3949 = vmatpush1.msra.mxu0 0.0
        %3950 = vmatprep.subr.mxu0 0.0
        %3951 = vmatpush1.msra.mxu0 0.0
        %3952 = vmatprep.subr.mxu0 0.0
        %3953 = vmatpush1.msra.mxu0 0.0
        %3954 = vmatprep.subr.mxu0 0.0
        %3955 = vmatpush1.msra.mxu0 0.0
        %3956 = vmatprep.subr.mxu0 0.0
        %3957 = vmatpush1.msra.mxu0 0.0
        %3958 = vmatprep.subr.mxu0 0.0
        %3959 = vmatpush1.msra.mxu0 0.0
        %3960 = vmatprep.subr.mxu0 0.0
        %3961 = vmatpush1.msra.mxu0 0.0
        %3962 = vmatprep.subr.mxu0 0.0
        %3963 = vmatpush1.msra.mxu0 0.0
        %3964 = vmatprep.subr.mxu0 0.0
        %3965 = vmatpush1.msra.mxu0 0.0
        %3966 = vmatprep.subr.mxu0 0.0
        %3967 = vmatpush1.msra.mxu0 0.0
        %3968 = vmatprep.subr.mxu0 0.0
        %3969 = vmatpush1.msra.mxu0 0.0
        %3970 = vmatprep.subr.mxu0 0.0
        %3971 = vmatpush1.msra.mxu0 0.0
        %3972 = vmatprep.subr.mxu0 0.0
        %3973 = vmatpush1.msra.mxu0 0.0
        %3974 = vmatprep.subr.mxu0 0.0
        %3975 = vmatpush1.msra.mxu0 0.0
        %3976 = vmatprep.subr.mxu0 0.0
        %3977 = vmatpush1.msra.mxu0 0.0
        %3978 = vmatprep.mubr.f32.mxu0 0.0
        %3979 = vmatmul.mubr.f32.gmra.mrb[0].mxu0 %v3264
        %v3980 = vpop.f32.mrb[0].mxu0
        %v3981 = vadd.f32 %v3561, %v3980
        %v3982 = vpop.f32.mrb[0].mxu0
        %v3983 = vadd.f32 %v3565, %v3982
        %3984 = vmatprep.mubr.f32.mxu0 0.0
        %3985 = vmatmul.mubr.f32.gmra.mrb[0].mxu0 %v3265
        %v3986 = vpop.f32.mrb[0].mxu0
        %v3987 = vadd.f32 %v3561, %v3986
        %v3988 = vpop.f32.mrb[0].mxu0
        %v3989 = vadd.f32 %v3565, %v3988
        %3990 = vdwg.mxu0
        %3991 = vmatprep.subr.mxu0 %v3277
        %3992 = vmatpush1.msra.mxu0 %v3276
        %3993 = vmatprep.subr.mxu0 %v3293
        %3994 = vmatpush1.msra.mxu0 %v3292
        %3995 = vmatprep.subr.mxu0 %v3309
        %3996 = vmatpush1.msra.mxu0 %v3308
        %3997 = vmatprep.subr.mxu0 %v3325
        %3998 = vmatpush1.msra.mxu0 %v3324
        %3999 = vmatprep.subr.mxu0 %v3341
        %4000 = vmatpush1.msra.mxu0 %v3340
        %4001 = vmatprep.subr.mxu0 %v3357
        %4002 = vmatpush1.msra.mxu0 %v3356
        %4003 = vmatprep.subr.mxu0 %v3373
        %4004 = vmatpush1.msra.mxu0 %v3372
        %4005 = vmatprep.subr.mxu0 %v3389
        %4006 = vmatpush1.msra.mxu0 %v3388
        %4007 = vmatprep.subr.mxu0 %v3405
        %4008 = vmatpush1.msra.mxu0 %v3404
        %4009 = vmatprep.subr.mxu0 %v3421
        %4010 = vmatpush1.msra.mxu0 %v3420
        %4011 = vmatprep.subr.mxu0 %v3437
        %4012 = vmatpush1.msra.mxu0 %v3436
        %4013 = vmatprep.subr.mxu0 %v3453
        %4014 = vmatpush1.msra.mxu0 %v3452
        %4015 = vmatprep.subr.mxu0 %v3469
        %4016 = vmatpush1.msra.mxu0 %v3468
        %4017 = vmatprep.subr.mxu0 %v3485
        %4018 = vmatpush1.msra.mxu0 %v3484
        %4019 = vmatprep.subr.mxu0 %v3501
        %4020 = vmatpush1.msra.mxu0 %v3500
        %4021 = vmatprep.subr.mxu0 %v3517
        %4022 = vmatpush1.msra.mxu0 %v3516
        %4023 = vmatprep.subr.mxu0 0.0
        %4024 = vmatpush1.msra.mxu0 0.0
        %4025 = vmatprep.subr.mxu0 0.0
        %4026 = vmatpush1.msra.mxu0 0.0
        %4027 = vmatprep.subr.mxu0 0.0
        %4028 = vmatpush1.msra.mxu0 0.0
        %4029 = vmatprep.subr.mxu0 0.0
        %4030 = vmatpush1.msra.mxu0 0.0
        %4031 = vmatprep.subr.mxu0 0.0
        %4032 = vmatpush1.msra.mxu0 0.0
        %4033 = vmatprep.subr.mxu0 0.0
        %4034 = vmatpush1.msra.mxu0 0.0
        %4035 = vmatprep.subr.mxu0 0.0
        %4036 = vmatpush1.msra.mxu0 0.0
        %4037 = vmatprep.subr.mxu0 0.0
        %4038 = vmatpush1.msra.mxu0 0.0
        %4039 = vmatprep.subr.mxu0 0.0
        %4040 = vmatpush1.msra.mxu0 0.0
        %4041 = vmatprep.subr.mxu0 0.0
        %4042 = vmatpush1.msra.mxu0 0.0
        %4043 = vmatprep.subr.mxu0 0.0
        %4044 = vmatpush1.msra.mxu0 0.0
        %4045 = vmatprep.subr.mxu0 0.0
        %4046 = vmatpush1.msra.mxu0 0.0
        %4047 = vmatprep.subr.mxu0 0.0
        %4048 = vmatpush1.msra.mxu0 0.0
        %4049 = vmatprep.subr.mxu0 0.0
        %4050 = vmatpush1.msra.mxu0 0.0
        %4051 = vmatprep.subr.mxu0 0.0
        %4052 = vmatpush1.msra.mxu0 0.0
        %4053 = vmatprep.subr.mxu0 0.0
        %4054 = vmatpush1.msra.mxu0 0.0
        %4055 = vmatprep.mubr.f32.mxu0 0.0
        %4056 = vmatmul.mubr.f32.gmra.mrb[0].mxu0 %v3264
        %v4057 = vpop.f32.mrb[0].mxu0
        %v4058 = vadd.f32 %v3569, %v4057
        %v4059 = vpop.f32.mrb[0].mxu0
        %v4060 = vadd.f32 %v3573, %v4059
        %4061 = vmatprep.mubr.f32.mxu0 0.0
        %4062 = vmatmul.mubr.f32.gmra.mrb[0].mxu0 %v3265
        %v4063 = vpop.f32.mrb[0].mxu0
        %v4064 = vadd.f32 %v3569, %v4063
        %v4065 = vpop.f32.mrb[0].mxu0
        %v4066 = vadd.f32 %v3573, %v4065
        %4067 = vdwg.mxu0
        %4068 = vmatprep.subr.mxu0 %v3279
        %4069 = vmatpush1.msra.mxu0 %v3278
        %4070 = vmatprep.subr.mxu0 %v3295
        %4071 = vmatpush1.msra.mxu0 %v3294
        %4072 = vmatprep.subr.mxu0 %v3311
        %4073 = vmatpush1.msra.mxu0 %v3310
        %4074 = vmatprep.subr.mxu0 %v3327
        %4075 = vmatpush1.msra.mxu0 %v3326
        %4076 = vmatprep.subr.mxu0 %v3343
        %4077 = vmatpush1.msra.mxu0 %v3342
        %4078 = vmatprep.subr.mxu0 %v3359
        %4079 = vmatpush1.msra.mxu0 %v3358
        %4080 = vmatprep.subr.mxu0 %v3375
        %4081 = vmatpush1.msra.mxu0 %v3374
        %4082 = vmatprep.subr.mxu0 %v3391
        %4083 = vmatpush1.msra.mxu0 %v3390
        %4084 = vmatprep.subr.mxu0 %v3407
        %4085 = vmatpush1.msra.mxu0 %v3406
        %4086 = vmatprep.subr.mxu0 %v3423
        %4087 = vmatpush1.msra.mxu0 %v3422
        %4088 = vmatprep.subr.mxu0 %v3439
        %4089 = vmatpush1.msra.mxu0 %v3438
        %4090 = vmatprep.subr.mxu0 %v3455
        %4091 = vmatpush1.msra.mxu0 %v3454
        %4092 = vmatprep.subr.mxu0 %v3471
        %4093 = vmatpush1.msra.mxu0 %v3470
        %4094 = vmatprep.subr.mxu0 %v3487
        %4095 = vmatpush1.msra.mxu0 %v3486
        %4096 = vmatprep.subr.mxu0 %v3503
        %4097 = vmatpush1.msra.mxu0 %v3502
        %4098 = vmatprep.subr.mxu0 %v3519
        %4099 = vmatpush1.msra.mxu0 %v3518
        %4100 = vmatprep.subr.mxu0 0.0
        %4101 = vmatpush1.msra.mxu0 0.0
        %4102 = vmatprep.subr.mxu0 0.0
        %4103 = vmatpush1.msra.mxu0 0.0
        %4104 = vmatprep.subr.mxu0 0.0
        %4105 = vmatpush1.msra.mxu0 0.0
        %4106 = vmatprep.subr.mxu0 0.0
        %4107 = vmatpush1.msra.mxu0 0.0
        %4108 = vmatprep.subr.mxu0 0.0
        %4109 = vmatpush1.msra.mxu0 0.0
        %4110 = vmatprep.subr.mxu0 0.0
        %4111 = vmatpush1.msra.mxu0 0.0
        %4112 = vmatprep.subr.mxu0 0.0
        %4113 = vmatpush1.msra.mxu0 0.0
        %4114 = vmatprep.subr.mxu0 0.0
        %4115 = vmatpush1.msra.mxu0 0.0
        %4116 = vmatprep.subr.mxu0 0.0
        %4117 = vmatpush1.msra.mxu0 0.0
        %4118 = vmatprep.subr.mxu0 0.0
        %4119 = vmatpush1.msra.mxu0 0.0
        %4120 = vmatprep.subr.mxu0 0.0
        %4121 = vmatpush1.msra.mxu0 0.0
        %4122 = vmatprep.subr.mxu0 0.0
        %4123 = vmatpush1.msra.mxu0 0.0
        %4124 = vmatprep.subr.mxu0 0.0
        %4125 = vmatpush1.msra.mxu0 0.0
        %4126 = vmatprep.subr.mxu0 0.0
        %4127 = vmatpush1.msra.mxu0 0.0
        %4128 = vmatprep.subr.mxu0 0.0
        %4129 = vmatpush1.msra.mxu0 0.0
        %4130 = vmatprep.subr.mxu0 0.0
        %4131 = vmatpush1.msra.mxu0 0.0
        %4132 = vmatprep.mubr.f32.mxu0 0.0
        %4133 = vmatmul.mubr.f32.gmra.mrb[0].mxu0 %v3264
        %v4134 = vpop.f32.mrb[0].mxu0
        %v4135 = vadd.f32 %v3577, %v4134
        %v4136 = vpop.f32.mrb[0].mxu0
        %v4137 = vadd.f32 %v3581, %v4136
        %4138 = vmatprep.mubr.f32.mxu0 0.0
        %4139 = vmatmul.mubr.f32.gmra.mrb[0].mxu0 %v3265
        %v4140 = vpop.f32.mrb[0].mxu0
        %v4141 = vadd.f32 %v3577, %v4140
        %v4142 = vpop.f32.mrb[0].mxu0
        %v4143 = vadd.f32 %v3581, %v4142
        %4144 = vdwg.mxu0
        %4145 = vmatprep.subr.mxu0 %v3281
        %4146 = vmatpush1.msra.mxu0 %v3280
        %4147 = vmatprep.subr.mxu0 %v3297
        %4148 = vmatpush1.msra.mxu0 %v3296
        %4149 = vmatprep.subr.mxu0 %v3313
        %4150 = vmatpush1.msra.mxu0 %v3312
        %4151 = vmatprep.subr.mxu0 %v3329
        %4152 = vmatpush1.msra.mxu0 %v3328
        %4153 = vmatprep.subr.mxu0 %v3345
        %4154 = vmatpush1.msra.mxu0 %v3344
        %4155 = vmatprep.subr.mxu0 %v3361
        %4156 = vmatpush1.msra.mxu0 %v3360
        %4157 = vmatprep.subr.mxu0 %v3377
        %4158 = vmatpush1.msra.mxu0 %v3376
        %4159 = vmatprep.subr.mxu0 %v3393
        %4160 = vmatpush1.msra.mxu0 %v3392
        %4161 = vmatprep.subr.mxu0 %v3409
        %4162 = vmatpush1.msra.mxu0 %v3408
        %4163 = vmatprep.subr.mxu0 %v3425
        %4164 = vmatpush1.msra.mxu0 %v3424
        %4165 = vmatprep.subr.mxu0 %v3441
        %4166 = vmatpush1.msra.mxu0 %v3440
        %4167 = vmatprep.subr.mxu0 %v3457
        %4168 = vmatpush1.msra.mxu0 %v3456
        %4169 = vmatprep.subr.mxu0 %v3473
        %4170 = vmatpush1.msra.mxu0 %v3472
        %4171 = vmatprep.subr.mxu0 %v3489
        %4172 = vmatpush1.msra.mxu0 %v3488
        %4173 = vmatprep.subr.mxu0 %v3505
        %4174 = vmatpush1.msra.mxu0 %v3504
        %4175 = vmatprep.subr.mxu0 %v3521
        %4176 = vmatpush1.msra.mxu0 %v3520
        %4177 = vmatprep.subr.mxu0 0.0
        %4178 = vmatpush1.msra.mxu0 0.0
        %4179 = vmatprep.subr.mxu0 0.0
        %4180 = vmatpush1.msra.mxu0 0.0
        %4181 = vmatprep.subr.mxu0 0.0
        %4182 = vmatpush1.msra.mxu0 0.0
        %4183 = vmatprep.subr.mxu0 0.0
        %4184 = vmatpush1.msra.mxu0 0.0
        %4185 = vmatprep.subr.mxu0 0.0
        %4186 = vmatpush1.msra.mxu0 0.0
        %4187 = vmatprep.subr.mxu0 0.0
        %4188 = vmatpush1.msra.mxu0 0.0
        %4189 = vmatprep.subr.mxu0 0.0
        %4190 = vmatpush1.msra.mxu0 0.0
        %4191 = vmatprep.subr.mxu0 0.0
        %4192 = vmatpush1.msra.mxu0 0.0
        %4193 = vmatprep.subr.mxu0 0.0
        %4194 = vmatpush1.msra.mxu0 0.0
        %4195 = vmatprep.subr.mxu0 0.0
        %4196 = vmatpush1.msra.mxu0 0.0
        %4197 = vmatprep.subr.mxu0 0.0
        %4198 = vmatpush1.msra.mxu0 0.0
        %4199 = vmatprep.subr.mxu0 0.0
        %4200 = vmatpush1.msra.mxu0 0.0
        %4201 = vmatprep.subr.mxu0 0.0
        %4202 = vmatpush1.msra.mxu0 0.0
        %4203 = vmatprep.subr.mxu0 0.0
        %4204 = vmatpush1.msra.mxu0 0.0
        %4205 = vmatprep.subr.mxu0 0.0
        %4206 = vmatpush1.msra.mxu0 0.0
        %4207 = vmatprep.subr.mxu0 0.0
        %4208 = vmatpush1.msra.mxu0 0.0
        %4209 = vmatprep.mubr.f32.mxu0 0.0
        %4210 = vmatmul.mubr.f32.gmra.mrb[0].mxu0 %v3264
        %v4211 = vpop.f32.mrb[0].mxu0
        %v4212 = vadd.f32 %v3585, %v4211
        %v4213 = vpop.f32.mrb[0].mxu0
        %v4214 = vadd.f32 %v3589, %v4213
        %4215 = vmatprep.mubr.f32.mxu0 0.0
        %4216 = vmatmul.mubr.f32.gmra.mrb[0].mxu0 %v3265
        %v4217 = vpop.f32.mrb[0].mxu0
        %v4218 = vadd.f32 %v3585, %v4217
        %v4219 = vpop.f32.mrb[0].mxu0
        %v4220 = vadd.f32 %v3589, %v4219
        %4221 = vdwg.mxu0
        %v4222 = vmax.f32 %v3673, 0.0
        %v4223 = vmax.f32 %v3675, 0.0
        %v4224 = vmax.f32 %v3750, 0.0
        %v4225 = vmax.f32 %v3752, 0.0
        %v4226 = vmax.f32 %v3827, 0.0
        %v4227 = vmax.f32 %v3829, 0.0
        %v4228 = vmax.f32 %v3904, 0.0
        %v4229 = vmax.f32 %v3906, 0.0
        %v4230 = vmax.f32 %v3981, 0.0
        %v4231 = vmax.f32 %v3983, 0.0
        %v4232 = vmax.f32 %v4058, 0.0
        %v4233 = vmax.f32 %v4060, 0.0
        %v4234 = vmax.f32 %v4135, 0.0
        %v4235 = vmax.f32 %v4137, 0.0
        %v4236 = vmax.f32 %v4212, 0.0
        %v4237 = vmax.f32 %v4214, 0.0
        %v4238 = vmax.f32 %v3679, 0.0
        %v4239 = vmax.f32 %v3681, 0.0
        %v4240 = vmax.f32 %v3756, 0.0
        %v4241 = vmax.f32 %v3758, 0.0
        %v4242 = vmax.f32 %v3833, 0.0
        %v4243 = vmax.f32 %v3835, 0.0
        %v4244 = vmax.f32 %v3910, 0.0
        %v4245 = vmax.f32 %v3912, 0.0
        %v4246 = vmax.f32 %v3987, 0.0
        %v4247 = vmax.f32 %v3989, 0.0
        %v4248 = vmax.f32 %v4064, 0.0
        %v4249 = vmax.f32 %v4066, 0.0
        %v4250 = vmax.f32 %v4141, 0.0
        %v4251 = vmax.f32 %v4143, 0.0
        %v4252 = vmax.f32 %v4218, 0.0
        %v4253 = vmax.f32 %v4220, 0.0
        %v4254 = vld [vmem:[%s5] sm:$0xff]
        %v4255 = vld [vmem:[%s5 + $0x8] sm:$0xff]
        %v4256 = vld [vmem:[%s5 + $0x10] sm:$0xff]
        %v4257 = vld [vmem:[%s5 + $0x18] sm:$0xff]
        %v4258 = vld [vmem:[%s5 + $0x20] sm:$0xff]
        %v4259 = vld [vmem:[%s5 + $0x28] sm:$0xff]
        %v4260 = vld [vmem:[%s5 + $0x30] sm:$0xff]
        %v4261 = vld [vmem:[%s5 + $0x38] sm:$0xff]
        %v4262 = vld [vmem:[%s5 + $0x40] sm:$0xff]
        %v4263 = vld [vmem:[%s5 + $0x48] sm:$0xff]
        %v4264 = vld [vmem:[%s5 + $0x50] sm:$0xff]
        %v4265 = vld [vmem:[%s5 + $0x58] sm:$0xff]
        %v4266 = vld [vmem:[%s5 + $0x60] sm:$0xff]
        %v4267 = vld [vmem:[%s5 + $0x68] sm:$0xff]
        %v4268 = vld [vmem:[%s5 + $0x70] sm:$0xff]
        %v4269 = vld [vmem:[%s5 + $0x78] sm:$0xff]
        %v4270 = vld [vmem:[%s5 + $0x80] sm:$0xff]
        %v4271 = vld [vmem:[%s5 + $0x88] sm:$0xff]
        %v4272 = vld [vmem:[%s5 + $0x90] sm:$0xff]
        %v4273 = vld [vmem:[%s5 + $0x98] sm:$0xff]
        %v4274 = vld [vmem:[%s5 + $0xa0] sm:$0xff]
        %v4275 = vld [vmem:[%s5 + $0xa8] sm:$0xff]
        %v4276 = vld [vmem:[%s5 + $0xb0] sm:$0xff]
        %v4277 = vld [vmem:[%s5 + $0xb8] sm:$0xff]
        %v4278 = vld [vmem:[%s5 + $0xc0] sm:$0xff]
        %v4279 = vld [vmem:[%s5 + $0xc8] sm:$0xff]
        %v4280 = vld [vmem:[%s5 + $0xd0] sm:$0xff]
        %v4281 = vld [vmem:[%s5 + $0xd8] sm:$0xff]
        %v4282 = vld [vmem:[%s5 + $0xe0] sm:$0xff]
        %v4283 = vld [vmem:[%s5 + $0xe8] sm:$0xff]
        %v4284 = vld [vmem:[%s5 + $0xf0] sm:$0xff]
        %v4285 = vld [vmem:[%s5 + $0xf8] sm:$0xff]
        %v4286 = vld [vmem:[%s5 + $0x100] sm:$0xff]
        %v4287 = vld [vmem:[%s5 + $0x108] sm:$0xff]
        %v4288 = vld [vmem:[%s5 + $0x110] sm:$0xff]
        %v4289 = vld [vmem:[%s5 + $0x118] sm:$0xff]
        %v4290 = vld [vmem:[%s5 + $0x120] sm:$0xff]
        %v4291 = vld [vmem:[%s5 + $0x128] sm:$0xff]
        %v4292 = vld [vmem:[%s5 + $0x130] sm:$0xff]
        %v4293 = vld [vmem:[%s5 + $0x138] sm:$0xff]
        %v4294 = vld [vmem:[%s5 + $0x140] sm:$0xff]
        %v4295 = vld [vmem:[%s5 + $0x148] sm:$0xff]
        %v4296 = vld [vmem:[%s5 + $0x150] sm:$0xff]
        %v4297 = vld [vmem:[%s5 + $0x158] sm:$0xff]
        %v4298 = vld [vmem:[%s5 + $0x160] sm:$0xff]
        %v4299 = vld [vmem:[%s5 + $0x168] sm:$0xff]
        %v4300 = vld [vmem:[%s5 + $0x170] sm:$0xff]
        %v4301 = vld [vmem:[%s5 + $0x178] sm:$0xff]
        %v4302 = vld [vmem:[%s5 + $0x180] sm:$0xff]
        %v4303 = vld [vmem:[%s5 + $0x188] sm:$0xff]
        %v4304 = vld [vmem:[%s5 + $0x190] sm:$0xff]
        %v4305 = vld [vmem:[%s5 + $0x198] sm:$0xff]
        %v4306 = vld [vmem:[%s5 + $0x1a0] sm:$0xff]
        %v4307 = vld [vmem:[%s5 + $0x1a8] sm:$0xff]
        %v4308 = vld [vmem:[%s5 + $0x1b0] sm:$0xff]
        %v4309 = vld [vmem:[%s5 + $0x1b8] sm:$0xff]
        %v4310 = vld [vmem:[%s5 + $0x1c0] sm:$0xff]
        %v4311 = vld [vmem:[%s5 + $0x1c8] sm:$0xff]
        %v4312 = vld [vmem:[%s5 + $0x1d0] sm:$0xff]
        %v4313 = vld [vmem:[%s5 + $0x1d8] sm:$0xff]
        %v4314 = vld [vmem:[%s5 + $0x1e0] sm:$0xff]
        %v4315 = vld [vmem:[%s5 + $0x1e8] sm:$0xff]
        %v4316 = vld [vmem:[%s5 + $0x1f0] sm:$0xff]
        %v4317 = vld [vmem:[%s5 + $0x1f8] sm:$0xff]
        %v4318 = vld [vmem:[%s5 + $0x200] sm:$0xff]
        %v4319 = vld [vmem:[%s5 + $0x208] sm:$0xff]
        %v4320 = vld [vmem:[%s5 + $0x210] sm:$0xff]
        %v4321 = vld [vmem:[%s5 + $0x218] sm:$0xff]
        %v4322 = vld [vmem:[%s5 + $0x220] sm:$0xff]
        %v4323 = vld [vmem:[%s5 + $0x228] sm:$0xff]
        %v4324 = vld [vmem:[%s5 + $0x230] sm:$0xff]
        %v4325 = vld [vmem:[%s5 + $0x238] sm:$0xff]
        %v4326 = vld [vmem:[%s5 + $0x240] sm:$0xff]
        %v4327 = vld [vmem:[%s5 + $0x248] sm:$0xff]
        %v4328 = vld [vmem:[%s5 + $0x250] sm:$0xff]
        %v4329 = vld [vmem:[%s5 + $0x258] sm:$0xff]
        %v4330 = vld [vmem:[%s5 + $0x260] sm:$0xff]
        %v4331 = vld [vmem:[%s5 + $0x268] sm:$0xff]
        %v4332 = vld [vmem:[%s5 + $0x270] sm:$0xff]
        %v4333 = vld [vmem:[%s5 + $0x278] sm:$0xff]
        %v4334 = vld [vmem:[%s5 + $0x280] sm:$0xff]
        %v4335 = vld [vmem:[%s5 + $0x288] sm:$0xff]
        %v4336 = vld [vmem:[%s5 + $0x290] sm:$0xff]
        %v4337 = vld [vmem:[%s5 + $0x298] sm:$0xff]
        %v4338 = vld [vmem:[%s5 + $0x2a0] sm:$0xff]
        %v4339 = vld [vmem:[%s5 + $0x2a8] sm:$0xff]
        %v4340 = vld [vmem:[%s5 + $0x2b0] sm:$0xff]
        %v4341 = vld [vmem:[%s5 + $0x2b8] sm:$0xff]
        %v4342 = vld [vmem:[%s5 + $0x2c0] sm:$0xff]
        %v4343 = vld [vmem:[%s5 + $0x2c8] sm:$0xff]
        %v4344 = vld [vmem:[%s5 + $0x2d0] sm:$0xff]
        %v4345 = vld [vmem:[%s5 + $0x2d8] sm:$0xff]
        %v4346 = vld [vmem:[%s5 + $0x2e0] sm:$0xff]
        %v4347 = vld [vmem:[%s5 + $0x2e8] sm:$0xff]
        %v4348 = vld [vmem:[%s5 + $0x2f0] sm:$0xff]
        %v4349 = vld [vmem:[%s5 + $0x2f8] sm:$0xff]
        %v4350 = vld [vmem:[%s5 + $0x300] sm:$0xff]
        %v4351 = vld [vmem:[%s5 + $0x308] sm:$0xff]
        %v4352 = vld [vmem:[%s5 + $0x310] sm:$0xff]
        %v4353 = vld [vmem:[%s5 + $0x318] sm:$0xff]
        %v4354 = vld [vmem:[%s5 + $0x320] sm:$0xff]
        %v4355 = vld [vmem:[%s5 + $0x328] sm:$0xff]
        %v4356 = vld [vmem:[%s5 + $0x330] sm:$0xff]
        %v4357 = vld [vmem:[%s5 + $0x338] sm:$0xff]
        %v4358 = vld [vmem:[%s5 + $0x340] sm:$0xff]
        %v4359 = vld [vmem:[%s5 + $0x348] sm:$0xff]
        %v4360 = vld [vmem:[%s5 + $0x350] sm:$0xff]
        %v4361 = vld [vmem:[%s5 + $0x358] sm:$0xff]
        %v4362 = vld [vmem:[%s5 + $0x360] sm:$0xff]
        %v4363 = vld [vmem:[%s5 + $0x368] sm:$0xff]
        %v4364 = vld [vmem:[%s5 + $0x370] sm:$0xff]
        %v4365 = vld [vmem:[%s5 + $0x378] sm:$0xff]
        %v4366 = vld [vmem:[%s5 + $0x380] sm:$0xff]
        %v4367 = vld [vmem:[%s5 + $0x388] sm:$0xff]
        %v4368 = vld [vmem:[%s5 + $0x390] sm:$0xff]
        %v4369 = vld [vmem:[%s5 + $0x398] sm:$0xff]
        %v4370 = vld [vmem:[%s5 + $0x3a0] sm:$0xff]
        %v4371 = vld [vmem:[%s5 + $0x3a8] sm:$0xff]
        %v4372 = vld [vmem:[%s5 + $0x3b0] sm:$0xff]
        %v4373 = vld [vmem:[%s5 + $0x3b8] sm:$0xff]
        %v4374 = vld [vmem:[%s5 + $0x3c0] sm:$0xff]
        %v4375 = vld [vmem:[%s5 + $0x3c8] sm:$0xff]
        %v4376 = vld [vmem:[%s5 + $0x3d0] sm:$0xff]
        %v4377 = vld [vmem:[%s5 + $0x3d8] sm:$0xff]
        %v4378 = vld [vmem:[%s5 + $0x3e0] sm:$0xff]
        %v4379 = vld [vmem:[%s5 + $0x3e8] sm:$0xff]
        %v4380 = vld [vmem:[%s5 + $0x3f0] sm:$0xff]
        %v4381 = vld [vmem:[%s5 + $0x3f8] sm:$0xff]
        %v4382 = vld [vmem:[%s5 + $0x400] sm:$0xff]
        %v4383 = vld [vmem:[%s5 + $0x408] sm:$0xff]
        %v4384 = vld [vmem:[%s5 + $0x410] sm:$0xff]
        %v4385 = vld [vmem:[%s5 + $0x418] sm:$0xff]
        %v4386 = vld [vmem:[%s5 + $0x420] sm:$0xff]
        %v4387 = vld [vmem:[%s5 + $0x428] sm:$0xff]
        %v4388 = vld [vmem:[%s5 + $0x430] sm:$0xff]
        %v4389 = vld [vmem:[%s5 + $0x438] sm:$0xff]
        %v4390 = vld [vmem:[%s5 + $0x440] sm:$0xff]
        %v4391 = vld [vmem:[%s5 + $0x448] sm:$0xff]
        %v4392 = vld [vmem:[%s5 + $0x450] sm:$0xff]
        %v4393 = vld [vmem:[%s5 + $0x458] sm:$0xff]
        %v4394 = vld [vmem:[%s5 + $0x460] sm:$0xff]
        %v4395 = vld [vmem:[%s5 + $0x468] sm:$0xff]
        %v4396 = vld [vmem:[%s5 + $0x470] sm:$0xff]
        %v4397 = vld [vmem:[%s5 + $0x478] sm:$0xff]
        %v4398 = vld [vmem:[%s5 + $0x480] sm:$0xff]
        %v4399 = vld [vmem:[%s5 + $0x488] sm:$0xff]
        %v4400 = vld [vmem:[%s5 + $0x490] sm:$0xff]
        %v4401 = vld [vmem:[%s5 + $0x498] sm:$0xff]
        %v4402 = vld [vmem:[%s5 + $0x4a0] sm:$0xff]
        %v4403 = vld [vmem:[%s5 + $0x4a8] sm:$0xff]
        %v4404 = vld [vmem:[%s5 + $0x4b0] sm:$0xff]
        %v4405 = vld [vmem:[%s5 + $0x4b8] sm:$0xff]
        %v4406 = vld [vmem:[%s5 + $0x4c0] sm:$0xff]
        %v4407 = vld [vmem:[%s5 + $0x4c8] sm:$0xff]
        %v4408 = vld [vmem:[%s5 + $0x4d0] sm:$0xff]
        %v4409 = vld [vmem:[%s5 + $0x4d8] sm:$0xff]
        %v4410 = vld [vmem:[%s5 + $0x4e0] sm:$0xff]
        %v4411 = vld [vmem:[%s5 + $0x4e8] sm:$0xff]
        %v4412 = vld [vmem:[%s5 + $0x4f0] sm:$0xff]
        %v4413 = vld [vmem:[%s5 + $0x4f8] sm:$0xff]
        %v4414 = vld [vmem:[%s5 + $0x500] sm:$0xff]
        %v4415 = vld [vmem:[%s5 + $0x508] sm:$0xff]
        %v4416 = vld [vmem:[%s5 + $0x510] sm:$0xff]
        %v4417 = vld [vmem:[%s5 + $0x518] sm:$0xff]
        %v4418 = vld [vmem:[%s5 + $0x520] sm:$0xff]
        %v4419 = vld [vmem:[%s5 + $0x528] sm:$0xff]
        %v4420 = vld [vmem:[%s5 + $0x530] sm:$0xff]
        %v4421 = vld [vmem:[%s5 + $0x538] sm:$0xff]
        %v4422 = vld [vmem:[%s5 + $0x540] sm:$0xff]
        %v4423 = vld [vmem:[%s5 + $0x548] sm:$0xff]
        %v4424 = vld [vmem:[%s5 + $0x550] sm:$0xff]
        %v4425 = vld [vmem:[%s5 + $0x558] sm:$0xff]
        %v4426 = vld [vmem:[%s5 + $0x560] sm:$0xff]
        %v4427 = vld [vmem:[%s5 + $0x568] sm:$0xff]
        %v4428 = vld [vmem:[%s5 + $0x570] sm:$0xff]
        %v4429 = vld [vmem:[%s5 + $0x578] sm:$0xff]
        %v4430 = vld [vmem:[%s5 + $0x580] sm:$0xff]
        %v4431 = vld [vmem:[%s5 + $0x588] sm:$0xff]
        %v4432 = vld [vmem:[%s5 + $0x590] sm:$0xff]
        %v4433 = vld [vmem:[%s5 + $0x598] sm:$0xff]
        %v4434 = vld [vmem:[%s5 + $0x5a0] sm:$0xff]
        %v4435 = vld [vmem:[%s5 + $0x5a8] sm:$0xff]
        %v4436 = vld [vmem:[%s5 + $0x5b0] sm:$0xff]
        %v4437 = vld [vmem:[%s5 + $0x5b8] sm:$0xff]
        %v4438 = vld [vmem:[%s5 + $0x5c0] sm:$0xff]
        %v4439 = vld [vmem:[%s5 + $0x5c8] sm:$0xff]
        %v4440 = vld [vmem:[%s5 + $0x5d0] sm:$0xff]
        %v4441 = vld [vmem:[%s5 + $0x5d8] sm:$0xff]
        %v4442 = vld [vmem:[%s5 + $0x5e0] sm:$0xff]
        %v4443 = vld [vmem:[%s5 + $0x5e8] sm:$0xff]
        %v4444 = vld [vmem:[%s5 + $0x5f0] sm:$0xff]
        %v4445 = vld [vmem:[%s5 + $0x5f8] sm:$0xff]
        %v4446 = vld [vmem:[%s5 + $0x600] sm:$0xff]
        %v4447 = vld [vmem:[%s5 + $0x608] sm:$0xff]
        %v4448 = vld [vmem:[%s5 + $0x610] sm:$0xff]
        %v4449 = vld [vmem:[%s5 + $0x618] sm:$0xff]
        %v4450 = vld [vmem:[%s5 + $0x620] sm:$0xff]
        %v4451 = vld [vmem:[%s5 + $0x628] sm:$0xff]
        %v4452 = vld [vmem:[%s5 + $0x630] sm:$0xff]
        %v4453 = vld [vmem:[%s5 + $0x638] sm:$0xff]
        %v4454 = vld [vmem:[%s5 + $0x640] sm:$0xff]
        %v4455 = vld [vmem:[%s5 + $0x648] sm:$0xff]
        %v4456 = vld [vmem:[%s5 + $0x650] sm:$0xff]
        %v4457 = vld [vmem:[%s5 + $0x658] sm:$0xff]
        %v4458 = vld [vmem:[%s5 + $0x660] sm:$0xff]
        %v4459 = vld [vmem:[%s5 + $0x668] sm:$0xff]
        %v4460 = vld [vmem:[%s5 + $0x670] sm:$0xff]
        %v4461 = vld [vmem:[%s5 + $0x678] sm:$0xff]
        %v4462 = vld [vmem:[%s5 + $0x680] sm:$0xff]
        %v4463 = vld [vmem:[%s5 + $0x688] sm:$0xff]
        %v4464 = vld [vmem:[%s5 + $0x690] sm:$0xff]
        %v4465 = vld [vmem:[%s5 + $0x698] sm:$0xff]
        %v4466 = vld [vmem:[%s5 + $0x6a0] sm:$0xff]
        %v4467 = vld [vmem:[%s5 + $0x6a8] sm:$0xff]
        %v4468 = vld [vmem:[%s5 + $0x6b0] sm:$0xff]
        %v4469 = vld [vmem:[%s5 + $0x6b8] sm:$0xff]
        %v4470 = vld [vmem:[%s5 + $0x6c0] sm:$0xff]
        %v4471 = vld [vmem:[%s5 + $0x6c8] sm:$0xff]
        %v4472 = vld [vmem:[%s5 + $0x6d0] sm:$0xff]
        %v4473 = vld [vmem:[%s5 + $0x6d8] sm:$0xff]
        %v4474 = vld [vmem:[%s5 + $0x6e0] sm:$0xff]
        %v4475 = vld [vmem:[%s5 + $0x6e8] sm:$0xff]
        %v4476 = vld [vmem:[%s5 + $0x6f0] sm:$0xff]
        %v4477 = vld [vmem:[%s5 + $0x6f8] sm:$0xff]
        %v4478 = vld [vmem:[%s5 + $0x700] sm:$0xff]
        %v4479 = vld [vmem:[%s5 + $0x708] sm:$0xff]
        %v4480 = vld [vmem:[%s5 + $0x710] sm:$0xff]
        %v4481 = vld [vmem:[%s5 + $0x718] sm:$0xff]
        %v4482 = vld [vmem:[%s5 + $0x720] sm:$0xff]
        %v4483 = vld [vmem:[%s5 + $0x728] sm:$0xff]
        %v4484 = vld [vmem:[%s5 + $0x730] sm:$0xff]
        %v4485 = vld [vmem:[%s5 + $0x738] sm:$0xff]
        %v4486 = vld [vmem:[%s5 + $0x740] sm:$0xff]
        %v4487 = vld [vmem:[%s5 + $0x748] sm:$0xff]
        %v4488 = vld [vmem:[%s5 + $0x750] sm:$0xff]
        %v4489 = vld [vmem:[%s5 + $0x758] sm:$0xff]
        %v4490 = vld [vmem:[%s5 + $0x760] sm:$0xff]
        %v4491 = vld [vmem:[%s5 + $0x768] sm:$0xff]
        %v4492 = vld [vmem:[%s5 + $0x770] sm:$0xff]
        %v4493 = vld [vmem:[%s5 + $0x778] sm:$0xff]
        %v4494 = vld [vmem:[%s5 + $0x780] sm:$0xff]
        %v4495 = vld [vmem:[%s5 + $0x788] sm:$0xff]
        %v4496 = vld [vmem:[%s5 + $0x790] sm:$0xff]
        %v4497 = vld [vmem:[%s5 + $0x798] sm:$0xff]
        %v4498 = vld [vmem:[%s5 + $0x7a0] sm:$0xff]
        %v4499 = vld [vmem:[%s5 + $0x7a8] sm:$0xff]
        %v4500 = vld [vmem:[%s5 + $0x7b0] sm:$0xff]
        %v4501 = vld [vmem:[%s5 + $0x7b8] sm:$0xff]
        %v4502 = vld [vmem:[%s5 + $0x7c0] sm:$0xff]
        %v4503 = vld [vmem:[%s5 + $0x7c8] sm:$0xff]
        %v4504 = vld [vmem:[%s5 + $0x7d0] sm:$0xff]
        %v4505 = vld [vmem:[%s5 + $0x7d8] sm:$0xff]
        %v4506 = vld [vmem:[%s5 + $0x7e0] sm:$0xff]
        %v4507 = vld [vmem:[%s5 + $0x7e8] sm:$0xff]
        %v4508 = vld [vmem:[%s5 + $0x7f0] sm:$0xff]
        %v4509 = vld [vmem:[%s5 + $0x7f8] sm:$0xff]
        %v4510 = vld [vmem:[%s5 + $0x800] sm:$0xff]
        %v4511 = vld [vmem:[%s5 + $0x808] sm:$0xff]
        %v4512 = vld [vmem:[%s5 + $0x810] sm:$0xff]
        %v4513 = vld [vmem:[%s5 + $0x818] sm:$0xff]
        %v4514 = vld [vmem:[%s5 + $0x820] sm:$0xff]
        %v4515 = vld [vmem:[%s5 + $0x828] sm:$0xff]
        %v4516 = vld [vmem:[%s5 + $0x830] sm:$0xff]
        %v4517 = vld [vmem:[%s5 + $0x838] sm:$0xff]
        %v4518 = vld [vmem:[%s5 + $0x840] sm:$0xff]
        %v4519 = vld [vmem:[%s5 + $0x848] sm:$0xff]
        %v4520 = vld [vmem:[%s5 + $0x850] sm:$0xff]
        %v4521 = vld [vmem:[%s5 + $0x858] sm:$0xff]
        %v4522 = vld [vmem:[%s5 + $0x860] sm:$0xff]
        %v4523 = vld [vmem:[%s5 + $0x868] sm:$0xff]
        %v4524 = vld [vmem:[%s5 + $0x870] sm:$0xff]
        %v4525 = vld [vmem:[%s5 + $0x878] sm:$0xff]
        %v4526 = vld [vmem:[%s5 + $0x880] sm:$0xff]
        %v4527 = vld [vmem:[%s5 + $0x888] sm:$0xff]
        %v4528 = vld [vmem:[%s5 + $0x890] sm:$0xff]
        %v4529 = vld [vmem:[%s5 + $0x898] sm:$0xff]
        %v4530 = vld [vmem:[%s5 + $0x8a0] sm:$0xff]
        %v4531 = vld [vmem:[%s5 + $0x8a8] sm:$0xff]
        %v4532 = vld [vmem:[%s5 + $0x8b0] sm:$0xff]
        %v4533 = vld [vmem:[%s5 + $0x8b8] sm:$0xff]
        %v4534 = vld [vmem:[%s5 + $0x8c0] sm:$0xff]
        %v4535 = vld [vmem:[%s5 + $0x8c8] sm:$0xff]
        %v4536 = vld [vmem:[%s5 + $0x8d0] sm:$0xff]
        %v4537 = vld [vmem:[%s5 + $0x8d8] sm:$0xff]
        %v4538 = vld [vmem:[%s5 + $0x8e0] sm:$0xff]
        %v4539 = vld [vmem:[%s5 + $0x8e8] sm:$0xff]
        %v4540 = vld [vmem:[%s5 + $0x8f0] sm:$0xff]
        %v4541 = vld [vmem:[%s5 + $0x8f8] sm:$0xff]
        %v4542 = vld [vmem:[%s5 + $0x900] sm:$0xff]
        %v4543 = vld [vmem:[%s5 + $0x908] sm:$0xff]
        %v4544 = vld [vmem:[%s5 + $0x910] sm:$0xff]
        %v4545 = vld [vmem:[%s5 + $0x918] sm:$0xff]
        %v4546 = vld [vmem:[%s5 + $0x920] sm:$0xff]
        %v4547 = vld [vmem:[%s5 + $0x928] sm:$0xff]
        %v4548 = vld [vmem:[%s5 + $0x930] sm:$0xff]
        %v4549 = vld [vmem:[%s5 + $0x938] sm:$0xff]
        %v4550 = vld [vmem:[%s5 + $0x940] sm:$0xff]
        %v4551 = vld [vmem:[%s5 + $0x948] sm:$0xff]
        %v4552 = vld [vmem:[%s5 + $0x950] sm:$0xff]
        %v4553 = vld [vmem:[%s5 + $0x958] sm:$0xff]
        %v4554 = vld [vmem:[%s5 + $0x960] sm:$0xff]
        %v4555 = vld [vmem:[%s5 + $0x968] sm:$0xff]
        %v4556 = vld [vmem:[%s5 + $0x970] sm:$0xff]
        %v4557 = vld [vmem:[%s5 + $0x978] sm:$0xff]
        %v4558 = vld [vmem:[%s5 + $0x980] sm:$0xff]
        %v4559 = vld [vmem:[%s5 + $0x988] sm:$0xff]
        %v4560 = vld [vmem:[%s5 + $0x990] sm:$0xff]
        %v4561 = vld [vmem:[%s5 + $0x998] sm:$0xff]
        %v4562 = vld [vmem:[%s5 + $0x9a0] sm:$0xff]
        %v4563 = vld [vmem:[%s5 + $0x9a8] sm:$0xff]
        %v4564 = vld [vmem:[%s5 + $0x9b0] sm:$0xff]
        %v4565 = vld [vmem:[%s5 + $0x9b8] sm:$0xff]
        %v4566 = vld [vmem:[%s5 + $0x9c0] sm:$0xff]
        %v4567 = vld [vmem:[%s5 + $0x9c8] sm:$0xff]
        %v4568 = vld [vmem:[%s5 + $0x9d0] sm:$0xff]
        %v4569 = vld [vmem:[%s5 + $0x9d8] sm:$0xff]
        %v4570 = vld [vmem:[%s5 + $0x9e0] sm:$0xff]
        %v4571 = vld [vmem:[%s5 + $0x9e8] sm:$0xff]
        %v4572 = vld [vmem:[%s5 + $0x9f0] sm:$0xff]
        %v4573 = vld [vmem:[%s5 + $0x9f8] sm:$0xff]
        %v4574 = vld [vmem:[%s5 + $0xa00] sm:$0xff]
        %v4575 = vld [vmem:[%s5 + $0xa08] sm:$0xff]
        %v4576 = vld [vmem:[%s5 + $0xa10] sm:$0xff]
        %v4577 = vld [vmem:[%s5 + $0xa18] sm:$0xff]
        %v4578 = vld [vmem:[%s5 + $0xa20] sm:$0xff]
        %v4579 = vld [vmem:[%s5 + $0xa28] sm:$0xff]
        %v4580 = vld [vmem:[%s5 + $0xa30] sm:$0xff]
        %v4581 = vld [vmem:[%s5 + $0xa38] sm:$0xff]
        %v4582 = vld [vmem:[%s5 + $0xa40] sm:$0xff]
        %v4583 = vld [vmem:[%s5 + $0xa48] sm:$0xff]
        %v4584 = vld [vmem:[%s5 + $0xa50] sm:$0xff]
        %v4585 = vld [vmem:[%s5 + $0xa58] sm:$0xff]
        %v4586 = vld [vmem:[%s5 + $0xa60] sm:$0xff]
        %v4587 = vld [vmem:[%s5 + $0xa68] sm:$0xff]
        %v4588 = vld [vmem:[%s5 + $0xa70] sm:$0xff]
        %v4589 = vld [vmem:[%s5 + $0xa78] sm:$0xff]
        %v4590 = vld [vmem:[%s5 + $0xa80] sm:$0xff]
        %v4591 = vld [vmem:[%s5 + $0xa88] sm:$0xff]
        %v4592 = vld [vmem:[%s5 + $0xa90] sm:$0xff]
        %v4593 = vld [vmem:[%s5 + $0xa98] sm:$0xff]
        %v4594 = vld [vmem:[%s5 + $0xaa0] sm:$0xff]
        %v4595 = vld [vmem:[%s5 + $0xaa8] sm:$0xff]
        %v4596 = vld [vmem:[%s5 + $0xab0] sm:$0xff]
        %v4597 = vld [vmem:[%s5 + $0xab8] sm:$0xff]
        %v4598 = vld [vmem:[%s5 + $0xac0] sm:$0xff]
        %v4599 = vld [vmem:[%s5 + $0xac8] sm:$0xff]
        %v4600 = vld [vmem:[%s5 + $0xad0] sm:$0xff]
        %v4601 = vld [vmem:[%s5 + $0xad8] sm:$0xff]
        %v4602 = vld [vmem:[%s5 + $0xae0] sm:$0xff]
        %v4603 = vld [vmem:[%s5 + $0xae8] sm:$0xff]
        %v4604 = vld [vmem:[%s5 + $0xaf0] sm:$0xff]
        %v4605 = vld [vmem:[%s5 + $0xaf8] sm:$0xff]
        %v4606 = vld [vmem:[%s5 + $0xb00] sm:$0xff]
        %v4607 = vld [vmem:[%s5 + $0xb08] sm:$0xff]
        %v4608 = vld [vmem:[%s5 + $0xb10] sm:$0xff]
        %v4609 = vld [vmem:[%s5 + $0xb18] sm:$0xff]
        %v4610 = vld [vmem:[%s5 + $0xb20] sm:$0xff]
        %v4611 = vld [vmem:[%s5 + $0xb28] sm:$0xff]
        %v4612 = vld [vmem:[%s5 + $0xb30] sm:$0xff]
        %v4613 = vld [vmem:[%s5 + $0xb38] sm:$0xff]
        %v4614 = vld [vmem:[%s5 + $0xb40] sm:$0xff]
        %v4615 = vld [vmem:[%s5 + $0xb48] sm:$0xff]
        %v4616 = vld [vmem:[%s5 + $0xb50] sm:$0xff]
        %v4617 = vld [vmem:[%s5 + $0xb58] sm:$0xff]
        %v4618 = vld [vmem:[%s5 + $0xb60] sm:$0xff]
        %v4619 = vld [vmem:[%s5 + $0xb68] sm:$0xff]
        %v4620 = vld [vmem:[%s5 + $0xb70] sm:$0xff]
        %v4621 = vld [vmem:[%s5 + $0xb78] sm:$0xff]
        %v4622 = vld [vmem:[%s5 + $0xb80] sm:$0xff]
        %v4623 = vld [vmem:[%s5 + $0xb88] sm:$0xff]
        %v4624 = vld [vmem:[%s5 + $0xb90] sm:$0xff]
        %v4625 = vld [vmem:[%s5 + $0xb98] sm:$0xff]
        %v4626 = vld [vmem:[%s5 + $0xba0] sm:$0xff]
        %v4627 = vld [vmem:[%s5 + $0xba8] sm:$0xff]
        %v4628 = vld [vmem:[%s5 + $0xbb0] sm:$0xff]
        %v4629 = vld [vmem:[%s5 + $0xbb8] sm:$0xff]
        %v4630 = vld [vmem:[%s5 + $0xbc0] sm:$0xff]
        %v4631 = vld [vmem:[%s5 + $0xbc8] sm:$0xff]
        %v4632 = vld [vmem:[%s5 + $0xbd0] sm:$0xff]
        %v4633 = vld [vmem:[%s5 + $0xbd8] sm:$0xff]
        %v4634 = vld [vmem:[%s5 + $0xbe0] sm:$0xff]
        %v4635 = vld [vmem:[%s5 + $0xbe8] sm:$0xff]
        %v4636 = vld [vmem:[%s5 + $0xbf0] sm:$0xff]
        %v4637 = vld [vmem:[%s5 + $0xbf8] sm:$0xff]
        %v4638 = vld [vmem:[%s5 + $0xc00] sm:$0xff]
        %v4639 = vld [vmem:[%s5 + $0xc08] sm:$0xff]
        %v4640 = vld [vmem:[%s5 + $0xc10] sm:$0xff]
        %v4641 = vld [vmem:[%s5 + $0xc18] sm:$0xff]
        %v4642 = vld [vmem:[%s5 + $0xc20] sm:$0xff]
        %v4643 = vld [vmem:[%s5 + $0xc28] sm:$0xff]
        %v4644 = vld [vmem:[%s5 + $0xc30] sm:$0xff]
        %v4645 = vld [vmem:[%s5 + $0xc38] sm:$0xff]
        %v4646 = vld [vmem:[%s5 + $0xc40] sm:$0xff]
        %v4647 = vld [vmem:[%s5 + $0xc48] sm:$0xff]
        %v4648 = vld [vmem:[%s5 + $0xc50] sm:$0xff]
        %v4649 = vld [vmem:[%s5 + $0xc58] sm:$0xff]
        %v4650 = vld [vmem:[%s5 + $0xc60] sm:$0xff]
        %v4651 = vld [vmem:[%s5 + $0xc68] sm:$0xff]
        %v4652 = vld [vmem:[%s5 + $0xc70] sm:$0xff]
        %v4653 = vld [vmem:[%s5 + $0xc78] sm:$0xff]
        %v4654 = vld [vmem:[%s5 + $0xc80] sm:$0xff]
        %v4655 = vld [vmem:[%s5 + $0xc88] sm:$0xff]
        %v4656 = vld [vmem:[%s5 + $0xc90] sm:$0xff]
        %v4657 = vld [vmem:[%s5 + $0xc98] sm:$0xff]
        %v4658 = vld [vmem:[%s5 + $0xca0] sm:$0xff]
        %v4659 = vld [vmem:[%s5 + $0xca8] sm:$0xff]
        %v4660 = vld [vmem:[%s5 + $0xcb0] sm:$0xff]
        %v4661 = vld [vmem:[%s5 + $0xcb8] sm:$0xff]
        %v4662 = vld [vmem:[%s5 + $0xcc0] sm:$0xff]
        %v4663 = vld [vmem:[%s5 + $0xcc8] sm:$0xff]
        %v4664 = vld [vmem:[%s5 + $0xcd0] sm:$0xff]
        %v4665 = vld [vmem:[%s5 + $0xcd8] sm:$0xff]
        %v4666 = vld [vmem:[%s5 + $0xce0] sm:$0xff]
        %v4667 = vld [vmem:[%s5 + $0xce8] sm:$0xff]
        %v4668 = vld [vmem:[%s5 + $0xcf0] sm:$0xff]
        %v4669 = vld [vmem:[%s5 + $0xcf8] sm:$0xff]
        %v4670 = vld [vmem:[%s5 + $0xd00] sm:$0xff]
        %v4671 = vld [vmem:[%s5 + $0xd08] sm:$0xff]
        %v4672 = vld [vmem:[%s5 + $0xd10] sm:$0xff]
        %v4673 = vld [vmem:[%s5 + $0xd18] sm:$0xff]
        %v4674 = vld [vmem:[%s5 + $0xd20] sm:$0xff]
        %v4675 = vld [vmem:[%s5 + $0xd28] sm:$0xff]
        %v4676 = vld [vmem:[%s5 + $0xd30] sm:$0xff]
        %v4677 = vld [vmem:[%s5 + $0xd38] sm:$0xff]
        %v4678 = vld [vmem:[%s5 + $0xd40] sm:$0xff]
        %v4679 = vld [vmem:[%s5 + $0xd48] sm:$0xff]
        %v4680 = vld [vmem:[%s5 + $0xd50] sm:$0xff]
        %v4681 = vld [vmem:[%s5 + $0xd58] sm:$0xff]
        %v4682 = vld [vmem:[%s5 + $0xd60] sm:$0xff]
        %v4683 = vld [vmem:[%s5 + $0xd68] sm:$0xff]
        %v4684 = vld [vmem:[%s5 + $0xd70] sm:$0xff]
        %v4685 = vld [vmem:[%s5 + $0xd78] sm:$0xff]
        %v4686 = vld [vmem:[%s5 + $0xd80] sm:$0xff]
        %v4687 = vld [vmem:[%s5 + $0xd88] sm:$0xff]
        %v4688 = vld [vmem:[%s5 + $0xd90] sm:$0xff]
        %v4689 = vld [vmem:[%s5 + $0xd98] sm:$0xff]
        %v4690 = vld [vmem:[%s5 + $0xda0] sm:$0xff]
        %v4691 = vld [vmem:[%s5 + $0xda8] sm:$0xff]
        %v4692 = vld [vmem:[%s5 + $0xdb0] sm:$0xff]
        %v4693 = vld [vmem:[%s5 + $0xdb8] sm:$0xff]
        %v4694 = vld [vmem:[%s5 + $0xdc0] sm:$0xff]
        %v4695 = vld [vmem:[%s5 + $0xdc8] sm:$0xff]
        %v4696 = vld [vmem:[%s5 + $0xdd0] sm:$0xff]
        %v4697 = vld [vmem:[%s5 + $0xdd8] sm:$0xff]
        %v4698 = vld [vmem:[%s5 + $0xde0] sm:$0xff]
        %v4699 = vld [vmem:[%s5 + $0xde8] sm:$0xff]
        %v4700 = vld [vmem:[%s5 + $0xdf0] sm:$0xff]
        %v4701 = vld [vmem:[%s5 + $0xdf8] sm:$0xff]
        %v4702 = vld [vmem:[%s5 + $0xe00] sm:$0xff]
        %v4703 = vld [vmem:[%s5 + $0xe08] sm:$0xff]
        %v4704 = vld [vmem:[%s5 + $0xe10] sm:$0xff]
        %v4705 = vld [vmem:[%s5 + $0xe18] sm:$0xff]
        %v4706 = vld [vmem:[%s5 + $0xe20] sm:$0xff]
        %v4707 = vld [vmem:[%s5 + $0xe28] sm:$0xff]
        %v4708 = vld [vmem:[%s5 + $0xe30] sm:$0xff]
        %v4709 = vld [vmem:[%s5 + $0xe38] sm:$0xff]
        %v4710 = vld [vmem:[%s5 + $0xe40] sm:$0xff]
        %v4711 = vld [vmem:[%s5 + $0xe48] sm:$0xff]
        %v4712 = vld [vmem:[%s5 + $0xe50] sm:$0xff]
        %v4713 = vld [vmem:[%s5 + $0xe58] sm:$0xff]
        %v4714 = vld [vmem:[%s5 + $0xe60] sm:$0xff]
        %v4715 = vld [vmem:[%s5 + $0xe68] sm:$0xff]
        %v4716 = vld [vmem:[%s5 + $0xe70] sm:$0xff]
        %v4717 = vld [vmem:[%s5 + $0xe78] sm:$0xff]
        %v4718 = vld [vmem:[%s5 + $0xe80] sm:$0xff]
        %v4719 = vld [vmem:[%s5 + $0xe88] sm:$0xff]
        %v4720 = vld [vmem:[%s5 + $0xe90] sm:$0xff]
        %v4721 = vld [vmem:[%s5 + $0xe98] sm:$0xff]
        %v4722 = vld [vmem:[%s5 + $0xea0] sm:$0xff]
        %v4723 = vld [vmem:[%s5 + $0xea8] sm:$0xff]
        %v4724 = vld [vmem:[%s5 + $0xeb0] sm:$0xff]
        %v4725 = vld [vmem:[%s5 + $0xeb8] sm:$0xff]
        %v4726 = vld [vmem:[%s5 + $0xec0] sm:$0xff]
        %v4727 = vld [vmem:[%s5 + $0xec8] sm:$0xff]
        %v4728 = vld [vmem:[%s5 + $0xed0] sm:$0xff]
        %v4729 = vld [vmem:[%s5 + $0xed8] sm:$0xff]
        %v4730 = vld [vmem:[%s5 + $0xee0] sm:$0xff]
        %v4731 = vld [vmem:[%s5 + $0xee8] sm:$0xff]
        %v4732 = vld [vmem:[%s5 + $0xef0] sm:$0xff]
        %v4733 = vld [vmem:[%s5 + $0xef8] sm:$0xff]
        %v4734 = vld [vmem:[%s5 + $0xf00] sm:$0xff]
        %v4735 = vld [vmem:[%s5 + $0xf08] sm:$0xff]
        %v4736 = vld [vmem:[%s5 + $0xf10] sm:$0xff]
        %v4737 = vld [vmem:[%s5 + $0xf18] sm:$0xff]
        %v4738 = vld [vmem:[%s5 + $0xf20] sm:$0xff]
        %v4739 = vld [vmem:[%s5 + $0xf28] sm:$0xff]
        %v4740 = vld [vmem:[%s5 + $0xf30] sm:$0xff]
        %v4741 = vld [vmem:[%s5 + $0xf38] sm:$0xff]
        %v4742 = vld [vmem:[%s5 + $0xf40] sm:$0xff]
        %v4743 = vld [vmem:[%s5 + $0xf48] sm:$0xff]
        %v4744 = vld [vmem:[%s5 + $0xf50] sm:$0xff]
        %v4745 = vld [vmem:[%s5 + $0xf58] sm:$0xff]
        %v4746 = vld [vmem:[%s5 + $0xf60] sm:$0xff]
        %v4747 = vld [vmem:[%s5 + $0xf68] sm:$0xff]
        %v4748 = vld [vmem:[%s5 + $0xf70] sm:$0xff]
        %v4749 = vld [vmem:[%s5 + $0xf78] sm:$0xff]
        %v4750 = vld [vmem:[%s5 + $0xf80] sm:$0xff]
        %v4751 = vld [vmem:[%s5 + $0xf88] sm:$0xff]
        %v4752 = vld [vmem:[%s5 + $0xf90] sm:$0xff]
        %v4753 = vld [vmem:[%s5 + $0xf98] sm:$0xff]
        %v4754 = vld [vmem:[%s5 + $0xfa0] sm:$0xff]
        %v4755 = vld [vmem:[%s5 + $0xfa8] sm:$0xff]
        %v4756 = vld [vmem:[%s5 + $0xfb0] sm:$0xff]
        %v4757 = vld [vmem:[%s5 + $0xfb8] sm:$0xff]
        %v4758 = vld [vmem:[%s5 + $0xfc0] sm:$0xff]
        %v4759 = vld [vmem:[%s5 + $0xfc8] sm:$0xff]
        %v4760 = vld [vmem:[%s5 + $0xfd0] sm:$0xff]
        %v4761 = vld [vmem:[%s5 + $0xfd8] sm:$0xff]
        %v4762 = vld [vmem:[%s5 + $0xfe0] sm:$0xff]
        %v4763 = vld [vmem:[%s5 + $0xfe8] sm:$0xff]
        %v4764 = vld [vmem:[%s5 + $0xff0] sm:$0xff]
        %v4765 = vld [vmem:[%s5 + $0xff8] sm:$0xff]
        %v4766 = vld [vmem:[%s6] sm:$0x3]
        %v4768 = vlaneseq
        %v4769 = vshrl.u32 %v4768, 7
        %v4770 = vsub.s32 0, %v4769
        %v4771 = vrot.slane %v4766, %v4770
        %v4772 = vlaneseq
        %v4773 = vshrl.u32 %v4772, 7
        %v4774 = vsub.s32 1, %v4773
        %v4775 = vrot.slane %v4766, %v4774
        %4778 = vmatprep.subr.mxu0 %v4255
        %4779 = vmatpush1.msra.mxu0 %v4254
        %4780 = vmatprep.subr.mxu0 %v4257
        %4781 = vmatpush1.msra.mxu0 %v4256
        %4782 = vmatprep.subr.mxu0 %v4259
        %4783 = vmatpush1.msra.mxu0 %v4258
        %4784 = vmatprep.subr.mxu0 %v4261
        %4785 = vmatpush1.msra.mxu0 %v4260
        %4786 = vmatprep.subr.mxu0 %v4263
        %4787 = vmatpush1.msra.mxu0 %v4262
        %4788 = vmatprep.subr.mxu0 %v4265
        %4789 = vmatpush1.msra.mxu0 %v4264
        %4790 = vmatprep.subr.mxu0 %v4267
        %4791 = vmatpush1.msra.mxu0 %v4266
        %4792 = vmatprep.subr.mxu0 %v4269
        %4793 = vmatpush1.msra.mxu0 %v4268
        %4794 = vmatprep.subr.mxu0 %v4271
        %4795 = vmatpush1.msra.mxu0 %v4270
        %4796 = vmatprep.subr.mxu0 %v4273
        %4797 = vmatpush1.msra.mxu0 %v4272
        %4798 = vmatprep.subr.mxu0 %v4275
        %4799 = vmatpush1.msra.mxu0 %v4274
        %4800 = vmatprep.subr.mxu0 %v4277
        %4801 = vmatpush1.msra.mxu0 %v4276
        %4802 = vmatprep.subr.mxu0 %v4279
        %4803 = vmatpush1.msra.mxu0 %v4278
        %4804 = vmatprep.subr.mxu0 %v4281
        %4805 = vmatpush1.msra.mxu0 %v4280
        %4806 = vmatprep.subr.mxu0 %v4283
        %4807 = vmatpush1.msra.mxu0 %v4282
        %4808 = vmatprep.subr.mxu0 %v4285
        %4809 = vmatpush1.msra.mxu0 %v4284
        %4810 = vmatprep.subr.mxu0 %v4287
        %4811 = vmatpush1.msra.mxu0 %v4286
        %4812 = vmatprep.subr.mxu0 %v4289
        %4813 = vmatpush1.msra.mxu0 %v4288
        %4814 = vmatprep.subr.mxu0 %v4291
        %4815 = vmatpush1.msra.mxu0 %v4290
        %4816 = vmatprep.subr.mxu0 %v4293
        %4817 = vmatpush1.msra.mxu0 %v4292
        %4818 = vmatprep.subr.mxu0 %v4295
        %4819 = vmatpush1.msra.mxu0 %v4294
        %4820 = vmatprep.subr.mxu0 %v4297
        %4821 = vmatpush1.msra.mxu0 %v4296
        %4822 = vmatprep.subr.mxu0 %v4299
        %4823 = vmatpush1.msra.mxu0 %v4298
        %4824 = vmatprep.subr.mxu0 %v4301
        %4825 = vmatpush1.msra.mxu0 %v4300
        %4826 = vmatprep.subr.mxu0 %v4303
        %4827 = vmatpush1.msra.mxu0 %v4302
        %4828 = vmatprep.subr.mxu0 %v4305
        %4829 = vmatpush1.msra.mxu0 %v4304
        %4830 = vmatprep.subr.mxu0 %v4307
        %4831 = vmatpush1.msra.mxu0 %v4306
        %4832 = vmatprep.subr.mxu0 %v4309
        %4833 = vmatpush1.msra.mxu0 %v4308
        %4834 = vmatprep.subr.mxu0 %v4311
        %4835 = vmatpush1.msra.mxu0 %v4310
        %4836 = vmatprep.subr.mxu0 %v4313
        %4837 = vmatpush1.msra.mxu0 %v4312
        %4838 = vmatprep.subr.mxu0 %v4315
        %4839 = vmatpush1.msra.mxu0 %v4314
        %4840 = vmatprep.subr.mxu0 %v4317
        %4841 = vmatpush1.msra.mxu0 %v4316
        %4842 = vmatprep.mubr.f32.mxu0 %v4223
        %4843 = vmatmul.mubr.f32.gmra.mrb[0].mxu0 %v4222
        %v4844 = vpop.f32.mrb[0].mxu0
        %v4845 = vadd.f32 %v4771, %v4844
        %v4846 = vpop.f32.mrb[0].mxu0
        %v4847 = vadd.f32 %v4775, %v4846
        %4848 = vmatprep.mubr.f32.mxu0 %v4239
        %4849 = vmatmul.mubr.f32.gmra.mrb[0].mxu0 %v4238
        %v4850 = vpop.f32.mrb[0].mxu0
        %v4851 = vadd.f32 %v4771, %v4850
        %v4852 = vpop.f32.mrb[0].mxu0
        %v4853 = vadd.f32 %v4775, %v4852
        %4854 = vdwg.mxu0
        %4855 = vmatprep.subr.mxu0 %v4319
        %4856 = vmatpush1.msra.mxu0 %v4318
        %4857 = vmatprep.subr.mxu0 %v4321
        %4858 = vmatpush1.msra.mxu0 %v4320
        %4859 = vmatprep.subr.mxu0 %v4323
        %4860 = vmatpush1.msra.mxu0 %v4322
        %4861 = vmatprep.subr.mxu0 %v4325
        %4862 = vmatpush1.msra.mxu0 %v4324
        %4863 = vmatprep.subr.mxu0 %v4327
        %4864 = vmatpush1.msra.mxu0 %v4326
        %4865 = vmatprep.subr.mxu0 %v4329
        %4866 = vmatpush1.msra.mxu0 %v4328
        %4867 = vmatprep.subr.mxu0 %v4331
        %4868 = vmatpush1.msra.mxu0 %v4330
        %4869 = vmatprep.subr.mxu0 %v4333
        %4870 = vmatpush1.msra.mxu0 %v4332
        %4871 = vmatprep.subr.mxu0 %v4335
        %4872 = vmatpush1.msra.mxu0 %v4334
        %4873 = vmatprep.subr.mxu0 %v4337
        %4874 = vmatpush1.msra.mxu0 %v4336
        %4875 = vmatprep.subr.mxu0 %v4339
        %4876 = vmatpush1.msra.mxu0 %v4338
        %4877 = vmatprep.subr.mxu0 %v4341
        %4878 = vmatpush1.msra.mxu0 %v4340
        %4879 = vmatprep.subr.mxu0 %v4343
        %4880 = vmatpush1.msra.mxu0 %v4342
        %4881 = vmatprep.subr.mxu0 %v4345
        %4882 = vmatpush1.msra.mxu0 %v4344
        %4883 = vmatprep.subr.mxu0 %v4347
        %4884 = vmatpush1.msra.mxu0 %v4346
        %4885 = vmatprep.subr.mxu0 %v4349
        %4886 = vmatpush1.msra.mxu0 %v4348
        %4887 = vmatprep.subr.mxu0 %v4351
        %4888 = vmatpush1.msra.mxu0 %v4350
        %4889 = vmatprep.subr.mxu0 %v4353
        %4890 = vmatpush1.msra.mxu0 %v4352
        %4891 = vmatprep.subr.mxu0 %v4355
        %4892 = vmatpush1.msra.mxu0 %v4354
        %4893 = vmatprep.subr.mxu0 %v4357
        %4894 = vmatpush1.msra.mxu0 %v4356
        %4895 = vmatprep.subr.mxu0 %v4359
        %4896 = vmatpush1.msra.mxu0 %v4358
        %4897 = vmatprep.subr.mxu0 %v4361
        %4898 = vmatpush1.msra.mxu0 %v4360
        %4899 = vmatprep.subr.mxu0 %v4363
        %4900 = vmatpush1.msra.mxu0 %v4362
        %4901 = vmatprep.subr.mxu0 %v4365
        %4902 = vmatpush1.msra.mxu0 %v4364
        %4903 = vmatprep.subr.mxu0 %v4367
        %4904 = vmatpush1.msra.mxu0 %v4366
        %4905 = vmatprep.subr.mxu0 %v4369
        %4906 = vmatpush1.msra.mxu0 %v4368
        %4907 = vmatprep.subr.mxu0 %v4371
        %4908 = vmatpush1.msra.mxu0 %v4370
        %4909 = vmatprep.subr.mxu0 %v4373
        %4910 = vmatpush1.msra.mxu0 %v4372
        %4911 = vmatprep.subr.mxu0 %v4375
        %4912 = vmatpush1.msra.mxu0 %v4374
        %4913 = vmatprep.subr.mxu0 %v4377
        %4914 = vmatpush1.msra.mxu0 %v4376
        %4915 = vmatprep.subr.mxu0 %v4379
        %4916 = vmatpush1.msra.mxu0 %v4378
        %4917 = vmatprep.subr.mxu0 %v4381
        %4918 = vmatpush1.msra.mxu0 %v4380
        %4919 = vmatprep.mubr.f32.mxu0 %v4225
        %4920 = vmatmul.mubr.f32.gmra.mrb[0].mxu0 %v4224
        %v4921 = vpop.f32.mrb[0].mxu0
        %v4922 = vadd.f32 %v4845, %v4921
        %v4923 = vpop.f32.mrb[0].mxu0
        %v4924 = vadd.f32 %v4847, %v4923
        %4925 = vmatprep.mubr.f32.mxu0 %v4241
        %4926 = vmatmul.mubr.f32.gmra.mrb[0].mxu0 %v4240
        %v4927 = vpop.f32.mrb[0].mxu0
        %v4928 = vadd.f32 %v4851, %v4927
        %v4929 = vpop.f32.mrb[0].mxu0
        %v4930 = vadd.f32 %v4853, %v4929
        %4931 = vdwg.mxu0
        %4932 = vmatprep.subr.mxu0 %v4383
        %4933 = vmatpush1.msra.mxu0 %v4382
        %4934 = vmatprep.subr.mxu0 %v4385
        %4935 = vmatpush1.msra.mxu0 %v4384
        %4936 = vmatprep.subr.mxu0 %v4387
        %4937 = vmatpush1.msra.mxu0 %v4386
        %4938 = vmatprep.subr.mxu0 %v4389
        %4939 = vmatpush1.msra.mxu0 %v4388
        %4940 = vmatprep.subr.mxu0 %v4391
        %4941 = vmatpush1.msra.mxu0 %v4390
        %4942 = vmatprep.subr.mxu0 %v4393
        %4943 = vmatpush1.msra.mxu0 %v4392
        %4944 = vmatprep.subr.mxu0 %v4395
        %4945 = vmatpush1.msra.mxu0 %v4394
        %4946 = vmatprep.subr.mxu0 %v4397
        %4947 = vmatpush1.msra.mxu0 %v4396
        %4948 = vmatprep.subr.mxu0 %v4399
        %4949 = vmatpush1.msra.mxu0 %v4398
        %4950 = vmatprep.subr.mxu0 %v4401
        %4951 = vmatpush1.msra.mxu0 %v4400
        %4952 = vmatprep.subr.mxu0 %v4403
        %4953 = vmatpush1.msra.mxu0 %v4402
        %4954 = vmatprep.subr.mxu0 %v4405
        %4955 = vmatpush1.msra.mxu0 %v4404
        %4956 = vmatprep.subr.mxu0 %v4407
        %4957 = vmatpush1.msra.mxu0 %v4406
        %4958 = vmatprep.subr.mxu0 %v4409
        %4959 = vmatpush1.msra.mxu0 %v4408
        %4960 = vmatprep.subr.mxu0 %v4411
        %4961 = vmatpush1.msra.mxu0 %v4410
        %4962 = vmatprep.subr.mxu0 %v4413
        %4963 = vmatpush1.msra.mxu0 %v4412
        %4964 = vmatprep.subr.mxu0 %v4415
        %4965 = vmatpush1.msra.mxu0 %v4414
        %4966 = vmatprep.subr.mxu0 %v4417
        %4967 = vmatpush1.msra.mxu0 %v4416
        %4968 = vmatprep.subr.mxu0 %v4419
        %4969 = vmatpush1.msra.mxu0 %v4418
        %4970 = vmatprep.subr.mxu0 %v4421
        %4971 = vmatpush1.msra.mxu0 %v4420
        %4972 = vmatprep.subr.mxu0 %v4423
        %4973 = vmatpush1.msra.mxu0 %v4422
        %4974 = vmatprep.subr.mxu0 %v4425
        %4975 = vmatpush1.msra.mxu0 %v4424
        %4976 = vmatprep.subr.mxu0 %v4427
        %4977 = vmatpush1.msra.mxu0 %v4426
        %4978 = vmatprep.subr.mxu0 %v4429
        %4979 = vmatpush1.msra.mxu0 %v4428
        %4980 = vmatprep.subr.mxu0 %v4431
        %4981 = vmatpush1.msra.mxu0 %v4430
        %4982 = vmatprep.subr.mxu0 %v4433
        %4983 = vmatpush1.msra.mxu0 %v4432
        %4984 = vmatprep.subr.mxu0 %v4435
        %4985 = vmatpush1.msra.mxu0 %v4434
        %4986 = vmatprep.subr.mxu0 %v4437
        %4987 = vmatpush1.msra.mxu0 %v4436
        %4988 = vmatprep.subr.mxu0 %v4439
        %4989 = vmatpush1.msra.mxu0 %v4438
        %4990 = vmatprep.subr.mxu0 %v4441
        %4991 = vmatpush1.msra.mxu0 %v4440
        %4992 = vmatprep.subr.mxu0 %v4443
        %4993 = vmatpush1.msra.mxu0 %v4442
        %4994 = vmatprep.subr.mxu0 %v4445
        %4995 = vmatpush1.msra.mxu0 %v4444
        %4996 = vmatprep.mubr.f32.mxu0 %v4227
        %4997 = vmatmul.mubr.f32.gmra.mrb[0].mxu0 %v4226
        %v4998 = vpop.f32.mrb[0].mxu0
        %v4999 = vadd.f32 %v4922, %v4998
        %v5000 = vpop.f32.mrb[0].mxu0
        %v5001 = vadd.f32 %v4924, %v5000
        %5002 = vmatprep.mubr.f32.mxu0 %v4243
        %5003 = vmatmul.mubr.f32.gmra.mrb[0].mxu0 %v4242
        %v5004 = vpop.f32.mrb[0].mxu0
        %v5005 = vadd.f32 %v4928, %v5004
        %v5006 = vpop.f32.mrb[0].mxu0
        %v5007 = vadd.f32 %v4930, %v5006
        %5008 = vdwg.mxu0
        %5009 = vmatprep.subr.mxu0 %v4447
        %5010 = vmatpush1.msra.mxu0 %v4446
        %5011 = vmatprep.subr.mxu0 %v4449
        %5012 = vmatpush1.msra.mxu0 %v4448
        %5013 = vmatprep.subr.mxu0 %v4451
        %5014 = vmatpush1.msra.mxu0 %v4450
        %5015 = vmatprep.subr.mxu0 %v4453
        %5016 = vmatpush1.msra.mxu0 %v4452
        %5017 = vmatprep.subr.mxu0 %v4455
        %5018 = vmatpush1.msra.mxu0 %v4454
        %5019 = vmatprep.subr.mxu0 %v4457
        %5020 = vmatpush1.msra.mxu0 %v4456
        %5021 = vmatprep.subr.mxu0 %v4459
        %5022 = vmatpush1.msra.mxu0 %v4458
        %5023 = vmatprep.subr.mxu0 %v4461
        %5024 = vmatpush1.msra.mxu0 %v4460
        %5025 = vmatprep.subr.mxu0 %v4463
        %5026 = vmatpush1.msra.mxu0 %v4462
        %5027 = vmatprep.subr.mxu0 %v4465
        %5028 = vmatpush1.msra.mxu0 %v4464
        %5029 = vmatprep.subr.mxu0 %v4467
        %5030 = vmatpush1.msra.mxu0 %v4466
        %5031 = vmatprep.subr.mxu0 %v4469
        %5032 = vmatpush1.msra.mxu0 %v4468
        %5033 = vmatprep.subr.mxu0 %v4471
        %5034 = vmatpush1.msra.mxu0 %v4470
        %5035 = vmatprep.subr.mxu0 %v4473
        %5036 = vmatpush1.msra.mxu0 %v4472
        %5037 = vmatprep.subr.mxu0 %v4475
        %5038 = vmatpush1.msra.mxu0 %v4474
        %5039 = vmatprep.subr.mxu0 %v4477
        %5040 = vmatpush1.msra.mxu0 %v4476
        %5041 = vmatprep.subr.mxu0 %v4479
        %5042 = vmatpush1.msra.mxu0 %v4478
        %5043 = vmatprep.subr.mxu0 %v4481
        %5044 = vmatpush1.msra.mxu0 %v4480
        %5045 = vmatprep.subr.mxu0 %v4483
        %5046 = vmatpush1.msra.mxu0 %v4482
        %5047 = vmatprep.subr.mxu0 %v4485
        %5048 = vmatpush1.msra.mxu0 %v4484
        %5049 = vmatprep.subr.mxu0 %v4487
        %5050 = vmatpush1.msra.mxu0 %v4486
        %5051 = vmatprep.subr.mxu0 %v4489
        %5052 = vmatpush1.msra.mxu0 %v4488
        %5053 = vmatprep.subr.mxu0 %v4491
        %5054 = vmatpush1.msra.mxu0 %v4490
        %5055 = vmatprep.subr.mxu0 %v4493
        %5056 = vmatpush1.msra.mxu0 %v4492
        %5057 = vmatprep.subr.mxu0 %v4495
        %5058 = vmatpush1.msra.mxu0 %v4494
        %5059 = vmatprep.subr.mxu0 %v4497
        %5060 = vmatpush1.msra.mxu0 %v4496
        %5061 = vmatprep.subr.mxu0 %v4499
        %5062 = vmatpush1.msra.mxu0 %v4498
        %5063 = vmatprep.subr.mxu0 %v4501
        %5064 = vmatpush1.msra.mxu0 %v4500
        %5065 = vmatprep.subr.mxu0 %v4503
        %5066 = vmatpush1.msra.mxu0 %v4502
        %5067 = vmatprep.subr.mxu0 %v4505
        %5068 = vmatpush1.msra.mxu0 %v4504
        %5069 = vmatprep.subr.mxu0 %v4507
        %5070 = vmatpush1.msra.mxu0 %v4506
        %5071 = vmatprep.subr.mxu0 %v4509
        %5072 = vmatpush1.msra.mxu0 %v4508
        %5073 = vmatprep.mubr.f32.mxu0 %v4229
        %5074 = vmatmul.mubr.f32.gmra.mrb[0].mxu0 %v4228
        %v5075 = vpop.f32.mrb[0].mxu0
        %v5076 = vadd.f32 %v4999, %v5075
        %v5077 = vpop.f32.mrb[0].mxu0
        %v5078 = vadd.f32 %v5001, %v5077
        %5079 = vmatprep.mubr.f32.mxu0 %v4245
        %5080 = vmatmul.mubr.f32.gmra.mrb[0].mxu0 %v4244
        %v5081 = vpop.f32.mrb[0].mxu0
        %v5082 = vadd.f32 %v5005, %v5081
        %v5083 = vpop.f32.mrb[0].mxu0
        %v5084 = vadd.f32 %v5007, %v5083
        %5085 = vdwg.mxu0
        %5086 = vmatprep.subr.mxu0 %v4511
        %5087 = vmatpush1.msra.mxu0 %v4510
        %5088 = vmatprep.subr.mxu0 %v4513
        %5089 = vmatpush1.msra.mxu0 %v4512
        %5090 = vmatprep.subr.mxu0 %v4515
        %5091 = vmatpush1.msra.mxu0 %v4514
        %5092 = vmatprep.subr.mxu0 %v4517
        %5093 = vmatpush1.msra.mxu0 %v4516
        %5094 = vmatprep.subr.mxu0 %v4519
        %5095 = vmatpush1.msra.mxu0 %v4518
        %5096 = vmatprep.subr.mxu0 %v4521
        %5097 = vmatpush1.msra.mxu0 %v4520
        %5098 = vmatprep.subr.mxu0 %v4523
        %5099 = vmatpush1.msra.mxu0 %v4522
        %5100 = vmatprep.subr.mxu0 %v4525
        %5101 = vmatpush1.msra.mxu0 %v4524
        %5102 = vmatprep.subr.mxu0 %v4527
        %5103 = vmatpush1.msra.mxu0 %v4526
        %5104 = vmatprep.subr.mxu0 %v4529
        %5105 = vmatpush1.msra.mxu0 %v4528
        %5106 = vmatprep.subr.mxu0 %v4531
        %5107 = vmatpush1.msra.mxu0 %v4530
        %5108 = vmatprep.subr.mxu0 %v4533
        %5109 = vmatpush1.msra.mxu0 %v4532
        %5110 = vmatprep.subr.mxu0 %v4535
        %5111 = vmatpush1.msra.mxu0 %v4534
        %5112 = vmatprep.subr.mxu0 %v4537
        %5113 = vmatpush1.msra.mxu0 %v4536
        %5114 = vmatprep.subr.mxu0 %v4539
        %5115 = vmatpush1.msra.mxu0 %v4538
        %5116 = vmatprep.subr.mxu0 %v4541
        %5117 = vmatpush1.msra.mxu0 %v4540
        %5118 = vmatprep.subr.mxu0 %v4543
        %5119 = vmatpush1.msra.mxu0 %v4542
        %5120 = vmatprep.subr.mxu0 %v4545
        %5121 = vmatpush1.msra.mxu0 %v4544
        %5122 = vmatprep.subr.mxu0 %v4547
        %5123 = vmatpush1.msra.mxu0 %v4546
        %5124 = vmatprep.subr.mxu0 %v4549
        %5125 = vmatpush1.msra.mxu0 %v4548
        %5126 = vmatprep.subr.mxu0 %v4551
        %5127 = vmatpush1.msra.mxu0 %v4550
        %5128 = vmatprep.subr.mxu0 %v4553
        %5129 = vmatpush1.msra.mxu0 %v4552
        %5130 = vmatprep.subr.mxu0 %v4555
        %5131 = vmatpush1.msra.mxu0 %v4554
        %5132 = vmatprep.subr.mxu0 %v4557
        %5133 = vmatpush1.msra.mxu0 %v4556
        %5134 = vmatprep.subr.mxu0 %v4559
        %5135 = vmatpush1.msra.mxu0 %v4558
        %5136 = vmatprep.subr.mxu0 %v4561
        %5137 = vmatpush1.msra.mxu0 %v4560
        %5138 = vmatprep.subr.mxu0 %v4563
        %5139 = vmatpush1.msra.mxu0 %v4562
        %5140 = vmatprep.subr.mxu0 %v4565
        %5141 = vmatpush1.msra.mxu0 %v4564
        %5142 = vmatprep.subr.mxu0 %v4567
        %5143 = vmatpush1.msra.mxu0 %v4566
        %5144 = vmatprep.subr.mxu0 %v4569
        %5145 = vmatpush1.msra.mxu0 %v4568
        %5146 = vmatprep.subr.mxu0 %v4571
        %5147 = vmatpush1.msra.mxu0 %v4570
        %5148 = vmatprep.subr.mxu0 %v4573
        %5149 = vmatpush1.msra.mxu0 %v4572
        %5150 = vmatprep.mubr.f32.mxu0 %v4231
        %5151 = vmatmul.mubr.f32.gmra.mrb[0].mxu0 %v4230
        %v5152 = vpop.f32.mrb[0].mxu0
        %v5153 = vadd.f32 %v5076, %v5152
        %v5154 = vpop.f32.mrb[0].mxu0
        %v5155 = vadd.f32 %v5078, %v5154
        %5156 = vmatprep.mubr.f32.mxu0 %v4247
        %5157 = vmatmul.mubr.f32.gmra.mrb[0].mxu0 %v4246
        %v5158 = vpop.f32.mrb[0].mxu0
        %v5159 = vadd.f32 %v5082, %v5158
        %v5160 = vpop.f32.mrb[0].mxu0
        %v5161 = vadd.f32 %v5084, %v5160
        %5162 = vdwg.mxu0
        %5163 = vmatprep.subr.mxu0 %v4575
        %5164 = vmatpush1.msra.mxu0 %v4574
        %5165 = vmatprep.subr.mxu0 %v4577
        %5166 = vmatpush1.msra.mxu0 %v4576
        %5167 = vmatprep.subr.mxu0 %v4579
        %5168 = vmatpush1.msra.mxu0 %v4578
        %5169 = vmatprep.subr.mxu0 %v4581
        %5170 = vmatpush1.msra.mxu0 %v4580
        %5171 = vmatprep.subr.mxu0 %v4583
        %5172 = vmatpush1.msra.mxu0 %v4582
        %5173 = vmatprep.subr.mxu0 %v4585
        %5174 = vmatpush1.msra.mxu0 %v4584
        %5175 = vmatprep.subr.mxu0 %v4587
        %5176 = vmatpush1.msra.mxu0 %v4586
        %5177 = vmatprep.subr.mxu0 %v4589
        %5178 = vmatpush1.msra.mxu0 %v4588
        %5179 = vmatprep.subr.mxu0 %v4591
        %5180 = vmatpush1.msra.mxu0 %v4590
        %5181 = vmatprep.subr.mxu0 %v4593
        %5182 = vmatpush1.msra.mxu0 %v4592
        %5183 = vmatprep.subr.mxu0 %v4595
        %5184 = vmatpush1.msra.mxu0 %v4594
        %5185 = vmatprep.subr.mxu0 %v4597
        %5186 = vmatpush1.msra.mxu0 %v4596
        %5187 = vmatprep.subr.mxu0 %v4599
        %5188 = vmatpush1.msra.mxu0 %v4598
        %5189 = vmatprep.subr.mxu0 %v4601
        %5190 = vmatpush1.msra.mxu0 %v4600
        %5191 = vmatprep.subr.mxu0 %v4603
        %5192 = vmatpush1.msra.mxu0 %v4602
        %5193 = vmatprep.subr.mxu0 %v4605
        %5194 = vmatpush1.msra.mxu0 %v4604
        %5195 = vmatprep.subr.mxu0 %v4607
        %5196 = vmatpush1.msra.mxu0 %v4606
        %5197 = vmatprep.subr.mxu0 %v4609
        %5198 = vmatpush1.msra.mxu0 %v4608
        %5199 = vmatprep.subr.mxu0 %v4611
        %5200 = vmatpush1.msra.mxu0 %v4610
        %5201 = vmatprep.subr.mxu0 %v4613
        %5202 = vmatpush1.msra.mxu0 %v4612
        %5203 = vmatprep.subr.mxu0 %v4615
        %5204 = vmatpush1.msra.mxu0 %v4614
        %5205 = vmatprep.subr.mxu0 %v4617
        %5206 = vmatpush1.msra.mxu0 %v4616
        %5207 = vmatprep.subr.mxu0 %v4619
        %5208 = vmatpush1.msra.mxu0 %v4618
        %5209 = vmatprep.subr.mxu0 %v4621
        %5210 = vmatpush1.msra.mxu0 %v4620
        %5211 = vmatprep.subr.mxu0 %v4623
        %5212 = vmatpush1.msra.mxu0 %v4622
        %5213 = vmatprep.subr.mxu0 %v4625
        %5214 = vmatpush1.msra.mxu0 %v4624
        %5215 = vmatprep.subr.mxu0 %v4627
        %5216 = vmatpush1.msra.mxu0 %v4626
        %5217 = vmatprep.subr.mxu0 %v4629
        %5218 = vmatpush1.msra.mxu0 %v4628
        %5219 = vmatprep.subr.mxu0 %v4631
        %5220 = vmatpush1.msra.mxu0 %v4630
        %5221 = vmatprep.subr.mxu0 %v4633
        %5222 = vmatpush1.msra.mxu0 %v4632
        %5223 = vmatprep.subr.mxu0 %v4635
        %5224 = vmatpush1.msra.mxu0 %v4634
        %5225 = vmatprep.subr.mxu0 %v4637
        %5226 = vmatpush1.msra.mxu0 %v4636
        %5227 = vmatprep.mubr.f32.mxu0 %v4233
        %5228 = vmatmul.mubr.f32.gmra.mrb[0].mxu0 %v4232
        %v5229 = vpop.f32.mrb[0].mxu0
        %v5230 = vadd.f32 %v5153, %v5229
        %v5231 = vpop.f32.mrb[0].mxu0
        %v5232 = vadd.f32 %v5155, %v5231
        %5233 = vmatprep.mubr.f32.mxu0 %v4249
        %5234 = vmatmul.mubr.f32.gmra.mrb[0].mxu0 %v4248
        %v5235 = vpop.f32.mrb[0].mxu0
        %v5236 = vadd.f32 %v5159, %v5235
        %v5237 = vpop.f32.mrb[0].mxu0
        %v5238 = vadd.f32 %v5161, %v5237
        %5239 = vdwg.mxu0
        %5240 = vmatprep.subr.mxu0 %v4639
        %5241 = vmatpush1.msra.mxu0 %v4638
        %5242 = vmatprep.subr.mxu0 %v4641
        %5243 = vmatpush1.msra.mxu0 %v4640
        %5244 = vmatprep.subr.mxu0 %v4643
        %5245 = vmatpush1.msra.mxu0 %v4642
        %5246 = vmatprep.subr.mxu0 %v4645
        %5247 = vmatpush1.msra.mxu0 %v4644
        %5248 = vmatprep.subr.mxu0 %v4647
        %5249 = vmatpush1.msra.mxu0 %v4646
        %5250 = vmatprep.subr.mxu0 %v4649
        %5251 = vmatpush1.msra.mxu0 %v4648
        %5252 = vmatprep.subr.mxu0 %v4651
        %5253 = vmatpush1.msra.mxu0 %v4650
        %5254 = vmatprep.subr.mxu0 %v4653
        %5255 = vmatpush1.msra.mxu0 %v4652
        %5256 = vmatprep.subr.mxu0 %v4655
        %5257 = vmatpush1.msra.mxu0 %v4654
        %5258 = vmatprep.subr.mxu0 %v4657
        %5259 = vmatpush1.msra.mxu0 %v4656
        %5260 = vmatprep.subr.mxu0 %v4659
        %5261 = vmatpush1.msra.mxu0 %v4658
        %5262 = vmatprep.subr.mxu0 %v4661
        %5263 = vmatpush1.msra.mxu0 %v4660
        %5264 = vmatprep.subr.mxu0 %v4663
        %5265 = vmatpush1.msra.mxu0 %v4662
        %5266 = vmatprep.subr.mxu0 %v4665
        %5267 = vmatpush1.msra.mxu0 %v4664
        %5268 = vmatprep.subr.mxu0 %v4667
        %5269 = vmatpush1.msra.mxu0 %v4666
        %5270 = vmatprep.subr.mxu0 %v4669
        %5271 = vmatpush1.msra.mxu0 %v4668
        %5272 = vmatprep.subr.mxu0 %v4671
        %5273 = vmatpush1.msra.mxu0 %v4670
        %5274 = vmatprep.subr.mxu0 %v4673
        %5275 = vmatpush1.msra.mxu0 %v4672
        %5276 = vmatprep.subr.mxu0 %v4675
        %5277 = vmatpush1.msra.mxu0 %v4674
        %5278 = vmatprep.subr.mxu0 %v4677
        %5279 = vmatpush1.msra.mxu0 %v4676
        %5280 = vmatprep.subr.mxu0 %v4679
        %5281 = vmatpush1.msra.mxu0 %v4678
        %5282 = vmatprep.subr.mxu0 %v4681
        %5283 = vmatpush1.msra.mxu0 %v4680
        %5284 = vmatprep.subr.mxu0 %v4683
        %5285 = vmatpush1.msra.mxu0 %v4682
        %5286 = vmatprep.subr.mxu0 %v4685
        %5287 = vmatpush1.msra.mxu0 %v4684
        %5288 = vmatprep.subr.mxu0 %v4687
        %5289 = vmatpush1.msra.mxu0 %v4686
        %5290 = vmatprep.subr.mxu0 %v4689
        %5291 = vmatpush1.msra.mxu0 %v4688
        %5292 = vmatprep.subr.mxu0 %v4691
        %5293 = vmatpush1.msra.mxu0 %v4690
        %5294 = vmatprep.subr.mxu0 %v4693
        %5295 = vmatpush1.msra.mxu0 %v4692
        %5296 = vmatprep.subr.mxu0 %v4695
        %5297 = vmatpush1.msra.mxu0 %v4694
        %5298 = vmatprep.subr.mxu0 %v4697
        %5299 = vmatpush1.msra.mxu0 %v4696
        %5300 = vmatprep.subr.mxu0 %v4699
        %5301 = vmatpush1.msra.mxu0 %v4698
        %5302 = vmatprep.subr.mxu0 %v4701
        %5303 = vmatpush1.msra.mxu0 %v4700
        %5304 = vmatprep.mubr.f32.mxu0 %v4235
        %5305 = vmatmul.mubr.f32.gmra.mrb[0].mxu0 %v4234
        %v5306 = vpop.f32.mrb[0].mxu0
        %v5307 = vadd.f32 %v5230, %v5306
        %v5308 = vpop.f32.mrb[0].mxu0
        %v5309 = vadd.f32 %v5232, %v5308
        %5310 = vmatprep.mubr.f32.mxu0 %v4251
        %5311 = vmatmul.mubr.f32.gmra.mrb[0].mxu0 %v4250
        %v5312 = vpop.f32.mrb[0].mxu0
        %v5313 = vadd.f32 %v5236, %v5312
        %v5314 = vpop.f32.mrb[0].mxu0
        %v5315 = vadd.f32 %v5238, %v5314
        %5316 = vdwg.mxu0
        %5317 = vmatprep.subr.mxu0 %v4703
        %5318 = vmatpush1.msra.mxu0 %v4702
        %5319 = vmatprep.subr.mxu0 %v4705
        %5320 = vmatpush1.msra.mxu0 %v4704
        %5321 = vmatprep.subr.mxu0 %v4707
        %5322 = vmatpush1.msra.mxu0 %v4706
        %5323 = vmatprep.subr.mxu0 %v4709
        %5324 = vmatpush1.msra.mxu0 %v4708
        %5325 = vmatprep.subr.mxu0 %v4711
        %5326 = vmatpush1.msra.mxu0 %v4710
        %5327 = vmatprep.subr.mxu0 %v4713
        %5328 = vmatpush1.msra.mxu0 %v4712
        %5329 = vmatprep.subr.mxu0 %v4715
        %5330 = vmatpush1.msra.mxu0 %v4714
        %5331 = vmatprep.subr.mxu0 %v4717
        %5332 = vmatpush1.msra.mxu0 %v4716
        %5333 = vmatprep.subr.mxu0 %v4719
        %5334 = vmatpush1.msra.mxu0 %v4718
        %5335 = vmatprep.subr.mxu0 %v4721
        %5336 = vmatpush1.msra.mxu0 %v4720
        %5337 = vmatprep.subr.mxu0 %v4723
        %5338 = vmatpush1.msra.mxu0 %v4722
        %5339 = vmatprep.subr.mxu0 %v4725
        %5340 = vmatpush1.msra.mxu0 %v4724
        %5341 = vmatprep.subr.mxu0 %v4727
        %5342 = vmatpush1.msra.mxu0 %v4726
        %5343 = vmatprep.subr.mxu0 %v4729
        %5344 = vmatpush1.msra.mxu0 %v4728
        %5345 = vmatprep.subr.mxu0 %v4731
        %5346 = vmatpush1.msra.mxu0 %v4730
        %5347 = vmatprep.subr.mxu0 %v4733
        %5348 = vmatpush1.msra.mxu0 %v4732
        %5349 = vmatprep.subr.mxu0 %v4735
        %5350 = vmatpush1.msra.mxu0 %v4734
        %5351 = vmatprep.subr.mxu0 %v4737
        %5352 = vmatpush1.msra.mxu0 %v4736
        %5353 = vmatprep.subr.mxu0 %v4739
        %5354 = vmatpush1.msra.mxu0 %v4738
        %5355 = vmatprep.subr.mxu0 %v4741
        %5356 = vmatpush1.msra.mxu0 %v4740
        %5357 = vmatprep.subr.mxu0 %v4743
        %5358 = vmatpush1.msra.mxu0 %v4742
        %5359 = vmatprep.subr.mxu0 %v4745
        %5360 = vmatpush1.msra.mxu0 %v4744
        %5361 = vmatprep.subr.mxu0 %v4747
        %5362 = vmatpush1.msra.mxu0 %v4746
        %5363 = vmatprep.subr.mxu0 %v4749
        %5364 = vmatpush1.msra.mxu0 %v4748
        %5365 = vmatprep.subr.mxu0 %v4751
        %5366 = vmatpush1.msra.mxu0 %v4750
        %5367 = vmatprep.subr.mxu0 %v4753
        %5368 = vmatpush1.msra.mxu0 %v4752
        %5369 = vmatprep.subr.mxu0 %v4755
        %5370 = vmatpush1.msra.mxu0 %v4754
        %5371 = vmatprep.subr.mxu0 %v4757
        %5372 = vmatpush1.msra.mxu0 %v4756
        %5373 = vmatprep.subr.mxu0 %v4759
        %5374 = vmatpush1.msra.mxu0 %v4758
        %5375 = vmatprep.subr.mxu0 %v4761
        %5376 = vmatpush1.msra.mxu0 %v4760
        %5377 = vmatprep.subr.mxu0 %v4763
        %5378 = vmatpush1.msra.mxu0 %v4762
        %5379 = vmatprep.subr.mxu0 %v4765
        %5380 = vmatpush1.msra.mxu0 %v4764
        %5381 = vmatprep.mubr.f32.mxu0 %v4237
        %5382 = vmatmul.mubr.f32.gmra.mrb[0].mxu0 %v4236
        %v5383 = vpop.f32.mrb[0].mxu0
        %v5384 = vadd.f32 %v5307, %v5383
        %v5385 = vpop.f32.mrb[0].mxu0
        %v5386 = vadd.f32 %v5309, %v5385
        %5387 = vmatprep.mubr.f32.mxu0 %v4253
        %5388 = vmatmul.mubr.f32.gmra.mrb[0].mxu0 %v4252
        %v5389 = vpop.f32.mrb[0].mxu0
        %v5390 = vadd.f32 %v5313, %v5389
        %v5391 = vpop.f32.mrb[0].mxu0
        %v5392 = vadd.f32 %v5315, %v5391
        %5393 = vdwg.mxu0
        %v5394 = vmax.f32 %v5384, 0.0
        %v5395 = vmax.f32 %v5386, 0.0
        %v5396 = vmax.f32 %v5390, 0.0
        %v5397 = vmax.f32 %v5392, 0.0
        %v5398 = vld [vmem:[%s7] sm:$0xff]
        %v5399 = vld [vmem:[%s7 + $0x8] sm:$0xff]
        %v5400 = vld [vmem:[%s7 + $0x10] sm:$0xff]
        %v5401 = vld [vmem:[%s7 + $0x18] sm:$0xff]
        %v5402 = vld [vmem:[%s7 + $0x20] sm:$0xff]
        %v5403 = vld [vmem:[%s7 + $0x28] sm:$0xff]
        %v5404 = vld [vmem:[%s7 + $0x30] sm:$0xff]
        %v5405 = vld [vmem:[%s7 + $0x38] sm:$0xff]
        %v5406 = vld [vmem:[%s7 + $0x40] sm:$0xff]
        %v5407 = vld [vmem:[%s7 + $0x48] sm:$0xff]
        %v5408 = vld [vmem:[%s7 + $0x50] sm:$0xff]
        %v5409 = vld [vmem:[%s7 + $0x58] sm:$0xff]
        %v5410 = vld [vmem:[%s7 + $0x60] sm:$0xff]
        %v5411 = vld [vmem:[%s7 + $0x68] sm:$0xff]
        %v5412 = vld [vmem:[%s7 + $0x70] sm:$0xff]
        %v5413 = vld [vmem:[%s7 + $0x78] sm:$0xff]
        %v5414 = vld [vmem:[%s7 + $0x80] sm:$0xff]
        %v5415 = vld [vmem:[%s7 + $0x88] sm:$0xff]
        %v5416 = vld [vmem:[%s7 + $0x90] sm:$0xff]
        %v5417 = vld [vmem:[%s7 + $0x98] sm:$0xff]
        %v5418 = vld [vmem:[%s7 + $0xa0] sm:$0xff]
        %v5419 = vld [vmem:[%s7 + $0xa8] sm:$0xff]
        %v5420 = vld [vmem:[%s7 + $0xb0] sm:$0xff]
        %v5421 = vld [vmem:[%s7 + $0xb8] sm:$0xff]
        %v5422 = vld [vmem:[%s7 + $0xc0] sm:$0xff]
        %v5423 = vld [vmem:[%s7 + $0xc8] sm:$0xff]
        %v5424 = vld [vmem:[%s7 + $0xd0] sm:$0xff]
        %v5425 = vld [vmem:[%s7 + $0xd8] sm:$0xff]
        %v5426 = vld [vmem:[%s7 + $0xe0] sm:$0xff]
        %v5427 = vld [vmem:[%s7 + $0xe8] sm:$0xff]
        %v5428 = vld [vmem:[%s7 + $0xf0] sm:$0xff]
        %v5429 = vld [vmem:[%s7 + $0xf8] sm:$0xff]
        %v5430 = vld [vmem:[%s7 + $0x100] sm:$0xff]
        %v5431 = vld [vmem:[%s7 + $0x108] sm:$0xff]
        %v5432 = vld [vmem:[%s7 + $0x110] sm:$0xff]
        %v5433 = vld [vmem:[%s7 + $0x118] sm:$0xff]
        %v5434 = vld [vmem:[%s7 + $0x120] sm:$0xff]
        %v5435 = vld [vmem:[%s7 + $0x128] sm:$0xff]
        %v5436 = vld [vmem:[%s7 + $0x130] sm:$0xff]
        %v5437 = vld [vmem:[%s7 + $0x138] sm:$0xff]
        %v5438 = vld [vmem:[%s7 + $0x140] sm:$0xff]
        %v5439 = vld [vmem:[%s7 + $0x148] sm:$0xff]
        %v5440 = vld [vmem:[%s7 + $0x150] sm:$0xff]
        %v5441 = vld [vmem:[%s7 + $0x158] sm:$0xff]
        %v5442 = vld [vmem:[%s7 + $0x160] sm:$0xff]
        %v5443 = vld [vmem:[%s7 + $0x168] sm:$0xff]
        %v5444 = vld [vmem:[%s7 + $0x170] sm:$0xff]
        %v5445 = vld [vmem:[%s7 + $0x178] sm:$0xff]
        %v5446 = vld [vmem:[%s7 + $0x180] sm:$0xff]
        %v5447 = vld [vmem:[%s7 + $0x188] sm:$0xff]
        %v5448 = vld [vmem:[%s7 + $0x190] sm:$0xff]
        %v5449 = vld [vmem:[%s7 + $0x198] sm:$0xff]
        %v5450 = vld [vmem:[%s7 + $0x1a0] sm:$0xff]
        %v5451 = vld [vmem:[%s7 + $0x1a8] sm:$0xff]
        %v5452 = vld [vmem:[%s7 + $0x1b0] sm:$0xff]
        %v5453 = vld [vmem:[%s7 + $0x1b8] sm:$0xff]
        %v5454 = vld [vmem:[%s7 + $0x1c0] sm:$0xff]
        %v5455 = vld [vmem:[%s7 + $0x1c8] sm:$0xff]
        %v5456 = vld [vmem:[%s7 + $0x1d0] sm:$0xff]
        %v5457 = vld [vmem:[%s7 + $0x1d8] sm:$0xff]
        %v5458 = vld [vmem:[%s7 + $0x1e0] sm:$0xff]
        %v5459 = vld [vmem:[%s7 + $0x1e8] sm:$0xff]
        %v5460 = vld [vmem:[%s7 + $0x1f0] sm:$0xff]
        %v5461 = vld [vmem:[%s7 + $0x1f8] sm:$0xff]
        %v5462 = vld [vmem:[%s7 + $0x200] sm:$0xff]
        %v5463 = vld [vmem:[%s7 + $0x208] sm:$0xff]
        %v5464 = vld [vmem:[%s7 + $0x210] sm:$0xff]
        %v5465 = vld [vmem:[%s7 + $0x218] sm:$0xff]
        %v5466 = vld [vmem:[%s7 + $0x220] sm:$0xff]
        %v5467 = vld [vmem:[%s7 + $0x228] sm:$0xff]
        %v5468 = vld [vmem:[%s7 + $0x230] sm:$0xff]
        %v5469 = vld [vmem:[%s7 + $0x238] sm:$0xff]
        %v5470 = vld [vmem:[%s7 + $0x240] sm:$0xff]
        %v5471 = vld [vmem:[%s7 + $0x248] sm:$0xff]
        %v5472 = vld [vmem:[%s7 + $0x250] sm:$0xff]
        %v5473 = vld [vmem:[%s7 + $0x258] sm:$0xff]
        %v5474 = vld [vmem:[%s7 + $0x260] sm:$0xff]
        %v5475 = vld [vmem:[%s7 + $0x268] sm:$0xff]
        %v5476 = vld [vmem:[%s7 + $0x270] sm:$0xff]
        %v5477 = vld [vmem:[%s7 + $0x278] sm:$0xff]
        %v5478 = vld [vmem:[%s7 + $0x280] sm:$0xff]
        %v5479 = vld [vmem:[%s7 + $0x288] sm:$0xff]
        %v5480 = vld [vmem:[%s7 + $0x290] sm:$0xff]
        %v5481 = vld [vmem:[%s7 + $0x298] sm:$0xff]
        %v5482 = vld [vmem:[%s7 + $0x2a0] sm:$0xff]
        %v5483 = vld [vmem:[%s7 + $0x2a8] sm:$0xff]
        %v5484 = vld [vmem:[%s7 + $0x2b0] sm:$0xff]
        %v5485 = vld [vmem:[%s7 + $0x2b8] sm:$0xff]
        %v5486 = vld [vmem:[%s7 + $0x2c0] sm:$0xff]
        %v5487 = vld [vmem:[%s7 + $0x2c8] sm:$0xff]
        %v5488 = vld [vmem:[%s7 + $0x2d0] sm:$0xff]
        %v5489 = vld [vmem:[%s7 + $0x2d8] sm:$0xff]
        %v5490 = vld [vmem:[%s7 + $0x2e0] sm:$0xff]
        %v5491 = vld [vmem:[%s7 + $0x2e8] sm:$0xff]
        %v5492 = vld [vmem:[%s7 + $0x2f0] sm:$0xff]
        %v5493 = vld [vmem:[%s7 + $0x2f8] sm:$0xff]
        %v5494 = vld [vmem:[%s7 + $0x300] sm:$0xff]
        %v5495 = vld [vmem:[%s7 + $0x308] sm:$0xff]
        %v5496 = vld [vmem:[%s7 + $0x310] sm:$0xff]
        %v5497 = vld [vmem:[%s7 + $0x318] sm:$0xff]
        %v5498 = vld [vmem:[%s7 + $0x320] sm:$0xff]
        %v5499 = vld [vmem:[%s7 + $0x328] sm:$0xff]
        %v5500 = vld [vmem:[%s7 + $0x330] sm:$0xff]
        %v5501 = vld [vmem:[%s7 + $0x338] sm:$0xff]
        %v5502 = vld [vmem:[%s7 + $0x340] sm:$0xff]
        %v5503 = vld [vmem:[%s7 + $0x348] sm:$0xff]
        %v5504 = vld [vmem:[%s7 + $0x350] sm:$0xff]
        %v5505 = vld [vmem:[%s7 + $0x358] sm:$0xff]
        %v5506 = vld [vmem:[%s7 + $0x360] sm:$0xff]
        %v5507 = vld [vmem:[%s7 + $0x368] sm:$0xff]
        %v5508 = vld [vmem:[%s7 + $0x370] sm:$0xff]
        %v5509 = vld [vmem:[%s7 + $0x378] sm:$0xff]
        %v5510 = vld [vmem:[%s7 + $0x380] sm:$0xff]
        %v5511 = vld [vmem:[%s7 + $0x388] sm:$0xff]
        %v5512 = vld [vmem:[%s7 + $0x390] sm:$0xff]
        %v5513 = vld [vmem:[%s7 + $0x398] sm:$0xff]
        %v5514 = vld [vmem:[%s7 + $0x3a0] sm:$0xff]
        %v5515 = vld [vmem:[%s7 + $0x3a8] sm:$0xff]
        %v5516 = vld [vmem:[%s7 + $0x3b0] sm:$0xff]
        %v5517 = vld [vmem:[%s7 + $0x3b8] sm:$0xff]
        %v5518 = vld [vmem:[%s7 + $0x3c0] sm:$0xff]
        %v5519 = vld [vmem:[%s7 + $0x3c8] sm:$0xff]
        %v5520 = vld [vmem:[%s7 + $0x3d0] sm:$0xff]
        %v5521 = vld [vmem:[%s7 + $0x3d8] sm:$0xff]
        %v5522 = vld [vmem:[%s7 + $0x3e0] sm:$0xff]
        %v5523 = vld [vmem:[%s7 + $0x3e8] sm:$0xff]
        %v5524 = vld [vmem:[%s7 + $0x3f0] sm:$0xff]
        %v5525 = vld [vmem:[%s7 + $0x3f8] sm:$0xff]
        %5526 = vmatprep.subr.mxu0 %v5399
        %5527 = vmatpush1.msra.mxu0 %v5398
        %5528 = vmatprep.subr.mxu0 %v5403
        %5529 = vmatpush1.msra.mxu0 %v5402
        %5530 = vmatprep.subr.mxu0 %v5407
        %5531 = vmatpush1.msra.mxu0 %v5406
        %5532 = vmatprep.subr.mxu0 %v5411
        %5533 = vmatpush1.msra.mxu0 %v5410
        %5534 = vmatprep.subr.mxu0 %v5415
        %5535 = vmatpush1.msra.mxu0 %v5414
        %5536 = vmatprep.subr.mxu0 %v5419
        %5537 = vmatpush1.msra.mxu0 %v5418
        %5538 = vmatprep.subr.mxu0 %v5423
        %5539 = vmatpush1.msra.mxu0 %v5422
        %5540 = vmatprep.subr.mxu0 %v5427
        %5541 = vmatpush1.msra.mxu0 %v5426
        %5542 = vmatprep.subr.mxu0 %v5431
        %5543 = vmatpush1.msra.mxu0 %v5430
        %5544 = vmatprep.subr.mxu0 %v5435
        %5545 = vmatpush1.msra.mxu0 %v5434
        %5546 = vmatprep.subr.mxu0 %v5439
        %5547 = vmatpush1.msra.mxu0 %v5438
        %5548 = vmatprep.subr.mxu0 %v5443
        %5549 = vmatpush1.msra.mxu0 %v5442
        %5550 = vmatprep.subr.mxu0 %v5447
        %5551 = vmatpush1.msra.mxu0 %v5446
        %5552 = vmatprep.subr.mxu0 %v5451
        %5553 = vmatpush1.msra.mxu0 %v5450
        %5554 = vmatprep.subr.mxu0 %v5455
        %5555 = vmatpush1.msra.mxu0 %v5454
        %5556 = vmatprep.subr.mxu0 %v5459
        %5557 = vmatpush1.msra.mxu0 %v5458
        %5558 = vmatprep.subr.mxu0 %v5463
        %5559 = vmatpush1.msra.mxu0 %v5462
        %5560 = vmatprep.subr.mxu0 %v5467
        %5561 = vmatpush1.msra.mxu0 %v5466
        %5562 = vmatprep.subr.mxu0 %v5471
        %5563 = vmatpush1.msra.mxu0 %v5470
        %5564 = vmatprep.subr.mxu0 %v5475
        %5565 = vmatpush1.msra.mxu0 %v5474
        %5566 = vmatprep.subr.mxu0 %v5479
        %5567 = vmatpush1.msra.mxu0 %v5478
        %5568 = vmatprep.subr.mxu0 %v5483
        %5569 = vmatpush1.msra.mxu0 %v5482
        %5570 = vmatprep.subr.mxu0 %v5487
        %5571 = vmatpush1.msra.mxu0 %v5486
        %5572 = vmatprep.subr.mxu0 %v5491
        %5573 = vmatpush1.msra.mxu0 %v5490
        %5574 = vmatprep.subr.mxu0 %v5495
        %5575 = vmatpush1.msra.mxu0 %v5494
        %5576 = vmatprep.subr.mxu0 %v5499
        %5577 = vmatpush1.msra.mxu0 %v5498
        %5578 = vmatprep.subr.mxu0 %v5503
        %5579 = vmatpush1.msra.mxu0 %v5502
        %5580 = vmatprep.subr.mxu0 %v5507
        %5581 = vmatpush1.msra.mxu0 %v5506
        %5582 = vmatprep.subr.mxu0 %v5511
        %5583 = vmatpush1.msra.mxu0 %v5510
        %5584 = vmatprep.subr.mxu0 %v5515
        %5585 = vmatpush1.msra.mxu0 %v5514
        %5586 = vmatprep.subr.mxu0 %v5519
        %5587 = vmatpush1.msra.mxu0 %v5518
        %5588 = vmatprep.subr.mxu0 %v5523
        %5589 = vmatpush1.msra.mxu0 %v5522
        %5590 = vmatprep.mubr.f32.mxu0 %v5395
        %5591 = vmatmul.mubr.f32.gmra.mrb[0].mxu0 %v5394
        %v5592 = vpop.f32.mrb[0].mxu0
        %v5593 = vadd.f32 0.0, %v5592
        %v5594 = vpop.f32.mrb[0].mxu0
        %v5595 = vadd.f32 0.0, %v5594
        %5596 = vmatprep.mubr.f32.mxu0 %v5397
        %5597 = vmatmul.mubr.f32.gmra.mrb[0].mxu0 %v5396
        %v5598 = vpop.f32.mrb[0].mxu0
        %v5599 = vadd.f32 0.0, %v5598
        %v5600 = vpop.f32.mrb[0].mxu0
        %v5601 = vadd.f32 0.0, %v5600
        %5602 = vdwg.mxu0
        %5603 = vmatprep.subr.mxu0 %v5401
        %5604 = vmatpush1.msra.mxu0 %v5400
        %5605 = vmatprep.subr.mxu0 %v5405
        %5606 = vmatpush1.msra.mxu0 %v5404
        %5607 = vmatprep.subr.mxu0 %v5409
        %5608 = vmatpush1.msra.mxu0 %v5408
        %5609 = vmatprep.subr.mxu0 %v5413
        %5610 = vmatpush1.msra.mxu0 %v5412
        %5611 = vmatprep.subr.mxu0 %v5417
        %5612 = vmatpush1.msra.mxu0 %v5416
        %5613 = vmatprep.subr.mxu0 %v5421
        %5614 = vmatpush1.msra.mxu0 %v5420
        %5615 = vmatprep.subr.mxu0 %v5425
        %5616 = vmatpush1.msra.mxu0 %v5424
        %5617 = vmatprep.subr.mxu0 %v5429
        %5618 = vmatpush1.msra.mxu0 %v5428
        %5619 = vmatprep.subr.mxu0 %v5433
        %5620 = vmatpush1.msra.mxu0 %v5432
        %5621 = vmatprep.subr.mxu0 %v5437
        %5622 = vmatpush1.msra.mxu0 %v5436
        %5623 = vmatprep.subr.mxu0 %v5441
        %5624 = vmatpush1.msra.mxu0 %v5440
        %5625 = vmatprep.subr.mxu0 %v5445
        %5626 = vmatpush1.msra.mxu0 %v5444
        %5627 = vmatprep.subr.mxu0 %v5449
        %5628 = vmatpush1.msra.mxu0 %v5448
        %5629 = vmatprep.subr.mxu0 %v5453
        %5630 = vmatpush1.msra.mxu0 %v5452
        %5631 = vmatprep.subr.mxu0 %v5457
        %5632 = vmatpush1.msra.mxu0 %v5456
        %5633 = vmatprep.subr.mxu0 %v5461
        %5634 = vmatpush1.msra.mxu0 %v5460
        %5635 = vmatprep.subr.mxu0 %v5465
        %5636 = vmatpush1.msra.mxu0 %v5464
        %5637 = vmatprep.subr.mxu0 %v5469
        %5638 = vmatpush1.msra.mxu0 %v5468
        %5639 = vmatprep.subr.mxu0 %v5473
        %5640 = vmatpush1.msra.mxu0 %v5472
        %5641 = vmatprep.subr.mxu0 %v5477
        %5642 = vmatpush1.msra.mxu0 %v5476
        %5643 = vmatprep.subr.mxu0 %v5481
        %5644 = vmatpush1.msra.mxu0 %v5480
        %5645 = vmatprep.subr.mxu0 %v5485
        %5646 = vmatpush1.msra.mxu0 %v5484
        %5647 = vmatprep.subr.mxu0 %v5489
        %5648 = vmatpush1.msra.mxu0 %v5488
        %5649 = vmatprep.subr.mxu0 %v5493
        %5650 = vmatpush1.msra.mxu0 %v5492
        %5651 = vmatprep.subr.mxu0 %v5497
        %5652 = vmatpush1.msra.mxu0 %v5496
        %5653 = vmatprep.subr.mxu0 %v5501
        %5654 = vmatpush1.msra.mxu0 %v5500
        %5655 = vmatprep.subr.mxu0 %v5505
        %5656 = vmatpush1.msra.mxu0 %v5504
        %5657 = vmatprep.subr.mxu0 %v5509
        %5658 = vmatpush1.msra.mxu0 %v5508
        %5659 = vmatprep.subr.mxu0 %v5513
        %5660 = vmatpush1.msra.mxu0 %v5512
        %5661 = vmatprep.subr.mxu0 %v5517
        %5662 = vmatpush1.msra.mxu0 %v5516
        %5663 = vmatprep.subr.mxu0 %v5521
        %5664 = vmatpush1.msra.mxu0 %v5520
        %5665 = vmatprep.subr.mxu0 %v5525
        %5666 = vmatpush1.msra.mxu0 %v5524
        %5667 = vmatprep.mubr.f32.mxu0 %v5395
        %5668 = vmatmul.mubr.f32.gmra.mrb[0].mxu0 %v5394
        %v5669 = vpop.f32.mrb[0].mxu0
        %v5670 = vadd.f32 0.0, %v5669
        %v5671 = vpop.f32.mrb[0].mxu0
        %v5672 = vadd.f32 0.0, %v5671
        %5673 = vmatprep.mubr.f32.mxu0 %v5397
        %5674 = vmatmul.mubr.f32.gmra.mrb[0].mxu0 %v5396
        %v5675 = vpop.f32.mrb[0].mxu0
        %v5676 = vadd.f32 0.0, %v5675
        %v5677 = vpop.f32.mrb[0].mxu0
        %v5678 = vadd.f32 0.0, %v5677
        %5679 = vdwg.mxu0
        %5680 = vst [vmem:[%s8] sm:$0xff] %v5593
        %5681 = vst [vmem:[%s8 + $0x8] sm:$0xff] %v5595
        %5682 = vst [vmem:[%s8 + $0x10] sm:$0xff] %v5670
        %5683 = vst [vmem:[%s8 + $0x18] sm:$0xff] %v5672
        %5684 = vst [vmem:[%s8 + $0x20] sm:$0xff] %v5599
        %5685 = vst [vmem:[%s8 + $0x28] sm:$0xff] %v5601
        %5686 = vst [vmem:[%s8 + $0x30] sm:$0xff] %v5676
        %5687 = vst [vmem:[%s8 + $0x38] sm:$0xff] %v5678
      $region56: #{kart_model8_forward.2} parent=51 // pred_fallthru
        _
      // Predicated region
      $region57: #{kart_model8_forward.2} parent=51 // pred_check
        %p5688 = pneg %p205
      $region58: #{kart_model8_forward.2} parent=51 // pred_check_branch
        %5690 = sbr.rel (%p5688) target = $region60
      $region59: #{kart_model8_forward.2} parent=51 // pred_region
        _
      $region60: #{kart_model8_forward.2} parent=51 // pred_fallthru
        _
      // Predicated region
      $region61: #{kart_model8_forward.2} parent=51 // pred_check
        %p5691 = pneg %p205
      $region62: #{kart_model8_forward.2} parent=51 // pred_check_branch
        %5693 = sbr.rel (%p5691) target = $region64
      $region63: #{kart_model8_forward.2} parent=51 // pred_region
        _
      $region64: #{kart_model8_forward.2} parent=51 // pred_fallthru
        _
    $region52: #{kart_model8_forward.2} parent=5 // pred_fallthru
      _
    %p5694 = scmp.le.s32.totalorder 2, %s14
    // Predicated region
    $region65: #{kart_model8_forward.2} parent=5 // pred_check
      %p5695 = pneg %p5694
    $region66: #{kart_model8_forward.2} parent=5 // pred_check_branch
      %5697 = sbr.rel (%p5695) target = $region68
    $region67: #{kart_model8_forward.2} parent=5 // pred_region
      %s5698 = ssub.s32 %s14, 2
    $region68: #{kart_model8_forward.2} parent=5 // pred_fallthru
      _
  $region6: #{kart_model8_forward.2} parent=0 // loop_footer
    %s18 = sadd.s32 1, %s14
  $region7: #{kart_model8_forward.2} parent=0 // loop_footer_branch
    %13 = sbr.rel target = $region3
  $region8: #{kart_model8_forward.2} parent=0 // loop_exit
    _

</llo_original>
